<compile_context>
chip_gen: v5e
topology: v5e:2x2
jax: 0.10.0
libtpu: 0.0.40
codegen_flags: <defaults>
</compile_context>

<pallas_src>
import functools
import math

import numpy as np
import jax
import jax.numpy as jnp
from jax.experimental import pallas as pl
from jax.experimental.pallas import tpu as pltpu

EPS = 1e-5  # nn.GroupNorm default eps


def sa_ela20_kernel(x_ref, m_ref, eh_ref, ew_ref, t1_ref, w2_ref,
                    gamma_ref, beta_ref, mask0_ref, o_ref, *, c, h, w, pad2):
    bc, hw = x_ref.shape
    bb = bc // c                            # examples per grid step (static)
    k2 = w2_ref.shape[0]
    lt = m_ref.shape[1]                     # (h + 2p) + (w + 2p) + 1
    n = h + 2 * pad2 + w                    # fused conv-tap window width
    inv_h = 1.0 / h
    inv_w = 1.0 / w

    # One fused MXU pass over the whole (bb*C, HW) slab:
    #   cols [0, h+2p)            zero-padded mean over W (per spatial row)
    #   cols [h+2p, h+2p+w+2p)    zero-padded mean over H (per spatial col)
    #   col  [lt-1]               per-channel global mean
    buf = jnp.dot(x_ref[...], m_ref[...],
                  preferred_element_type=jnp.float32)          # (bb*c, lt)

    gamma = gamma_ref[...]                  # (c, 1)
    beta = beta_ref[...]                    # (c, 1)
    mask0 = mask0_ref[...]                  # (c, 1), 1.0 on x_0 rows
    mask1 = 1.0 - mask0

    def gn_sig(y, inv_len):
        # GroupNorm(half, half): per-channel normalization over the length axis.
        mu = jnp.sum(y, axis=1, keepdims=True) * inv_len
        d = y - mu
        var = jnp.sum(d * d, axis=1, keepdims=True) * inv_len
        yn = d * jax.lax.rsqrt(var + EPS) * gamma + beta
        return mask0 + mask1 * jax.nn.sigmoid(yn)   # x_0 rows -> 1.0

    for bi in range(bb):                    # small static count, unrolled
        r0 = bi * c
        bufb = buf[r0:r0 + c, :]                                # (c, lt)

        # ---- channel-attention branch (x_0 half of each group) ----------
        # conv1 applied to the global-mean column via the dense within-group
        # channel-mix T1 (full-width dot: same single MXU pass as N=1).
        t1b = jnp.dot(t1_ref[...], bufb,
                      preferred_element_type=jnp.float32)       # (c, lt)
        s_ch = mask0 * jax.nn.sigmoid(t1b[:, lt - 1:lt]) + mask1  # (c, 1)

        # ---- spatial (ELA) branch (x_1 half of each group) --------------
        # One matmul per conv2 tap over the combined padded h|w window; the
        # 2*pad2 columns between the h and w halves of y are garbage.
        y = jnp.dot(w2_ref[0], bufb[:, 0:n],
                    preferred_element_type=jnp.float32)         # (c, n)
        for t in range(1, k2):
            y = y + jnp.dot(w2_ref[t], bufb[:, t:t + n],
                            preferred_element_type=jnp.float32)

        a_h = gn_sig(y[:, :h], inv_h) * s_ch    # fold s_ch before expansion
        a_w = gn_sig(y[:, n - w:n], inv_w)

        # ---- expand to (c, hw) on the MXU; fused lane-dense store --------
        ah_full = jnp.dot(a_h, eh_ref[...], preferred_element_type=jnp.float32)
        aw_full = jnp.dot(a_w, ew_ref[...], preferred_element_type=jnp.float32)
        o_ref[r0:r0 + c, :] = (x_ref[r0:r0 + c, :].astype(jnp.float32)
                               * ah_full * aw_full).astype(o_ref.dtype)


def _pick_batch_block(b, target=8):
    """Batch several examples per grid step, but keep >=2 grid steps."""
    cap = min(target, max(1, b // 2))
    for bb in range(cap, 0, -1):
        if b % bb == 0:
            return bb
    return 1


def sa_ela20_forward(x, conv1_w, conv2_w, gn_weight, gn_bias, *, groups=32):
    b, c, h, w = x.shape
    assert c % (2 * groups) == 0
    cg = c // groups
    half = cg // 2
    hw = h * w

    c1w = np.asarray(conv1_w, np.float32).reshape(1, 1, -1)   # (1, 1, K1)
    c2w = np.asarray(conv2_w, np.float32)                     # (half, half, K2)
    gn_w = np.asarray(gn_weight, np.float32)
    gn_b = np.asarray(gn_bias, np.float32)

    K1, K2 = c1w.shape[-1], c2w.shape[-1]
    pad1, pad2 = K1 // 2, K2 // 2
    Lh, Lw = h + 2 * pad2, w + 2 * pad2
    LT = Lh + Lw + 1

    # Fused mean constant (padding folded in): x(C,HW) @ M ->
    # [padded mean-over-W | padded mean-over-H | global mean] in one pass.
    ii = np.arange(hw) // w
    jj = np.arange(hw) % w
    M = np.zeros((hw, LT), np.float32)
    M[np.arange(hw), pad2 + ii] = 1.0 / w
    M[np.arange(hw), Lh + pad2 + jj] = 1.0 / h
    M[:, LT - 1] = 1.0 / hw

    # Broadcast-expansion constants (C,h)->(C,HW) and (C,w)->(C,HW).
    Eh = np.zeros((h, hw), np.float32); Eh[ii, np.arange(hw)] = 1.0
    Ew = np.zeros((w, hw), np.float32); Ew[jj, np.arange(hw)] = 1.0

    # conv1 (1->1 over within-group channel axis of x_0) as dense (C,C);
    # conv2 per-tap block-diagonal (C,C) acting on the x_1 half of each group.
    T1 = np.zeros((c, c), np.float32)
    W2 = np.zeros((K2, c, c), np.float32)
    gamma = np.ones((c, 1), np.float32)
    beta = np.zeros((c, 1), np.float32)
    mask0 = np.zeros((c, 1), np.float32)
    for g in range(groups):
        b0 = g * cg
        b1 = b0 + half
        mask0[b0:b1, 0] = 1.0
        gamma[b1:b0 + cg, 0] = gn_w
        beta[b1:b0 + cg, 0] = gn_b
        for p in range(half):
            for q in range(half):
                k = q - p + pad1
                if 0 <= k < K1:
                    T1[b0 + p, b0 + q] = c1w[0, 0, k]
        for t in range(K2):
            W2[t, b1:b0 + cg, b1:b0 + cg] = c2w[:, :, t]

    bb = _pick_batch_block(b)
    x2d = x.reshape(b * c, hw)            # contiguity-preserving, free in XLA

    kernel = functools.partial(sa_ela20_kernel, c=c, h=h, w=w, pad2=pad2)
    out2d = pl.pallas_call(
        kernel,
        out_shape=jax.ShapeDtypeStruct((b * c, hw), x.dtype),
        grid=(b // bb,),
        in_specs=[
            pl.BlockSpec((bb * c, hw), lambda i: (i, 0)),     # x (bb examples)
            pl.BlockSpec((hw, LT), lambda i: (0, 0)),         # fused mean matrix
            pl.BlockSpec((h, hw), lambda i: (0, 0)),          # Eh
            pl.BlockSpec((w, hw), lambda i: (0, 0)),          # Ew
            pl.BlockSpec((c, c), lambda i: (0, 0)),           # T1
            pl.BlockSpec((K2, c, c), lambda i: (0, 0, 0)),    # W2 taps
            pl.BlockSpec((c, 1), lambda i: (0, 0)),           # gamma
            pl.BlockSpec((c, 1), lambda i: (0, 0)),           # beta
            pl.BlockSpec((c, 1), lambda i: (0, 0)),           # mask0
        ],
        out_specs=pl.BlockSpec((bb * c, hw), lambda i: (i, 0)),
        compiler_params=pltpu.CompilerParams(
            dimension_semantics=("parallel",),
            vmem_limit_bytes=32 * 1024 * 1024,
        ),
    )(x2d, jnp.asarray(M), jnp.asarray(Eh), jnp.asarray(Ew),
      jnp.asarray(T1), jnp.asarray(W2), jnp.asarray(gamma),
      jnp.asarray(beta), jnp.asarray(mask0))
    return out2d.reshape(b, c, h, w)


def sa_ela20_ref(x, conv1_w, conv2_w, gn_weight, gn_bias, *, groups=32):
    """Pure-JAX reference matching the PyTorch sa_ela20_t.forward."""
    b, c, h, w = x.shape
    half = c // (2 * groups)
    K1 = conv1_w.shape[-1]
    K2 = conv2_w.shape[-1]
    pad1, pad2 = K1 // 2, K2 // 2
    hp = jax.lax.Precision.HIGHEST

    xg = x.reshape(b * groups, c // groups, h, w)
    x0, x1 = xg[:, :half], xg[:, half:]

    # channel-attention branch on x_0
    y = jnp.mean(x0, axis=(2, 3))[:, None, :]                 # (bg, 1, half)
    y = jax.lax.conv_general_dilated(
        y, conv1_w, (1,), [(pad1, pad1)],
        dimension_numbers=("NCH", "OIH", "NCH"), precision=hp)
    y = jax.nn.sigmoid(y)[:, 0, :, None, None]                # (bg, half, 1, 1)
    xn = x0 * y

    # spatial (ELA) branch on x_1
    def conv_gn_sig(v):                                       # v: (bg, half, L)
        v = jax.lax.conv_general_dilated(
            v, conv2_w, (1,), [(pad2, pad2)],
            dimension_numbers=("NCH", "OIH", "NCH"), precision=hp)
        mu = jnp.mean(v, axis=2, keepdims=True)
        var = jnp.mean((v - mu) ** 2, axis=2, keepdims=True)
        vn = (v - mu) * jax.lax.rsqrt(var + EPS)
        vn = vn * gn_weight[None, :, None] + gn_bias[None, :, None]
        return jax.nn.sigmoid(vn)

    a_h = conv_gn_sig(jnp.mean(x1, axis=3))                   # (bg, half, h)
    a_w = conv_gn_sig(jnp.mean(x1, axis=2))                   # (bg, half, w)
    xs = x1 * a_h[..., None] * a_w[:, :, None, :]
    return jnp.concatenate([xn, xs], axis=1).reshape(b, c, h, w)


if __name__ == "__main__":
    key = jax.random.PRNGKey(0)
    # module defaults: groups=32, ks=7 ; channel must be a multiple of 64.
    # batch=4 exercises both the per-step batching (bb=2) and a 2-step grid.
    b, c, h, w = 4, 128, 16, 16
    groups, ks = 32, 7
    half = c // (2 * groups)

    # conv1 kernel size, exactly as in sa_ela20_t.__init__ (gamma=2, b=1)
    k1 = int(abs((math.log(c, 2) + 1) / 2))
    k1 = k1 if k1 % 2 else k1 + 1

    keys = jax.random.split(key, 5)
    x = jax.random.normal(keys[0], (b, c, h, w), jnp.float32)
    conv1_w = jax.random.normal(keys[1], (1, 1, k1), jnp.float32) / np.sqrt(k1)
    conv2_w = jax.random.normal(keys[2], (half, half, ks), jnp.float32) / np.sqrt(half * ks)
    gn_weight = 1.0 + 0.1 * jax.random.normal(keys[3], (half,), jnp.float32)
    gn_bias = 0.1 * jax.random.normal(keys[4], (half,), jnp.float32)

    out = sa_ela20_forward(x, conv1_w, conv2_w, gn_weight, gn_bias, groups=groups)
    out = jax.block_until_ready(out)

    ref = sa_ela20_ref(x, conv1_w, conv2_w, gn_weight, gn_bias, groups=groups)
    assert out.shape == x.shape and out.dtype == x.dtype
    np.testing.assert_allclose(np.asarray(out), np.asarray(ref),
                               rtol=2e-3, atol=2e-3)
    print("KERNEL_OK")
</pallas_src>

<mosaic_0001>
module attributes {stable_mosaic.version = 11 : i64} {
  func.func @sa_ela20_kernel(%arg0: i32, %arg1: memref<256x256xf32, #tpu.memory_space<vmem>>, %arg2: memref<256x45xf32, #tpu.memory_space<vmem>>, %arg3: memref<16x256xf32, #tpu.memory_space<vmem>>, %arg4: memref<16x256xf32, #tpu.memory_space<vmem>>, %arg5: memref<128x128xf32, #tpu.memory_space<vmem>>, %arg6: memref<7x128x128xf32, #tpu.memory_space<vmem>>, %arg7: memref<128x1xf32, #tpu.memory_space<vmem>>, %arg8: memref<128x1xf32, #tpu.memory_space<vmem>>, %arg9: memref<128x1xf32, #tpu.memory_space<vmem>>, %arg10: memref<256x256xf32, #tpu.memory_space<vmem>>) attributes {dimension_semantics = [#tpu.dimension_semantics<parallel>], iteration_bounds = array<i64: 2>, scalar_prefetch = 0 : i64, scratch_operands = 0 : i64, tpu.core_type = #tpu.core_type<tc>, window_params = [{transform_indices = @transform_0, window_bounds = array<i64: 256, 256>}, {pipeline_mode = #tpu.pipeline_mode<synchronous>, transform_indices = @transform_1, window_bounds = array<i64: 256, 45>}, {pipeline_mode = #tpu.pipeline_mode<synchronous>, transform_indices = @transform_2, window_bounds = array<i64: 16, 256>}, {pipeline_mode = #tpu.pipeline_mode<synchronous>, transform_indices = @transform_3, window_bounds = array<i64: 16, 256>}, {pipeline_mode = #tpu.pipeline_mode<synchronous>, transform_indices = @transform_4, window_bounds = array<i64: 128, 128>}, {pipeline_mode = #tpu.pipeline_mode<synchronous>, transform_indices = @transform_5, window_bounds = array<i64: 7, 128, 128>}, {pipeline_mode = #tpu.pipeline_mode<synchronous>, transform_indices = @transform_6, window_bounds = array<i64: 128, 1>}, {pipeline_mode = #tpu.pipeline_mode<synchronous>, transform_indices = @transform_7, window_bounds = array<i64: 128, 1>}, {pipeline_mode = #tpu.pipeline_mode<synchronous>, transform_indices = @transform_8, window_bounds = array<i64: 128, 1>}, {transform_indices = @transform_9, window_bounds = array<i64: 256, 256>}]} {
    %c0 = arith.constant 0 : index
    %c0_0 = arith.constant 0 : index
    %0 = vector.load %arg1[%c0, %c0_0] : memref<256x256xf32, #tpu.memory_space<vmem>>, vector<256x256xf32>
    %c0_1 = arith.constant 0 : index
    %c0_2 = arith.constant 0 : index
    %1 = vector.load %arg2[%c0_1, %c0_2] : memref<256x45xf32, #tpu.memory_space<vmem>>, vector<256x45xf32>
    %cst = arith.constant dense<0.000000e+00> : vector<256x45xf32>
    %2 = tpu.matmul %0, %1, %cst {dimension_numbers = #tpu.dot_dimension_numbers<[1], [0], [0], [1], [0, 0, 1, 1], [], []>} : vector<256x256xf32>, vector<256x45xf32>, vector<256x45xf32> -> vector<256x45xf32>
    %c0_3 = arith.constant 0 : index
    %c0_4 = arith.constant 0 : index
    %3 = vector.load %arg7[%c0_3, %c0_4] : memref<128x1xf32, #tpu.memory_space<vmem>>, vector<128x1xf32>
    %c0_5 = arith.constant 0 : index
    %c0_6 = arith.constant 0 : index
    %4 = vector.load %arg8[%c0_5, %c0_6] : memref<128x1xf32, #tpu.memory_space<vmem>>, vector<128x1xf32>
    %c0_7 = arith.constant 0 : index
    %c0_8 = arith.constant 0 : index
    %5 = vector.load %arg9[%c0_7, %c0_8] : memref<128x1xf32, #tpu.memory_space<vmem>>, vector<128x1xf32>
    %cst_9 = arith.constant 1.000000e+00 : f32
    %6 = vector.broadcast %cst_9 : f32 to vector<128x1xf32>
    %7 = arith.subf %6, %5 : vector<128x1xf32>
    %8 = vector.extract_strided_slice %2 {offsets = [0, 0], sizes = [128, 45], strides = [1, 1]} : vector<256x45xf32> to vector<128x45xf32>
    %c0_10 = arith.constant 0 : index
    %c0_11 = arith.constant 0 : index
    %9 = vector.load %arg5[%c0_10, %c0_11] : memref<128x128xf32, #tpu.memory_space<vmem>>, vector<128x128xf32>
    %cst_12 = arith.constant dense<0.000000e+00> : vector<128x45xf32>
    %10 = tpu.matmul %9, %8, %cst_12 {dimension_numbers = #tpu.dot_dimension_numbers<[1], [0], [0], [1], [0, 0, 1, 1], [], []>} : vector<128x128xf32>, vector<128x45xf32>, vector<128x45xf32> -> vector<128x45xf32>
    %11 = vector.extract_strided_slice %10 {offsets = [0, 44], sizes = [128, 1], strides = [1, 1]} : vector<128x45xf32> to vector<128x1xf32>
    %12 = arith.negf %11 : vector<128x1xf32>
    %13 = math.exp %12 : vector<128x1xf32>
    %cst_13 = arith.constant 1.000000e+00 : f32
    %14 = vector.broadcast %cst_13 : f32 to vector<128x1xf32>
    %15 = arith.addf %14, %13 : vector<128x1xf32>
    %16 = arith.divf %14, %15 : vector<128x1xf32>
    %17 = arith.mulf %5, %16 : vector<128x1xf32>
    %18 = arith.addf %17, %7 : vector<128x1xf32>
    %c0_14 = arith.constant 0 : index
    %c0_15 = arith.constant 0 : index
    %c0_16 = arith.constant 0 : index
    %19 = vector.load %arg6[%c0_14, %c0_15, %c0_16] : memref<7x128x128xf32, #tpu.memory_space<vmem>>, vector<1x128x128xf32>
    %20 = vector.shape_cast %19 : vector<1x128x128xf32> to vector<128x128xf32>
    %21 = vector.extract_strided_slice %8 {offsets = [0, 0], sizes = [128, 38], strides = [1, 1]} : vector<128x45xf32> to vector<128x38xf32>
    %cst_17 = arith.constant dense<0.000000e+00> : vector<128x38xf32>
    %22 = tpu.matmul %20, %21, %cst_17 {dimension_numbers = #tpu.dot_dimension_numbers<[1], [0], [0], [1], [0, 0, 1, 1], [], []>} : vector<128x128xf32>, vector<128x38xf32>, vector<128x38xf32> -> vector<128x38xf32>
    %c1 = arith.constant 1 : index
    %c0_18 = arith.constant 0 : index
    %c0_19 = arith.constant 0 : index
    %23 = vector.load %arg6[%c1, %c0_18, %c0_19] : memref<7x128x128xf32, #tpu.memory_space<vmem>>, vector<1x128x128xf32>
    %24 = vector.shape_cast %23 : vector<1x128x128xf32> to vector<128x128xf32>
    %25 = vector.extract_strided_slice %8 {offsets = [0, 1], sizes = [128, 38], strides = [1, 1]} : vector<128x45xf32> to vector<128x38xf32>
    %cst_20 = arith.constant dense<0.000000e+00> : vector<128x38xf32>
    %26 = tpu.matmul %24, %25, %cst_20 {dimension_numbers = #tpu.dot_dimension_numbers<[1], [0], [0], [1], [0, 0, 1, 1], [], []>} : vector<128x128xf32>, vector<128x38xf32>, vector<128x38xf32> -> vector<128x38xf32>
    %27 = arith.addf %22, %26 : vector<128x38xf32>
    %c2 = arith.constant 2 : index
    %c0_21 = arith.constant 0 : index
    %c0_22 = arith.constant 0 : index
    %28 = vector.load %arg6[%c2, %c0_21, %c0_22] : memref<7x128x128xf32, #tpu.memory_space<vmem>>, vector<1x128x128xf32>
    %29 = vector.shape_cast %28 : vector<1x128x128xf32> to vector<128x128xf32>
    %30 = vector.extract_strided_slice %8 {offsets = [0, 2], sizes = [128, 38], strides = [1, 1]} : vector<128x45xf32> to vector<128x38xf32>
    %cst_23 = arith.constant dense<0.000000e+00> : vector<128x38xf32>
    %31 = tpu.matmul %29, %30, %cst_23 {dimension_numbers = #tpu.dot_dimension_numbers<[1], [0], [0], [1], [0, 0, 1, 1], [], []>} : vector<128x128xf32>, vector<128x38xf32>, vector<128x38xf32> -> vector<128x38xf32>
    %32 = arith.addf %27, %31 : vector<128x38xf32>
    %c3 = arith.constant 3 : index
    %c0_24 = arith.constant 0 : index
    %c0_25 = arith.constant 0 : index
    %33 = vector.load %arg6[%c3, %c0_24, %c0_25] : memref<7x128x128xf32, #tpu.memory_space<vmem>>, vector<1x128x128xf32>
    %34 = vector.shape_cast %33 : vector<1x128x128xf32> to vector<128x128xf32>
    %35 = vector.extract_strided_slice %8 {offsets = [0, 3], sizes = [128, 38], strides = [1, 1]} : vector<128x45xf32> to vector<128x38xf32>
    %cst_26 = arith.constant dense<0.000000e+00> : vector<128x38xf32>
    %36 = tpu.matmul %34, %35, %cst_26 {dimension_numbers = #tpu.dot_dimension_numbers<[1], [0], [0], [1], [0, 0, 1, 1], [], []>} : vector<128x128xf32>, vector<128x38xf32>, vector<128x38xf32> -> vector<128x38xf32>
    %37 = arith.addf %32, %36 : vector<128x38xf32>
    %c4 = arith.constant 4 : index
    %c0_27 = arith.constant 0 : index
    %c0_28 = arith.constant 0 : index
    %38 = vector.load %arg6[%c4, %c0_27, %c0_28] : memref<7x128x128xf32, #tpu.memory_space<vmem>>, vector<1x128x128xf32>
    %39 = vector.shape_cast %38 : vector<1x128x128xf32> to vector<128x128xf32>
    %40 = vector.extract_strided_slice %8 {offsets = [0, 4], sizes = [128, 38], strides = [1, 1]} : vector<128x45xf32> to vector<128x38xf32>
    %cst_29 = arith.constant dense<0.000000e+00> : vector<128x38xf32>
    %41 = tpu.matmul %39, %40, %cst_29 {dimension_numbers = #tpu.dot_dimension_numbers<[1], [0], [0], [1], [0, 0, 1, 1], [], []>} : vector<128x128xf32>, vector<128x38xf32>, vector<128x38xf32> -> vector<128x38xf32>
    %42 = arith.addf %37, %41 : vector<128x38xf32>
    %c5 = arith.constant 5 : index
    %c0_30 = arith.constant 0 : index
    %c0_31 = arith.constant 0 : index
    %43 = vector.load %arg6[%c5, %c0_30, %c0_31] : memref<7x128x128xf32, #tpu.memory_space<vmem>>, vector<1x128x128xf32>
    %44 = vector.shape_cast %43 : vector<1x128x128xf32> to vector<128x128xf32>
    %45 = vector.extract_strided_slice %8 {offsets = [0, 5], sizes = [128, 38], strides = [1, 1]} : vector<128x45xf32> to vector<128x38xf32>
    %cst_32 = arith.constant dense<0.000000e+00> : vector<128x38xf32>
    %46 = tpu.matmul %44, %45, %cst_32 {dimension_numbers = #tpu.dot_dimension_numbers<[1], [0], [0], [1], [0, 0, 1, 1], [], []>} : vector<128x128xf32>, vector<128x38xf32>, vector<128x38xf32> -> vector<128x38xf32>
    %47 = arith.addf %42, %46 : vector<128x38xf32>
    %c6 = arith.constant 6 : index
    %c0_33 = arith.constant 0 : index
    %c0_34 = arith.constant 0 : index
    %48 = vector.load %arg6[%c6, %c0_33, %c0_34] : memref<7x128x128xf32, #tpu.memory_space<vmem>>, vector<1x128x128xf32>
    %49 = vector.shape_cast %48 : vector<1x128x128xf32> to vector<128x128xf32>
    %50 = vector.extract_strided_slice %8 {offsets = [0, 6], sizes = [128, 38], strides = [1, 1]} : vector<128x45xf32> to vector<128x38xf32>
    %cst_35 = arith.constant dense<0.000000e+00> : vector<128x38xf32>
    %51 = tpu.matmul %49, %50, %cst_35 {dimension_numbers = #tpu.dot_dimension_numbers<[1], [0], [0], [1], [0, 0, 1, 1], [], []>} : vector<128x128xf32>, vector<128x38xf32>, vector<128x38xf32> -> vector<128x38xf32>
    %52 = arith.addf %47, %51 : vector<128x38xf32>
    %53 = vector.extract_strided_slice %52 {offsets = [0, 0], sizes = [128, 16], strides = [1, 1]} : vector<128x38xf32> to vector<128x16xf32>
    %cst_36 = arith.constant dense<0.000000e+00> : vector<128xf32>
    %54 = vector.multi_reduction <add>, %53, %cst_36 [1] : vector<128x16xf32> to vector<128xf32>
    %55 = vector.shape_cast %54 : vector<128xf32> to vector<128x1xf32>
    %cst_37 = arith.constant 6.250000e-02 : f32
    %56 = vector.broadcast %cst_37 : f32 to vector<128x1xf32>
    %57 = arith.mulf %55, %56 : vector<128x1xf32>
    %58 = vector.broadcast %57 : vector<128x1xf32> to vector<128x16xf32>
    %59 = arith.subf %53, %58 : vector<128x16xf32>
    %60 = arith.mulf %59, %59 : vector<128x16xf32>
    %cst_38 = arith.constant dense<0.000000e+00> : vector<128xf32>
    %61 = vector.multi_reduction <add>, %60, %cst_38 [1] : vector<128x16xf32> to vector<128xf32>
    %62 = vector.shape_cast %61 : vector<128xf32> to vector<128x1xf32>
    %cst_39 = arith.constant 6.250000e-02 : f32
    %63 = vector.broadcast %cst_39 : f32 to vector<128x1xf32>
    %64 = arith.mulf %62, %63 : vector<128x1xf32>
    %cst_40 = arith.constant 9.99999974E-6 : f32
    %65 = vector.broadcast %cst_40 : f32 to vector<128x1xf32>
    %66 = arith.addf %64, %65 : vector<128x1xf32>
    %67 = math.rsqrt %66 : vector<128x1xf32>
    %68 = vector.broadcast %67 : vector<128x1xf32> to vector<128x16xf32>
    %69 = arith.mulf %59, %68 : vector<128x16xf32>
    %70 = vector.broadcast %3 : vector<128x1xf32> to vector<128x16xf32>
    %71 = arith.mulf %69, %70 : vector<128x16xf32>
    %72 = vector.broadcast %4 : vector<128x1xf32> to vector<128x16xf32>
    %73 = arith.addf %71, %72 : vector<128x16xf32>
    %74 = arith.negf %73 : vector<128x16xf32>
    %75 = math.exp %74 : vector<128x16xf32>
    %cst_41 = arith.constant 1.000000e+00 : f32
    %76 = vector.broadcast %cst_41 : f32 to vector<128x16xf32>
    %77 = arith.addf %76, %75 : vector<128x16xf32>
    %78 = arith.divf %76, %77 : vector<128x16xf32>
    %79 = vector.broadcast %7 : vector<128x1xf32> to vector<128x16xf32>
    %80 = arith.mulf %79, %78 : vector<128x16xf32>
    %81 = vector.broadcast %5 : vector<128x1xf32> to vector<128x16xf32>
    %82 = arith.addf %81, %80 : vector<128x16xf32>
    %83 = vector.broadcast %18 : vector<128x1xf32> to vector<128x16xf32>
    %84 = arith.mulf %82, %83 : vector<128x16xf32>
    %85 = vector.extract_strided_slice %52 {offsets = [0, 22], sizes = [128, 16], strides = [1, 1]} : vector<128x38xf32> to vector<128x16xf32>
    %cst_42 = arith.constant dense<0.000000e+00> : vector<128xf32>
    %86 = vector.multi_reduction <add>, %85, %cst_42 [1] : vector<128x16xf32> to vector<128xf32>
    %87 = vector.shape_cast %86 : vector<128xf32> to vector<128x1xf32>
    %cst_43 = arith.constant 6.250000e-02 : f32
    %88 = vector.broadcast %cst_43 : f32 to vector<128x1xf32>
    %89 = arith.mulf %87, %88 : vector<128x1xf32>
    %90 = vector.broadcast %89 : vector<128x1xf32> to vector<128x16xf32>
    %91 = arith.subf %85, %90 : vector<128x16xf32>
    %92 = arith.mulf %91, %91 : vector<128x16xf32>
    %cst_44 = arith.constant dense<0.000000e+00> : vector<128xf32>
    %93 = vector.multi_reduction <add>, %92, %cst_44 [1] : vector<128x16xf32> to vector<128xf32>
    %94 = vector.shape_cast %93 : vector<128xf32> to vector<128x1xf32>
    %cst_45 = arith.constant 6.250000e-02 : f32
    %95 = vector.broadcast %cst_45 : f32 to vector<128x1xf32>
    %96 = arith.mulf %94, %95 : vector<128x1xf32>
    %cst_46 = arith.constant 9.99999974E-6 : f32
    %97 = vector.broadcast %cst_46 : f32 to vector<128x1xf32>
    %98 = arith.addf %96, %97 : vector<128x1xf32>
    %99 = math.rsqrt %98 : vector<128x1xf32>
    %100 = vector.broadcast %99 : vector<128x1xf32> to vector<128x16xf32>
    %101 = arith.mulf %91, %100 : vector<128x16xf32>
    %102 = vector.broadcast %3 : vector<128x1xf32> to vector<128x16xf32>
    %103 = arith.mulf %101, %102 : vector<128x16xf32>
    %104 = vector.broadcast %4 : vector<128x1xf32> to vector<128x16xf32>
    %105 = arith.addf %103, %104 : vector<128x16xf32>
    %106 = arith.negf %105 : vector<128x16xf32>
    %107 = math.exp %106 : vector<128x16xf32>
    %cst_47 = arith.constant 1.000000e+00 : f32
    %108 = vector.broadcast %cst_47 : f32 to vector<128x16xf32>
    %109 = arith.addf %108, %107 : vector<128x16xf32>
    %110 = arith.divf %108, %109 : vector<128x16xf32>
    %111 = vector.broadcast %7 : vector<128x1xf32> to vector<128x16xf32>
    %112 = arith.mulf %111, %110 : vector<128x16xf32>
    %113 = vector.broadcast %5 : vector<128x1xf32> to vector<128x16xf32>
    %114 = arith.addf %113, %112 : vector<128x16xf32>
    %c0_48 = arith.constant 0 : index
    %c0_49 = arith.constant 0 : index
    %115 = vector.load %arg3[%c0_48, %c0_49] : memref<16x256xf32, #tpu.memory_space<vmem>>, vector<16x256xf32>
    %cst_50 = arith.constant dense<0.000000e+00> : vector<128x256xf32>
    %116 = tpu.matmul %84, %115, %cst_50 {dimension_numbers = #tpu.dot_dimension_numbers<[1], [0], [0], [1], [0, 0, 1, 1], [], []>} : vector<128x16xf32>, vector<16x256xf32>, vector<128x256xf32> -> vector<128x256xf32>
    %c0_51 = arith.constant 0 : index
    %c0_52 = arith.constant 0 : index
    %117 = vector.load %arg4[%c0_51, %c0_52] : memref<16x256xf32, #tpu.memory_space<vmem>>, vector<16x256xf32>
    %cst_53 = arith.constant dense<0.000000e+00> : vector<128x256xf32>
    %118 = tpu.matmul %114, %117, %cst_53 {dimension_numbers = #tpu.dot_dimension_numbers<[1], [0], [0], [1], [0, 0, 1, 1], [], []>} : vector<128x16xf32>, vector<16x256xf32>, vector<128x256xf32> -> vector<128x256xf32>
    %c0_54 = arith.constant 0 : index
    %c0_55 = arith.constant 0 : index
    %119 = vector.load %arg1[%c0_54, %c0_55] : memref<256x256xf32, #tpu.memory_space<vmem>>, vector<128x256xf32>
    %120 = arith.mulf %119, %116 : vector<128x256xf32>
    %121 = arith.mulf %120, %118 : vector<128x256xf32>
    %c0_56 = arith.constant 0 : index
    %c0_57 = arith.constant 0 : index
    %122 = vector.load %arg10[%c0_56, %c0_57] : memref<256x256xf32, #tpu.memory_space<vmem>>, vector<128x256xf32>
    tpu.vector_store %arg10[%c0_56, %c0_57], %121 {strides = array<i32>} : memref<256x256xf32, #tpu.memory_space<vmem>>, vector<128x256xf32>,
    %123 = vector.extract_strided_slice %2 {offsets = [128, 0], sizes = [128, 45], strides = [1, 1]} : vector<256x45xf32> to vector<128x45xf32>
    %c0_58 = arith.constant 0 : index
    %c0_59 = arith.constant 0 : index
    %124 = vector.load %arg5[%c0_58, %c0_59] : memref<128x128xf32, #tpu.memory_space<vmem>>, vector<128x128xf32>
    %cst_60 = arith.constant dense<0.000000e+00> : vector<128x45xf32>
    %125 = tpu.matmul %124, %123, %cst_60 {dimension_numbers = #tpu.dot_dimension_numbers<[1], [0], [0], [1], [0, 0, 1, 1], [], []>} : vector<128x128xf32>, vector<128x45xf32>, vector<128x45xf32> -> vector<128x45xf32>
    %126 = vector.extract_strided_slice %125 {offsets = [0, 44], sizes = [128, 1], strides = [1, 1]} : vector<128x45xf32> to vector<128x1xf32>
    %127 = arith.negf %126 : vector<128x1xf32>
    %128 = math.exp %127 : vector<128x1xf32>
    %cst_61 = arith.constant 1.000000e+00 : f32
    %129 = vector.broadcast %cst_61 : f32 to vector<128x1xf32>
    %130 = arith.addf %129, %128 : vector<128x1xf32>
    %131 = arith.divf %129, %130 : vector<128x1xf32>
    %132 = arith.mulf %5, %131 : vector<128x1xf32>
    %133 = arith.addf %132, %7 : vector<128x1xf32>
    %c0_62 = arith.constant 0 : index
    %c0_63 = arith.constant 0 : index
    %c0_64 = arith.constant 0 : index
    %134 = vector.load %arg6[%c0_62, %c0_63, %c0_64] : memref<7x128x128xf32, #tpu.memory_space<vmem>>, vector<1x128x128xf32>
    %135 = vector.shape_cast %134 : vector<1x128x128xf32> to vector<128x128xf32>
    %136 = vector.extract_strided_slice %123 {offsets = [0, 0], sizes = [128, 38], strides = [1, 1]} : vector<128x45xf32> to vector<128x38xf32>
    %cst_65 = arith.constant dense<0.000000e+00> : vector<128x38xf32>
    %137 = tpu.matmul %135, %136, %cst_65 {dimension_numbers = #tpu.dot_dimension_numbers<[1], [0], [0], [1], [0, 0, 1, 1], [], []>} : vector<128x128xf32>, vector<128x38xf32>, vector<128x38xf32> -> vector<128x38xf32>
    %c1_66 = arith.constant 1 : index
    %c0_67 = arith.constant 0 : index
    %c0_68 = arith.constant 0 : index
    %138 = vector.load %arg6[%c1_66, %c0_67, %c0_68] : memref<7x128x128xf32, #tpu.memory_space<vmem>>, vector<1x128x128xf32>
    %139 = vector.shape_cast %138 : vector<1x128x128xf32> to vector<128x128xf32>
    %140 = vector.extract_strided_slice %123 {offsets = [0, 1], sizes = [128, 38], strides = [1, 1]} : vector<128x45xf32> to vector<128x38xf32>
    %cst_69 = arith.constant dense<0.000000e+00> : vector<128x38xf32>
    %141 = tpu.matmul %139, %140, %cst_69 {dimension_numbers = #tpu.dot_dimension_numbers<[1], [0], [0], [1], [0, 0, 1, 1], [], []>} : vector<128x128xf32>, vector<128x38xf32>, vector<128x38xf32> -> vector<128x38xf32>
    %142 = arith.addf %137, %141 : vector<128x38xf32>
    %c2_70 = arith.constant 2 : index
    %c0_71 = arith.constant 0 : index
    %c0_72 = arith.constant 0 : index
    %143 = vector.load %arg6[%c2_70, %c0_71, %c0_72] : memref<7x128x128xf32, #tpu.memory_space<vmem>>, vector<1x128x128xf32>
    %144 = vector.shape_cast %143 : vector<1x128x128xf32> to vector<128x128xf32>
    %145 = vector.extract_strided_slice %123 {offsets = [0, 2], sizes = [128, 38], strides = [1, 1]} : vector<128x45xf32> to vector<128x38xf32>
    %cst_73 = arith.constant dense<0.000000e+00> : vector<128x38xf32>
    %146 = tpu.matmul %144, %145, %cst_73 {dimension_numbers = #tpu.dot_dimension_numbers<[1], [0], [0], [1], [0, 0, 1, 1], [], []>} : vector<128x128xf32>, vector<128x38xf32>, vector<128x38xf32> -> vector<128x38xf32>
    %147 = arith.addf %142, %146 : vector<128x38xf32>
    %c3_74 = arith.constant 3 : index
    %c0_75 = arith.constant 0 : index
    %c0_76 = arith.constant 0 : index
    %148 = vector.load %arg6[%c3_74, %c0_75, %c0_76] : memref<7x128x128xf32, #tpu.memory_space<vmem>>, vector<1x128x128xf32>
    %149 = vector.shape_cast %148 : vector<1x128x128xf32> to vector<128x128xf32>
    %150 = vector.extract_strided_slice %123 {offsets = [0, 3], sizes = [128, 38], strides = [1, 1]} : vector<128x45xf32> to vector<128x38xf32>
    %cst_77 = arith.constant dense<0.000000e+00> : vector<128x38xf32>
    %151 = tpu.matmul %149, %150, %cst_77 {dimension_numbers = #tpu.dot_dimension_numbers<[1], [0], [0], [1], [0, 0, 1, 1], [], []>} : vector<128x128xf32>, vector<128x38xf32>, vector<128x38xf32> -> vector<128x38xf32>
    %152 = arith.addf %147, %151 : vector<128x38xf32>
    %c4_78 = arith.constant 4 : index
    %c0_79 = arith.constant 0 : index
    %c0_80 = arith.constant 0 : index
    %153 = vector.load %arg6[%c4_78, %c0_79, %c0_80] : memref<7x128x128xf32, #tpu.memory_space<vmem>>, vector<1x128x128xf32>
    %154 = vector.shape_cast %153 : vector<1x128x128xf32> to vector<128x128xf32>
    %155 = vector.extract_strided_slice %123 {offsets = [0, 4], sizes = [128, 38], strides = [1, 1]} : vector<128x45xf32> to vector<128x38xf32>
    %cst_81 = arith.constant dense<0.000000e+00> : vector<128x38xf32>
    %156 = tpu.matmul %154, %155, %cst_81 {dimension_numbers = #tpu.dot_dimension_numbers<[1], [0], [0], [1], [0, 0, 1, 1], [], []>} : vector<128x128xf32>, vector<128x38xf32>, vector<128x38xf32> -> vector<128x38xf32>
    %157 = arith.addf %152, %156 : vector<128x38xf32>
    %c5_82 = arith.constant 5 : index
    %c0_83 = arith.constant 0 : index
    %c0_84 = arith.constant 0 : index
    %158 = vector.load %arg6[%c5_82, %c0_83, %c0_84] : memref<7x128x128xf32, #tpu.memory_space<vmem>>, vector<1x128x128xf32>
    %159 = vector.shape_cast %158 : vector<1x128x128xf32> to vector<128x128xf32>
    %160 = vector.extract_strided_slice %123 {offsets = [0, 5], sizes = [128, 38], strides = [1, 1]} : vector<128x45xf32> to vector<128x38xf32>
    %cst_85 = arith.constant dense<0.000000e+00> : vector<128x38xf32>
    %161 = tpu.matmul %159, %160, %cst_85 {dimension_numbers = #tpu.dot_dimension_numbers<[1], [0], [0], [1], [0, 0, 1, 1], [], []>} : vector<128x128xf32>, vector<128x38xf32>, vector<128x38xf32> -> vector<128x38xf32>
    %162 = arith.addf %157, %161 : vector<128x38xf32>
    %c6_86 = arith.constant 6 : index
    %c0_87 = arith.constant 0 : index
    %c0_88 = arith.constant 0 : index
    %163 = vector.load %arg6[%c6_86, %c0_87, %c0_88] : memref<7x128x128xf32, #tpu.memory_space<vmem>>, vector<1x128x128xf32>
    %164 = vector.shape_cast %163 : vector<1x128x128xf32> to vector<128x128xf32>
    %165 = vector.extract_strided_slice %123 {offsets = [0, 6], sizes = [128, 38], strides = [1, 1]} : vector<128x45xf32> to vector<128x38xf32>
    %cst_89 = arith.constant dense<0.000000e+00> : vector<128x38xf32>
    %166 = tpu.matmul %164, %165, %cst_89 {dimension_numbers = #tpu.dot_dimension_numbers<[1], [0], [0], [1], [0, 0, 1, 1], [], []>} : vector<128x128xf32>, vector<128x38xf32>, vector<128x38xf32> -> vector<128x38xf32>
    %167 = arith.addf %162, %166 : vector<128x38xf32>
    %168 = vector.extract_strided_slice %167 {offsets = [0, 0], sizes = [128, 16], strides = [1, 1]} : vector<128x38xf32> to vector<128x16xf32>
    %cst_90 = arith.constant dense<0.000000e+00> : vector<128xf32>
    %169 = vector.multi_reduction <add>, %168, %cst_90 [1] : vector<128x16xf32> to vector<128xf32>
    %170 = vector.shape_cast %169 : vector<128xf32> to vector<128x1xf32>
    %cst_91 = arith.constant 6.250000e-02 : f32
    %171 = vector.broadcast %cst_91 : f32 to vector<128x1xf32>
    %172 = arith.mulf %170, %171 : vector<128x1xf32>
    %173 = vector.broadcast %172 : vector<128x1xf32> to vector<128x16xf32>
    %174 = arith.subf %168, %173 : vector<128x16xf32>
    %175 = arith.mulf %174, %174 : vector<128x16xf32>
    %cst_92 = arith.constant dense<0.000000e+00> : vector<128xf32>
    %176 = vector.multi_reduction <add>, %175, %cst_92 [1] : vector<128x16xf32> to vector<128xf32>
    %177 = vector.shape_cast %176 : vector<128xf32> to vector<128x1xf32>
    %cst_93 = arith.constant 6.250000e-02 : f32
    %178 = vector.broadcast %cst_93 : f32 to vector<128x1xf32>
    %179 = arith.mulf %177, %178 : vector<128x1xf32>
    %cst_94 = arith.constant 9.99999974E-6 : f32
    %180 = vector.broadcast %cst_94 : f32 to vector<128x1xf32>
    %181 = arith.addf %179, %180 : vector<128x1xf32>
    %182 = math.rsqrt %181 : vector<128x1xf32>
    %183 = vector.broadcast %182 : vector<128x1xf32> to vector<128x16xf32>
    %184 = arith.mulf %174, %183 : vector<128x16xf32>
    %185 = vector.broadcast %3 : vector<128x1xf32> to vector<128x16xf32>
    %186 = arith.mulf %184, %185 : vector<128x16xf32>
    %187 = vector.broadcast %4 : vector<128x1xf32> to vector<128x16xf32>
    %188 = arith.addf %186, %187 : vector<128x16xf32>
    %189 = arith.negf %188 : vector<128x16xf32>
    %190 = math.exp %189 : vector<128x16xf32>
    %cst_95 = arith.constant 1.000000e+00 : f32
    %191 = vector.broadcast %cst_95 : f32 to vector<128x16xf32>
    %192 = arith.addf %191, %190 : vector<128x16xf32>
    %193 = arith.divf %191, %192 : vector<128x16xf32>
    %194 = vector.broadcast %7 : vector<128x1xf32> to vector<128x16xf32>
    %195 = arith.mulf %194, %193 : vector<128x16xf32>
    %196 = vector.broadcast %5 : vector<128x1xf32> to vector<128x16xf32>
    %197 = arith.addf %196, %195 : vector<128x16xf32>
    %198 = vector.broadcast %133 : vector<128x1xf32> to vector<128x16xf32>
    %199 = arith.mulf %197, %198 : vector<128x16xf32>
    %200 = vector.extract_strided_slice %167 {offsets = [0, 22], sizes = [128, 16], strides = [1, 1]} : vector<128x38xf32> to vector<128x16xf32>
    %cst_96 = arith.constant dense<0.000000e+00> : vector<128xf32>
    %201 = vector.multi_reduction <add>, %200, %cst_96 [1] : vector<128x16xf32> to vector<128xf32>
    %202 = vector.shape_cast %201 : vector<128xf32> to vector<128x1xf32>
    %cst_97 = arith.constant 6.250000e-02 : f32
    %203 = vector.broadcast %cst_97 : f32 to vector<128x1xf32>
    %204 = arith.mulf %202, %203 : vector<128x1xf32>
    %205 = vector.broadcast %204 : vector<128x1xf32> to vector<128x16xf32>
    %206 = arith.subf %200, %205 : vector<128x16xf32>
    %207 = arith.mulf %206, %206 : vector<128x16xf32>
    %cst_98 = arith.constant dense<0.000000e+00> : vector<128xf32>
    %208 = vector.multi_reduction <add>, %207, %cst_98 [1] : vector<128x16xf32> to vector<128xf32>
    %209 = vector.shape_cast %208 : vector<128xf32> to vector<128x1xf32>
    %cst_99 = arith.constant 6.250000e-02 : f32
    %210 = vector.broadcast %cst_99 : f32 to vector<128x1xf32>
    %211 = arith.mulf %209, %210 : vector<128x1xf32>
    %cst_100 = arith.constant 9.99999974E-6 : f32
    %212 = vector.broadcast %cst_100 : f32 to vector<128x1xf32>
    %213 = arith.addf %211, %212 : vector<128x1xf32>
    %214 = math.rsqrt %213 : vector<128x1xf32>
    %215 = vector.broadcast %214 : vector<128x1xf32> to vector<128x16xf32>
    %216 = arith.mulf %206, %215 : vector<128x16xf32>
    %217 = vector.broadcast %3 : vector<128x1xf32> to vector<128x16xf32>
    %218 = arith.mulf %216, %217 : vector<128x16xf32>
    %219 = vector.broadcast %4 : vector<128x1xf32> to vector<128x16xf32>
    %220 = arith.addf %218, %219 : vector<128x16xf32>
    %221 = arith.negf %220 : vector<128x16xf32>
    %222 = math.exp %221 : vector<128x16xf32>
    %cst_101 = arith.constant 1.000000e+00 : f32
    %223 = vector.broadcast %cst_101 : f32 to vector<128x16xf32>
    %224 = arith.addf %223, %222 : vector<128x16xf32>
    %225 = arith.divf %223, %224 : vector<128x16xf32>
    %226 = vector.broadcast %7 : vector<128x1xf32> to vector<128x16xf32>
    %227 = arith.mulf %226, %225 : vector<128x16xf32>
    %228 = vector.broadcast %5 : vector<128x1xf32> to vector<128x16xf32>
    %229 = arith.addf %228, %227 : vector<128x16xf32>
    %c0_102 = arith.constant 0 : index
    %c0_103 = arith.constant 0 : index
    %230 = vector.load %arg3[%c0_102, %c0_103] : memref<16x256xf32, #tpu.memory_space<vmem>>, vector<16x256xf32>
    %cst_104 = arith.constant dense<0.000000e+00> : vector<128x256xf32>
    %231 = tpu.matmul %199, %230, %cst_104 {dimension_numbers = #tpu.dot_dimension_numbers<[1], [0], [0], [1], [0, 0, 1, 1], [], []>} : vector<128x16xf32>, vector<16x256xf32>, vector<128x256xf32> -> vector<128x256xf32>
    %c0_105 = arith.constant 0 : index
    %c0_106 = arith.constant 0 : index
    %232 = vector.load %arg4[%c0_105, %c0_106] : memref<16x256xf32, #tpu.memory_space<vmem>>, vector<16x256xf32>
    %cst_107 = arith.constant dense<0.000000e+00> : vector<128x256xf32>
    %233 = tpu.matmul %229, %232, %cst_107 {dimension_numbers = #tpu.dot_dimension_numbers<[1], [0], [0], [1], [0, 0, 1, 1], [], []>} : vector<128x16xf32>, vector<16x256xf32>, vector<128x256xf32> -> vector<128x256xf32>
    %c128 = arith.constant 128 : index
    %c0_108 = arith.constant 0 : index
    %234 = vector.load %arg1[%c128, %c0_108] : memref<256x256xf32, #tpu.memory_space<vmem>>, vector<128x256xf32>
    %235 = arith.mulf %234, %231 : vector<128x256xf32>
    %236 = arith.mulf %235, %233 : vector<128x256xf32>
    %c128_109 = arith.constant 128 : index
    %c0_110 = arith.constant 0 : index
    %237 = vector.load %arg10[%c128_109, %c0_110] : memref<256x256xf32, #tpu.memory_space<vmem>>, vector<128x256xf32>
    tpu.vector_store %arg10[%c128_109, %c0_110], %236 {strides = array<i32>} : memref<256x256xf32, #tpu.memory_space<vmem>>, vector<128x256xf32>,
    return
  }
  func.func @transform_0(%arg0: i32) -> (i32, i32) {
    %c0_i32 = arith.constant 0 : i32
    %c0_i32_0 = arith.constant 0 : i32
    return %arg0, %c0_i32 : i32, i32
  }
  func.func @transform_1(%arg0: i32) -> (i32, i32) {
    %c0_i32 = arith.constant 0 : i32
    %c0_i32_0 = arith.constant 0 : i32
    %c0_i32_1 = arith.constant 0 : i32
    return %c0_i32, %c0_i32_0 : i32, i32
  }
  func.func @transform_2(%arg0: i32) -> (i32, i32) {
    %c0_i32 = arith.constant 0 : i32
    %c0_i32_0 = arith.constant 0 : i32
    %c0_i32_1 = arith.constant 0 : i32
    return %c0_i32, %c0_i32_0 : i32, i32
  }
  func.func @transform_3(%arg0: i32) -> (i32, i32) {
    %c0_i32 = arith.constant 0 : i32
    %c0_i32_0 = arith.constant 0 : i32
    %c0_i32_1 = arith.constant 0 : i32
    return %c0_i32, %c0_i32_0 : i32, i32
  }
  func.func @transform_4(%arg0: i32) -> (i32, i32) {
    %c0_i32 = arith.constant 0 : i32
    %c0_i32_0 = arith.constant 0 : i32
    %c0_i32_1 = arith.constant 0 : i32
    return %c0_i32, %c0_i32_0 : i32, i32
  }
  func.func @transform_5(%arg0: i32) -> (i32, i32, i32) {
    %c0_i32 = arith.constant 0 : i32
    %c0_i32_0 = arith.constant 0 : i32
    %c0_i32_1 = arith.constant 0 : i32
    %c0_i32_2 = arith.constant 0 : i32
    return %c0_i32, %c0_i32_0, %c0_i32_1 : i32, i32, i32
  }
  func.func @transform_6(%arg0: i32) -> (i32, i32) {
    %c0_i32 = arith.constant 0 : i32
    %c0_i32_0 = arith.constant 0 : i32
    %c0_i32_1 = arith.constant 0 : i32
    return %c0_i32, %c0_i32_0 : i32, i32
  }
  func.func @transform_7(%arg0: i32) -> (i32, i32) {
    %c0_i32 = arith.constant 0 : i32
    %c0_i32_0 = arith.constant 0 : i32
    %c0_i32_1 = arith.constant 0 : i32
    return %c0_i32, %c0_i32_0 : i32, i32
  }
  func.func @transform_8(%arg0: i32) -> (i32, i32) {
    %c0_i32 = arith.constant 0 : i32
    %c0_i32_0 = arith.constant 0 : i32
    %c0_i32_1 = arith.constant 0 : i32
    return %c0_i32, %c0_i32_0 : i32, i32
  }
  func.func @transform_9(%arg0: i32) -> (i32, i32) {
    %c0_i32 = arith.constant 0 : i32
    %c0_i32_0 = arith.constant 0 : i32
    return %arg0, %c0_i32 : i32, i32
  }
}

</mosaic_0001>

<llo_original>
// kernel: tpu_custom_call.1
$region0: #{tpu_custom_call.1}
  #allocation0 [shape = 'u32[]', space=smem, size = 0x4, offset = 0x4, fixed_abs, tag = 'smem constant byte address 0x4 - core index']
  #allocation1 [shape = 'u32[72,128]{1,0:T(1,128)}', space=vmem, size = 0x9000, scoped, tag = 'internal scratch']
  %s0 = inlined_call_operand.hbm [shape: f32[512,256], index: 0, kind: input, shape index: {}]
  %s1 = inlined_call_operand.vmem [shape: f32[256,45], index: 1, kind: input, shape index: {}]
  %s2 = inlined_call_operand.vmem [shape: f32[16,256], index: 2, kind: input, shape index: {}]
  %s3 = inlined_call_operand.vmem [shape: f32[16,256], index: 3, kind: input, shape index: {}]
  %s4 = inlined_call_operand.vmem [shape: f32[128,128], index: 4, kind: input, shape index: {}]
  %s5 = inlined_call_operand.hbm [shape: f32[7,128,128], index: 5, kind: input, shape index: {}]
  %s6 = inlined_call_operand.vmem [shape: f32[128,1], index: 6, kind: input, shape index: {}]
  %s7 = inlined_call_operand.vmem [shape: f32[128,1], index: 7, kind: input, shape index: {}]
  %s8 = inlined_call_operand.vmem [shape: f32[128,1], index: 8, kind: input, shape index: {}]
  %s9 = inlined_call_operand.hbm [shape: f32[512,256], index: 9, kind: output, shape index: {}]
  %s10 = sld [smem:[#allocation0]]
  $region77: #{tpu_custom_call.1} parent=0
    _
  %s12 = ssub.s32 1, %s10
  %s13 = scalar_select 0, %s12, %s10
  $region1: #{tpu_custom_call.1} parent=0
    #allocation2 [shape = 'u8[524288]{0}', space=vmem, size = 0x80000, scoped, tag = 'input window, operand 0']
    #allocation3 [shape = 's32[2]{0}', space=sflag, size = 0x8, scoped, tag = 'scoped memory for tpu_custom_call.1']
    #allocation4 [shape = 's32[2]{0}', space=sflag, size = 0x8, scoped, tag = 'scoped memory for tpu_custom_call.1']
    #allocation5 [shape = 'u8[458752]{0}', space=vmem, size = 0x70000, scoped, tag = 'input window, operand 5, single buffered']
    #allocation6 [shape = 's32[1]{0}', space=sflag, size = 0x4, scoped, tag = 'scoped memory for tpu_custom_call.1']
    #allocation7 [shape = 'u8[524288]{0}', space=vmem, size = 0x80000, scoped, tag = 'output window, operand 0']
    %14 = vsyncpa [#allocation3], 0
    %s15 = scalar_lea.sflag [#allocation3], 1
    %16 = vsyncpa %s15, 0
    %17 = vsyncpa [#allocation6], 0
    %18 = vsyncpa [#allocation4], 0
    %s19 = scalar_lea.sflag [#allocation4], 1
    %20 = vsyncpa %s19, 0
    loop: start=0, step=1, limit=4
    $region2: #{tpu_custom_call.1} parent=1 // loop_pre_header
      _
    $region3: #{tpu_custom_call.1} parent=1 // loop_header
      %s22 = sphi 0, %s26
      %p23 = scmp.ge.s32.totalorder %s22, 4
      %s32 = sphi 0, %s34
      %s35 = sphi 0, %s32
      %s36 = sphi 0, %s35
      %s52 = sphi 0, %s36
      %s56 = sphi 0, %s56
      %s58 = sphi 0, %s56
      %s59 = sphi 0, %s58
      %s73 = sphi 0, %s59
      %s77 = sphi 0, %s77
      %s79 = sphi 0, %s77
      %s80 = sphi 0, %s79
      %s94 = sphi 0, %s80
      %s98 = sphi 0, %s98
      %s100 = sphi 0, %s98
      %s101 = sphi 0, %s100
      %s115 = sphi 0, %s101
      %s119 = sphi 0, %s119
      %s121 = sphi 0, %s119
      %s122 = sphi 0, %s121
      %s136 = sphi 0, %s122
      %s140 = sphi 0, %s140
      %s142 = sphi 0, %s140
      %s143 = sphi 0, %s142
      %s157 = sphi 0, %s143
      %s161 = sphi 0, %s161
      %s163 = sphi 0, %s161
      %s164 = sphi 0, %s163
      %s178 = sphi 0, %s164
      %s182 = sphi 0, %s182
      %s184 = sphi 0, %s182
      %s185 = sphi 0, %s184
      %s199 = sphi 0, %s185
      %s203 = sphi 0, %s203
      %s205 = sphi 0, %s203
      %s206 = sphi 0, %s205
      %s220 = sphi 0, %s206
      %s226 = sphi 0, %s228
      %s229 = sphi 0, %s226
      %s230 = sphi 0, %s229
      %s246 = sphi 0, %s230
    $region4: #{tpu_custom_call.1} parent=1 // loop_header_branch
      %25 = sbr.rel (%p23) target = $region8
    $region5: #{tpu_custom_call.1} parent=1 // loop_body
      %s27 = ssub.s32 %s22, 1
      %s28 = ssub.s32 %s22, 2
      %s29 = sadd.s32 %s22, 1
      %s30 = ssub.s32 %s22, %s29
      %p31 = scmp.eq.s32.totalorder %s30, 0
      %s33 = sadd.s32 %s32, 1
      %s34 = scalar_select %p31, %s32, %s33
      %p37 = pneg %p31
      %p38 = scmp.eq.s32.totalorder %s22, 1
      %p39 = por %p37, %p38
      %p40 = scmp.ne.s32.totalorder %s32, %s35
      %p41 = scmp.eq.s32.totalorder %s22, 0
      %p42 = por %p40, %p41
      %p43 = scmp.ne.s32.totalorder %s32, %s35
      %p44 = scmp.eq.s32.totalorder %s27, 1
      %p45 = por %p43, %p44
      %p46 = scmp.ne.s32.totalorder %s35, %s36
      %p47 = scmp.eq.s32.totalorder %s27, 0
      %p48 = por %p46, %p47
      %p49 = scmp.ne.s32.totalorder %s35, %s36
      %p50 = scmp.eq.s32.totalorder %s28, 1
      %p51 = por %p49, %p50
      %p53 = scmp.ne.s32.totalorder %s36, %s52
      %p54 = scmp.eq.s32.totalorder %s28, 0
      %p55 = por %p53, %p54
      %s57 = sadd.s32 %s56, 1
      %p60 = scmp.eq.s32.totalorder %s22, 1
      %p61 = scmp.ne.s32.totalorder %s56, %s58
      %p62 = scmp.eq.s32.totalorder %s22, 0
      %p63 = por %p61, %p62
      %p64 = scmp.ne.s32.totalorder %s56, %s58
      %p65 = scmp.eq.s32.totalorder %s27, 1
      %p66 = por %p64, %p65
      %p67 = scmp.ne.s32.totalorder %s58, %s59
      %p68 = scmp.eq.s32.totalorder %s27, 0
      %p69 = por %p67, %p68
      %p70 = scmp.ne.s32.totalorder %s58, %s59
      %p71 = scmp.eq.s32.totalorder %s28, 1
      %p72 = por %p70, %p71
      %p74 = scmp.ne.s32.totalorder %s59, %s73
      %p75 = scmp.eq.s32.totalorder %s28, 0
      %p76 = por %p74, %p75
      %s78 = sadd.s32 %s77, 1
      %p81 = scmp.eq.s32.totalorder %s22, 1
      %p82 = scmp.ne.s32.totalorder %s77, %s79
      %p83 = scmp.eq.s32.totalorder %s22, 0
      %p84 = por %p82, %p83
      %p85 = scmp.ne.s32.totalorder %s77, %s79
      %p86 = scmp.eq.s32.totalorder %s27, 1
      %p87 = por %p85, %p86
      %p88 = scmp.ne.s32.totalorder %s79, %s80
      %p89 = scmp.eq.s32.totalorder %s27, 0
      %p90 = por %p88, %p89
      %p91 = scmp.ne.s32.totalorder %s79, %s80
      %p92 = scmp.eq.s32.totalorder %s28, 1
      %p93 = por %p91, %p92
      %p95 = scmp.ne.s32.totalorder %s80, %s94
      %p96 = scmp.eq.s32.totalorder %s28, 0
      %p97 = por %p95, %p96
      %s99 = sadd.s32 %s98, 1
      %p102 = scmp.eq.s32.totalorder %s22, 1
      %p103 = scmp.ne.s32.totalorder %s98, %s100
      %p104 = scmp.eq.s32.totalorder %s22, 0
      %p105 = por %p103, %p104
      %p106 = scmp.ne.s32.totalorder %s98, %s100
      %p107 = scmp.eq.s32.totalorder %s27, 1
      %p108 = por %p106, %p107
      %p109 = scmp.ne.s32.totalorder %s100, %s101
      %p110 = scmp.eq.s32.totalorder %s27, 0
      %p111 = por %p109, %p110
      %p112 = scmp.ne.s32.totalorder %s100, %s101
      %p113 = scmp.eq.s32.totalorder %s28, 1
      %p114 = por %p112, %p113
      %p116 = scmp.ne.s32.totalorder %s101, %s115
      %p117 = scmp.eq.s32.totalorder %s28, 0
      %p118 = por %p116, %p117
      %s120 = sadd.s32 %s119, 1
      %p123 = scmp.eq.s32.totalorder %s22, 1
      %p124 = scmp.ne.s32.totalorder %s119, %s121
      %p125 = scmp.eq.s32.totalorder %s22, 0
      %p126 = por %p124, %p125
      %p127 = scmp.ne.s32.totalorder %s119, %s121
      %p128 = scmp.eq.s32.totalorder %s27, 1
      %p129 = por %p127, %p128
      %p130 = scmp.ne.s32.totalorder %s121, %s122
      %p131 = scmp.eq.s32.totalorder %s27, 0
      %p132 = por %p130, %p131
      %p133 = scmp.ne.s32.totalorder %s121, %s122
      %p134 = scmp.eq.s32.totalorder %s28, 1
      %p135 = por %p133, %p134
      %p137 = scmp.ne.s32.totalorder %s122, %s136
      %p138 = scmp.eq.s32.totalorder %s28, 0
      %p139 = por %p137, %p138
      %s141 = sadd.s32 %s140, 1
      %p144 = scmp.eq.s32.totalorder %s22, 1
      %p145 = scmp.ne.s32.totalorder %s140, %s142
      %p146 = scmp.eq.s32.totalorder %s22, 0
      %p147 = por %p145, %p146
      %p148 = scmp.ne.s32.totalorder %s140, %s142
      %p149 = scmp.eq.s32.totalorder %s27, 1
      %p150 = por %p148, %p149
      %p151 = scmp.ne.s32.totalorder %s142, %s143
      %p152 = scmp.eq.s32.totalorder %s27, 0
      %p153 = por %p151, %p152
      %p154 = scmp.ne.s32.totalorder %s142, %s143
      %p155 = scmp.eq.s32.totalorder %s28, 1
      %p156 = por %p154, %p155
      %p158 = scmp.ne.s32.totalorder %s143, %s157
      %p159 = scmp.eq.s32.totalorder %s28, 0
      %p160 = por %p158, %p159
      %s162 = sadd.s32 %s161, 1
      %p165 = scmp.eq.s32.totalorder %s22, 1
      %p166 = scmp.ne.s32.totalorder %s161, %s163
      %p167 = scmp.eq.s32.totalorder %s22, 0
      %p168 = por %p166, %p167
      %p169 = scmp.ne.s32.totalorder %s161, %s163
      %p170 = scmp.eq.s32.totalorder %s27, 1
      %p171 = por %p169, %p170
      %p172 = scmp.ne.s32.totalorder %s163, %s164
      %p173 = scmp.eq.s32.totalorder %s27, 0
      %p174 = por %p172, %p173
      %p175 = scmp.ne.s32.totalorder %s163, %s164
      %p176 = scmp.eq.s32.totalorder %s28, 1
      %p177 = por %p175, %p176
      %p179 = scmp.ne.s32.totalorder %s164, %s178
      %p180 = scmp.eq.s32.totalorder %s28, 0
      %p181 = por %p179, %p180
      %s183 = sadd.s32 %s182, 1
      %p186 = scmp.eq.s32.totalorder %s22, 1
      %p187 = scmp.ne.s32.totalorder %s182, %s184
      %p188 = scmp.eq.s32.totalorder %s22, 0
      %p189 = por %p187, %p188
      %p190 = scmp.ne.s32.totalorder %s182, %s184
      %p191 = scmp.eq.s32.totalorder %s27, 1
      %p192 = por %p190, %p191
      %p193 = scmp.ne.s32.totalorder %s184, %s185
      %p194 = scmp.eq.s32.totalorder %s27, 0
      %p195 = por %p193, %p194
      %p196 = scmp.ne.s32.totalorder %s184, %s185
      %p197 = scmp.eq.s32.totalorder %s28, 1
      %p198 = por %p196, %p197
      %p200 = scmp.ne.s32.totalorder %s185, %s199
      %p201 = scmp.eq.s32.totalorder %s28, 0
      %p202 = por %p200, %p201
      %s204 = sadd.s32 %s203, 1
      %p207 = scmp.eq.s32.totalorder %s22, 1
      %p208 = scmp.ne.s32.totalorder %s203, %s205
      %p209 = scmp.eq.s32.totalorder %s22, 0
      %p210 = por %p208, %p209
      %p211 = scmp.ne.s32.totalorder %s203, %s205
      %p212 = scmp.eq.s32.totalorder %s27, 1
      %p213 = por %p211, %p212
      %p214 = scmp.ne.s32.totalorder %s205, %s206
      %p215 = scmp.eq.s32.totalorder %s27, 0
      %p216 = por %p214, %p215
      %p217 = scmp.ne.s32.totalorder %s205, %s206
      %p218 = scmp.eq.s32.totalorder %s28, 1
      %p219 = por %p217, %p218
      %p221 = scmp.ne.s32.totalorder %s206, %s220
      %p222 = scmp.eq.s32.totalorder %s28, 0
      %p223 = por %p221, %p222
      %s224 = ssub.s32 %s22, %s29
      %p225 = scmp.eq.s32.totalorder %s224, 0
      %s227 = sadd.s32 %s226, 1
      %s228 = scalar_select %p225, %s226, %s227
      %p231 = pneg %p225
      %p232 = scmp.eq.s32.totalorder %s22, 1
      %p233 = por %p231, %p232
      %p234 = scmp.ne.s32.totalorder %s226, %s229
      %p235 = scmp.eq.s32.totalorder %s22, 0
      %p236 = por %p234, %p235
      %p237 = scmp.ne.s32.totalorder %s226, %s229
      %p238 = scmp.eq.s32.totalorder %s27, 1
      %p239 = por %p237, %p238
      %p240 = scmp.ne.s32.totalorder %s229, %s230
      %p241 = scmp.eq.s32.totalorder %s27, 0
      %p242 = por %p240, %p241
      %p243 = scmp.ne.s32.totalorder %s229, %s230
      %p244 = scmp.eq.s32.totalorder %s28, 1
      %p245 = por %p243, %p244
      %p247 = scmp.ne.s32.totalorder %s230, %s246
      %p248 = scmp.eq.s32.totalorder %s28, 0
      %p249 = por %p247, %p248
      %p250 = scmp.le.s32.totalorder 1, %s22
      %p251 = scmp.lt.s32.totalorder %s22, 3
      %p252 = pnand %p250, %p251
      %p253 = pneg %p252
      // Predicated region
      $region9: #{tpu_custom_call.1} parent=5 // pred_check
        _
      $region10: #{tpu_custom_call.1} parent=5 // pred_check_branch
        %255 = sbr.rel (%p252) target = $region12
      $region11: #{tpu_custom_call.1} parent=5 // pred_region
        %s256 = ssub.s32 %s22, 1
        // Predicated region
        $region13: #{tpu_custom_call.1} parent=11 // pred_check
          %p257 = pneg %p69
        $region14: #{tpu_custom_call.1} parent=11 // pred_check_branch
          %259 = sbr.rel (%p257) target = $region16
        $region15: #{tpu_custom_call.1} parent=11 // pred_region
          _
        $region16: #{tpu_custom_call.1} parent=11 // pred_fallthru
          _
        // Predicated region
        $region17: #{tpu_custom_call.1} parent=11 // pred_check
          %p260 = pneg %p90
        $region18: #{tpu_custom_call.1} parent=11 // pred_check_branch
          %262 = sbr.rel (%p260) target = $region20
        $region19: #{tpu_custom_call.1} parent=11 // pred_region
          _
        $region20: #{tpu_custom_call.1} parent=11 // pred_fallthru
          _
        // Predicated region
        $region21: #{tpu_custom_call.1} parent=11 // pred_check
          %p263 = pneg %p111
        $region22: #{tpu_custom_call.1} parent=11 // pred_check_branch
          %265 = sbr.rel (%p263) target = $region24
        $region23: #{tpu_custom_call.1} parent=11 // pred_region
          _
        $region24: #{tpu_custom_call.1} parent=11 // pred_fallthru
          _
        // Predicated region
        $region25: #{tpu_custom_call.1} parent=11 // pred_check
          %p266 = pneg %p132
        $region26: #{tpu_custom_call.1} parent=11 // pred_check_branch
          %268 = sbr.rel (%p266) target = $region28
        $region27: #{tpu_custom_call.1} parent=11 // pred_region
          _
        $region28: #{tpu_custom_call.1} parent=11 // pred_fallthru
          _
        // Predicated region
        $region29: #{tpu_custom_call.1} parent=11 // pred_check
          %p269 = pneg %p153
        $region30: #{tpu_custom_call.1} parent=11 // pred_check_branch
          %271 = sbr.rel (%p269) target = $region32
        $region31: #{tpu_custom_call.1} parent=11 // pred_region
          %273 = vsyncadd [#allocation6], 0
          %s274 = sshll.u32 %s5, 4
          %s275 = int_to_ptr.hbm [resolvable:$true] %s274
          %s276 = sshll.u32 [#allocation5], 4
          %s277 = int_to_ptr.vmem [resolvable:$true] %s276
          %282 = dma.hbm_to_vmem [thread:$0]  %s275, 14336, %s277, [#allocation6], 128, 128, 8
        $region32: #{tpu_custom_call.1} parent=11 // pred_fallthru
          _
        // Predicated region
        $region33: #{tpu_custom_call.1} parent=11 // pred_check
          %p283 = pneg %p174
        $region34: #{tpu_custom_call.1} parent=11 // pred_check_branch
          %285 = sbr.rel (%p283) target = $region36
        $region35: #{tpu_custom_call.1} parent=11 // pred_region
          _
        $region36: #{tpu_custom_call.1} parent=11 // pred_fallthru
          _
        // Predicated region
        $region37: #{tpu_custom_call.1} parent=11 // pred_check
          %p286 = pneg %p195
        $region38: #{tpu_custom_call.1} parent=11 // pred_check_branch
          %288 = sbr.rel (%p286) target = $region40
        $region39: #{tpu_custom_call.1} parent=11 // pred_region
          _
        $region40: #{tpu_custom_call.1} parent=11 // pred_fallthru
          _
        // Predicated region
        $region41: #{tpu_custom_call.1} parent=11 // pred_check
          %p289 = pneg %p216
        $region42: #{tpu_custom_call.1} parent=11 // pred_check_branch
          %291 = sbr.rel (%p289) target = $region44
        $region43: #{tpu_custom_call.1} parent=11 // pred_region
          _
        $region44: #{tpu_custom_call.1} parent=11 // pred_fallthru
          _
      $region12: #{tpu_custom_call.1} parent=5 // pred_fallthru
        _
      %p292 = scmp.lt.s32.totalorder %s22, 2
      // Predicated region
      $region45: #{tpu_custom_call.1} parent=5 // pred_check
        %p293 = pneg %p292
      $region46: #{tpu_custom_call.1} parent=5 // pred_check_branch
        %295 = sbr.rel (%p293) target = $region48
      $region47: #{tpu_custom_call.1} parent=5 // pred_region
        // Predicated region
        $region49: #{tpu_custom_call.1} parent=47 // pred_check
          %p296 = pneg %p42
        $region50: #{tpu_custom_call.1} parent=47 // pred_check_branch
          %298 = sbr.rel (%p296) target = $region52
        $region51: #{tpu_custom_call.1} parent=47 // pred_region
          %s299 = sand.u32 %s32, 1
          %s300 = scalar_lea.sflag [#allocation3], %s299
          %s301 = sand.u32 %s32, 1
          %s302 = smul.addr %s301, 512
          %s303 = scalar_lea.vmem [#allocation2], %s302
          %s304 = smul.u32 32, %s22
          %306 = vsyncadd %s300, 0
          %s307 = smul.addr %s304, 2
          %s308 = smul.addr %s307, 8
          %s309 = scalar_lea.hbm %s0, %s308
          %s310 = sshll.u32 %s309, 4
          %s311 = int_to_ptr.hbm [resolvable:$true] %s310
          %s312 = sshll.u32 %s303, 4
          %s313 = int_to_ptr.vmem [resolvable:$true] %s312
          %318 = dma.hbm_to_vmem [thread:$0]  %s311, 8192, %s313, %s300, 256, 256, 16
        $region52: #{tpu_custom_call.1} parent=47 // pred_fallthru
          _
      $region48: #{tpu_custom_call.1} parent=5 // pred_fallthru
        _
      %p319 = scmp.le.s32.totalorder 1, %s22
      %p320 = scmp.lt.s32.totalorder %s22, 3
      %p321 = pnand %p319, %p320
      %p322 = pneg %p321
      // Predicated region
      $region53: #{tpu_custom_call.1} parent=5 // pred_check
        _
      $region54: #{tpu_custom_call.1} parent=5 // pred_check_branch
        %324 = sbr.rel (%p321) target = $region56
      $region55: #{tpu_custom_call.1} parent=5 // pred_region
        %s325 = ssub.s32 %s22, 1
        %s326 = sand.u32 %s35, 1
        %s327 = scalar_lea.sflag [#allocation3], %s326
        %s328 = sand.u32 %s35, 1
        %s329 = smul.addr %s328, 512
        %s330 = scalar_lea.vmem [#allocation2], %s329
        // Predicated region
        $region57: #{tpu_custom_call.1} parent=55 // pred_check
          %p331 = pneg %p48
        $region58: #{tpu_custom_call.1} parent=55 // pred_check_branch
          %333 = sbr.rel (%p331) target = $region60
        $region59: #{tpu_custom_call.1} parent=55 // pred_region
          %335 = dma.done %s327, 8192
        $region60: #{tpu_custom_call.1} parent=55 // pred_fallthru
          _
        // Predicated region
        $region61: #{tpu_custom_call.1} parent=55 // pred_check
          %p336 = pneg %p153
        $region62: #{tpu_custom_call.1} parent=55 // pred_check_branch
          %338 = sbr.rel (%p336) target = $region64
        $region63: #{tpu_custom_call.1} parent=55 // pred_region
          %340 = dma.done [#allocation6], 14336
        $region64: #{tpu_custom_call.1} parent=55 // pred_fallthru
          _
        %s341 = sand.u32 %s35, 1
        %s342 = scalar_lea.sflag [#allocation3], %s341
        %s343 = sand.u32 %s35, 1
        %s344 = smul.addr %s343, 512
        %s345 = scalar_lea.vmem [#allocation2], %s344
        %p346 = pneg %p48
        %p347 = pneg %p45
        %p348 = pneg %p69
        %p349 = pneg %p66
        %p350 = pneg %p90
        %p351 = pneg %p87
        %p352 = pneg %p111
        %p353 = pneg %p108
        %p354 = pneg %p132
        %p355 = pneg %p129
        %p356 = pneg %p153
        %p357 = pneg %p150
        %p358 = pneg %p174
        %p359 = pneg %p171
        %p360 = pneg %p195
        %p361 = pneg %p192
        %p362 = pneg %p216
        %p363 = pneg %p213
        %p364 = pneg %p242
        %p365 = pneg %p239
        %s366 = sand.u32 %s229, 1
        %s367 = scalar_lea.sflag [#allocation4], %s366
        %s368 = sand.u32 %s229, 1
        %s369 = smul.addr %s368, 512
        %s370 = scalar_lea.vmem [#allocation7], %s369
        %s371 = smul.u32 32, %s27
        %s372 = smul.u32 32, %s27
        %v373 = vld [vmem:[%s330] sm:$0xff]
        %v374 = vld [vmem:[%s330 + $0x8] sm:$0xff]
        %v375 = vld [vmem:[%s330 + $0x10] sm:$0xff]
        %v376 = vld [vmem:[%s330 + $0x18] sm:$0xff]
        %v377 = vld [vmem:[%s330 + $0x20] sm:$0xff]
        %v378 = vld [vmem:[%s330 + $0x28] sm:$0xff]
        %v379 = vld [vmem:[%s330 + $0x30] sm:$0xff]
        %v380 = vld [vmem:[%s330 + $0x38] sm:$0xff]
        %v381 = vld [vmem:[%s330 + $0x40] sm:$0xff]
        %v382 = vld [vmem:[%s330 + $0x48] sm:$0xff]
        %v383 = vld [vmem:[%s330 + $0x50] sm:$0xff]
        %v384 = vld [vmem:[%s330 + $0x58] sm:$0xff]
        %v385 = vld [vmem:[%s330 + $0x60] sm:$0xff]
        %v386 = vld [vmem:[%s330 + $0x68] sm:$0xff]
        %v387 = vld [vmem:[%s330 + $0x70] sm:$0xff]
        %v388 = vld [vmem:[%s330 + $0x78] sm:$0xff]
        %v389 = vld [vmem:[%s330 + $0x80] sm:$0xff]
        %v390 = vld [vmem:[%s330 + $0x88] sm:$0xff]
        %v391 = vld [vmem:[%s330 + $0x90] sm:$0xff]
        %v392 = vld [vmem:[%s330 + $0x98] sm:$0xff]
        %v393 = vld [vmem:[%s330 + $0xa0] sm:$0xff]
        %v394 = vld [vmem:[%s330 + $0xa8] sm:$0xff]
        %v395 = vld [vmem:[%s330 + $0xb0] sm:$0xff]
        %v396 = vld [vmem:[%s330 + $0xb8] sm:$0xff]
        %v397 = vld [vmem:[%s330 + $0xc0] sm:$0xff]
        %v398 = vld [vmem:[%s330 + $0xc8] sm:$0xff]
        %v399 = vld [vmem:[%s330 + $0xd0] sm:$0xff]
        %v400 = vld [vmem:[%s330 + $0xd8] sm:$0xff]
        %v401 = vld [vmem:[%s330 + $0xe0] sm:$0xff]
        %v402 = vld [vmem:[%s330 + $0xe8] sm:$0xff]
        %v403 = vld [vmem:[%s330 + $0xf0] sm:$0xff]
        %v404 = vld [vmem:[%s330 + $0xf8] sm:$0xff]
        %v405 = vld [vmem:[%s330 + $0x100] sm:$0xff]
        %v406 = vld [vmem:[%s330 + $0x108] sm:$0xff]
        %v407 = vld [vmem:[%s330 + $0x110] sm:$0xff]
        %v408 = vld [vmem:[%s330 + $0x118] sm:$0xff]
        %v409 = vld [vmem:[%s330 + $0x120] sm:$0xff]
        %v410 = vld [vmem:[%s330 + $0x128] sm:$0xff]
        %v411 = vld [vmem:[%s330 + $0x130] sm:$0xff]
        %v412 = vld [vmem:[%s330 + $0x138] sm:$0xff]
        %v413 = vld [vmem:[%s330 + $0x140] sm:$0xff]
        %v414 = vld [vmem:[%s330 + $0x148] sm:$0xff]
        %v415 = vld [vmem:[%s330 + $0x150] sm:$0xff]
        %v416 = vld [vmem:[%s330 + $0x158] sm:$0xff]
        %v417 = vld [vmem:[%s330 + $0x160] sm:$0xff]
        %v418 = vld [vmem:[%s330 + $0x168] sm:$0xff]
        %v419 = vld [vmem:[%s330 + $0x170] sm:$0xff]
        %v420 = vld [vmem:[%s330 + $0x178] sm:$0xff]
        %v421 = vld [vmem:[%s330 + $0x180] sm:$0xff]
        %v422 = vld [vmem:[%s330 + $0x188] sm:$0xff]
        %v423 = vld [vmem:[%s330 + $0x190] sm:$0xff]
        %v424 = vld [vmem:[%s330 + $0x198] sm:$0xff]
        %v425 = vld [vmem:[%s330 + $0x1a0] sm:$0xff]
        %v426 = vld [vmem:[%s330 + $0x1a8] sm:$0xff]
        %v427 = vld [vmem:[%s330 + $0x1b0] sm:$0xff]
        %v428 = vld [vmem:[%s330 + $0x1b8] sm:$0xff]
        %v429 = vld [vmem:[%s330 + $0x1c0] sm:$0xff]
        %v430 = vld [vmem:[%s330 + $0x1c8] sm:$0xff]
        %v431 = vld [vmem:[%s330 + $0x1d0] sm:$0xff]
        %v432 = vld [vmem:[%s330 + $0x1d8] sm:$0xff]
        %v433 = vld [vmem:[%s330 + $0x1e0] sm:$0xff]
        %v434 = vld [vmem:[%s330 + $0x1e8] sm:$0xff]
        %v435 = vld [vmem:[%s330 + $0x1f0] sm:$0xff]
        %v436 = vld [vmem:[%s330 + $0x1f8] sm:$0xff]
        %v437 = vld [vmem:[%s1] sm:$0xff]
        %v438 = vld [vmem:[%s1 + $0x8] sm:$0xff]
        %v439 = vld [vmem:[%s1 + $0x10] sm:$0xff]
        %v440 = vld [vmem:[%s1 + $0x18] sm:$0xff]
        %v441 = vld [vmem:[%s1 + $0x20] sm:$0xff]
        %v442 = vld [vmem:[%s1 + $0x28] sm:$0xff]
        %v443 = vld [vmem:[%s1 + $0x30] sm:$0xff]
        %v444 = vld [vmem:[%s1 + $0x38] sm:$0xff]
        %v445 = vld [vmem:[%s1 + $0x40] sm:$0xff]
        %v446 = vld [vmem:[%s1 + $0x48] sm:$0xff]
        %v447 = vld [vmem:[%s1 + $0x50] sm:$0xff]
        %v448 = vld [vmem:[%s1 + $0x58] sm:$0xff]
        %v449 = vld [vmem:[%s1 + $0x60] sm:$0xff]
        %v450 = vld [vmem:[%s1 + $0x68] sm:$0xff]
        %v451 = vld [vmem:[%s1 + $0x70] sm:$0xff]
        %v452 = vld [vmem:[%s1 + $0x78] sm:$0xff]
        %v453 = vld [vmem:[%s1 + $0x80] sm:$0xff]
        %v454 = vld [vmem:[%s1 + $0x88] sm:$0xff]
        %v455 = vld [vmem:[%s1 + $0x90] sm:$0xff]
        %v456 = vld [vmem:[%s1 + $0x98] sm:$0xff]
        %v457 = vld [vmem:[%s1 + $0xa0] sm:$0xff]
        %v458 = vld [vmem:[%s1 + $0xa8] sm:$0xff]
        %v459 = vld [vmem:[%s1 + $0xb0] sm:$0xff]
        %v460 = vld [vmem:[%s1 + $0xb8] sm:$0xff]
        %v461 = vld [vmem:[%s1 + $0xc0] sm:$0xff]
        %v462 = vld [vmem:[%s1 + $0xc8] sm:$0xff]
        %v463 = vld [vmem:[%s1 + $0xd0] sm:$0xff]
        %v464 = vld [vmem:[%s1 + $0xd8] sm:$0xff]
        %v465 = vld [vmem:[%s1 + $0xe0] sm:$0xff]
        %v466 = vld [vmem:[%s1 + $0xe8] sm:$0xff]
        %v467 = vld [vmem:[%s1 + $0xf0] sm:$0xff]
        %v468 = vld [vmem:[%s1 + $0xf8] sm:$0xff]
        %469 = vmatpush.msra.mxu0 %v452
        %470 = vmatpush.msra.mxu0 %v451
        %471 = vmatpush.msra.mxu0 %v450
        %472 = vmatpush.msra.mxu0 %v449
        %473 = vmatpush.msra.mxu0 %v448
        %474 = vmatpush.msra.mxu0 %v447
        %475 = vmatpush.msra.mxu0 %v446
        %476 = vmatpush.msra.mxu0 %v445
        %477 = vmatpush.msra.mxu0 %v444
        %478 = vmatpush.msra.mxu0 %v443
        %479 = vmatpush.msra.mxu0 %v442
        %480 = vmatpush.msra.mxu0 %v441
        %481 = vmatpush.msra.mxu0 %v440
        %482 = vmatpush.msra.mxu0 %v439
        %483 = vmatpush.msra.mxu0 %v438
        %484 = vmatpush.msra.mxu0 %v437
        %485 = vmatmul.f32.gmra.mxu0 %v373
        %v486 = vpop.f32.mrf.mxu0
        %v487 = vadd.f32 0.0, %v486
        %488 = vmatmul.f32.gmra.mxu0 %v375
        %v489 = vpop.f32.mrf.mxu0
        %v490 = vadd.f32 0.0, %v489
        %491 = vmatmul.f32.gmra.mxu0 %v377
        %v492 = vpop.f32.mrf.mxu0
        %v493 = vadd.f32 0.0, %v492
        %494 = vmatmul.f32.gmra.mxu0 %v379
        %v495 = vpop.f32.mrf.mxu0
        %v496 = vadd.f32 0.0, %v495
        %497 = vmatmul.f32.gmra.mxu0 %v381
        %v498 = vpop.f32.mrf.mxu0
        %v499 = vadd.f32 0.0, %v498
        %500 = vmatmul.f32.gmra.mxu0 %v383
        %v501 = vpop.f32.mrf.mxu0
        %v502 = vadd.f32 0.0, %v501
        %503 = vmatmul.f32.gmra.mxu0 %v385
        %v504 = vpop.f32.mrf.mxu0
        %v505 = vadd.f32 0.0, %v504
        %506 = vmatmul.f32.gmra.mxu0 %v387
        %v507 = vpop.f32.mrf.mxu0
        %v508 = vadd.f32 0.0, %v507
        %509 = vmatmul.f32.gmra.mxu0 %v389
        %v510 = vpop.f32.mrf.mxu0
        %v511 = vadd.f32 0.0, %v510
        %512 = vmatmul.f32.gmra.mxu0 %v391
        %v513 = vpop.f32.mrf.mxu0
        %v514 = vadd.f32 0.0, %v513
        %515 = vmatmul.f32.gmra.mxu0 %v393
        %v516 = vpop.f32.mrf.mxu0
        %v517 = vadd.f32 0.0, %v516
        %518 = vmatmul.f32.gmra.mxu0 %v395
        %v519 = vpop.f32.mrf.mxu0
        %v520 = vadd.f32 0.0, %v519
        %521 = vmatmul.f32.gmra.mxu0 %v397
        %v522 = vpop.f32.mrf.mxu0
        %v523 = vadd.f32 0.0, %v522
        %524 = vmatmul.f32.gmra.mxu0 %v399
        %v525 = vpop.f32.mrf.mxu0
        %v526 = vadd.f32 0.0, %v525
        %527 = vmatmul.f32.gmra.mxu0 %v401
        %v528 = vpop.f32.mrf.mxu0
        %v529 = vadd.f32 0.0, %v528
        %530 = vmatmul.f32.gmra.mxu0 %v403
        %v531 = vpop.f32.mrf.mxu0
        %v532 = vadd.f32 0.0, %v531
        %533 = vmatmul.f32.gmra.mxu0 %v405
        %v534 = vpop.f32.mrf.mxu0
        %v535 = vadd.f32 0.0, %v534
        %536 = vmatmul.f32.gmra.mxu0 %v407
        %v537 = vpop.f32.mrf.mxu0
        %v538 = vadd.f32 0.0, %v537
        %539 = vmatmul.f32.gmra.mxu0 %v409
        %v540 = vpop.f32.mrf.mxu0
        %v541 = vadd.f32 0.0, %v540
        %542 = vmatmul.f32.gmra.mxu0 %v411
        %v543 = vpop.f32.mrf.mxu0
        %v544 = vadd.f32 0.0, %v543
        %545 = vmatmul.f32.gmra.mxu0 %v413
        %v546 = vpop.f32.mrf.mxu0
        %v547 = vadd.f32 0.0, %v546
        %548 = vmatmul.f32.gmra.mxu0 %v415
        %v549 = vpop.f32.mrf.mxu0
        %v550 = vadd.f32 0.0, %v549
        %551 = vmatmul.f32.gmra.mxu0 %v417
        %v552 = vpop.f32.mrf.mxu0
        %v553 = vadd.f32 0.0, %v552
        %554 = vmatmul.f32.gmra.mxu0 %v419
        %v555 = vpop.f32.mrf.mxu0
        %v556 = vadd.f32 0.0, %v555
        %557 = vmatmul.f32.gmra.mxu0 %v421
        %v558 = vpop.f32.mrf.mxu0
        %v559 = vadd.f32 0.0, %v558
        %560 = vmatmul.f32.gmra.mxu0 %v423
        %v561 = vpop.f32.mrf.mxu0
        %v562 = vadd.f32 0.0, %v561
        %563 = vmatmul.f32.gmra.mxu0 %v425
        %v564 = vpop.f32.mrf.mxu0
        %v565 = vadd.f32 0.0, %v564
        %566 = vmatmul.f32.gmra.mxu0 %v427
        %v567 = vpop.f32.mrf.mxu0
        %v568 = vadd.f32 0.0, %v567
        %569 = vmatmul.f32.gmra.mxu0 %v429
        %v570 = vpop.f32.mrf.mxu0
        %v571 = vadd.f32 0.0, %v570
        %572 = vmatmul.f32.gmra.mxu0 %v431
        %v573 = vpop.f32.mrf.mxu0
        %v574 = vadd.f32 0.0, %v573
        %575 = vmatmul.f32.gmra.mxu0 %v433
        %v576 = vpop.f32.mrf.mxu0
        %v577 = vadd.f32 0.0, %v576
        %578 = vmatmul.f32.gmra.mxu0 %v435
        %v579 = vpop.f32.mrf.mxu0
        %v580 = vadd.f32 0.0, %v579
        %581 = vdwg.mxu0
        %582 = vmatpush.msra.mxu0 %v468
        %583 = vmatpush.msra.mxu0 %v467
        %584 = vmatpush.msra.mxu0 %v466
        %585 = vmatpush.msra.mxu0 %v465
        %586 = vmatpush.msra.mxu0 %v464
        %587 = vmatpush.msra.mxu0 %v463
        %588 = vmatpush.msra.mxu0 %v462
        %589 = vmatpush.msra.mxu0 %v461
        %590 = vmatpush.msra.mxu0 %v460
        %591 = vmatpush.msra.mxu0 %v459
        %592 = vmatpush.msra.mxu0 %v458
        %593 = vmatpush.msra.mxu0 %v457
        %594 = vmatpush.msra.mxu0 %v456
        %595 = vmatpush.msra.mxu0 %v455
        %596 = vmatpush.msra.mxu0 %v454
        %597 = vmatpush.msra.mxu0 %v453
        %598 = vmatmul.f32.gmra.mxu0 %v374
        %v599 = vpop.f32.mrf.mxu0
        %v600 = vadd.f32 %v487, %v599
        %601 = vmatmul.f32.gmra.mxu0 %v376
        %v602 = vpop.f32.mrf.mxu0
        %v603 = vadd.f32 %v490, %v602
        %604 = vmatmul.f32.gmra.mxu0 %v378
        %v605 = vpop.f32.mrf.mxu0
        %v606 = vadd.f32 %v493, %v605
        %607 = vmatmul.f32.gmra.mxu0 %v380
        %v608 = vpop.f32.mrf.mxu0
        %v609 = vadd.f32 %v496, %v608
        %610 = vmatmul.f32.gmra.mxu0 %v382
        %v611 = vpop.f32.mrf.mxu0
        %v612 = vadd.f32 %v499, %v611
        %613 = vmatmul.f32.gmra.mxu0 %v384
        %v614 = vpop.f32.mrf.mxu0
        %v615 = vadd.f32 %v502, %v614
        %616 = vmatmul.f32.gmra.mxu0 %v386
        %v617 = vpop.f32.mrf.mxu0
        %v618 = vadd.f32 %v505, %v617
        %619 = vmatmul.f32.gmra.mxu0 %v388
        %v620 = vpop.f32.mrf.mxu0
        %v621 = vadd.f32 %v508, %v620
        %622 = vmatmul.f32.gmra.mxu0 %v390
        %v623 = vpop.f32.mrf.mxu0
        %v624 = vadd.f32 %v511, %v623
        %625 = vmatmul.f32.gmra.mxu0 %v392
        %v626 = vpop.f32.mrf.mxu0
        %v627 = vadd.f32 %v514, %v626
        %628 = vmatmul.f32.gmra.mxu0 %v394
        %v629 = vpop.f32.mrf.mxu0
        %v630 = vadd.f32 %v517, %v629
        %631 = vmatmul.f32.gmra.mxu0 %v396
        %v632 = vpop.f32.mrf.mxu0
        %v633 = vadd.f32 %v520, %v632
        %634 = vmatmul.f32.gmra.mxu0 %v398
        %v635 = vpop.f32.mrf.mxu0
        %v636 = vadd.f32 %v523, %v635
        %637 = vmatmul.f32.gmra.mxu0 %v400
        %v638 = vpop.f32.mrf.mxu0
        %v639 = vadd.f32 %v526, %v638
        %640 = vmatmul.f32.gmra.mxu0 %v402
        %v641 = vpop.f32.mrf.mxu0
        %v642 = vadd.f32 %v529, %v641
        %643 = vmatmul.f32.gmra.mxu0 %v404
        %v644 = vpop.f32.mrf.mxu0
        %v645 = vadd.f32 %v532, %v644
        %646 = vmatmul.f32.gmra.mxu0 %v406
        %v647 = vpop.f32.mrf.mxu0
        %v648 = vadd.f32 %v535, %v647
        %649 = vmatmul.f32.gmra.mxu0 %v408
        %v650 = vpop.f32.mrf.mxu0
        %v651 = vadd.f32 %v538, %v650
        %652 = vmatmul.f32.gmra.mxu0 %v410
        %v653 = vpop.f32.mrf.mxu0
        %v654 = vadd.f32 %v541, %v653
        %655 = vmatmul.f32.gmra.mxu0 %v412
        %v656 = vpop.f32.mrf.mxu0
        %v657 = vadd.f32 %v544, %v656
        %658 = vmatmul.f32.gmra.mxu0 %v414
        %v659 = vpop.f32.mrf.mxu0
        %v660 = vadd.f32 %v547, %v659
        %661 = vmatmul.f32.gmra.mxu0 %v416
        %v662 = vpop.f32.mrf.mxu0
        %v663 = vadd.f32 %v550, %v662
        %664 = vmatmul.f32.gmra.mxu0 %v418
        %v665 = vpop.f32.mrf.mxu0
        %v666 = vadd.f32 %v553, %v665
        %667 = vmatmul.f32.gmra.mxu0 %v420
        %v668 = vpop.f32.mrf.mxu0
        %v669 = vadd.f32 %v556, %v668
        %670 = vmatmul.f32.gmra.mxu0 %v422
        %v671 = vpop.f32.mrf.mxu0
        %v672 = vadd.f32 %v559, %v671
        %673 = vmatmul.f32.gmra.mxu0 %v424
        %v674 = vpop.f32.mrf.mxu0
        %v675 = vadd.f32 %v562, %v674
        %676 = vmatmul.f32.gmra.mxu0 %v426
        %v677 = vpop.f32.mrf.mxu0
        %v678 = vadd.f32 %v565, %v677
        %679 = vmatmul.f32.gmra.mxu0 %v428
        %v680 = vpop.f32.mrf.mxu0
        %v681 = vadd.f32 %v568, %v680
        %682 = vmatmul.f32.gmra.mxu0 %v430
        %v683 = vpop.f32.mrf.mxu0
        %v684 = vadd.f32 %v571, %v683
        %685 = vmatmul.f32.gmra.mxu0 %v432
        %v686 = vpop.f32.mrf.mxu0
        %v687 = vadd.f32 %v574, %v686
        %688 = vmatmul.f32.gmra.mxu0 %v434
        %v689 = vpop.f32.mrf.mxu0
        %v690 = vadd.f32 %v577, %v689
        %691 = vmatmul.f32.gmra.mxu0 %v436
        %v692 = vpop.f32.mrf.mxu0
        %v693 = vadd.f32 %v580, %v692
        %694 = vdwg.mxu0
        %v695 = vld [vmem:[%s6] sm:$0xff]
        %v696 = vld [vmem:[%s6 + $0x8] sm:$0xff]
        %v697 = vld [vmem:[%s6 + $0x10] sm:$0xff]
        %v698 = vld [vmem:[%s6 + $0x18] sm:$0xff]
        %v699 = vld [vmem:[%s6 + $0x20] sm:$0xff]
        %v700 = vld [vmem:[%s6 + $0x28] sm:$0xff]
        %v701 = vld [vmem:[%s6 + $0x30] sm:$0xff]
        %v702 = vld [vmem:[%s6 + $0x38] sm:$0xff]
        %v703 = vld [vmem:[%s6 + $0x40] sm:$0xff]
        %v704 = vld [vmem:[%s6 + $0x48] sm:$0xff]
        %v705 = vld [vmem:[%s6 + $0x50] sm:$0xff]
        %v706 = vld [vmem:[%s6 + $0x58] sm:$0xff]
        %v707 = vld [vmem:[%s6 + $0x60] sm:$0xff]
        %v708 = vld [vmem:[%s6 + $0x68] sm:$0xff]
        %v709 = vld [vmem:[%s6 + $0x70] sm:$0xff]
        %v710 = vld [vmem:[%s6 + $0x78] sm:$0xff]
        %v711 = vld [vmem:[%s7] sm:$0xff]
        %v712 = vld [vmem:[%s7 + $0x8] sm:$0xff]
        %v713 = vld [vmem:[%s7 + $0x10] sm:$0xff]
        %v714 = vld [vmem:[%s7 + $0x18] sm:$0xff]
        %v715 = vld [vmem:[%s7 + $0x20] sm:$0xff]
        %v716 = vld [vmem:[%s7 + $0x28] sm:$0xff]
        %v717 = vld [vmem:[%s7 + $0x30] sm:$0xff]
        %v718 = vld [vmem:[%s7 + $0x38] sm:$0xff]
        %v719 = vld [vmem:[%s7 + $0x40] sm:$0xff]
        %v720 = vld [vmem:[%s7 + $0x48] sm:$0xff]
        %v721 = vld [vmem:[%s7 + $0x50] sm:$0xff]
        %v722 = vld [vmem:[%s7 + $0x58] sm:$0xff]
        %v723 = vld [vmem:[%s7 + $0x60] sm:$0xff]
        %v724 = vld [vmem:[%s7 + $0x68] sm:$0xff]
        %v725 = vld [vmem:[%s7 + $0x70] sm:$0xff]
        %v726 = vld [vmem:[%s7 + $0x78] sm:$0xff]
        %v727 = vld [vmem:[%s8] sm:$0xff]
        %v728 = vld [vmem:[%s8 + $0x8] sm:$0xff]
        %v729 = vld [vmem:[%s8 + $0x10] sm:$0xff]
        %v730 = vld [vmem:[%s8 + $0x18] sm:$0xff]
        %v731 = vld [vmem:[%s8 + $0x20] sm:$0xff]
        %v732 = vld [vmem:[%s8 + $0x28] sm:$0xff]
        %v733 = vld [vmem:[%s8 + $0x30] sm:$0xff]
        %v734 = vld [vmem:[%s8 + $0x38] sm:$0xff]
        %v735 = vld [vmem:[%s8 + $0x40] sm:$0xff]
        %v736 = vld [vmem:[%s8 + $0x48] sm:$0xff]
        %v737 = vld [vmem:[%s8 + $0x50] sm:$0xff]
        %v738 = vld [vmem:[%s8 + $0x58] sm:$0xff]
        %v739 = vld [vmem:[%s8 + $0x60] sm:$0xff]
        %v740 = vld [vmem:[%s8 + $0x68] sm:$0xff]
        %v741 = vld [vmem:[%s8 + $0x70] sm:$0xff]
        %v742 = vld [vmem:[%s8 + $0x78] sm:$0xff]
        %v743 = vsub.f32 1.0, %v727
        %v744 = vsub.f32 1.0, %v728
        %v745 = vsub.f32 1.0, %v729
        %v746 = vsub.f32 1.0, %v730
        %v747 = vsub.f32 1.0, %v731
        %v748 = vsub.f32 1.0, %v732
        %v749 = vsub.f32 1.0, %v733
        %v750 = vsub.f32 1.0, %v734
        %v751 = vsub.f32 1.0, %v735
        %v752 = vsub.f32 1.0, %v736
        %v753 = vsub.f32 1.0, %v737
        %v754 = vsub.f32 1.0, %v738
        %v755 = vsub.f32 1.0, %v739
        %v756 = vsub.f32 1.0, %v740
        %v757 = vsub.f32 1.0, %v741
        %v758 = vsub.f32 1.0, %v742
        %v759 = vld [vmem:[%s4] sm:$0xff]
        %v760 = vld [vmem:[%s4 + $0x8] sm:$0xff]
        %v761 = vld [vmem:[%s4 + $0x10] sm:$0xff]
        %v762 = vld [vmem:[%s4 + $0x18] sm:$0xff]
        %v763 = vld [vmem:[%s4 + $0x20] sm:$0xff]
        %v764 = vld [vmem:[%s4 + $0x28] sm:$0xff]
        %v765 = vld [vmem:[%s4 + $0x30] sm:$0xff]
        %v766 = vld [vmem:[%s4 + $0x38] sm:$0xff]
        %v767 = vld [vmem:[%s4 + $0x40] sm:$0xff]
        %v768 = vld [vmem:[%s4 + $0x48] sm:$0xff]
        %v769 = vld [vmem:[%s4 + $0x50] sm:$0xff]
        %v770 = vld [vmem:[%s4 + $0x58] sm:$0xff]
        %v771 = vld [vmem:[%s4 + $0x60] sm:$0xff]
        %v772 = vld [vmem:[%s4 + $0x68] sm:$0xff]
        %v773 = vld [vmem:[%s4 + $0x70] sm:$0xff]
        %v774 = vld [vmem:[%s4 + $0x78] sm:$0xff]
        %775 = vmatpush.msra.mxu0 %v645
        %776 = vmatpush.msra.mxu0 %v642
        %777 = vmatpush.msra.mxu0 %v639
        %778 = vmatpush.msra.mxu0 %v636
        %779 = vmatpush.msra.mxu0 %v633
        %780 = vmatpush.msra.mxu0 %v630
        %781 = vmatpush.msra.mxu0 %v627
        %782 = vmatpush.msra.mxu0 %v624
        %783 = vmatpush.msra.mxu0 %v621
        %784 = vmatpush.msra.mxu0 %v618
        %785 = vmatpush.msra.mxu0 %v615
        %786 = vmatpush.msra.mxu0 %v612
        %787 = vmatpush.msra.mxu0 %v609
        %788 = vmatpush.msra.mxu0 %v606
        %789 = vmatpush.msra.mxu0 %v603
        %790 = vmatpush.msra.mxu0 %v600
        %791 = vmatmul.f32.gmra.mxu0 %v759
        %v792 = vpop.f32.mrf.mxu0
        %v793 = vadd.f32 0.0, %v792
        %794 = vmatmul.f32.gmra.mxu0 %v760
        %v795 = vpop.f32.mrf.mxu0
        %v796 = vadd.f32 0.0, %v795
        %797 = vmatmul.f32.gmra.mxu0 %v761
        %v798 = vpop.f32.mrf.mxu0
        %v799 = vadd.f32 0.0, %v798
        %800 = vmatmul.f32.gmra.mxu0 %v762
        %v801 = vpop.f32.mrf.mxu0
        %v802 = vadd.f32 0.0, %v801
        %803 = vmatmul.f32.gmra.mxu0 %v763
        %v804 = vpop.f32.mrf.mxu0
        %v805 = vadd.f32 0.0, %v804
        %806 = vmatmul.f32.gmra.mxu0 %v764
        %v807 = vpop.f32.mrf.mxu0
        %v808 = vadd.f32 0.0, %v807
        %809 = vmatmul.f32.gmra.mxu0 %v765
        %v810 = vpop.f32.mrf.mxu0
        %v811 = vadd.f32 0.0, %v810
        %812 = vmatmul.f32.gmra.mxu0 %v766
        %v813 = vpop.f32.mrf.mxu0
        %v814 = vadd.f32 0.0, %v813
        %815 = vmatmul.f32.gmra.mxu0 %v767
        %v816 = vpop.f32.mrf.mxu0
        %v817 = vadd.f32 0.0, %v816
        %818 = vmatmul.f32.gmra.mxu0 %v768
        %v819 = vpop.f32.mrf.mxu0
        %v820 = vadd.f32 0.0, %v819
        %821 = vmatmul.f32.gmra.mxu0 %v769
        %v822 = vpop.f32.mrf.mxu0
        %v823 = vadd.f32 0.0, %v822
        %824 = vmatmul.f32.gmra.mxu0 %v770
        %v825 = vpop.f32.mrf.mxu0
        %v826 = vadd.f32 0.0, %v825
        %827 = vmatmul.f32.gmra.mxu0 %v771
        %v828 = vpop.f32.mrf.mxu0
        %v829 = vadd.f32 0.0, %v828
        %830 = vmatmul.f32.gmra.mxu0 %v772
        %v831 = vpop.f32.mrf.mxu0
        %v832 = vadd.f32 0.0, %v831
        %833 = vmatmul.f32.gmra.mxu0 %v773
        %v834 = vpop.f32.mrf.mxu0
        %v835 = vadd.f32 0.0, %v834
        %836 = vmatmul.f32.gmra.mxu0 %v774
        %v837 = vpop.f32.mrf.mxu0
        %v838 = vadd.f32 0.0, %v837
        %839 = vdwg.mxu0
        %v840 = vxor.u32 %v793, 2147483648
        %v841 = vxor.u32 %v796, 2147483648
        %v842 = vxor.u32 %v799, 2147483648
        %v843 = vxor.u32 %v802, 2147483648
        %v844 = vxor.u32 %v805, 2147483648
        %v845 = vxor.u32 %v808, 2147483648
        %v846 = vxor.u32 %v811, 2147483648
        %v847 = vxor.u32 %v814, 2147483648
        %v848 = vxor.u32 %v817, 2147483648
        %v849 = vxor.u32 %v820, 2147483648
        %v850 = vxor.u32 %v823, 2147483648
        %v851 = vxor.u32 %v826, 2147483648
        %v852 = vxor.u32 %v829, 2147483648
        %v853 = vxor.u32 %v832, 2147483648
        %v854 = vxor.u32 %v835, 2147483648
        %v855 = vxor.u32 %v838, 2147483648
        %v856 = vmul.f32 %v840, 1.442695
        %v857 = vpow.pop %v856
        %v858 = vmul.f32 %v841, 1.442695
        %v859 = vpow.pop %v858
        %v860 = vmul.f32 %v842, 1.442695
        %v861 = vpow.pop %v860
        %v862 = vmul.f32 %v843, 1.442695
        %v863 = vpow.pop %v862
        %v864 = vmul.f32 %v844, 1.442695
        %v865 = vpow.pop %v864
        %v866 = vmul.f32 %v845, 1.442695
        %v867 = vpow.pop %v866
        %v868 = vmul.f32 %v846, 1.442695
        %v869 = vpow.pop %v868
        %v870 = vmul.f32 %v847, 1.442695
        %v871 = vpow.pop %v870
        %v872 = vmul.f32 %v848, 1.442695
        %v873 = vpow.pop %v872
        %v874 = vmul.f32 %v849, 1.442695
        %v875 = vpow.pop %v874
        %v876 = vmul.f32 %v850, 1.442695
        %v877 = vpow.pop %v876
        %v878 = vmul.f32 %v851, 1.442695
        %v879 = vpow.pop %v878
        %v880 = vmul.f32 %v852, 1.442695
        %v881 = vpow.pop %v880
        %v882 = vmul.f32 %v853, 1.442695
        %v883 = vpow.pop %v882
        %v884 = vmul.f32 %v854, 1.442695
        %v885 = vpow.pop %v884
        %v886 = vmul.f32 %v855, 1.442695
        %v887 = vpow.pop %v886
        %v888 = vadd.f32 %v857, 1.0
        %v889 = vadd.f32 %v859, 1.0
        %v890 = vadd.f32 %v861, 1.0
        %v891 = vadd.f32 %v863, 1.0
        %v892 = vadd.f32 %v865, 1.0
        %v893 = vadd.f32 %v867, 1.0
        %v894 = vadd.f32 %v869, 1.0
        %v895 = vadd.f32 %v871, 1.0
        %v896 = vadd.f32 %v873, 1.0
        %v897 = vadd.f32 %v875, 1.0
        %v898 = vadd.f32 %v877, 1.0
        %v899 = vadd.f32 %v879, 1.0
        %v900 = vadd.f32 %v881, 1.0
        %v901 = vadd.f32 %v883, 1.0
        %v902 = vadd.f32 %v885, 1.0
        %v903 = vadd.f32 %v887, 1.0
        %v904 = vrcp.pop %v888
        %v905 = vmul.f32 %v888, %v904
        %v906 = vsub.f32 1.0, %v905
        %v907 = vmul.f32 %v904, %v906
        %v908 = vadd.f32 %v904, %v907
        %vm909 = vweird.f32 %v888
        %vm910 = vweird.f32 %v904
        %vm911 = vmor %vm909, %vm910
        %v912 = vsel %vm911, %v904, %v908
        %v913 = vand.u32 2147483647, %v888
        %vm914 = vcmp.eq.f32.partialorder %v913, 8.507059e+37
        %v915 = vand.u32 %v888, 2147483648
        %v916 = vor.u32 1.1754944e-38, %v915
        %v917 = vsel %vm914, %v916, %v912
        %v918 = vmul.f32 1.0, %v917
        %v919 = vrcp.pop %v889
        %v920 = vmul.f32 %v889, %v919
        %v921 = vsub.f32 1.0, %v920
        %v922 = vmul.f32 %v919, %v921
        %v923 = vadd.f32 %v919, %v922
        %vm924 = vweird.f32 %v889
        %vm925 = vweird.f32 %v919
        %vm926 = vmor %vm924, %vm925
        %v927 = vsel %vm926, %v919, %v923
        %v928 = vand.u32 2147483647, %v889
        %vm929 = vcmp.eq.f32.partialorder %v928, 8.507059e+37
        %v930 = vand.u32 %v889, 2147483648
        %v931 = vor.u32 1.1754944e-38, %v930
        %v932 = vsel %vm929, %v931, %v927
        %v933 = vmul.f32 1.0, %v932
        %v934 = vrcp.pop %v890
        %v935 = vmul.f32 %v890, %v934
        %v936 = vsub.f32 1.0, %v935
        %v937 = vmul.f32 %v934, %v936
        %v938 = vadd.f32 %v934, %v937
        %vm939 = vweird.f32 %v890
        %vm940 = vweird.f32 %v934
        %vm941 = vmor %vm939, %vm940
        %v942 = vsel %vm941, %v934, %v938
        %v943 = vand.u32 2147483647, %v890
        %vm944 = vcmp.eq.f32.partialorder %v943, 8.507059e+37
        %v945 = vand.u32 %v890, 2147483648
        %v946 = vor.u32 1.1754944e-38, %v945
        %v947 = vsel %vm944, %v946, %v942
        %v948 = vmul.f32 1.0, %v947
        %v949 = vrcp.pop %v891
        %v950 = vmul.f32 %v891, %v949
        %v951 = vsub.f32 1.0, %v950
        %v952 = vmul.f32 %v949, %v951
        %v953 = vadd.f32 %v949, %v952
        %vm954 = vweird.f32 %v891
        %vm955 = vweird.f32 %v949
        %vm956 = vmor %vm954, %vm955
        %v957 = vsel %vm956, %v949, %v953
        %v958 = vand.u32 2147483647, %v891
        %vm959 = vcmp.eq.f32.partialorder %v958, 8.507059e+37
        %v960 = vand.u32 %v891, 2147483648
        %v961 = vor.u32 1.1754944e-38, %v960
        %v962 = vsel %vm959, %v961, %v957
        %v963 = vmul.f32 1.0, %v962
        %v964 = vrcp.pop %v892
        %v965 = vmul.f32 %v892, %v964
        %v966 = vsub.f32 1.0, %v965
        %v967 = vmul.f32 %v964, %v966
        %v968 = vadd.f32 %v964, %v967
        %vm969 = vweird.f32 %v892
        %vm970 = vweird.f32 %v964
        %vm971 = vmor %vm969, %vm970
        %v972 = vsel %vm971, %v964, %v968
        %v973 = vand.u32 2147483647, %v892
        %vm974 = vcmp.eq.f32.partialorder %v973, 8.507059e+37
        %v975 = vand.u32 %v892, 2147483648
        %v976 = vor.u32 1.1754944e-38, %v975
        %v977 = vsel %vm974, %v976, %v972
        %v978 = vmul.f32 1.0, %v977
        %v979 = vrcp.pop %v893
        %v980 = vmul.f32 %v893, %v979
        %v981 = vsub.f32 1.0, %v980
        %v982 = vmul.f32 %v979, %v981
        %v983 = vadd.f32 %v979, %v982
        %vm984 = vweird.f32 %v893
        %vm985 = vweird.f32 %v979
        %vm986 = vmor %vm984, %vm985
        %v987 = vsel %vm986, %v979, %v983
        %v988 = vand.u32 2147483647, %v893
        %vm989 = vcmp.eq.f32.partialorder %v988, 8.507059e+37
        %v990 = vand.u32 %v893, 2147483648
        %v991 = vor.u32 1.1754944e-38, %v990
        %v992 = vsel %vm989, %v991, %v987
        %v993 = vmul.f32 1.0, %v992
        %v994 = vrcp.pop %v894
        %v995 = vmul.f32 %v894, %v994
        %v996 = vsub.f32 1.0, %v995
        %v997 = vmul.f32 %v994, %v996
        %v998 = vadd.f32 %v994, %v997
        %vm999 = vweird.f32 %v894
        %vm1000 = vweird.f32 %v994
        %vm1001 = vmor %vm999, %vm1000
        %v1002 = vsel %vm1001, %v994, %v998
        %v1003 = vand.u32 2147483647, %v894
        %vm1004 = vcmp.eq.f32.partialorder %v1003, 8.507059e+37
        %v1005 = vand.u32 %v894, 2147483648
        %v1006 = vor.u32 1.1754944e-38, %v1005
        %v1007 = vsel %vm1004, %v1006, %v1002
        %v1008 = vmul.f32 1.0, %v1007
        %v1009 = vrcp.pop %v895
        %v1010 = vmul.f32 %v895, %v1009
        %v1011 = vsub.f32 1.0, %v1010
        %v1012 = vmul.f32 %v1009, %v1011
        %v1013 = vadd.f32 %v1009, %v1012
        %vm1014 = vweird.f32 %v895
        %vm1015 = vweird.f32 %v1009
        %vm1016 = vmor %vm1014, %vm1015
        %v1017 = vsel %vm1016, %v1009, %v1013
        %v1018 = vand.u32 2147483647, %v895
        %vm1019 = vcmp.eq.f32.partialorder %v1018, 8.507059e+37
        %v1020 = vand.u32 %v895, 2147483648
        %v1021 = vor.u32 1.1754944e-38, %v1020
        %v1022 = vsel %vm1019, %v1021, %v1017
        %v1023 = vmul.f32 1.0, %v1022
        %v1024 = vrcp.pop %v896
        %v1025 = vmul.f32 %v896, %v1024
        %v1026 = vsub.f32 1.0, %v1025
        %v1027 = vmul.f32 %v1024, %v1026
        %v1028 = vadd.f32 %v1024, %v1027
        %vm1029 = vweird.f32 %v896
        %vm1030 = vweird.f32 %v1024
        %vm1031 = vmor %vm1029, %vm1030
        %v1032 = vsel %vm1031, %v1024, %v1028
        %v1033 = vand.u32 2147483647, %v896
        %vm1034 = vcmp.eq.f32.partialorder %v1033, 8.507059e+37
        %v1035 = vand.u32 %v896, 2147483648
        %v1036 = vor.u32 1.1754944e-38, %v1035
        %v1037 = vsel %vm1034, %v1036, %v1032
        %v1038 = vmul.f32 1.0, %v1037
        %v1039 = vrcp.pop %v897
        %v1040 = vmul.f32 %v897, %v1039
        %v1041 = vsub.f32 1.0, %v1040
        %v1042 = vmul.f32 %v1039, %v1041
        %v1043 = vadd.f32 %v1039, %v1042
        %vm1044 = vweird.f32 %v897
        %vm1045 = vweird.f32 %v1039
        %vm1046 = vmor %vm1044, %vm1045
        %v1047 = vsel %vm1046, %v1039, %v1043
        %v1048 = vand.u32 2147483647, %v897
        %vm1049 = vcmp.eq.f32.partialorder %v1048, 8.507059e+37
        %v1050 = vand.u32 %v897, 2147483648
        %v1051 = vor.u32 1.1754944e-38, %v1050
        %v1052 = vsel %vm1049, %v1051, %v1047
        %v1053 = vmul.f32 1.0, %v1052
        %v1054 = vrcp.pop %v898
        %v1055 = vmul.f32 %v898, %v1054
        %v1056 = vsub.f32 1.0, %v1055
        %v1057 = vmul.f32 %v1054, %v1056
        %v1058 = vadd.f32 %v1054, %v1057
        %vm1059 = vweird.f32 %v898
        %vm1060 = vweird.f32 %v1054
        %vm1061 = vmor %vm1059, %vm1060
        %v1062 = vsel %vm1061, %v1054, %v1058
        %v1063 = vand.u32 2147483647, %v898
        %vm1064 = vcmp.eq.f32.partialorder %v1063, 8.507059e+37
        %v1065 = vand.u32 %v898, 2147483648
        %v1066 = vor.u32 1.1754944e-38, %v1065
        %v1067 = vsel %vm1064, %v1066, %v1062
        %v1068 = vmul.f32 1.0, %v1067
        %v1069 = vrcp.pop %v899
        %v1070 = vmul.f32 %v899, %v1069
        %v1071 = vsub.f32 1.0, %v1070
        %v1072 = vmul.f32 %v1069, %v1071
        %v1073 = vadd.f32 %v1069, %v1072
        %vm1074 = vweird.f32 %v899
        %vm1075 = vweird.f32 %v1069
        %vm1076 = vmor %vm1074, %vm1075
        %v1077 = vsel %vm1076, %v1069, %v1073
        %v1078 = vand.u32 2147483647, %v899
        %vm1079 = vcmp.eq.f32.partialorder %v1078, 8.507059e+37
        %v1080 = vand.u32 %v899, 2147483648
        %v1081 = vor.u32 1.1754944e-38, %v1080
        %v1082 = vsel %vm1079, %v1081, %v1077
        %v1083 = vmul.f32 1.0, %v1082
        %v1084 = vrcp.pop %v900
        %v1085 = vmul.f32 %v900, %v1084
        %v1086 = vsub.f32 1.0, %v1085
        %v1087 = vmul.f32 %v1084, %v1086
        %v1088 = vadd.f32 %v1084, %v1087
        %vm1089 = vweird.f32 %v900
        %vm1090 = vweird.f32 %v1084
        %vm1091 = vmor %vm1089, %vm1090
        %v1092 = vsel %vm1091, %v1084, %v1088
        %v1093 = vand.u32 2147483647, %v900
        %vm1094 = vcmp.eq.f32.partialorder %v1093, 8.507059e+37
        %v1095 = vand.u32 %v900, 2147483648
        %v1096 = vor.u32 1.1754944e-38, %v1095
        %v1097 = vsel %vm1094, %v1096, %v1092
        %v1098 = vmul.f32 1.0, %v1097
        %v1099 = vrcp.pop %v901
        %v1100 = vmul.f32 %v901, %v1099
        %v1101 = vsub.f32 1.0, %v1100
        %v1102 = vmul.f32 %v1099, %v1101
        %v1103 = vadd.f32 %v1099, %v1102
        %vm1104 = vweird.f32 %v901
        %vm1105 = vweird.f32 %v1099
        %vm1106 = vmor %vm1104, %vm1105
        %v1107 = vsel %vm1106, %v1099, %v1103
        %v1108 = vand.u32 2147483647, %v901
        %vm1109 = vcmp.eq.f32.partialorder %v1108, 8.507059e+37
        %v1110 = vand.u32 %v901, 2147483648
        %v1111 = vor.u32 1.1754944e-38, %v1110
        %v1112 = vsel %vm1109, %v1111, %v1107
        %v1113 = vmul.f32 1.0, %v1112
        %v1114 = vrcp.pop %v902
        %v1115 = vmul.f32 %v902, %v1114
        %v1116 = vsub.f32 1.0, %v1115
        %v1117 = vmul.f32 %v1114, %v1116
        %v1118 = vadd.f32 %v1114, %v1117
        %vm1119 = vweird.f32 %v902
        %vm1120 = vweird.f32 %v1114
        %vm1121 = vmor %vm1119, %vm1120
        %v1122 = vsel %vm1121, %v1114, %v1118
        %v1123 = vand.u32 2147483647, %v902
        %vm1124 = vcmp.eq.f32.partialorder %v1123, 8.507059e+37
        %v1125 = vand.u32 %v902, 2147483648
        %v1126 = vor.u32 1.1754944e-38, %v1125
        %v1127 = vsel %vm1124, %v1126, %v1122
        %v1128 = vmul.f32 1.0, %v1127
        %v1129 = vrcp.pop %v903
        %v1130 = vmul.f32 %v903, %v1129
        %v1131 = vsub.f32 1.0, %v1130
        %v1132 = vmul.f32 %v1129, %v1131
        %v1133 = vadd.f32 %v1129, %v1132
        %vm1134 = vweird.f32 %v903
        %vm1135 = vweird.f32 %v1129
        %vm1136 = vmor %vm1134, %vm1135
        %v1137 = vsel %vm1136, %v1129, %v1133
        %v1138 = vand.u32 2147483647, %v903
        %vm1139 = vcmp.eq.f32.partialorder %v1138, 8.507059e+37
        %v1140 = vand.u32 %v903, 2147483648
        %v1141 = vor.u32 1.1754944e-38, %v1140
        %v1142 = vsel %vm1139, %v1141, %v1137
        %v1143 = vmul.f32 1.0, %v1142
        %1160 = vrot.lane.b32.xlu0 %v918, 84
        %v1161 = vpop.permute.xlu0 %1160
        %1162 = vrot.lane.b32.xlu0 %v933, 84
        %v1163 = vpop.permute.xlu0 %1162
        %1164 = vrot.lane.b32.xlu0 %v948, 84
        %v1165 = vpop.permute.xlu0 %1164
        %1166 = vrot.lane.b32.xlu0 %v963, 84
        %v1167 = vpop.permute.xlu0 %1166
        %1168 = vrot.lane.b32.xlu0 %v978, 84
        %v1169 = vpop.permute.xlu0 %1168
        %1170 = vrot.lane.b32.xlu0 %v993, 84
        %v1171 = vpop.permute.xlu0 %1170
        %1172 = vrot.lane.b32.xlu0 %v1008, 84
        %v1173 = vpop.permute.xlu0 %1172
        %1174 = vrot.lane.b32.xlu0 %v1023, 84
        %v1175 = vpop.permute.xlu0 %1174
        %1176 = vrot.lane.b32.xlu0 %v1038, 84
        %v1177 = vpop.permute.xlu0 %1176
        %1178 = vrot.lane.b32.xlu0 %v1053, 84
        %v1179 = vpop.permute.xlu0 %1178
        %1180 = vrot.lane.b32.xlu0 %v1068, 84
        %v1181 = vpop.permute.xlu0 %1180
        %1182 = vrot.lane.b32.xlu0 %v1083, 84
        %v1183 = vpop.permute.xlu0 %1182
        %1184 = vrot.lane.b32.xlu0 %v1098, 84
        %v1185 = vpop.permute.xlu0 %1184
        %1186 = vrot.lane.b32.xlu0 %v1113, 84
        %v1187 = vpop.permute.xlu0 %1186
        %1188 = vrot.lane.b32.xlu0 %v1128, 84
        %v1189 = vpop.permute.xlu0 %1188
        %1190 = vrot.lane.b32.xlu0 %v1143, 84
        %v1191 = vpop.permute.xlu0 %1190
        %v1208 = vmul.f32 %v727, %v1161
        %v1209 = vmul.f32 %v728, %v1163
        %v1210 = vmul.f32 %v729, %v1165
        %v1211 = vmul.f32 %v730, %v1167
        %v1212 = vmul.f32 %v731, %v1169
        %v1213 = vmul.f32 %v732, %v1171
        %v1214 = vmul.f32 %v733, %v1173
        %v1215 = vmul.f32 %v734, %v1175
        %v1216 = vmul.f32 %v735, %v1177
        %v1217 = vmul.f32 %v736, %v1179
        %v1218 = vmul.f32 %v737, %v1181
        %v1219 = vmul.f32 %v738, %v1183
        %v1220 = vmul.f32 %v739, %v1185
        %v1221 = vmul.f32 %v740, %v1187
        %v1222 = vmul.f32 %v741, %v1189
        %v1223 = vmul.f32 %v742, %v1191
        %v1224 = vadd.f32 %v1208, %v743
        %v1225 = vadd.f32 %v1209, %v744
        %v1226 = vadd.f32 %v1210, %v745
        %v1227 = vadd.f32 %v1211, %v746
        %v1228 = vadd.f32 %v1212, %v747
        %v1229 = vadd.f32 %v1213, %v748
        %v1230 = vadd.f32 %v1214, %v749
        %v1231 = vadd.f32 %v1215, %v750
        %v1232 = vadd.f32 %v1216, %v751
        %v1233 = vadd.f32 %v1217, %v752
        %v1234 = vadd.f32 %v1218, %v753
        %v1235 = vadd.f32 %v1219, %v754
        %v1236 = vadd.f32 %v1220, %v755
        %v1237 = vadd.f32 %v1221, %v756
        %v1238 = vadd.f32 %v1222, %v757
        %v1239 = vadd.f32 %v1223, %v758
        %v1240 = vld [vmem:[#allocation5] sm:$0xff]
        %v1241 = vld [vmem:[#allocation5 + $0x8] sm:$0xff]
        %v1242 = vld [vmem:[#allocation5 + $0x10] sm:$0xff]
        %v1243 = vld [vmem:[#allocation5 + $0x18] sm:$0xff]
        %v1244 = vld [vmem:[#allocation5 + $0x20] sm:$0xff]
        %v1245 = vld [vmem:[#allocation5 + $0x28] sm:$0xff]
        %v1246 = vld [vmem:[#allocation5 + $0x30] sm:$0xff]
        %v1247 = vld [vmem:[#allocation5 + $0x38] sm:$0xff]
        %v1248 = vld [vmem:[#allocation5 + $0x40] sm:$0xff]
        %v1249 = vld [vmem:[#allocation5 + $0x48] sm:$0xff]
        %v1250 = vld [vmem:[#allocation5 + $0x50] sm:$0xff]
        %v1251 = vld [vmem:[#allocation5 + $0x58] sm:$0xff]
        %v1252 = vld [vmem:[#allocation5 + $0x60] sm:$0xff]
        %v1253 = vld [vmem:[#allocation5 + $0x68] sm:$0xff]
        %v1254 = vld [vmem:[#allocation5 + $0x70] sm:$0xff]
        %v1255 = vld [vmem:[#allocation5 + $0x78] sm:$0xff]
        %s1256 = scalar_lea.vmem [#allocation5], 128
        %v1257 = vld [vmem:[%s1256] sm:$0xff]
        %v1258 = vld [vmem:[%s1256 + $0x8] sm:$0xff]
        %v1259 = vld [vmem:[%s1256 + $0x10] sm:$0xff]
        %v1260 = vld [vmem:[%s1256 + $0x18] sm:$0xff]
        %v1261 = vld [vmem:[%s1256 + $0x20] sm:$0xff]
        %v1262 = vld [vmem:[%s1256 + $0x28] sm:$0xff]
        %v1263 = vld [vmem:[%s1256 + $0x30] sm:$0xff]
        %v1264 = vld [vmem:[%s1256 + $0x38] sm:$0xff]
        %v1265 = vld [vmem:[%s1256 + $0x40] sm:$0xff]
        %v1266 = vld [vmem:[%s1256 + $0x48] sm:$0xff]
        %v1267 = vld [vmem:[%s1256 + $0x50] sm:$0xff]
        %v1268 = vld [vmem:[%s1256 + $0x58] sm:$0xff]
        %v1269 = vld [vmem:[%s1256 + $0x60] sm:$0xff]
        %v1270 = vld [vmem:[%s1256 + $0x68] sm:$0xff]
        %v1271 = vld [vmem:[%s1256 + $0x70] sm:$0xff]
        %v1272 = vld [vmem:[%s1256 + $0x78] sm:$0xff]
        %1289 = vrot.lane.b32.xlu0 %v600, 127
        %v1290 = vpop.permute.xlu0 %1289
        %1291 = vrot.lane.b32.xlu0 %v603, 127
        %v1292 = vpop.permute.xlu0 %1291
        %1293 = vrot.lane.b32.xlu0 %v606, 127
        %v1294 = vpop.permute.xlu0 %1293
        %1295 = vrot.lane.b32.xlu0 %v609, 127
        %v1296 = vpop.permute.xlu0 %1295
        %1297 = vrot.lane.b32.xlu0 %v612, 127
        %v1298 = vpop.permute.xlu0 %1297
        %1299 = vrot.lane.b32.xlu0 %v615, 127
        %v1300 = vpop.permute.xlu0 %1299
        %1301 = vrot.lane.b32.xlu0 %v618, 127
        %v1302 = vpop.permute.xlu0 %1301
        %1303 = vrot.lane.b32.xlu0 %v621, 127
        %v1304 = vpop.permute.xlu0 %1303
        %1305 = vrot.lane.b32.xlu0 %v624, 127
        %v1306 = vpop.permute.xlu0 %1305
        %1307 = vrot.lane.b32.xlu0 %v627, 127
        %v1308 = vpop.permute.xlu0 %1307
        %1309 = vrot.lane.b32.xlu0 %v630, 127
        %v1310 = vpop.permute.xlu0 %1309
        %1311 = vrot.lane.b32.xlu0 %v633, 127
        %v1312 = vpop.permute.xlu0 %1311
        %1313 = vrot.lane.b32.xlu0 %v636, 127
        %v1314 = vpop.permute.xlu0 %1313
        %1315 = vrot.lane.b32.xlu0 %v639, 127
        %v1316 = vpop.permute.xlu0 %1315
        %1317 = vrot.lane.b32.xlu0 %v642, 127
        %v1318 = vpop.permute.xlu0 %1317
        %1319 = vrot.lane.b32.xlu0 %v645, 127
        %v1320 = vpop.permute.xlu0 %1319
        %1337 = vmatpush.msra.mxu0 %v1320
        %1338 = vmatpush.msra.mxu0 %v1318
        %1339 = vmatpush.msra.mxu0 %v1316
        %1340 = vmatpush.msra.mxu0 %v1314
        %1341 = vmatpush.msra.mxu0 %v1312
        %1342 = vmatpush.msra.mxu0 %v1310
        %1343 = vmatpush.msra.mxu0 %v1308
        %1344 = vmatpush.msra.mxu0 %v1306
        %1345 = vmatpush.msra.mxu0 %v1304
        %1346 = vmatpush.msra.mxu0 %v1302
        %1347 = vmatpush.msra.mxu0 %v1300
        %1348 = vmatpush.msra.mxu0 %v1298
        %1349 = vmatpush.msra.mxu0 %v1296
        %1350 = vmatpush.msra.mxu0 %v1294
        %1351 = vmatpush.msra.mxu0 %v1292
        %1352 = vmatpush.msra.mxu0 %v1290
        %1353 = vmatmul.f32.gmra.mxu0 %v1257
        %v1354 = vpop.f32.mrf.mxu0
        %v1355 = vadd.f32 0.0, %v1354
        %1356 = vmatmul.f32.gmra.mxu0 %v1258
        %v1357 = vpop.f32.mrf.mxu0
        %v1358 = vadd.f32 0.0, %v1357
        %1359 = vmatmul.f32.gmra.mxu0 %v1259
        %v1360 = vpop.f32.mrf.mxu0
        %v1361 = vadd.f32 0.0, %v1360
        %1362 = vmatmul.f32.gmra.mxu0 %v1260
        %v1363 = vpop.f32.mrf.mxu0
        %v1364 = vadd.f32 0.0, %v1363
        %1365 = vmatmul.f32.gmra.mxu0 %v1261
        %v1366 = vpop.f32.mrf.mxu0
        %v1367 = vadd.f32 0.0, %v1366
        %1368 = vmatmul.f32.gmra.mxu0 %v1262
        %v1369 = vpop.f32.mrf.mxu0
        %v1370 = vadd.f32 0.0, %v1369
        %1371 = vmatmul.f32.gmra.mxu0 %v1263
        %v1372 = vpop.f32.mrf.mxu0
        %v1373 = vadd.f32 0.0, %v1372
        %1374 = vmatmul.f32.gmra.mxu0 %v1264
        %v1375 = vpop.f32.mrf.mxu0
        %v1376 = vadd.f32 0.0, %v1375
        %1377 = vmatmul.f32.gmra.mxu0 %v1265
        %v1378 = vpop.f32.mrf.mxu0
        %v1379 = vadd.f32 0.0, %v1378
        %1380 = vmatmul.f32.gmra.mxu0 %v1266
        %v1381 = vpop.f32.mrf.mxu0
        %v1382 = vadd.f32 0.0, %v1381
        %1383 = vmatmul.f32.gmra.mxu0 %v1267
        %v1384 = vpop.f32.mrf.mxu0
        %v1385 = vadd.f32 0.0, %v1384
        %1386 = vmatmul.f32.gmra.mxu0 %v1268
        %v1387 = vpop.f32.mrf.mxu0
        %v1388 = vadd.f32 0.0, %v1387
        %1389 = vmatmul.f32.gmra.mxu0 %v1269
        %v1390 = vpop.f32.mrf.mxu0
        %v1391 = vadd.f32 0.0, %v1390
        %1392 = vmatmul.f32.gmra.mxu0 %v1270
        %v1393 = vpop.f32.mrf.mxu0
        %v1394 = vadd.f32 0.0, %v1393
        %1395 = vmatmul.f32.gmra.mxu0 %v1271
        %v1396 = vpop.f32.mrf.mxu0
        %v1397 = vadd.f32 0.0, %v1396
        %1398 = vmatmul.f32.gmra.mxu0 %v1272
        %v1399 = vpop.f32.mrf.mxu0
        %v1400 = vadd.f32 0.0, %v1399
        %1401 = vdwg.mxu0
        %1402 = vmatpush.msra.mxu0 %v645
        %1403 = vmatpush.msra.mxu0 %v642
        %1404 = vmatpush.msra.mxu0 %v639
        %1405 = vmatpush.msra.mxu0 %v636
        %1406 = vmatpush.msra.mxu0 %v633
        %1407 = vmatpush.msra.mxu0 %v630
        %1408 = vmatpush.msra.mxu0 %v627
        %1409 = vmatpush.msra.mxu0 %v624
        %1410 = vmatpush.msra.mxu0 %v621
        %1411 = vmatpush.msra.mxu0 %v618
        %1412 = vmatpush.msra.mxu0 %v615
        %1413 = vmatpush.msra.mxu0 %v612
        %1414 = vmatpush.msra.mxu0 %v609
        %1415 = vmatpush.msra.mxu0 %v606
        %1416 = vmatpush.msra.mxu0 %v603
        %1417 = vmatpush.msra.mxu0 %v600
        %1418 = vmatmul.f32.gmra.mxu0 %v1240
        %v1419 = vpop.f32.mrf.mxu0
        %v1420 = vadd.f32 %v1355, %v1419
        %1421 = vmatmul.f32.gmra.mxu0 %v1241
        %v1422 = vpop.f32.mrf.mxu0
        %v1423 = vadd.f32 %v1358, %v1422
        %1424 = vmatmul.f32.gmra.mxu0 %v1242
        %v1425 = vpop.f32.mrf.mxu0
        %v1426 = vadd.f32 %v1361, %v1425
        %1427 = vmatmul.f32.gmra.mxu0 %v1243
        %v1428 = vpop.f32.mrf.mxu0
        %v1429 = vadd.f32 %v1364, %v1428
        %1430 = vmatmul.f32.gmra.mxu0 %v1244
        %v1431 = vpop.f32.mrf.mxu0
        %v1432 = vadd.f32 %v1367, %v1431
        %1433 = vmatmul.f32.gmra.mxu0 %v1245
        %v1434 = vpop.f32.mrf.mxu0
        %v1435 = vadd.f32 %v1370, %v1434
        %1436 = vmatmul.f32.gmra.mxu0 %v1246
        %v1437 = vpop.f32.mrf.mxu0
        %v1438 = vadd.f32 %v1373, %v1437
        %1439 = vmatmul.f32.gmra.mxu0 %v1247
        %v1440 = vpop.f32.mrf.mxu0
        %v1441 = vadd.f32 %v1376, %v1440
        %1442 = vmatmul.f32.gmra.mxu0 %v1248
        %v1443 = vpop.f32.mrf.mxu0
        %v1444 = vadd.f32 %v1379, %v1443
        %1445 = vmatmul.f32.gmra.mxu0 %v1249
        %v1446 = vpop.f32.mrf.mxu0
        %v1447 = vadd.f32 %v1382, %v1446
        %1448 = vmatmul.f32.gmra.mxu0 %v1250
        %v1449 = vpop.f32.mrf.mxu0
        %v1450 = vadd.f32 %v1385, %v1449
        %1451 = vmatmul.f32.gmra.mxu0 %v1251
        %v1452 = vpop.f32.mrf.mxu0
        %v1453 = vadd.f32 %v1388, %v1452
        %1454 = vmatmul.f32.gmra.mxu0 %v1252
        %v1455 = vpop.f32.mrf.mxu0
        %v1456 = vadd.f32 %v1391, %v1455
        %1457 = vmatmul.f32.gmra.mxu0 %v1253
        %v1458 = vpop.f32.mrf.mxu0
        %v1459 = vadd.f32 %v1394, %v1458
        %1460 = vmatmul.f32.gmra.mxu0 %v1254
        %v1461 = vpop.f32.mrf.mxu0
        %v1462 = vadd.f32 %v1397, %v1461
        %1463 = vmatmul.f32.gmra.mxu0 %v1255
        %v1464 = vpop.f32.mrf.mxu0
        %v1465 = vadd.f32 %v1400, %v1464
        %1466 = vdwg.mxu0
        %s1467 = scalar_lea.vmem [#allocation5], 256
        %v1468 = vld [vmem:[%s1467] sm:$0xff]
        %v1469 = vld [vmem:[%s1467 + $0x8] sm:$0xff]
        %v1470 = vld [vmem:[%s1467 + $0x10] sm:$0xff]
        %v1471 = vld [vmem:[%s1467 + $0x18] sm:$0xff]
        %v1472 = vld [vmem:[%s1467 + $0x20] sm:$0xff]
        %v1473 = vld [vmem:[%s1467 + $0x28] sm:$0xff]
        %v1474 = vld [vmem:[%s1467 + $0x30] sm:$0xff]
        %v1475 = vld [vmem:[%s1467 + $0x38] sm:$0xff]
        %v1476 = vld [vmem:[%s1467 + $0x40] sm:$0xff]
        %v1477 = vld [vmem:[%s1467 + $0x48] sm:$0xff]
        %v1478 = vld [vmem:[%s1467 + $0x50] sm:$0xff]
        %v1479 = vld [vmem:[%s1467 + $0x58] sm:$0xff]
        %v1480 = vld [vmem:[%s1467 + $0x60] sm:$0xff]
        %v1481 = vld [vmem:[%s1467 + $0x68] sm:$0xff]
        %v1482 = vld [vmem:[%s1467 + $0x70] sm:$0xff]
        %v1483 = vld [vmem:[%s1467 + $0x78] sm:$0xff]
        %1484 = vrot.lane.b32.xlu0 %v600, 126
        %v1485 = vpop.permute.xlu0 %1484
        %1486 = vrot.lane.b32.xlu0 %v603, 126
        %v1487 = vpop.permute.xlu0 %1486
        %1488 = vrot.lane.b32.xlu0 %v606, 126
        %v1489 = vpop.permute.xlu0 %1488
        %1490 = vrot.lane.b32.xlu0 %v609, 126
        %v1491 = vpop.permute.xlu0 %1490
        %1492 = vrot.lane.b32.xlu0 %v612, 126
        %v1493 = vpop.permute.xlu0 %1492
        %1494 = vrot.lane.b32.xlu0 %v615, 126
        %v1495 = vpop.permute.xlu0 %1494
        %1496 = vrot.lane.b32.xlu0 %v618, 126
        %v1497 = vpop.permute.xlu0 %1496
        %1498 = vrot.lane.b32.xlu0 %v621, 126
        %v1499 = vpop.permute.xlu0 %1498
        %1500 = vrot.lane.b32.xlu0 %v624, 126
        %v1501 = vpop.permute.xlu0 %1500
        %1502 = vrot.lane.b32.xlu0 %v627, 126
        %v1503 = vpop.permute.xlu0 %1502
        %1504 = vrot.lane.b32.xlu0 %v630, 126
        %v1505 = vpop.permute.xlu0 %1504
        %1506 = vrot.lane.b32.xlu0 %v633, 126
        %v1507 = vpop.permute.xlu0 %1506
        %1508 = vrot.lane.b32.xlu0 %v636, 126
        %v1509 = vpop.permute.xlu0 %1508
        %1510 = vrot.lane.b32.xlu0 %v639, 126
        %v1511 = vpop.permute.xlu0 %1510
        %1512 = vrot.lane.b32.xlu0 %v642, 126
        %v1513 = vpop.permute.xlu0 %1512
        %1514 = vrot.lane.b32.xlu0 %v645, 126
        %v1515 = vpop.permute.xlu0 %1514
        %1532 = vmatpush.msra.mxu0 %v1515
        %1533 = vmatpush.msra.mxu0 %v1513
        %1534 = vmatpush.msra.mxu0 %v1511
        %1535 = vmatpush.msra.mxu0 %v1509
        %1536 = vmatpush.msra.mxu0 %v1507
        %1537 = vmatpush.msra.mxu0 %v1505
        %1538 = vmatpush.msra.mxu0 %v1503
        %1539 = vmatpush.msra.mxu0 %v1501
        %1540 = vmatpush.msra.mxu0 %v1499
        %1541 = vmatpush.msra.mxu0 %v1497
        %1542 = vmatpush.msra.mxu0 %v1495
        %1543 = vmatpush.msra.mxu0 %v1493
        %1544 = vmatpush.msra.mxu0 %v1491
        %1545 = vmatpush.msra.mxu0 %v1489
        %1546 = vmatpush.msra.mxu0 %v1487
        %1547 = vmatpush.msra.mxu0 %v1485
        %1548 = vmatmul.f32.gmra.mxu0 %v1468
        %v1549 = vpop.f32.mrf.mxu0
        %v1550 = vadd.f32 0.0, %v1549
        %1551 = vmatmul.f32.gmra.mxu0 %v1469
        %v1552 = vpop.f32.mrf.mxu0
        %v1553 = vadd.f32 0.0, %v1552
        %1554 = vmatmul.f32.gmra.mxu0 %v1470
        %v1555 = vpop.f32.mrf.mxu0
        %v1556 = vadd.f32 0.0, %v1555
        %1557 = vmatmul.f32.gmra.mxu0 %v1471
        %v1558 = vpop.f32.mrf.mxu0
        %v1559 = vadd.f32 0.0, %v1558
        %1560 = vmatmul.f32.gmra.mxu0 %v1472
        %v1561 = vpop.f32.mrf.mxu0
        %v1562 = vadd.f32 0.0, %v1561
        %1563 = vmatmul.f32.gmra.mxu0 %v1473
        %v1564 = vpop.f32.mrf.mxu0
        %v1565 = vadd.f32 0.0, %v1564
        %1566 = vmatmul.f32.gmra.mxu0 %v1474
        %v1567 = vpop.f32.mrf.mxu0
        %v1568 = vadd.f32 0.0, %v1567
        %1569 = vmatmul.f32.gmra.mxu0 %v1475
        %v1570 = vpop.f32.mrf.mxu0
        %v1571 = vadd.f32 0.0, %v1570
        %1572 = vmatmul.f32.gmra.mxu0 %v1476
        %v1573 = vpop.f32.mrf.mxu0
        %v1574 = vadd.f32 0.0, %v1573
        %1575 = vmatmul.f32.gmra.mxu0 %v1477
        %v1576 = vpop.f32.mrf.mxu0
        %v1577 = vadd.f32 0.0, %v1576
        %1578 = vmatmul.f32.gmra.mxu0 %v1478
        %v1579 = vpop.f32.mrf.mxu0
        %v1580 = vadd.f32 0.0, %v1579
        %1581 = vmatmul.f32.gmra.mxu0 %v1479
        %v1582 = vpop.f32.mrf.mxu0
        %v1583 = vadd.f32 0.0, %v1582
        %1584 = vmatmul.f32.gmra.mxu0 %v1480
        %v1585 = vpop.f32.mrf.mxu0
        %v1586 = vadd.f32 0.0, %v1585
        %1587 = vmatmul.f32.gmra.mxu0 %v1481
        %v1588 = vpop.f32.mrf.mxu0
        %v1589 = vadd.f32 0.0, %v1588
        %1590 = vmatmul.f32.gmra.mxu0 %v1482
        %v1591 = vpop.f32.mrf.mxu0
        %v1592 = vadd.f32 0.0, %v1591
        %1593 = vmatmul.f32.gmra.mxu0 %v1483
        %v1594 = vpop.f32.mrf.mxu0
        %v1595 = vadd.f32 0.0, %v1594
        %1596 = vdwg.mxu0
        %v1597 = vadd.f32 %v1420, %v1550
        %v1598 = vadd.f32 %v1423, %v1553
        %v1599 = vadd.f32 %v1426, %v1556
        %v1600 = vadd.f32 %v1429, %v1559
        %v1601 = vadd.f32 %v1432, %v1562
        %v1602 = vadd.f32 %v1435, %v1565
        %v1603 = vadd.f32 %v1438, %v1568
        %v1604 = vadd.f32 %v1441, %v1571
        %v1605 = vadd.f32 %v1444, %v1574
        %v1606 = vadd.f32 %v1447, %v1577
        %v1607 = vadd.f32 %v1450, %v1580
        %v1608 = vadd.f32 %v1453, %v1583
        %v1609 = vadd.f32 %v1456, %v1586
        %v1610 = vadd.f32 %v1459, %v1589
        %v1611 = vadd.f32 %v1462, %v1592
        %v1612 = vadd.f32 %v1465, %v1595
        %s1613 = scalar_lea.vmem [#allocation5], 384
        %v1614 = vld [vmem:[%s1613] sm:$0xff]
        %v1615 = vld [vmem:[%s1613 + $0x8] sm:$0xff]
        %v1616 = vld [vmem:[%s1613 + $0x10] sm:$0xff]
        %v1617 = vld [vmem:[%s1613 + $0x18] sm:$0xff]
        %v1618 = vld [vmem:[%s1613 + $0x20] sm:$0xff]
        %v1619 = vld [vmem:[%s1613 + $0x28] sm:$0xff]
        %v1620 = vld [vmem:[%s1613 + $0x30] sm:$0xff]
        %v1621 = vld [vmem:[%s1613 + $0x38] sm:$0xff]
        %v1622 = vld [vmem:[%s1613 + $0x40] sm:$0xff]
        %v1623 = vld [vmem:[%s1613 + $0x48] sm:$0xff]
        %v1624 = vld [vmem:[%s1613 + $0x50] sm:$0xff]
        %v1625 = vld [vmem:[%s1613 + $0x58] sm:$0xff]
        %v1626 = vld [vmem:[%s1613 + $0x60] sm:$0xff]
        %v1627 = vld [vmem:[%s1613 + $0x68] sm:$0xff]
        %v1628 = vld [vmem:[%s1613 + $0x70] sm:$0xff]
        %v1629 = vld [vmem:[%s1613 + $0x78] sm:$0xff]
        %1630 = vrot.lane.b32.xlu0 %v600, 125
        %v1631 = vpop.permute.xlu0 %1630
        %1632 = vrot.lane.b32.xlu0 %v603, 125
        %v1633 = vpop.permute.xlu0 %1632
        %1634 = vrot.lane.b32.xlu0 %v606, 125
        %v1635 = vpop.permute.xlu0 %1634
        %1636 = vrot.lane.b32.xlu0 %v609, 125
        %v1637 = vpop.permute.xlu0 %1636
        %1638 = vrot.lane.b32.xlu0 %v612, 125
        %v1639 = vpop.permute.xlu0 %1638
        %1640 = vrot.lane.b32.xlu0 %v615, 125
        %v1641 = vpop.permute.xlu0 %1640
        %1642 = vrot.lane.b32.xlu0 %v618, 125
        %v1643 = vpop.permute.xlu0 %1642
        %1644 = vrot.lane.b32.xlu0 %v621, 125
        %v1645 = vpop.permute.xlu0 %1644
        %1646 = vrot.lane.b32.xlu0 %v624, 125
        %v1647 = vpop.permute.xlu0 %1646
        %1648 = vrot.lane.b32.xlu0 %v627, 125
        %v1649 = vpop.permute.xlu0 %1648
        %1650 = vrot.lane.b32.xlu0 %v630, 125
        %v1651 = vpop.permute.xlu0 %1650
        %1652 = vrot.lane.b32.xlu0 %v633, 125
        %v1653 = vpop.permute.xlu0 %1652
        %1654 = vrot.lane.b32.xlu0 %v636, 125
        %v1655 = vpop.permute.xlu0 %1654
        %1656 = vrot.lane.b32.xlu0 %v639, 125
        %v1657 = vpop.permute.xlu0 %1656
        %1658 = vrot.lane.b32.xlu0 %v642, 125
        %v1659 = vpop.permute.xlu0 %1658
        %1660 = vrot.lane.b32.xlu0 %v645, 125
        %v1661 = vpop.permute.xlu0 %1660
        %1678 = vmatpush.msra.mxu0 %v1661
        %1679 = vmatpush.msra.mxu0 %v1659
        %1680 = vmatpush.msra.mxu0 %v1657
        %1681 = vmatpush.msra.mxu0 %v1655
        %1682 = vmatpush.msra.mxu0 %v1653
        %1683 = vmatpush.msra.mxu0 %v1651
        %1684 = vmatpush.msra.mxu0 %v1649
        %1685 = vmatpush.msra.mxu0 %v1647
        %1686 = vmatpush.msra.mxu0 %v1645
        %1687 = vmatpush.msra.mxu0 %v1643
        %1688 = vmatpush.msra.mxu0 %v1641
        %1689 = vmatpush.msra.mxu0 %v1639
        %1690 = vmatpush.msra.mxu0 %v1637
        %1691 = vmatpush.msra.mxu0 %v1635
        %1692 = vmatpush.msra.mxu0 %v1633
        %1693 = vmatpush.msra.mxu0 %v1631
        %1694 = vmatmul.f32.gmra.mxu0 %v1614
        %v1695 = vpop.f32.mrf.mxu0
        %v1696 = vadd.f32 0.0, %v1695
        %1697 = vmatmul.f32.gmra.mxu0 %v1615
        %v1698 = vpop.f32.mrf.mxu0
        %v1699 = vadd.f32 0.0, %v1698
        %1700 = vmatmul.f32.gmra.mxu0 %v1616
        %v1701 = vpop.f32.mrf.mxu0
        %v1702 = vadd.f32 0.0, %v1701
        %1703 = vmatmul.f32.gmra.mxu0 %v1617
        %v1704 = vpop.f32.mrf.mxu0
        %v1705 = vadd.f32 0.0, %v1704
        %1706 = vmatmul.f32.gmra.mxu0 %v1618
        %v1707 = vpop.f32.mrf.mxu0
        %v1708 = vadd.f32 0.0, %v1707
        %1709 = vmatmul.f32.gmra.mxu0 %v1619
        %v1710 = vpop.f32.mrf.mxu0
        %v1711 = vadd.f32 0.0, %v1710
        %1712 = vmatmul.f32.gmra.mxu0 %v1620
        %v1713 = vpop.f32.mrf.mxu0
        %v1714 = vadd.f32 0.0, %v1713
        %1715 = vmatmul.f32.gmra.mxu0 %v1621
        %v1716 = vpop.f32.mrf.mxu0
        %v1717 = vadd.f32 0.0, %v1716
        %1718 = vmatmul.f32.gmra.mxu0 %v1622
        %v1719 = vpop.f32.mrf.mxu0
        %v1720 = vadd.f32 0.0, %v1719
        %1721 = vmatmul.f32.gmra.mxu0 %v1623
        %v1722 = vpop.f32.mrf.mxu0
        %v1723 = vadd.f32 0.0, %v1722
        %1724 = vmatmul.f32.gmra.mxu0 %v1624
        %v1725 = vpop.f32.mrf.mxu0
        %v1726 = vadd.f32 0.0, %v1725
        %1727 = vmatmul.f32.gmra.mxu0 %v1625
        %v1728 = vpop.f32.mrf.mxu0
        %v1729 = vadd.f32 0.0, %v1728
        %1730 = vmatmul.f32.gmra.mxu0 %v1626
        %v1731 = vpop.f32.mrf.mxu0
        %v1732 = vadd.f32 0.0, %v1731
        %1733 = vmatmul.f32.gmra.mxu0 %v1627
        %v1734 = vpop.f32.mrf.mxu0
        %v1735 = vadd.f32 0.0, %v1734
        %1736 = vmatmul.f32.gmra.mxu0 %v1628
        %v1737 = vpop.f32.mrf.mxu0
        %v1738 = vadd.f32 0.0, %v1737
        %1739 = vmatmul.f32.gmra.mxu0 %v1629
        %v1740 = vpop.f32.mrf.mxu0
        %v1741 = vadd.f32 0.0, %v1740
        %1742 = vdwg.mxu0
        %v1743 = vadd.f32 %v1597, %v1696
        %v1744 = vadd.f32 %v1598, %v1699
        %v1745 = vadd.f32 %v1599, %v1702
        %v1746 = vadd.f32 %v1600, %v1705
        %v1747 = vadd.f32 %v1601, %v1708
        %v1748 = vadd.f32 %v1602, %v1711
        %v1749 = vadd.f32 %v1603, %v1714
        %v1750 = vadd.f32 %v1604, %v1717
        %v1751 = vadd.f32 %v1605, %v1720
        %v1752 = vadd.f32 %v1606, %v1723
        %v1753 = vadd.f32 %v1607, %v1726
        %v1754 = vadd.f32 %v1608, %v1729
        %v1755 = vadd.f32 %v1609, %v1732
        %v1756 = vadd.f32 %v1610, %v1735
        %v1757 = vadd.f32 %v1611, %v1738
        %v1758 = vadd.f32 %v1612, %v1741
        %s1759 = scalar_lea.vmem [#allocation5], 512
        %v1760 = vld [vmem:[%s1759] sm:$0xff]
        %v1761 = vld [vmem:[%s1759 + $0x8] sm:$0xff]
        %v1762 = vld [vmem:[%s1759 + $0x10] sm:$0xff]
        %v1763 = vld [vmem:[%s1759 + $0x18] sm:$0xff]
        %v1764 = vld [vmem:[%s1759 + $0x20] sm:$0xff]
        %v1765 = vld [vmem:[%s1759 + $0x28] sm:$0xff]
        %v1766 = vld [vmem:[%s1759 + $0x30] sm:$0xff]
        %v1767 = vld [vmem:[%s1759 + $0x38] sm:$0xff]
        %v1768 = vld [vmem:[%s1759 + $0x40] sm:$0xff]
        %v1769 = vld [vmem:[%s1759 + $0x48] sm:$0xff]
        %v1770 = vld [vmem:[%s1759 + $0x50] sm:$0xff]
        %v1771 = vld [vmem:[%s1759 + $0x58] sm:$0xff]
        %v1772 = vld [vmem:[%s1759 + $0x60] sm:$0xff]
        %v1773 = vld [vmem:[%s1759 + $0x68] sm:$0xff]
        %v1774 = vld [vmem:[%s1759 + $0x70] sm:$0xff]
        %v1775 = vld [vmem:[%s1759 + $0x78] sm:$0xff]
        %1776 = vrot.lane.b32.xlu0 %v600, 124
        %v1777 = vpop.permute.xlu0 %1776
        %1778 = vrot.lane.b32.xlu0 %v603, 124
        %v1779 = vpop.permute.xlu0 %1778
        %1780 = vrot.lane.b32.xlu0 %v606, 124
        %v1781 = vpop.permute.xlu0 %1780
        %1782 = vrot.lane.b32.xlu0 %v609, 124
        %v1783 = vpop.permute.xlu0 %1782
        %1784 = vrot.lane.b32.xlu0 %v612, 124
        %v1785 = vpop.permute.xlu0 %1784
        %1786 = vrot.lane.b32.xlu0 %v615, 124
        %v1787 = vpop.permute.xlu0 %1786
        %1788 = vrot.lane.b32.xlu0 %v618, 124
        %v1789 = vpop.permute.xlu0 %1788
        %1790 = vrot.lane.b32.xlu0 %v621, 124
        %v1791 = vpop.permute.xlu0 %1790
        %1792 = vrot.lane.b32.xlu0 %v624, 124
        %v1793 = vpop.permute.xlu0 %1792
        %1794 = vrot.lane.b32.xlu0 %v627, 124
        %v1795 = vpop.permute.xlu0 %1794
        %1796 = vrot.lane.b32.xlu0 %v630, 124
        %v1797 = vpop.permute.xlu0 %1796
        %1798 = vrot.lane.b32.xlu0 %v633, 124
        %v1799 = vpop.permute.xlu0 %1798
        %1800 = vrot.lane.b32.xlu0 %v636, 124
        %v1801 = vpop.permute.xlu0 %1800
        %1802 = vrot.lane.b32.xlu0 %v639, 124
        %v1803 = vpop.permute.xlu0 %1802
        %1804 = vrot.lane.b32.xlu0 %v642, 124
        %v1805 = vpop.permute.xlu0 %1804
        %1806 = vrot.lane.b32.xlu0 %v645, 124
        %v1807 = vpop.permute.xlu0 %1806
        %1824 = vmatpush.msra.mxu0 %v1807
        %1825 = vmatpush.msra.mxu0 %v1805
        %1826 = vmatpush.msra.mxu0 %v1803
        %1827 = vmatpush.msra.mxu0 %v1801
        %1828 = vmatpush.msra.mxu0 %v1799
        %1829 = vmatpush.msra.mxu0 %v1797
        %1830 = vmatpush.msra.mxu0 %v1795
        %1831 = vmatpush.msra.mxu0 %v1793
        %1832 = vmatpush.msra.mxu0 %v1791
        %1833 = vmatpush.msra.mxu0 %v1789
        %1834 = vmatpush.msra.mxu0 %v1787
        %1835 = vmatpush.msra.mxu0 %v1785
        %1836 = vmatpush.msra.mxu0 %v1783
        %1837 = vmatpush.msra.mxu0 %v1781
        %1838 = vmatpush.msra.mxu0 %v1779
        %1839 = vmatpush.msra.mxu0 %v1777
        %1840 = vmatmul.f32.gmra.mxu0 %v1760
        %v1841 = vpop.f32.mrf.mxu0
        %v1842 = vadd.f32 0.0, %v1841
        %1843 = vmatmul.f32.gmra.mxu0 %v1761
        %v1844 = vpop.f32.mrf.mxu0
        %v1845 = vadd.f32 0.0, %v1844
        %1846 = vmatmul.f32.gmra.mxu0 %v1762
        %v1847 = vpop.f32.mrf.mxu0
        %v1848 = vadd.f32 0.0, %v1847
        %1849 = vmatmul.f32.gmra.mxu0 %v1763
        %v1850 = vpop.f32.mrf.mxu0
        %v1851 = vadd.f32 0.0, %v1850
        %1852 = vmatmul.f32.gmra.mxu0 %v1764
        %v1853 = vpop.f32.mrf.mxu0
        %v1854 = vadd.f32 0.0, %v1853
        %1855 = vmatmul.f32.gmra.mxu0 %v1765
        %v1856 = vpop.f32.mrf.mxu0
        %v1857 = vadd.f32 0.0, %v1856
        %1858 = vmatmul.f32.gmra.mxu0 %v1766
        %v1859 = vpop.f32.mrf.mxu0
        %v1860 = vadd.f32 0.0, %v1859
        %1861 = vmatmul.f32.gmra.mxu0 %v1767
        %v1862 = vpop.f32.mrf.mxu0
        %v1863 = vadd.f32 0.0, %v1862
        %1864 = vmatmul.f32.gmra.mxu0 %v1768
        %v1865 = vpop.f32.mrf.mxu0
        %v1866 = vadd.f32 0.0, %v1865
        %1867 = vmatmul.f32.gmra.mxu0 %v1769
        %v1868 = vpop.f32.mrf.mxu0
        %v1869 = vadd.f32 0.0, %v1868
        %1870 = vmatmul.f32.gmra.mxu0 %v1770
        %v1871 = vpop.f32.mrf.mxu0
        %v1872 = vadd.f32 0.0, %v1871
        %1873 = vmatmul.f32.gmra.mxu0 %v1771
        %v1874 = vpop.f32.mrf.mxu0
        %v1875 = vadd.f32 0.0, %v1874
        %1876 = vmatmul.f32.gmra.mxu0 %v1772
        %v1877 = vpop.f32.mrf.mxu0
        %v1878 = vadd.f32 0.0, %v1877
        %1879 = vmatmul.f32.gmra.mxu0 %v1773
        %v1880 = vpop.f32.mrf.mxu0
        %v1881 = vadd.f32 0.0, %v1880
        %1882 = vmatmul.f32.gmra.mxu0 %v1774
        %v1883 = vpop.f32.mrf.mxu0
        %v1884 = vadd.f32 0.0, %v1883
        %1885 = vmatmul.f32.gmra.mxu0 %v1775
        %v1886 = vpop.f32.mrf.mxu0
        %v1887 = vadd.f32 0.0, %v1886
        %1888 = vdwg.mxu0
        %v1889 = vadd.f32 %v1743, %v1842
        %v1890 = vadd.f32 %v1744, %v1845
        %v1891 = vadd.f32 %v1745, %v1848
        %v1892 = vadd.f32 %v1746, %v1851
        %v1893 = vadd.f32 %v1747, %v1854
        %v1894 = vadd.f32 %v1748, %v1857
        %v1895 = vadd.f32 %v1749, %v1860
        %v1896 = vadd.f32 %v1750, %v1863
        %v1897 = vadd.f32 %v1751, %v1866
        %v1898 = vadd.f32 %v1752, %v1869
        %v1899 = vadd.f32 %v1753, %v1872
        %v1900 = vadd.f32 %v1754, %v1875
        %v1901 = vadd.f32 %v1755, %v1878
        %v1902 = vadd.f32 %v1756, %v1881
        %v1903 = vadd.f32 %v1757, %v1884
        %v1904 = vadd.f32 %v1758, %v1887
        %s1905 = scalar_lea.vmem [#allocation5], 640
        %v1906 = vld [vmem:[%s1905] sm:$0xff]
        %v1907 = vld [vmem:[%s1905 + $0x8] sm:$0xff]
        %v1908 = vld [vmem:[%s1905 + $0x10] sm:$0xff]
        %v1909 = vld [vmem:[%s1905 + $0x18] sm:$0xff]
        %v1910 = vld [vmem:[%s1905 + $0x20] sm:$0xff]
        %v1911 = vld [vmem:[%s1905 + $0x28] sm:$0xff]
        %v1912 = vld [vmem:[%s1905 + $0x30] sm:$0xff]
        %v1913 = vld [vmem:[%s1905 + $0x38] sm:$0xff]
        %v1914 = vld [vmem:[%s1905 + $0x40] sm:$0xff]
        %v1915 = vld [vmem:[%s1905 + $0x48] sm:$0xff]
        %v1916 = vld [vmem:[%s1905 + $0x50] sm:$0xff]
        %v1917 = vld [vmem:[%s1905 + $0x58] sm:$0xff]
        %v1918 = vld [vmem:[%s1905 + $0x60] sm:$0xff]
        %v1919 = vld [vmem:[%s1905 + $0x68] sm:$0xff]
        %v1920 = vld [vmem:[%s1905 + $0x70] sm:$0xff]
        %v1921 = vld [vmem:[%s1905 + $0x78] sm:$0xff]
        %1922 = vrot.lane.b32.xlu0 %v600, 123
        %v1923 = vpop.permute.xlu0 %1922
        %1924 = vrot.lane.b32.xlu0 %v603, 123
        %v1925 = vpop.permute.xlu0 %1924
        %1926 = vrot.lane.b32.xlu0 %v606, 123
        %v1927 = vpop.permute.xlu0 %1926
        %1928 = vrot.lane.b32.xlu0 %v609, 123
        %v1929 = vpop.permute.xlu0 %1928
        %1930 = vrot.lane.b32.xlu0 %v612, 123
        %v1931 = vpop.permute.xlu0 %1930
        %1932 = vrot.lane.b32.xlu0 %v615, 123
        %v1933 = vpop.permute.xlu0 %1932
        %1934 = vrot.lane.b32.xlu0 %v618, 123
        %v1935 = vpop.permute.xlu0 %1934
        %1936 = vrot.lane.b32.xlu0 %v621, 123
        %v1937 = vpop.permute.xlu0 %1936
        %1938 = vrot.lane.b32.xlu0 %v624, 123
        %v1939 = vpop.permute.xlu0 %1938
        %1940 = vrot.lane.b32.xlu0 %v627, 123
        %v1941 = vpop.permute.xlu0 %1940
        %1942 = vrot.lane.b32.xlu0 %v630, 123
        %v1943 = vpop.permute.xlu0 %1942
        %1944 = vrot.lane.b32.xlu0 %v633, 123
        %v1945 = vpop.permute.xlu0 %1944
        %1946 = vrot.lane.b32.xlu0 %v636, 123
        %v1947 = vpop.permute.xlu0 %1946
        %1948 = vrot.lane.b32.xlu0 %v639, 123
        %v1949 = vpop.permute.xlu0 %1948
        %1950 = vrot.lane.b32.xlu0 %v642, 123
        %v1951 = vpop.permute.xlu0 %1950
        %1952 = vrot.lane.b32.xlu0 %v645, 123
        %v1953 = vpop.permute.xlu0 %1952
        %1970 = vmatpush.msra.mxu0 %v1953
        %1971 = vmatpush.msra.mxu0 %v1951
        %1972 = vmatpush.msra.mxu0 %v1949
        %1973 = vmatpush.msra.mxu0 %v1947
        %1974 = vmatpush.msra.mxu0 %v1945
        %1975 = vmatpush.msra.mxu0 %v1943
        %1976 = vmatpush.msra.mxu0 %v1941
        %1977 = vmatpush.msra.mxu0 %v1939
        %1978 = vmatpush.msra.mxu0 %v1937
        %1979 = vmatpush.msra.mxu0 %v1935
        %1980 = vmatpush.msra.mxu0 %v1933
        %1981 = vmatpush.msra.mxu0 %v1931
        %1982 = vmatpush.msra.mxu0 %v1929
        %1983 = vmatpush.msra.mxu0 %v1927
        %1984 = vmatpush.msra.mxu0 %v1925
        %1985 = vmatpush.msra.mxu0 %v1923
        %1986 = vmatmul.f32.gmra.mxu0 %v1906
        %v1987 = vpop.f32.mrf.mxu0
        %v1988 = vadd.f32 0.0, %v1987
        %1989 = vmatmul.f32.gmra.mxu0 %v1907
        %v1990 = vpop.f32.mrf.mxu0
        %v1991 = vadd.f32 0.0, %v1990
        %1992 = vmatmul.f32.gmra.mxu0 %v1908
        %v1993 = vpop.f32.mrf.mxu0
        %v1994 = vadd.f32 0.0, %v1993
        %1995 = vmatmul.f32.gmra.mxu0 %v1909
        %v1996 = vpop.f32.mrf.mxu0
        %v1997 = vadd.f32 0.0, %v1996
        %1998 = vmatmul.f32.gmra.mxu0 %v1910
        %v1999 = vpop.f32.mrf.mxu0
        %v2000 = vadd.f32 0.0, %v1999
        %2001 = vmatmul.f32.gmra.mxu0 %v1911
        %v2002 = vpop.f32.mrf.mxu0
        %v2003 = vadd.f32 0.0, %v2002
        %2004 = vmatmul.f32.gmra.mxu0 %v1912
        %v2005 = vpop.f32.mrf.mxu0
        %v2006 = vadd.f32 0.0, %v2005
        %2007 = vmatmul.f32.gmra.mxu0 %v1913
        %v2008 = vpop.f32.mrf.mxu0
        %v2009 = vadd.f32 0.0, %v2008
        %2010 = vmatmul.f32.gmra.mxu0 %v1914
        %v2011 = vpop.f32.mrf.mxu0
        %v2012 = vadd.f32 0.0, %v2011
        %2013 = vmatmul.f32.gmra.mxu0 %v1915
        %v2014 = vpop.f32.mrf.mxu0
        %v2015 = vadd.f32 0.0, %v2014
        %2016 = vmatmul.f32.gmra.mxu0 %v1916
        %v2017 = vpop.f32.mrf.mxu0
        %v2018 = vadd.f32 0.0, %v2017
        %2019 = vmatmul.f32.gmra.mxu0 %v1917
        %v2020 = vpop.f32.mrf.mxu0
        %v2021 = vadd.f32 0.0, %v2020
        %2022 = vmatmul.f32.gmra.mxu0 %v1918
        %v2023 = vpop.f32.mrf.mxu0
        %v2024 = vadd.f32 0.0, %v2023
        %2025 = vmatmul.f32.gmra.mxu0 %v1919
        %v2026 = vpop.f32.mrf.mxu0
        %v2027 = vadd.f32 0.0, %v2026
        %2028 = vmatmul.f32.gmra.mxu0 %v1920
        %v2029 = vpop.f32.mrf.mxu0
        %v2030 = vadd.f32 0.0, %v2029
        %2031 = vmatmul.f32.gmra.mxu0 %v1921
        %v2032 = vpop.f32.mrf.mxu0
        %v2033 = vadd.f32 0.0, %v2032
        %2034 = vdwg.mxu0
        %v2035 = vadd.f32 %v1889, %v1988
        %v2036 = vadd.f32 %v1890, %v1991
        %v2037 = vadd.f32 %v1891, %v1994
        %v2038 = vadd.f32 %v1892, %v1997
        %v2039 = vadd.f32 %v1893, %v2000
        %v2040 = vadd.f32 %v1894, %v2003
        %v2041 = vadd.f32 %v1895, %v2006
        %v2042 = vadd.f32 %v1896, %v2009
        %v2043 = vadd.f32 %v1897, %v2012
        %v2044 = vadd.f32 %v1898, %v2015
        %v2045 = vadd.f32 %v1899, %v2018
        %v2046 = vadd.f32 %v1900, %v2021
        %v2047 = vadd.f32 %v1901, %v2024
        %v2048 = vadd.f32 %v1902, %v2027
        %v2049 = vadd.f32 %v1903, %v2030
        %v2050 = vadd.f32 %v1904, %v2033
        %s2051 = scalar_lea.vmem [#allocation5], 768
        %v2052 = vld [vmem:[%s2051] sm:$0xff]
        %v2053 = vld [vmem:[%s2051 + $0x8] sm:$0xff]
        %v2054 = vld [vmem:[%s2051 + $0x10] sm:$0xff]
        %v2055 = vld [vmem:[%s2051 + $0x18] sm:$0xff]
        %v2056 = vld [vmem:[%s2051 + $0x20] sm:$0xff]
        %v2057 = vld [vmem:[%s2051 + $0x28] sm:$0xff]
        %v2058 = vld [vmem:[%s2051 + $0x30] sm:$0xff]
        %v2059 = vld [vmem:[%s2051 + $0x38] sm:$0xff]
        %v2060 = vld [vmem:[%s2051 + $0x40] sm:$0xff]
        %v2061 = vld [vmem:[%s2051 + $0x48] sm:$0xff]
        %v2062 = vld [vmem:[%s2051 + $0x50] sm:$0xff]
        %v2063 = vld [vmem:[%s2051 + $0x58] sm:$0xff]
        %v2064 = vld [vmem:[%s2051 + $0x60] sm:$0xff]
        %v2065 = vld [vmem:[%s2051 + $0x68] sm:$0xff]
        %v2066 = vld [vmem:[%s2051 + $0x70] sm:$0xff]
        %v2067 = vld [vmem:[%s2051 + $0x78] sm:$0xff]
        %2068 = vrot.lane.b32.xlu0 %v600, 122
        %v2069 = vpop.permute.xlu0 %2068
        %2070 = vrot.lane.b32.xlu0 %v603, 122
        %v2071 = vpop.permute.xlu0 %2070
        %2072 = vrot.lane.b32.xlu0 %v606, 122
        %v2073 = vpop.permute.xlu0 %2072
        %2074 = vrot.lane.b32.xlu0 %v609, 122
        %v2075 = vpop.permute.xlu0 %2074
        %2076 = vrot.lane.b32.xlu0 %v612, 122
        %v2077 = vpop.permute.xlu0 %2076
        %2078 = vrot.lane.b32.xlu0 %v615, 122
        %v2079 = vpop.permute.xlu0 %2078
        %2080 = vrot.lane.b32.xlu0 %v618, 122
        %v2081 = vpop.permute.xlu0 %2080
        %2082 = vrot.lane.b32.xlu0 %v621, 122
        %v2083 = vpop.permute.xlu0 %2082
        %2084 = vrot.lane.b32.xlu0 %v624, 122
        %v2085 = vpop.permute.xlu0 %2084
        %2086 = vrot.lane.b32.xlu0 %v627, 122
        %v2087 = vpop.permute.xlu0 %2086
        %2088 = vrot.lane.b32.xlu0 %v630, 122
        %v2089 = vpop.permute.xlu0 %2088
        %2090 = vrot.lane.b32.xlu0 %v633, 122
        %v2091 = vpop.permute.xlu0 %2090
        %2092 = vrot.lane.b32.xlu0 %v636, 122
        %v2093 = vpop.permute.xlu0 %2092
        %2094 = vrot.lane.b32.xlu0 %v639, 122
        %v2095 = vpop.permute.xlu0 %2094
        %2096 = vrot.lane.b32.xlu0 %v642, 122
        %v2097 = vpop.permute.xlu0 %2096
        %2098 = vrot.lane.b32.xlu0 %v645, 122
        %v2099 = vpop.permute.xlu0 %2098
        %2116 = vmatpush.msra.mxu0 %v2099
        %2117 = vmatpush.msra.mxu0 %v2097
        %2118 = vmatpush.msra.mxu0 %v2095
        %2119 = vmatpush.msra.mxu0 %v2093
        %2120 = vmatpush.msra.mxu0 %v2091
        %2121 = vmatpush.msra.mxu0 %v2089
        %2122 = vmatpush.msra.mxu0 %v2087
        %2123 = vmatpush.msra.mxu0 %v2085
        %2124 = vmatpush.msra.mxu0 %v2083
        %2125 = vmatpush.msra.mxu0 %v2081
        %2126 = vmatpush.msra.mxu0 %v2079
        %2127 = vmatpush.msra.mxu0 %v2077
        %2128 = vmatpush.msra.mxu0 %v2075
        %2129 = vmatpush.msra.mxu0 %v2073
        %2130 = vmatpush.msra.mxu0 %v2071
        %2131 = vmatpush.msra.mxu0 %v2069
        %2132 = vmatmul.f32.gmra.mxu0 %v2052
        %v2133 = vpop.f32.mrf.mxu0
        %v2134 = vadd.f32 0.0, %v2133
        %2135 = vmatmul.f32.gmra.mxu0 %v2053
        %v2136 = vpop.f32.mrf.mxu0
        %v2137 = vadd.f32 0.0, %v2136
        %2138 = vmatmul.f32.gmra.mxu0 %v2054
        %v2139 = vpop.f32.mrf.mxu0
        %v2140 = vadd.f32 0.0, %v2139
        %2141 = vmatmul.f32.gmra.mxu0 %v2055
        %v2142 = vpop.f32.mrf.mxu0
        %v2143 = vadd.f32 0.0, %v2142
        %2144 = vmatmul.f32.gmra.mxu0 %v2056
        %v2145 = vpop.f32.mrf.mxu0
        %v2146 = vadd.f32 0.0, %v2145
        %2147 = vmatmul.f32.gmra.mxu0 %v2057
        %v2148 = vpop.f32.mrf.mxu0
        %v2149 = vadd.f32 0.0, %v2148
        %2150 = vmatmul.f32.gmra.mxu0 %v2058
        %v2151 = vpop.f32.mrf.mxu0
        %v2152 = vadd.f32 0.0, %v2151
        %2153 = vmatmul.f32.gmra.mxu0 %v2059
        %v2154 = vpop.f32.mrf.mxu0
        %v2155 = vadd.f32 0.0, %v2154
        %2156 = vmatmul.f32.gmra.mxu0 %v2060
        %v2157 = vpop.f32.mrf.mxu0
        %v2158 = vadd.f32 0.0, %v2157
        %2159 = vmatmul.f32.gmra.mxu0 %v2061
        %v2160 = vpop.f32.mrf.mxu0
        %v2161 = vadd.f32 0.0, %v2160
        %2162 = vmatmul.f32.gmra.mxu0 %v2062
        %v2163 = vpop.f32.mrf.mxu0
        %v2164 = vadd.f32 0.0, %v2163
        %2165 = vmatmul.f32.gmra.mxu0 %v2063
        %v2166 = vpop.f32.mrf.mxu0
        %v2167 = vadd.f32 0.0, %v2166
        %2168 = vmatmul.f32.gmra.mxu0 %v2064
        %v2169 = vpop.f32.mrf.mxu0
        %v2170 = vadd.f32 0.0, %v2169
        %2171 = vmatmul.f32.gmra.mxu0 %v2065
        %v2172 = vpop.f32.mrf.mxu0
        %v2173 = vadd.f32 0.0, %v2172
        %2174 = vmatmul.f32.gmra.mxu0 %v2066
        %v2175 = vpop.f32.mrf.mxu0
        %v2176 = vadd.f32 0.0, %v2175
        %2177 = vmatmul.f32.gmra.mxu0 %v2067
        %v2178 = vpop.f32.mrf.mxu0
        %v2179 = vadd.f32 0.0, %v2178
        %2180 = vdwg.mxu0
        %v2181 = vadd.f32 %v2035, %v2134
        %v2182 = vadd.f32 %v2036, %v2137
        %v2183 = vadd.f32 %v2037, %v2140
        %v2184 = vadd.f32 %v2038, %v2143
        %v2185 = vadd.f32 %v2039, %v2146
        %v2186 = vadd.f32 %v2040, %v2149
        %v2187 = vadd.f32 %v2041, %v2152
        %v2188 = vadd.f32 %v2042, %v2155
        %v2189 = vadd.f32 %v2043, %v2158
        %v2190 = vadd.f32 %v2044, %v2161
        %v2191 = vadd.f32 %v2045, %v2164
        %v2192 = vadd.f32 %v2046, %v2167
        %v2193 = vadd.f32 %v2047, %v2170
        %v2194 = vadd.f32 %v2048, %v2173
        %v2195 = vadd.f32 %v2049, %v2176
        %v2196 = vadd.f32 %v2050, %v2179
        %vm2197 = vcmask 130048
        %v2198 = vsel %vm2197, %v2181, 0.0
        %2199 = vadd.xlane.f32.xlu0 %v2198
        %v2200 = vpop.xlane.xlu0 %2199
        %v2201 = vsel %vm2197, %v2182, 0.0
        %2202 = vadd.xlane.f32.xlu0 %v2201
        %v2203 = vpop.xlane.xlu0 %2202
        %v2204 = vsel %vm2197, %v2183, 0.0
        %2205 = vadd.xlane.f32.xlu0 %v2204
        %v2206 = vpop.xlane.xlu0 %2205
        %v2207 = vsel %vm2197, %v2184, 0.0
        %2208 = vadd.xlane.f32.xlu0 %v2207
        %v2209 = vpop.xlane.xlu0 %2208
        %v2210 = vsel %vm2197, %v2185, 0.0
        %2211 = vadd.xlane.f32.xlu0 %v2210
        %v2212 = vpop.xlane.xlu0 %2211
        %v2213 = vsel %vm2197, %v2186, 0.0
        %2214 = vadd.xlane.f32.xlu0 %v2213
        %v2215 = vpop.xlane.xlu0 %2214
        %v2216 = vsel %vm2197, %v2187, 0.0
        %2217 = vadd.xlane.f32.xlu0 %v2216
        %v2218 = vpop.xlane.xlu0 %2217
        %v2219 = vsel %vm2197, %v2188, 0.0
        %2220 = vadd.xlane.f32.xlu0 %v2219
        %v2221 = vpop.xlane.xlu0 %2220
        %v2222 = vsel %vm2197, %v2189, 0.0
        %2223 = vadd.xlane.f32.xlu0 %v2222
        %v2224 = vpop.xlane.xlu0 %2223
        %v2225 = vsel %vm2197, %v2190, 0.0
        %2226 = vadd.xlane.f32.xlu0 %v2225
        %v2227 = vpop.xlane.xlu0 %2226
        %v2228 = vsel %vm2197, %v2191, 0.0
        %2229 = vadd.xlane.f32.xlu0 %v2228
        %v2230 = vpop.xlane.xlu0 %2229
        %v2231 = vsel %vm2197, %v2192, 0.0
        %2232 = vadd.xlane.f32.xlu0 %v2231
        %v2233 = vpop.xlane.xlu0 %2232
        %v2234 = vsel %vm2197, %v2193, 0.0
        %2235 = vadd.xlane.f32.xlu0 %v2234
        %v2236 = vpop.xlane.xlu0 %2235
        %v2237 = vsel %vm2197, %v2194, 0.0
        %2238 = vadd.xlane.f32.xlu0 %v2237
        %v2239 = vpop.xlane.xlu0 %2238
        %v2240 = vsel %vm2197, %v2195, 0.0
        %2241 = vadd.xlane.f32.xlu0 %v2240
        %v2242 = vpop.xlane.xlu0 %2241
        %v2243 = vsel %vm2197, %v2196, 0.0
        %2244 = vadd.xlane.f32.xlu0 %v2243
        %v2245 = vpop.xlane.xlu0 %2244
        %v2246 = vmul.f32 %v2200, 0.0625
        %v2247 = vmul.f32 %v2203, 0.0625
        %v2248 = vmul.f32 %v2206, 0.0625
        %v2249 = vmul.f32 %v2209, 0.0625
        %v2250 = vmul.f32 %v2212, 0.0625
        %v2251 = vmul.f32 %v2215, 0.0625
        %v2252 = vmul.f32 %v2218, 0.0625
        %v2253 = vmul.f32 %v2221, 0.0625
        %v2254 = vmul.f32 %v2224, 0.0625
        %v2255 = vmul.f32 %v2227, 0.0625
        %v2256 = vmul.f32 %v2230, 0.0625
        %v2257 = vmul.f32 %v2233, 0.0625
        %v2258 = vmul.f32 %v2236, 0.0625
        %v2259 = vmul.f32 %v2239, 0.0625
        %v2260 = vmul.f32 %v2242, 0.0625
        %v2261 = vmul.f32 %v2245, 0.0625
        %v2262 = vsub.f32 %v2181, %v2246
        %v2263 = vsub.f32 %v2182, %v2247
        %v2264 = vsub.f32 %v2183, %v2248
        %v2265 = vsub.f32 %v2184, %v2249
        %v2266 = vsub.f32 %v2185, %v2250
        %v2267 = vsub.f32 %v2186, %v2251
        %v2268 = vsub.f32 %v2187, %v2252
        %v2269 = vsub.f32 %v2188, %v2253
        %v2270 = vsub.f32 %v2189, %v2254
        %v2271 = vsub.f32 %v2190, %v2255
        %v2272 = vsub.f32 %v2191, %v2256
        %v2273 = vsub.f32 %v2192, %v2257
        %v2274 = vsub.f32 %v2193, %v2258
        %v2275 = vsub.f32 %v2194, %v2259
        %v2276 = vsub.f32 %v2195, %v2260
        %v2277 = vsub.f32 %v2196, %v2261
        %v2278 = vmul.f32 %v2262, %v2262
        %v2279 = vmul.f32 %v2263, %v2263
        %v2280 = vmul.f32 %v2264, %v2264
        %v2281 = vmul.f32 %v2265, %v2265
        %v2282 = vmul.f32 %v2266, %v2266
        %v2283 = vmul.f32 %v2267, %v2267
        %v2284 = vmul.f32 %v2268, %v2268
        %v2285 = vmul.f32 %v2269, %v2269
        %v2286 = vmul.f32 %v2270, %v2270
        %v2287 = vmul.f32 %v2271, %v2271
        %v2288 = vmul.f32 %v2272, %v2272
        %v2289 = vmul.f32 %v2273, %v2273
        %v2290 = vmul.f32 %v2274, %v2274
        %v2291 = vmul.f32 %v2275, %v2275
        %v2292 = vmul.f32 %v2276, %v2276
        %v2293 = vmul.f32 %v2277, %v2277
        %v2294 = vsel %vm2197, %v2278, 0.0
        %2295 = vadd.xlane.f32.xlu0 %v2294
        %v2296 = vpop.xlane.xlu0 %2295
        %v2297 = vsel %vm2197, %v2279, 0.0
        %2298 = vadd.xlane.f32.xlu0 %v2297
        %v2299 = vpop.xlane.xlu0 %2298
        %v2300 = vsel %vm2197, %v2280, 0.0
        %2301 = vadd.xlane.f32.xlu0 %v2300
        %v2302 = vpop.xlane.xlu0 %2301
        %v2303 = vsel %vm2197, %v2281, 0.0
        %2304 = vadd.xlane.f32.xlu0 %v2303
        %v2305 = vpop.xlane.xlu0 %2304
        %v2306 = vsel %vm2197, %v2282, 0.0
        %2307 = vadd.xlane.f32.xlu0 %v2306
        %v2308 = vpop.xlane.xlu0 %2307
        %v2309 = vsel %vm2197, %v2283, 0.0
        %2310 = vadd.xlane.f32.xlu0 %v2309
        %v2311 = vpop.xlane.xlu0 %2310
        %v2312 = vsel %vm2197, %v2284, 0.0
        %2313 = vadd.xlane.f32.xlu0 %v2312
        %v2314 = vpop.xlane.xlu0 %2313
        %v2315 = vsel %vm2197, %v2285, 0.0
        %2316 = vadd.xlane.f32.xlu0 %v2315
        %v2317 = vpop.xlane.xlu0 %2316
        %v2318 = vsel %vm2197, %v2286, 0.0
        %2319 = vadd.xlane.f32.xlu0 %v2318
        %v2320 = vpop.xlane.xlu0 %2319
        %v2321 = vsel %vm2197, %v2287, 0.0
        %2322 = vadd.xlane.f32.xlu0 %v2321
        %v2323 = vpop.xlane.xlu0 %2322
        %v2324 = vsel %vm2197, %v2288, 0.0
        %2325 = vadd.xlane.f32.xlu0 %v2324
        %v2326 = vpop.xlane.xlu0 %2325
        %v2327 = vsel %vm2197, %v2289, 0.0
        %2328 = vadd.xlane.f32.xlu0 %v2327
        %v2329 = vpop.xlane.xlu0 %2328
        %v2330 = vsel %vm2197, %v2290, 0.0
        %2331 = vadd.xlane.f32.xlu0 %v2330
        %v2332 = vpop.xlane.xlu0 %2331
        %v2333 = vsel %vm2197, %v2291, 0.0
        %2334 = vadd.xlane.f32.xlu0 %v2333
        %v2335 = vpop.xlane.xlu0 %2334
        %v2336 = vsel %vm2197, %v2292, 0.0
        %2337 = vadd.xlane.f32.xlu0 %v2336
        %v2338 = vpop.xlane.xlu0 %2337
        %v2339 = vsel %vm2197, %v2293, 0.0
        %2340 = vadd.xlane.f32.xlu0 %v2339
        %v2341 = vpop.xlane.xlu0 %2340
        %v2342 = vmul.f32 %v2296, 0.0625
        %v2343 = vmul.f32 %v2299, 0.0625
        %v2344 = vmul.f32 %v2302, 0.0625
        %v2345 = vmul.f32 %v2305, 0.0625
        %v2346 = vmul.f32 %v2308, 0.0625
        %v2347 = vmul.f32 %v2311, 0.0625
        %v2348 = vmul.f32 %v2314, 0.0625
        %v2349 = vmul.f32 %v2317, 0.0625
        %v2350 = vmul.f32 %v2320, 0.0625
        %v2351 = vmul.f32 %v2323, 0.0625
        %v2352 = vmul.f32 %v2326, 0.0625
        %v2353 = vmul.f32 %v2329, 0.0625
        %v2354 = vmul.f32 %v2332, 0.0625
        %v2355 = vmul.f32 %v2335, 0.0625
        %v2356 = vmul.f32 %v2338, 0.0625
        %v2357 = vmul.f32 %v2341, 0.0625
        %v2358 = vadd.f32 %v2342, 1e-05
        %v2359 = vadd.f32 %v2343, 1e-05
        %v2360 = vadd.f32 %v2344, 1e-05
        %v2361 = vadd.f32 %v2345, 1e-05
        %v2362 = vadd.f32 %v2346, 1e-05
        %v2363 = vadd.f32 %v2347, 1e-05
        %v2364 = vadd.f32 %v2348, 1e-05
        %v2365 = vadd.f32 %v2349, 1e-05
        %v2366 = vadd.f32 %v2350, 1e-05
        %v2367 = vadd.f32 %v2351, 1e-05
        %v2368 = vadd.f32 %v2352, 1e-05
        %v2369 = vadd.f32 %v2353, 1e-05
        %v2370 = vadd.f32 %v2354, 1e-05
        %v2371 = vadd.f32 %v2355, 1e-05
        %v2372 = vadd.f32 %v2356, 1e-05
        %v2373 = vadd.f32 %v2357, 1e-05
        %v2374 = vrsqrt.pop %v2358
        %v2375 = vmul.f32 %v2374, %v2358
        %v2376 = vmul.f32 %v2375, %v2374
        %v2377 = vmul.f32 0.5, %v2376
        %v2378 = vsub.f32 1.5, %v2377
        %v2379 = vmul.f32 %v2374, %v2378
        %vm2380 = vweird.f32 %v2358
        %vm2381 = vweird.f32 %v2374
        %vm2382 = vmor %vm2380, %vm2381
        %v2383 = vsel %vm2382, %v2374, %v2379
        %v2384 = vrsqrt.pop %v2359
        %v2385 = vmul.f32 %v2384, %v2359
        %v2386 = vmul.f32 %v2385, %v2384
        %v2387 = vmul.f32 0.5, %v2386
        %v2388 = vsub.f32 1.5, %v2387
        %v2389 = vmul.f32 %v2384, %v2388
        %vm2390 = vweird.f32 %v2359
        %vm2391 = vweird.f32 %v2384
        %vm2392 = vmor %vm2390, %vm2391
        %v2393 = vsel %vm2392, %v2384, %v2389
        %v2394 = vrsqrt.pop %v2360
        %v2395 = vmul.f32 %v2394, %v2360
        %v2396 = vmul.f32 %v2395, %v2394
        %v2397 = vmul.f32 0.5, %v2396
        %v2398 = vsub.f32 1.5, %v2397
        %v2399 = vmul.f32 %v2394, %v2398
        %vm2400 = vweird.f32 %v2360
        %vm2401 = vweird.f32 %v2394
        %vm2402 = vmor %vm2400, %vm2401
        %v2403 = vsel %vm2402, %v2394, %v2399
        %v2404 = vrsqrt.pop %v2361
        %v2405 = vmul.f32 %v2404, %v2361
        %v2406 = vmul.f32 %v2405, %v2404
        %v2407 = vmul.f32 0.5, %v2406
        %v2408 = vsub.f32 1.5, %v2407
        %v2409 = vmul.f32 %v2404, %v2408
        %vm2410 = vweird.f32 %v2361
        %vm2411 = vweird.f32 %v2404
        %vm2412 = vmor %vm2410, %vm2411
        %v2413 = vsel %vm2412, %v2404, %v2409
        %v2414 = vrsqrt.pop %v2362
        %v2415 = vmul.f32 %v2414, %v2362
        %v2416 = vmul.f32 %v2415, %v2414
        %v2417 = vmul.f32 0.5, %v2416
        %v2418 = vsub.f32 1.5, %v2417
        %v2419 = vmul.f32 %v2414, %v2418
        %vm2420 = vweird.f32 %v2362
        %vm2421 = vweird.f32 %v2414
        %vm2422 = vmor %vm2420, %vm2421
        %v2423 = vsel %vm2422, %v2414, %v2419
        %v2424 = vrsqrt.pop %v2363
        %v2425 = vmul.f32 %v2424, %v2363
        %v2426 = vmul.f32 %v2425, %v2424
        %v2427 = vmul.f32 0.5, %v2426
        %v2428 = vsub.f32 1.5, %v2427
        %v2429 = vmul.f32 %v2424, %v2428
        %vm2430 = vweird.f32 %v2363
        %vm2431 = vweird.f32 %v2424
        %vm2432 = vmor %vm2430, %vm2431
        %v2433 = vsel %vm2432, %v2424, %v2429
        %v2434 = vrsqrt.pop %v2364
        %v2435 = vmul.f32 %v2434, %v2364
        %v2436 = vmul.f32 %v2435, %v2434
        %v2437 = vmul.f32 0.5, %v2436
        %v2438 = vsub.f32 1.5, %v2437
        %v2439 = vmul.f32 %v2434, %v2438
        %vm2440 = vweird.f32 %v2364
        %vm2441 = vweird.f32 %v2434
        %vm2442 = vmor %vm2440, %vm2441
        %v2443 = vsel %vm2442, %v2434, %v2439
        %v2444 = vrsqrt.pop %v2365
        %v2445 = vmul.f32 %v2444, %v2365
        %v2446 = vmul.f32 %v2445, %v2444
        %v2447 = vmul.f32 0.5, %v2446
        %v2448 = vsub.f32 1.5, %v2447
        %v2449 = vmul.f32 %v2444, %v2448
        %vm2450 = vweird.f32 %v2365
        %vm2451 = vweird.f32 %v2444
        %vm2452 = vmor %vm2450, %vm2451
        %v2453 = vsel %vm2452, %v2444, %v2449
        %v2454 = vrsqrt.pop %v2366
        %v2455 = vmul.f32 %v2454, %v2366
        %v2456 = vmul.f32 %v2455, %v2454
        %v2457 = vmul.f32 0.5, %v2456
        %v2458 = vsub.f32 1.5, %v2457
        %v2459 = vmul.f32 %v2454, %v2458
        %vm2460 = vweird.f32 %v2366
        %vm2461 = vweird.f32 %v2454
        %vm2462 = vmor %vm2460, %vm2461
        %v2463 = vsel %vm2462, %v2454, %v2459
        %v2464 = vrsqrt.pop %v2367
        %v2465 = vmul.f32 %v2464, %v2367
        %v2466 = vmul.f32 %v2465, %v2464
        %v2467 = vmul.f32 0.5, %v2466
        %v2468 = vsub.f32 1.5, %v2467
        %v2469 = vmul.f32 %v2464, %v2468
        %vm2470 = vweird.f32 %v2367
        %vm2471 = vweird.f32 %v2464
        %vm2472 = vmor %vm2470, %vm2471
        %v2473 = vsel %vm2472, %v2464, %v2469
        %v2474 = vrsqrt.pop %v2368
        %v2475 = vmul.f32 %v2474, %v2368
        %v2476 = vmul.f32 %v2475, %v2474
        %v2477 = vmul.f32 0.5, %v2476
        %v2478 = vsub.f32 1.5, %v2477
        %v2479 = vmul.f32 %v2474, %v2478
        %vm2480 = vweird.f32 %v2368
        %vm2481 = vweird.f32 %v2474
        %vm2482 = vmor %vm2480, %vm2481
        %v2483 = vsel %vm2482, %v2474, %v2479
        %v2484 = vrsqrt.pop %v2369
        %v2485 = vmul.f32 %v2484, %v2369
        %v2486 = vmul.f32 %v2485, %v2484
        %v2487 = vmul.f32 0.5, %v2486
        %v2488 = vsub.f32 1.5, %v2487
        %v2489 = vmul.f32 %v2484, %v2488
        %vm2490 = vweird.f32 %v2369
        %vm2491 = vweird.f32 %v2484
        %vm2492 = vmor %vm2490, %vm2491
        %v2493 = vsel %vm2492, %v2484, %v2489
        %v2494 = vrsqrt.pop %v2370
        %v2495 = vmul.f32 %v2494, %v2370
        %v2496 = vmul.f32 %v2495, %v2494
        %v2497 = vmul.f32 0.5, %v2496
        %v2498 = vsub.f32 1.5, %v2497
        %v2499 = vmul.f32 %v2494, %v2498
        %vm2500 = vweird.f32 %v2370
        %vm2501 = vweird.f32 %v2494
        %vm2502 = vmor %vm2500, %vm2501
        %v2503 = vsel %vm2502, %v2494, %v2499
        %v2504 = vrsqrt.pop %v2371
        %v2505 = vmul.f32 %v2504, %v2371
        %v2506 = vmul.f32 %v2505, %v2504
        %v2507 = vmul.f32 0.5, %v2506
        %v2508 = vsub.f32 1.5, %v2507
        %v2509 = vmul.f32 %v2504, %v2508
        %vm2510 = vweird.f32 %v2371
        %vm2511 = vweird.f32 %v2504
        %vm2512 = vmor %vm2510, %vm2511
        %v2513 = vsel %vm2512, %v2504, %v2509
        %v2514 = vrsqrt.pop %v2372
        %v2515 = vmul.f32 %v2514, %v2372
        %v2516 = vmul.f32 %v2515, %v2514
        %v2517 = vmul.f32 0.5, %v2516
        %v2518 = vsub.f32 1.5, %v2517
        %v2519 = vmul.f32 %v2514, %v2518
        %vm2520 = vweird.f32 %v2372
        %vm2521 = vweird.f32 %v2514
        %vm2522 = vmor %vm2520, %vm2521
        %v2523 = vsel %vm2522, %v2514, %v2519
        %v2524 = vrsqrt.pop %v2373
        %v2525 = vmul.f32 %v2524, %v2373
        %v2526 = vmul.f32 %v2525, %v2524
        %v2527 = vmul.f32 0.5, %v2526
        %v2528 = vsub.f32 1.5, %v2527
        %v2529 = vmul.f32 %v2524, %v2528
        %vm2530 = vweird.f32 %v2373
        %vm2531 = vweird.f32 %v2524
        %vm2532 = vmor %vm2530, %vm2531
        %v2533 = vsel %vm2532, %v2524, %v2529
        %v2534 = vmul.f32 %v2262, %v2383
        %v2535 = vmul.f32 %v2263, %v2393
        %v2536 = vmul.f32 %v2264, %v2403
        %v2537 = vmul.f32 %v2265, %v2413
        %v2538 = vmul.f32 %v2266, %v2423
        %v2539 = vmul.f32 %v2267, %v2433
        %v2540 = vmul.f32 %v2268, %v2443
        %v2541 = vmul.f32 %v2269, %v2453
        %v2542 = vmul.f32 %v2270, %v2463
        %v2543 = vmul.f32 %v2271, %v2473
        %v2544 = vmul.f32 %v2272, %v2483
        %v2545 = vmul.f32 %v2273, %v2493
        %v2546 = vmul.f32 %v2274, %v2503
        %v2547 = vmul.f32 %v2275, %v2513
        %v2548 = vmul.f32 %v2276, %v2523
        %v2549 = vmul.f32 %v2277, %v2533
        %2551 = vset.pattern.permute.xlu0 0
        %2552 = vperm.xlu0 %2551, %v695
        %v2553 = vpop.permute.xlu0 %2552
        %2556 = vset.pattern.permute.xlu0 0
        %2557 = vperm.xlu0 %2556, %v696
        %v2558 = vpop.permute.xlu0 %2557
        %2561 = vset.pattern.permute.xlu0 0
        %2562 = vperm.xlu0 %2561, %v697
        %v2563 = vpop.permute.xlu0 %2562
        %2566 = vset.pattern.permute.xlu0 0
        %2567 = vperm.xlu0 %2566, %v698
        %v2568 = vpop.permute.xlu0 %2567
        %2571 = vset.pattern.permute.xlu0 0
        %2572 = vperm.xlu0 %2571, %v699
        %v2573 = vpop.permute.xlu0 %2572
        %2576 = vset.pattern.permute.xlu0 0
        %2577 = vperm.xlu0 %2576, %v700
        %v2578 = vpop.permute.xlu0 %2577
        %2581 = vset.pattern.permute.xlu0 0
        %2582 = vperm.xlu0 %2581, %v701
        %v2583 = vpop.permute.xlu0 %2582
        %2586 = vset.pattern.permute.xlu0 0
        %2587 = vperm.xlu0 %2586, %v702
        %v2588 = vpop.permute.xlu0 %2587
        %2591 = vset.pattern.permute.xlu0 0
        %2592 = vperm.xlu0 %2591, %v703
        %v2593 = vpop.permute.xlu0 %2592
        %2596 = vset.pattern.permute.xlu0 0
        %2597 = vperm.xlu0 %2596, %v704
        %v2598 = vpop.permute.xlu0 %2597
        %2601 = vset.pattern.permute.xlu0 0
        %2602 = vperm.xlu0 %2601, %v705
        %v2603 = vpop.permute.xlu0 %2602
        %2606 = vset.pattern.permute.xlu0 0
        %2607 = vperm.xlu0 %2606, %v706
        %v2608 = vpop.permute.xlu0 %2607
        %2611 = vset.pattern.permute.xlu0 0
        %2612 = vperm.xlu0 %2611, %v707
        %v2613 = vpop.permute.xlu0 %2612
        %2616 = vset.pattern.permute.xlu0 0
        %2617 = vperm.xlu0 %2616, %v708
        %v2618 = vpop.permute.xlu0 %2617
        %2621 = vset.pattern.permute.xlu0 0
        %2622 = vperm.xlu0 %2621, %v709
        %v2623 = vpop.permute.xlu0 %2622
        %2626 = vset.pattern.permute.xlu0 0
        %2627 = vperm.xlu0 %2626, %v710
        %v2628 = vpop.permute.xlu0 %2627
        %v2630 = vmul.f32 %v2534, %v2553
        %v2631 = vmul.f32 %v2535, %v2558
        %v2632 = vmul.f32 %v2536, %v2563
        %v2633 = vmul.f32 %v2537, %v2568
        %v2634 = vmul.f32 %v2538, %v2573
        %v2635 = vmul.f32 %v2539, %v2578
        %v2636 = vmul.f32 %v2540, %v2583
        %v2637 = vmul.f32 %v2541, %v2588
        %v2638 = vmul.f32 %v2542, %v2593
        %v2639 = vmul.f32 %v2543, %v2598
        %v2640 = vmul.f32 %v2544, %v2603
        %v2641 = vmul.f32 %v2545, %v2608
        %v2642 = vmul.f32 %v2546, %v2613
        %v2643 = vmul.f32 %v2547, %v2618
        %v2644 = vmul.f32 %v2548, %v2623
        %v2645 = vmul.f32 %v2549, %v2628
        %2647 = vset.pattern.permute.xlu0 0
        %2648 = vperm.xlu0 %2647, %v711
        %v2649 = vpop.permute.xlu0 %2648
        %2652 = vset.pattern.permute.xlu0 0
        %2653 = vperm.xlu0 %2652, %v712
        %v2654 = vpop.permute.xlu0 %2653
        %2657 = vset.pattern.permute.xlu0 0
        %2658 = vperm.xlu0 %2657, %v713
        %v2659 = vpop.permute.xlu0 %2658
        %2662 = vset.pattern.permute.xlu0 0
        %2663 = vperm.xlu0 %2662, %v714
        %v2664 = vpop.permute.xlu0 %2663
        %2667 = vset.pattern.permute.xlu0 0
        %2668 = vperm.xlu0 %2667, %v715
        %v2669 = vpop.permute.xlu0 %2668
        %2672 = vset.pattern.permute.xlu0 0
        %2673 = vperm.xlu0 %2672, %v716
        %v2674 = vpop.permute.xlu0 %2673
        %2677 = vset.pattern.permute.xlu0 0
        %2678 = vperm.xlu0 %2677, %v717
        %v2679 = vpop.permute.xlu0 %2678
        %2682 = vset.pattern.permute.xlu0 0
        %2683 = vperm.xlu0 %2682, %v718
        %v2684 = vpop.permute.xlu0 %2683
        %2687 = vset.pattern.permute.xlu0 0
        %2688 = vperm.xlu0 %2687, %v719
        %v2689 = vpop.permute.xlu0 %2688
        %2692 = vset.pattern.permute.xlu0 0
        %2693 = vperm.xlu0 %2692, %v720
        %v2694 = vpop.permute.xlu0 %2693
        %2697 = vset.pattern.permute.xlu0 0
        %2698 = vperm.xlu0 %2697, %v721
        %v2699 = vpop.permute.xlu0 %2698
        %2702 = vset.pattern.permute.xlu0 0
        %2703 = vperm.xlu0 %2702, %v722
        %v2704 = vpop.permute.xlu0 %2703
        %2707 = vset.pattern.permute.xlu0 0
        %2708 = vperm.xlu0 %2707, %v723
        %v2709 = vpop.permute.xlu0 %2708
        %2712 = vset.pattern.permute.xlu0 0
        %2713 = vperm.xlu0 %2712, %v724
        %v2714 = vpop.permute.xlu0 %2713
        %2717 = vset.pattern.permute.xlu0 0
        %2718 = vperm.xlu0 %2717, %v725
        %v2719 = vpop.permute.xlu0 %2718
        %2722 = vset.pattern.permute.xlu0 0
        %2723 = vperm.xlu0 %2722, %v726
        %v2724 = vpop.permute.xlu0 %2723
        %v2726 = vadd.f32 %v2630, %v2649
        %v2727 = vadd.f32 %v2631, %v2654
        %v2728 = vadd.f32 %v2632, %v2659
        %v2729 = vadd.f32 %v2633, %v2664
        %v2730 = vadd.f32 %v2634, %v2669
        %v2731 = vadd.f32 %v2635, %v2674
        %v2732 = vadd.f32 %v2636, %v2679
        %v2733 = vadd.f32 %v2637, %v2684
        %v2734 = vadd.f32 %v2638, %v2689
        %v2735 = vadd.f32 %v2639, %v2694
        %v2736 = vadd.f32 %v2640, %v2699
        %v2737 = vadd.f32 %v2641, %v2704
        %v2738 = vadd.f32 %v2642, %v2709
        %v2739 = vadd.f32 %v2643, %v2714
        %v2740 = vadd.f32 %v2644, %v2719
        %v2741 = vadd.f32 %v2645, %v2724
        %v2742 = vxor.u32 %v2726, 2147483648
        %v2743 = vxor.u32 %v2727, 2147483648
        %v2744 = vxor.u32 %v2728, 2147483648
        %v2745 = vxor.u32 %v2729, 2147483648
        %v2746 = vxor.u32 %v2730, 2147483648
        %v2747 = vxor.u32 %v2731, 2147483648
        %v2748 = vxor.u32 %v2732, 2147483648
        %v2749 = vxor.u32 %v2733, 2147483648
        %v2750 = vxor.u32 %v2734, 2147483648
        %v2751 = vxor.u32 %v2735, 2147483648
        %v2752 = vxor.u32 %v2736, 2147483648
        %v2753 = vxor.u32 %v2737, 2147483648
        %v2754 = vxor.u32 %v2738, 2147483648
        %v2755 = vxor.u32 %v2739, 2147483648
        %v2756 = vxor.u32 %v2740, 2147483648
        %v2757 = vxor.u32 %v2741, 2147483648
        %v2758 = vmul.f32 %v2742, 1.442695
        %v2759 = vpow.pop %v2758
        %v2760 = vmul.f32 %v2743, 1.442695
        %v2761 = vpow.pop %v2760
        %v2762 = vmul.f32 %v2744, 1.442695
        %v2763 = vpow.pop %v2762
        %v2764 = vmul.f32 %v2745, 1.442695
        %v2765 = vpow.pop %v2764
        %v2766 = vmul.f32 %v2746, 1.442695
        %v2767 = vpow.pop %v2766
        %v2768 = vmul.f32 %v2747, 1.442695
        %v2769 = vpow.pop %v2768
        %v2770 = vmul.f32 %v2748, 1.442695
        %v2771 = vpow.pop %v2770
        %v2772 = vmul.f32 %v2749, 1.442695
        %v2773 = vpow.pop %v2772
        %v2774 = vmul.f32 %v2750, 1.442695
        %v2775 = vpow.pop %v2774
        %v2776 = vmul.f32 %v2751, 1.442695
        %v2777 = vpow.pop %v2776
        %v2778 = vmul.f32 %v2752, 1.442695
        %v2779 = vpow.pop %v2778
        %v2780 = vmul.f32 %v2753, 1.442695
        %v2781 = vpow.pop %v2780
        %v2782 = vmul.f32 %v2754, 1.442695
        %v2783 = vpow.pop %v2782
        %v2784 = vmul.f32 %v2755, 1.442695
        %v2785 = vpow.pop %v2784
        %v2786 = vmul.f32 %v2756, 1.442695
        %v2787 = vpow.pop %v2786
        %v2788 = vmul.f32 %v2757, 1.442695
        %v2789 = vpow.pop %v2788
        %v2790 = vadd.f32 %v2759, 1.0
        %v2791 = vadd.f32 %v2761, 1.0
        %v2792 = vadd.f32 %v2763, 1.0
        %v2793 = vadd.f32 %v2765, 1.0
        %v2794 = vadd.f32 %v2767, 1.0
        %v2795 = vadd.f32 %v2769, 1.0
        %v2796 = vadd.f32 %v2771, 1.0
        %v2797 = vadd.f32 %v2773, 1.0
        %v2798 = vadd.f32 %v2775, 1.0
        %v2799 = vadd.f32 %v2777, 1.0
        %v2800 = vadd.f32 %v2779, 1.0
        %v2801 = vadd.f32 %v2781, 1.0
        %v2802 = vadd.f32 %v2783, 1.0
        %v2803 = vadd.f32 %v2785, 1.0
        %v2804 = vadd.f32 %v2787, 1.0
        %v2805 = vadd.f32 %v2789, 1.0
        %v2806 = vrcp.pop %v2790
        %v2807 = vmul.f32 %v2790, %v2806
        %v2808 = vsub.f32 1.0, %v2807
        %v2809 = vmul.f32 %v2806, %v2808
        %v2810 = vadd.f32 %v2806, %v2809
        %vm2811 = vweird.f32 %v2790
        %vm2812 = vweird.f32 %v2806
        %vm2813 = vmor %vm2811, %vm2812
        %v2814 = vsel %vm2813, %v2806, %v2810
        %v2815 = vand.u32 2147483647, %v2790
        %vm2816 = vcmp.eq.f32.partialorder %v2815, 8.507059e+37
        %v2817 = vand.u32 %v2790, 2147483648
        %v2818 = vor.u32 1.1754944e-38, %v2817
        %v2819 = vsel %vm2816, %v2818, %v2814
        %v2820 = vmul.f32 1.0, %v2819
        %v2821 = vrcp.pop %v2791
        %v2822 = vmul.f32 %v2791, %v2821
        %v2823 = vsub.f32 1.0, %v2822
        %v2824 = vmul.f32 %v2821, %v2823
        %v2825 = vadd.f32 %v2821, %v2824
        %vm2826 = vweird.f32 %v2791
        %vm2827 = vweird.f32 %v2821
        %vm2828 = vmor %vm2826, %vm2827
        %v2829 = vsel %vm2828, %v2821, %v2825
        %v2830 = vand.u32 2147483647, %v2791
        %vm2831 = vcmp.eq.f32.partialorder %v2830, 8.507059e+37
        %v2832 = vand.u32 %v2791, 2147483648
        %v2833 = vor.u32 1.1754944e-38, %v2832
        %v2834 = vsel %vm2831, %v2833, %v2829
        %v2835 = vmul.f32 1.0, %v2834
        %v2836 = vrcp.pop %v2792
        %v2837 = vmul.f32 %v2792, %v2836
        %v2838 = vsub.f32 1.0, %v2837
        %v2839 = vmul.f32 %v2836, %v2838
        %v2840 = vadd.f32 %v2836, %v2839
        %vm2841 = vweird.f32 %v2792
        %vm2842 = vweird.f32 %v2836
        %vm2843 = vmor %vm2841, %vm2842
        %v2844 = vsel %vm2843, %v2836, %v2840
        %v2845 = vand.u32 2147483647, %v2792
        %vm2846 = vcmp.eq.f32.partialorder %v2845, 8.507059e+37
        %v2847 = vand.u32 %v2792, 2147483648
        %v2848 = vor.u32 1.1754944e-38, %v2847
        %v2849 = vsel %vm2846, %v2848, %v2844
        %v2850 = vmul.f32 1.0, %v2849
        %v2851 = vrcp.pop %v2793
        %v2852 = vmul.f32 %v2793, %v2851
        %v2853 = vsub.f32 1.0, %v2852
        %v2854 = vmul.f32 %v2851, %v2853
        %v2855 = vadd.f32 %v2851, %v2854
        %vm2856 = vweird.f32 %v2793
        %vm2857 = vweird.f32 %v2851
        %vm2858 = vmor %vm2856, %vm2857
        %v2859 = vsel %vm2858, %v2851, %v2855
        %v2860 = vand.u32 2147483647, %v2793
        %vm2861 = vcmp.eq.f32.partialorder %v2860, 8.507059e+37
        %v2862 = vand.u32 %v2793, 2147483648
        %v2863 = vor.u32 1.1754944e-38, %v2862
        %v2864 = vsel %vm2861, %v2863, %v2859
        %v2865 = vmul.f32 1.0, %v2864
        %v2866 = vrcp.pop %v2794
        %v2867 = vmul.f32 %v2794, %v2866
        %v2868 = vsub.f32 1.0, %v2867
        %v2869 = vmul.f32 %v2866, %v2868
        %v2870 = vadd.f32 %v2866, %v2869
        %vm2871 = vweird.f32 %v2794
        %vm2872 = vweird.f32 %v2866
        %vm2873 = vmor %vm2871, %vm2872
        %v2874 = vsel %vm2873, %v2866, %v2870
        %v2875 = vand.u32 2147483647, %v2794
        %vm2876 = vcmp.eq.f32.partialorder %v2875, 8.507059e+37
        %v2877 = vand.u32 %v2794, 2147483648
        %v2878 = vor.u32 1.1754944e-38, %v2877
        %v2879 = vsel %vm2876, %v2878, %v2874
        %v2880 = vmul.f32 1.0, %v2879
        %v2881 = vrcp.pop %v2795
        %v2882 = vmul.f32 %v2795, %v2881
        %v2883 = vsub.f32 1.0, %v2882
        %v2884 = vmul.f32 %v2881, %v2883
        %v2885 = vadd.f32 %v2881, %v2884
        %vm2886 = vweird.f32 %v2795
        %vm2887 = vweird.f32 %v2881
        %vm2888 = vmor %vm2886, %vm2887
        %v2889 = vsel %vm2888, %v2881, %v2885
        %v2890 = vand.u32 2147483647, %v2795
        %vm2891 = vcmp.eq.f32.partialorder %v2890, 8.507059e+37
        %v2892 = vand.u32 %v2795, 2147483648
        %v2893 = vor.u32 1.1754944e-38, %v2892
        %v2894 = vsel %vm2891, %v2893, %v2889
        %v2895 = vmul.f32 1.0, %v2894
        %v2896 = vrcp.pop %v2796
        %v2897 = vmul.f32 %v2796, %v2896
        %v2898 = vsub.f32 1.0, %v2897
        %v2899 = vmul.f32 %v2896, %v2898
        %v2900 = vadd.f32 %v2896, %v2899
        %vm2901 = vweird.f32 %v2796
        %vm2902 = vweird.f32 %v2896
        %vm2903 = vmor %vm2901, %vm2902
        %v2904 = vsel %vm2903, %v2896, %v2900
        %v2905 = vand.u32 2147483647, %v2796
        %vm2906 = vcmp.eq.f32.partialorder %v2905, 8.507059e+37
        %v2907 = vand.u32 %v2796, 2147483648
        %v2908 = vor.u32 1.1754944e-38, %v2907
        %v2909 = vsel %vm2906, %v2908, %v2904
        %v2910 = vmul.f32 1.0, %v2909
        %v2911 = vrcp.pop %v2797
        %v2912 = vmul.f32 %v2797, %v2911
        %v2913 = vsub.f32 1.0, %v2912
        %v2914 = vmul.f32 %v2911, %v2913
        %v2915 = vadd.f32 %v2911, %v2914
        %vm2916 = vweird.f32 %v2797
        %vm2917 = vweird.f32 %v2911
        %vm2918 = vmor %vm2916, %vm2917
        %v2919 = vsel %vm2918, %v2911, %v2915
        %v2920 = vand.u32 2147483647, %v2797
        %vm2921 = vcmp.eq.f32.partialorder %v2920, 8.507059e+37
        %v2922 = vand.u32 %v2797, 2147483648
        %v2923 = vor.u32 1.1754944e-38, %v2922
        %v2924 = vsel %vm2921, %v2923, %v2919
        %v2925 = vmul.f32 1.0, %v2924
        %v2926 = vrcp.pop %v2798
        %v2927 = vmul.f32 %v2798, %v2926
        %v2928 = vsub.f32 1.0, %v2927
        %v2929 = vmul.f32 %v2926, %v2928
        %v2930 = vadd.f32 %v2926, %v2929
        %vm2931 = vweird.f32 %v2798
        %vm2932 = vweird.f32 %v2926
        %vm2933 = vmor %vm2931, %vm2932
        %v2934 = vsel %vm2933, %v2926, %v2930
        %v2935 = vand.u32 2147483647, %v2798
        %vm2936 = vcmp.eq.f32.partialorder %v2935, 8.507059e+37
        %v2937 = vand.u32 %v2798, 2147483648
        %v2938 = vor.u32 1.1754944e-38, %v2937
        %v2939 = vsel %vm2936, %v2938, %v2934
        %v2940 = vmul.f32 1.0, %v2939
        %v2941 = vrcp.pop %v2799
        %v2942 = vmul.f32 %v2799, %v2941
        %v2943 = vsub.f32 1.0, %v2942
        %v2944 = vmul.f32 %v2941, %v2943
        %v2945 = vadd.f32 %v2941, %v2944
        %vm2946 = vweird.f32 %v2799
        %vm2947 = vweird.f32 %v2941
        %vm2948 = vmor %vm2946, %vm2947
        %v2949 = vsel %vm2948, %v2941, %v2945
        %v2950 = vand.u32 2147483647, %v2799
        %vm2951 = vcmp.eq.f32.partialorder %v2950, 8.507059e+37
        %v2952 = vand.u32 %v2799, 2147483648
        %v2953 = vor.u32 1.1754944e-38, %v2952
        %v2954 = vsel %vm2951, %v2953, %v2949
        %v2955 = vmul.f32 1.0, %v2954
        %v2956 = vrcp.pop %v2800
        %v2957 = vmul.f32 %v2800, %v2956
        %v2958 = vsub.f32 1.0, %v2957
        %v2959 = vmul.f32 %v2956, %v2958
        %v2960 = vadd.f32 %v2956, %v2959
        %vm2961 = vweird.f32 %v2800
        %vm2962 = vweird.f32 %v2956
        %vm2963 = vmor %vm2961, %vm2962
        %v2964 = vsel %vm2963, %v2956, %v2960
        %v2965 = vand.u32 2147483647, %v2800
        %vm2966 = vcmp.eq.f32.partialorder %v2965, 8.507059e+37
        %v2967 = vand.u32 %v2800, 2147483648
        %v2968 = vor.u32 1.1754944e-38, %v2967
        %v2969 = vsel %vm2966, %v2968, %v2964
        %v2970 = vmul.f32 1.0, %v2969
        %v2971 = vrcp.pop %v2801
        %v2972 = vmul.f32 %v2801, %v2971
        %v2973 = vsub.f32 1.0, %v2972
        %v2974 = vmul.f32 %v2971, %v2973
        %v2975 = vadd.f32 %v2971, %v2974
        %vm2976 = vweird.f32 %v2801
        %vm2977 = vweird.f32 %v2971
        %vm2978 = vmor %vm2976, %vm2977
        %v2979 = vsel %vm2978, %v2971, %v2975
        %v2980 = vand.u32 2147483647, %v2801
        %vm2981 = vcmp.eq.f32.partialorder %v2980, 8.507059e+37
        %v2982 = vand.u32 %v2801, 2147483648
        %v2983 = vor.u32 1.1754944e-38, %v2982
        %v2984 = vsel %vm2981, %v2983, %v2979
        %v2985 = vmul.f32 1.0, %v2984
        %v2986 = vrcp.pop %v2802
        %v2987 = vmul.f32 %v2802, %v2986
        %v2988 = vsub.f32 1.0, %v2987
        %v2989 = vmul.f32 %v2986, %v2988
        %v2990 = vadd.f32 %v2986, %v2989
        %vm2991 = vweird.f32 %v2802
        %vm2992 = vweird.f32 %v2986
        %vm2993 = vmor %vm2991, %vm2992
        %v2994 = vsel %vm2993, %v2986, %v2990
        %v2995 = vand.u32 2147483647, %v2802
        %vm2996 = vcmp.eq.f32.partialorder %v2995, 8.507059e+37
        %v2997 = vand.u32 %v2802, 2147483648
        %v2998 = vor.u32 1.1754944e-38, %v2997
        %v2999 = vsel %vm2996, %v2998, %v2994
        %v3000 = vmul.f32 1.0, %v2999
        %v3001 = vrcp.pop %v2803
        %v3002 = vmul.f32 %v2803, %v3001
        %v3003 = vsub.f32 1.0, %v3002
        %v3004 = vmul.f32 %v3001, %v3003
        %v3005 = vadd.f32 %v3001, %v3004
        %vm3006 = vweird.f32 %v2803
        %vm3007 = vweird.f32 %v3001
        %vm3008 = vmor %vm3006, %vm3007
        %v3009 = vsel %vm3008, %v3001, %v3005
        %v3010 = vand.u32 2147483647, %v2803
        %vm3011 = vcmp.eq.f32.partialorder %v3010, 8.507059e+37
        %v3012 = vand.u32 %v2803, 2147483648
        %v3013 = vor.u32 1.1754944e-38, %v3012
        %v3014 = vsel %vm3011, %v3013, %v3009
        %v3015 = vmul.f32 1.0, %v3014
        %v3016 = vrcp.pop %v2804
        %v3017 = vmul.f32 %v2804, %v3016
        %v3018 = vsub.f32 1.0, %v3017
        %v3019 = vmul.f32 %v3016, %v3018
        %v3020 = vadd.f32 %v3016, %v3019
        %vm3021 = vweird.f32 %v2804
        %vm3022 = vweird.f32 %v3016
        %vm3023 = vmor %vm3021, %vm3022
        %v3024 = vsel %vm3023, %v3016, %v3020
        %v3025 = vand.u32 2147483647, %v2804
        %vm3026 = vcmp.eq.f32.partialorder %v3025, 8.507059e+37
        %v3027 = vand.u32 %v2804, 2147483648
        %v3028 = vor.u32 1.1754944e-38, %v3027
        %v3029 = vsel %vm3026, %v3028, %v3024
        %v3030 = vmul.f32 1.0, %v3029
        %v3031 = vrcp.pop %v2805
        %v3032 = vmul.f32 %v2805, %v3031
        %v3033 = vsub.f32 1.0, %v3032
        %v3034 = vmul.f32 %v3031, %v3033
        %v3035 = vadd.f32 %v3031, %v3034
        %vm3036 = vweird.f32 %v2805
        %vm3037 = vweird.f32 %v3031
        %vm3038 = vmor %vm3036, %vm3037
        %v3039 = vsel %vm3038, %v3031, %v3035
        %v3040 = vand.u32 2147483647, %v2805
        %vm3041 = vcmp.eq.f32.partialorder %v3040, 8.507059e+37
        %v3042 = vand.u32 %v2805, 2147483648
        %v3043 = vor.u32 1.1754944e-38, %v3042
        %v3044 = vsel %vm3041, %v3043, %v3039
        %v3045 = vmul.f32 1.0, %v3044
        %3047 = vset.pattern.permute.xlu0 0
        %3048 = vperm.xlu0 %3047, %v743
        %v3049 = vpop.permute.xlu0 %3048
        %3052 = vset.pattern.permute.xlu0 0
        %3053 = vperm.xlu0 %3052, %v744
        %v3054 = vpop.permute.xlu0 %3053
        %3057 = vset.pattern.permute.xlu0 0
        %3058 = vperm.xlu0 %3057, %v745
        %v3059 = vpop.permute.xlu0 %3058
        %3062 = vset.pattern.permute.xlu0 0
        %3063 = vperm.xlu0 %3062, %v746
        %v3064 = vpop.permute.xlu0 %3063
        %3067 = vset.pattern.permute.xlu0 0
        %3068 = vperm.xlu0 %3067, %v747
        %v3069 = vpop.permute.xlu0 %3068
        %3072 = vset.pattern.permute.xlu0 0
        %3073 = vperm.xlu0 %3072, %v748
        %v3074 = vpop.permute.xlu0 %3073
        %3077 = vset.pattern.permute.xlu0 0
        %3078 = vperm.xlu0 %3077, %v749
        %v3079 = vpop.permute.xlu0 %3078
        %3082 = vset.pattern.permute.xlu0 0
        %3083 = vperm.xlu0 %3082, %v750
        %v3084 = vpop.permute.xlu0 %3083
        %3087 = vset.pattern.permute.xlu0 0
        %3088 = vperm.xlu0 %3087, %v751
        %v3089 = vpop.permute.xlu0 %3088
        %3092 = vset.pattern.permute.xlu0 0
        %3093 = vperm.xlu0 %3092, %v752
        %v3094 = vpop.permute.xlu0 %3093
        %3097 = vset.pattern.permute.xlu0 0
        %3098 = vperm.xlu0 %3097, %v753
        %v3099 = vpop.permute.xlu0 %3098
        %3102 = vset.pattern.permute.xlu0 0
        %3103 = vperm.xlu0 %3102, %v754
        %v3104 = vpop.permute.xlu0 %3103
        %3107 = vset.pattern.permute.xlu0 0
        %3108 = vperm.xlu0 %3107, %v755
        %v3109 = vpop.permute.xlu0 %3108
        %3112 = vset.pattern.permute.xlu0 0
        %3113 = vperm.xlu0 %3112, %v756
        %v3114 = vpop.permute.xlu0 %3113
        %3117 = vset.pattern.permute.xlu0 0
        %3118 = vperm.xlu0 %3117, %v757
        %v3119 = vpop.permute.xlu0 %3118
        %3122 = vset.pattern.permute.xlu0 0
        %3123 = vperm.xlu0 %3122, %v758
        %v3124 = vpop.permute.xlu0 %3123
        %v3126 = vmul.f32 %v3049, %v2820
        %v3127 = vmul.f32 %v3054, %v2835
        %v3128 = vmul.f32 %v3059, %v2850
        %v3129 = vmul.f32 %v3064, %v2865
        %v3130 = vmul.f32 %v3069, %v2880
        %v3131 = vmul.f32 %v3074, %v2895
        %v3132 = vmul.f32 %v3079, %v2910
        %v3133 = vmul.f32 %v3084, %v2925
        %v3134 = vmul.f32 %v3089, %v2940
        %v3135 = vmul.f32 %v3094, %v2955
        %v3136 = vmul.f32 %v3099, %v2970
        %v3137 = vmul.f32 %v3104, %v2985
        %v3138 = vmul.f32 %v3109, %v3000
        %v3139 = vmul.f32 %v3114, %v3015
        %v3140 = vmul.f32 %v3119, %v3030
        %v3141 = vmul.f32 %v3124, %v3045
        %3143 = vset.pattern.permute.xlu0 0
        %3144 = vperm.xlu0 %3143, %v727
        %v3145 = vpop.permute.xlu0 %3144
        %3148 = vset.pattern.permute.xlu0 0
        %3149 = vperm.xlu0 %3148, %v728
        %v3150 = vpop.permute.xlu0 %3149
        %3153 = vset.pattern.permute.xlu0 0
        %3154 = vperm.xlu0 %3153, %v729
        %v3155 = vpop.permute.xlu0 %3154
        %3158 = vset.pattern.permute.xlu0 0
        %3159 = vperm.xlu0 %3158, %v730
        %v3160 = vpop.permute.xlu0 %3159
        %3163 = vset.pattern.permute.xlu0 0
        %3164 = vperm.xlu0 %3163, %v731
        %v3165 = vpop.permute.xlu0 %3164
        %3168 = vset.pattern.permute.xlu0 0
        %3169 = vperm.xlu0 %3168, %v732
        %v3170 = vpop.permute.xlu0 %3169
        %3173 = vset.pattern.permute.xlu0 0
        %3174 = vperm.xlu0 %3173, %v733
        %v3175 = vpop.permute.xlu0 %3174
        %3178 = vset.pattern.permute.xlu0 0
        %3179 = vperm.xlu0 %3178, %v734
        %v3180 = vpop.permute.xlu0 %3179
        %3183 = vset.pattern.permute.xlu0 0
        %3184 = vperm.xlu0 %3183, %v735
        %v3185 = vpop.permute.xlu0 %3184
        %3188 = vset.pattern.permute.xlu0 0
        %3189 = vperm.xlu0 %3188, %v736
        %v3190 = vpop.permute.xlu0 %3189
        %3193 = vset.pattern.permute.xlu0 0
        %3194 = vperm.xlu0 %3193, %v737
        %v3195 = vpop.permute.xlu0 %3194
        %3198 = vset.pattern.permute.xlu0 0
        %3199 = vperm.xlu0 %3198, %v738
        %v3200 = vpop.permute.xlu0 %3199
        %3203 = vset.pattern.permute.xlu0 0
        %3204 = vperm.xlu0 %3203, %v739
        %v3205 = vpop.permute.xlu0 %3204
        %3208 = vset.pattern.permute.xlu0 0
        %3209 = vperm.xlu0 %3208, %v740
        %v3210 = vpop.permute.xlu0 %3209
        %3213 = vset.pattern.permute.xlu0 0
        %3214 = vperm.xlu0 %3213, %v741
        %v3215 = vpop.permute.xlu0 %3214
        %3218 = vset.pattern.permute.xlu0 0
        %3219 = vperm.xlu0 %3218, %v742
        %v3220 = vpop.permute.xlu0 %3219
        %v3222 = vadd.f32 %v3145, %v3126
        %v3223 = vadd.f32 %v3150, %v3127
        %v3224 = vadd.f32 %v3155, %v3128
        %v3225 = vadd.f32 %v3160, %v3129
        %v3226 = vadd.f32 %v3165, %v3130
        %v3227 = vadd.f32 %v3170, %v3131
        %v3228 = vadd.f32 %v3175, %v3132
        %v3229 = vadd.f32 %v3180, %v3133
        %v3230 = vadd.f32 %v3185, %v3134
        %v3231 = vadd.f32 %v3190, %v3135
        %v3232 = vadd.f32 %v3195, %v3136
        %v3233 = vadd.f32 %v3200, %v3137
        %v3234 = vadd.f32 %v3205, %v3138
        %v3235 = vadd.f32 %v3210, %v3139
        %v3236 = vadd.f32 %v3215, %v3140
        %v3237 = vadd.f32 %v3220, %v3141
        %3239 = vset.pattern.permute.xlu0 0
        %3240 = vperm.xlu0 %3239, %v1224
        %v3241 = vpop.permute.xlu0 %3240
        %3244 = vset.pattern.permute.xlu0 0
        %3245 = vperm.xlu0 %3244, %v1225
        %v3246 = vpop.permute.xlu0 %3245
        %3249 = vset.pattern.permute.xlu0 0
        %3250 = vperm.xlu0 %3249, %v1226
        %v3251 = vpop.permute.xlu0 %3250
        %3254 = vset.pattern.permute.xlu0 0
        %3255 = vperm.xlu0 %3254, %v1227
        %v3256 = vpop.permute.xlu0 %3255
        %3259 = vset.pattern.permute.xlu0 0
        %3260 = vperm.xlu0 %3259, %v1228
        %v3261 = vpop.permute.xlu0 %3260
        %3264 = vset.pattern.permute.xlu0 0
        %3265 = vperm.xlu0 %3264, %v1229
        %v3266 = vpop.permute.xlu0 %3265
        %3269 = vset.pattern.permute.xlu0 0
        %3270 = vperm.xlu0 %3269, %v1230
        %v3271 = vpop.permute.xlu0 %3270
        %3274 = vset.pattern.permute.xlu0 0
        %3275 = vperm.xlu0 %3274, %v1231
        %v3276 = vpop.permute.xlu0 %3275
        %3279 = vset.pattern.permute.xlu0 0
        %3280 = vperm.xlu0 %3279, %v1232
        %v3281 = vpop.permute.xlu0 %3280
        %3284 = vset.pattern.permute.xlu0 0
        %3285 = vperm.xlu0 %3284, %v1233
        %v3286 = vpop.permute.xlu0 %3285
        %3289 = vset.pattern.permute.xlu0 0
        %3290 = vperm.xlu0 %3289, %v1234
        %v3291 = vpop.permute.xlu0 %3290
        %3294 = vset.pattern.permute.xlu0 0
        %3295 = vperm.xlu0 %3294, %v1235
        %v3296 = vpop.permute.xlu0 %3295
        %3299 = vset.pattern.permute.xlu0 0
        %3300 = vperm.xlu0 %3299, %v1236
        %v3301 = vpop.permute.xlu0 %3300
        %3304 = vset.pattern.permute.xlu0 0
        %3305 = vperm.xlu0 %3304, %v1237
        %v3306 = vpop.permute.xlu0 %3305
        %3309 = vset.pattern.permute.xlu0 0
        %3310 = vperm.xlu0 %3309, %v1238
        %v3311 = vpop.permute.xlu0 %3310
        %3314 = vset.pattern.permute.xlu0 0
        %3315 = vperm.xlu0 %3314, %v1239
        %v3316 = vpop.permute.xlu0 %3315
        %v3318 = vmul.f32 %v3222, %v3241
        %v3319 = vmul.f32 %v3223, %v3246
        %v3320 = vmul.f32 %v3224, %v3251
        %v3321 = vmul.f32 %v3225, %v3256
        %v3322 = vmul.f32 %v3226, %v3261
        %v3323 = vmul.f32 %v3227, %v3266
        %v3324 = vmul.f32 %v3228, %v3271
        %v3325 = vmul.f32 %v3229, %v3276
        %v3326 = vmul.f32 %v3230, %v3281
        %v3327 = vmul.f32 %v3231, %v3286
        %v3328 = vmul.f32 %v3232, %v3291
        %v3329 = vmul.f32 %v3233, %v3296
        %v3330 = vmul.f32 %v3234, %v3301
        %v3331 = vmul.f32 %v3235, %v3306
        %v3332 = vmul.f32 %v3236, %v3311
        %v3333 = vmul.f32 %v3237, %v3316
        %3350 = vrot.lane.b32.xlu0 %v2181, 106
        %v3351 = vpop.permute.xlu0 %3350
        %3352 = vrot.lane.b32.xlu0 %v2182, 106
        %v3353 = vpop.permute.xlu0 %3352
        %3354 = vrot.lane.b32.xlu0 %v2183, 106
        %v3355 = vpop.permute.xlu0 %3354
        %3356 = vrot.lane.b32.xlu0 %v2184, 106
        %v3357 = vpop.permute.xlu0 %3356
        %3358 = vrot.lane.b32.xlu0 %v2185, 106
        %v3359 = vpop.permute.xlu0 %3358
        %3360 = vrot.lane.b32.xlu0 %v2186, 106
        %v3361 = vpop.permute.xlu0 %3360
        %3362 = vrot.lane.b32.xlu0 %v2187, 106
        %v3363 = vpop.permute.xlu0 %3362
        %3364 = vrot.lane.b32.xlu0 %v2188, 106
        %v3365 = vpop.permute.xlu0 %3364
        %3366 = vrot.lane.b32.xlu0 %v2189, 106
        %v3367 = vpop.permute.xlu0 %3366
        %3368 = vrot.lane.b32.xlu0 %v2190, 106
        %v3369 = vpop.permute.xlu0 %3368
        %3370 = vrot.lane.b32.xlu0 %v2191, 106
        %v3371 = vpop.permute.xlu0 %3370
        %3372 = vrot.lane.b32.xlu0 %v2192, 106
        %v3373 = vpop.permute.xlu0 %3372
        %3374 = vrot.lane.b32.xlu0 %v2193, 106
        %v3375 = vpop.permute.xlu0 %3374
        %3376 = vrot.lane.b32.xlu0 %v2194, 106
        %v3377 = vpop.permute.xlu0 %3376
        %3378 = vrot.lane.b32.xlu0 %v2195, 106
        %v3379 = vpop.permute.xlu0 %3378
        %3380 = vrot.lane.b32.xlu0 %v2196, 106
        %v3381 = vpop.permute.xlu0 %3380
        %v3398 = vsel %vm2197, %v3351, 0.0
        %3399 = vadd.xlane.f32.xlu0 %v3398
        %v3400 = vpop.xlane.xlu0 %3399
        %v3401 = vsel %vm2197, %v3353, 0.0
        %3402 = vadd.xlane.f32.xlu0 %v3401
        %v3403 = vpop.xlane.xlu0 %3402
        %v3404 = vsel %vm2197, %v3355, 0.0
        %3405 = vadd.xlane.f32.xlu0 %v3404
        %v3406 = vpop.xlane.xlu0 %3405
        %v3407 = vsel %vm2197, %v3357, 0.0
        %3408 = vadd.xlane.f32.xlu0 %v3407
        %v3409 = vpop.xlane.xlu0 %3408
        %v3410 = vsel %vm2197, %v3359, 0.0
        %3411 = vadd.xlane.f32.xlu0 %v3410
        %v3412 = vpop.xlane.xlu0 %3411
        %v3413 = vsel %vm2197, %v3361, 0.0
        %3414 = vadd.xlane.f32.xlu0 %v3413
        %v3415 = vpop.xlane.xlu0 %3414
        %v3416 = vsel %vm2197, %v3363, 0.0
        %3417 = vadd.xlane.f32.xlu0 %v3416
        %v3418 = vpop.xlane.xlu0 %3417
        %v3419 = vsel %vm2197, %v3365, 0.0
        %3420 = vadd.xlane.f32.xlu0 %v3419
        %v3421 = vpop.xlane.xlu0 %3420
        %v3422 = vsel %vm2197, %v3367, 0.0
        %3423 = vadd.xlane.f32.xlu0 %v3422
        %v3424 = vpop.xlane.xlu0 %3423
        %v3425 = vsel %vm2197, %v3369, 0.0
        %3426 = vadd.xlane.f32.xlu0 %v3425
        %v3427 = vpop.xlane.xlu0 %3426
        %v3428 = vsel %vm2197, %v3371, 0.0
        %3429 = vadd.xlane.f32.xlu0 %v3428
        %v3430 = vpop.xlane.xlu0 %3429
        %v3431 = vsel %vm2197, %v3373, 0.0
        %3432 = vadd.xlane.f32.xlu0 %v3431
        %v3433 = vpop.xlane.xlu0 %3432
        %v3434 = vsel %vm2197, %v3375, 0.0
        %3435 = vadd.xlane.f32.xlu0 %v3434
        %v3436 = vpop.xlane.xlu0 %3435
        %v3437 = vsel %vm2197, %v3377, 0.0
        %3438 = vadd.xlane.f32.xlu0 %v3437
        %v3439 = vpop.xlane.xlu0 %3438
        %v3440 = vsel %vm2197, %v3379, 0.0
        %3441 = vadd.xlane.f32.xlu0 %v3440
        %v3442 = vpop.xlane.xlu0 %3441
        %v3443 = vsel %vm2197, %v3381, 0.0
        %3444 = vadd.xlane.f32.xlu0 %v3443
        %v3445 = vpop.xlane.xlu0 %3444
        %v3446 = vmul.f32 %v3400, 0.0625
        %v3447 = vmul.f32 %v3403, 0.0625
        %v3448 = vmul.f32 %v3406, 0.0625
        %v3449 = vmul.f32 %v3409, 0.0625
        %v3450 = vmul.f32 %v3412, 0.0625
        %v3451 = vmul.f32 %v3415, 0.0625
        %v3452 = vmul.f32 %v3418, 0.0625
        %v3453 = vmul.f32 %v3421, 0.0625
        %v3454 = vmul.f32 %v3424, 0.0625
        %v3455 = vmul.f32 %v3427, 0.0625
        %v3456 = vmul.f32 %v3430, 0.0625
        %v3457 = vmul.f32 %v3433, 0.0625
        %v3458 = vmul.f32 %v3436, 0.0625
        %v3459 = vmul.f32 %v3439, 0.0625
        %v3460 = vmul.f32 %v3442, 0.0625
        %v3461 = vmul.f32 %v3445, 0.0625
        %v3462 = vsub.f32 %v2181, %v3446
        %v3463 = vsub.f32 %v2182, %v3447
        %v3464 = vsub.f32 %v2183, %v3448
        %v3465 = vsub.f32 %v2184, %v3449
        %v3466 = vsub.f32 %v2185, %v3450
        %v3467 = vsub.f32 %v2186, %v3451
        %v3468 = vsub.f32 %v2187, %v3452
        %v3469 = vsub.f32 %v2188, %v3453
        %v3470 = vsub.f32 %v2189, %v3454
        %v3471 = vsub.f32 %v2190, %v3455
        %v3472 = vsub.f32 %v2191, %v3456
        %v3473 = vsub.f32 %v2192, %v3457
        %v3474 = vsub.f32 %v2193, %v3458
        %v3475 = vsub.f32 %v2194, %v3459
        %v3476 = vsub.f32 %v2195, %v3460
        %v3477 = vsub.f32 %v2196, %v3461
        %v3478 = vmul.f32 %v3462, %v3462
        %v3479 = vmul.f32 %v3463, %v3463
        %v3480 = vmul.f32 %v3464, %v3464
        %v3481 = vmul.f32 %v3465, %v3465
        %v3482 = vmul.f32 %v3466, %v3466
        %v3483 = vmul.f32 %v3467, %v3467
        %v3484 = vmul.f32 %v3468, %v3468
        %v3485 = vmul.f32 %v3469, %v3469
        %v3486 = vmul.f32 %v3470, %v3470
        %v3487 = vmul.f32 %v3471, %v3471
        %v3488 = vmul.f32 %v3472, %v3472
        %v3489 = vmul.f32 %v3473, %v3473
        %v3490 = vmul.f32 %v3474, %v3474
        %v3491 = vmul.f32 %v3475, %v3475
        %v3492 = vmul.f32 %v3476, %v3476
        %v3493 = vmul.f32 %v3477, %v3477
        %3510 = vrot.lane.b32.xlu0 %v3478, 106
        %v3511 = vpop.permute.xlu0 %3510
        %3512 = vrot.lane.b32.xlu0 %v3479, 106
        %v3513 = vpop.permute.xlu0 %3512
        %3514 = vrot.lane.b32.xlu0 %v3480, 106
        %v3515 = vpop.permute.xlu0 %3514
        %3516 = vrot.lane.b32.xlu0 %v3481, 106
        %v3517 = vpop.permute.xlu0 %3516
        %3518 = vrot.lane.b32.xlu0 %v3482, 106
        %v3519 = vpop.permute.xlu0 %3518
        %3520 = vrot.lane.b32.xlu0 %v3483, 106
        %v3521 = vpop.permute.xlu0 %3520
        %3522 = vrot.lane.b32.xlu0 %v3484, 106
        %v3523 = vpop.permute.xlu0 %3522
        %3524 = vrot.lane.b32.xlu0 %v3485, 106
        %v3525 = vpop.permute.xlu0 %3524
        %3526 = vrot.lane.b32.xlu0 %v3486, 106
        %v3527 = vpop.permute.xlu0 %3526
        %3528 = vrot.lane.b32.xlu0 %v3487, 106
        %v3529 = vpop.permute.xlu0 %3528
        %3530 = vrot.lane.b32.xlu0 %v3488, 106
        %v3531 = vpop.permute.xlu0 %3530
        %3532 = vrot.lane.b32.xlu0 %v3489, 106
        %v3533 = vpop.permute.xlu0 %3532
        %3534 = vrot.lane.b32.xlu0 %v3490, 106
        %v3535 = vpop.permute.xlu0 %3534
        %3536 = vrot.lane.b32.xlu0 %v3491, 106
        %v3537 = vpop.permute.xlu0 %3536
        %3538 = vrot.lane.b32.xlu0 %v3492, 106
        %v3539 = vpop.permute.xlu0 %3538
        %3540 = vrot.lane.b32.xlu0 %v3493, 106
        %v3541 = vpop.permute.xlu0 %3540
        %v3558 = vsel %vm2197, %v3511, 0.0
        %3559 = vadd.xlane.f32.xlu0 %v3558
        %v3560 = vpop.xlane.xlu0 %3559
        %v3561 = vsel %vm2197, %v3513, 0.0
        %3562 = vadd.xlane.f32.xlu0 %v3561
        %v3563 = vpop.xlane.xlu0 %3562
        %v3564 = vsel %vm2197, %v3515, 0.0
        %3565 = vadd.xlane.f32.xlu0 %v3564
        %v3566 = vpop.xlane.xlu0 %3565
        %v3567 = vsel %vm2197, %v3517, 0.0
        %3568 = vadd.xlane.f32.xlu0 %v3567
        %v3569 = vpop.xlane.xlu0 %3568
        %v3570 = vsel %vm2197, %v3519, 0.0
        %3571 = vadd.xlane.f32.xlu0 %v3570
        %v3572 = vpop.xlane.xlu0 %3571
        %v3573 = vsel %vm2197, %v3521, 0.0
        %3574 = vadd.xlane.f32.xlu0 %v3573
        %v3575 = vpop.xlane.xlu0 %3574
        %v3576 = vsel %vm2197, %v3523, 0.0
        %3577 = vadd.xlane.f32.xlu0 %v3576
        %v3578 = vpop.xlane.xlu0 %3577
        %v3579 = vsel %vm2197, %v3525, 0.0
        %3580 = vadd.xlane.f32.xlu0 %v3579
        %v3581 = vpop.xlane.xlu0 %3580
        %v3582 = vsel %vm2197, %v3527, 0.0
        %3583 = vadd.xlane.f32.xlu0 %v3582
        %v3584 = vpop.xlane.xlu0 %3583
        %v3585 = vsel %vm2197, %v3529, 0.0
        %3586 = vadd.xlane.f32.xlu0 %v3585
        %v3587 = vpop.xlane.xlu0 %3586
        %v3588 = vsel %vm2197, %v3531, 0.0
        %3589 = vadd.xlane.f32.xlu0 %v3588
        %v3590 = vpop.xlane.xlu0 %3589
        %v3591 = vsel %vm2197, %v3533, 0.0
        %3592 = vadd.xlane.f32.xlu0 %v3591
        %v3593 = vpop.xlane.xlu0 %3592
        %v3594 = vsel %vm2197, %v3535, 0.0
        %3595 = vadd.xlane.f32.xlu0 %v3594
        %v3596 = vpop.xlane.xlu0 %3595
        %v3597 = vsel %vm2197, %v3537, 0.0
        %3598 = vadd.xlane.f32.xlu0 %v3597
        %v3599 = vpop.xlane.xlu0 %3598
        %v3600 = vsel %vm2197, %v3539, 0.0
        %3601 = vadd.xlane.f32.xlu0 %v3600
        %v3602 = vpop.xlane.xlu0 %3601
        %v3603 = vsel %vm2197, %v3541, 0.0
        %3604 = vadd.xlane.f32.xlu0 %v3603
        %v3605 = vpop.xlane.xlu0 %3604
        %v3606 = vmul.f32 %v3560, 0.0625
        %v3607 = vmul.f32 %v3563, 0.0625
        %v3608 = vmul.f32 %v3566, 0.0625
        %v3609 = vmul.f32 %v3569, 0.0625
        %v3610 = vmul.f32 %v3572, 0.0625
        %v3611 = vmul.f32 %v3575, 0.0625
        %v3612 = vmul.f32 %v3578, 0.0625
        %v3613 = vmul.f32 %v3581, 0.0625
        %v3614 = vmul.f32 %v3584, 0.0625
        %v3615 = vmul.f32 %v3587, 0.0625
        %v3616 = vmul.f32 %v3590, 0.0625
        %v3617 = vmul.f32 %v3593, 0.0625
        %v3618 = vmul.f32 %v3596, 0.0625
        %v3619 = vmul.f32 %v3599, 0.0625
        %v3620 = vmul.f32 %v3602, 0.0625
        %v3621 = vmul.f32 %v3605, 0.0625
        %v3622 = vadd.f32 %v3606, 1e-05
        %v3623 = vadd.f32 %v3607, 1e-05
        %v3624 = vadd.f32 %v3608, 1e-05
        %v3625 = vadd.f32 %v3609, 1e-05
        %v3626 = vadd.f32 %v3610, 1e-05
        %v3627 = vadd.f32 %v3611, 1e-05
        %v3628 = vadd.f32 %v3612, 1e-05
        %v3629 = vadd.f32 %v3613, 1e-05
        %v3630 = vadd.f32 %v3614, 1e-05
        %v3631 = vadd.f32 %v3615, 1e-05
        %v3632 = vadd.f32 %v3616, 1e-05
        %v3633 = vadd.f32 %v3617, 1e-05
        %v3634 = vadd.f32 %v3618, 1e-05
        %v3635 = vadd.f32 %v3619, 1e-05
        %v3636 = vadd.f32 %v3620, 1e-05
        %v3637 = vadd.f32 %v3621, 1e-05
        %v3638 = vrsqrt.pop %v3622
        %v3639 = vmul.f32 %v3638, %v3622
        %v3640 = vmul.f32 %v3639, %v3638
        %v3641 = vmul.f32 0.5, %v3640
        %v3642 = vsub.f32 1.5, %v3641
        %v3643 = vmul.f32 %v3638, %v3642
        %vm3644 = vweird.f32 %v3622
        %vm3645 = vweird.f32 %v3638
        %vm3646 = vmor %vm3644, %vm3645
        %v3647 = vsel %vm3646, %v3638, %v3643
        %v3648 = vrsqrt.pop %v3623
        %v3649 = vmul.f32 %v3648, %v3623
        %v3650 = vmul.f32 %v3649, %v3648
        %v3651 = vmul.f32 0.5, %v3650
        %v3652 = vsub.f32 1.5, %v3651
        %v3653 = vmul.f32 %v3648, %v3652
        %vm3654 = vweird.f32 %v3623
        %vm3655 = vweird.f32 %v3648
        %vm3656 = vmor %vm3654, %vm3655
        %v3657 = vsel %vm3656, %v3648, %v3653
        %v3658 = vrsqrt.pop %v3624
        %v3659 = vmul.f32 %v3658, %v3624
        %v3660 = vmul.f32 %v3659, %v3658
        %v3661 = vmul.f32 0.5, %v3660
        %v3662 = vsub.f32 1.5, %v3661
        %v3663 = vmul.f32 %v3658, %v3662
        %vm3664 = vweird.f32 %v3624
        %vm3665 = vweird.f32 %v3658
        %vm3666 = vmor %vm3664, %vm3665
        %v3667 = vsel %vm3666, %v3658, %v3663
        %v3668 = vrsqrt.pop %v3625
        %v3669 = vmul.f32 %v3668, %v3625
        %v3670 = vmul.f32 %v3669, %v3668
        %v3671 = vmul.f32 0.5, %v3670
        %v3672 = vsub.f32 1.5, %v3671
        %v3673 = vmul.f32 %v3668, %v3672
        %vm3674 = vweird.f32 %v3625
        %vm3675 = vweird.f32 %v3668
        %vm3676 = vmor %vm3674, %vm3675
        %v3677 = vsel %vm3676, %v3668, %v3673
        %v3678 = vrsqrt.pop %v3626
        %v3679 = vmul.f32 %v3678, %v3626
        %v3680 = vmul.f32 %v3679, %v3678
        %v3681 = vmul.f32 0.5, %v3680
        %v3682 = vsub.f32 1.5, %v3681
        %v3683 = vmul.f32 %v3678, %v3682
        %vm3684 = vweird.f32 %v3626
        %vm3685 = vweird.f32 %v3678
        %vm3686 = vmor %vm3684, %vm3685
        %v3687 = vsel %vm3686, %v3678, %v3683
        %v3688 = vrsqrt.pop %v3627
        %v3689 = vmul.f32 %v3688, %v3627
        %v3690 = vmul.f32 %v3689, %v3688
        %v3691 = vmul.f32 0.5, %v3690
        %v3692 = vsub.f32 1.5, %v3691
        %v3693 = vmul.f32 %v3688, %v3692
        %vm3694 = vweird.f32 %v3627
        %vm3695 = vweird.f32 %v3688
        %vm3696 = vmor %vm3694, %vm3695
        %v3697 = vsel %vm3696, %v3688, %v3693
        %v3698 = vrsqrt.pop %v3628
        %v3699 = vmul.f32 %v3698, %v3628
        %v3700 = vmul.f32 %v3699, %v3698
        %v3701 = vmul.f32 0.5, %v3700
        %v3702 = vsub.f32 1.5, %v3701
        %v3703 = vmul.f32 %v3698, %v3702
        %vm3704 = vweird.f32 %v3628
        %vm3705 = vweird.f32 %v3698
        %vm3706 = vmor %vm3704, %vm3705
        %v3707 = vsel %vm3706, %v3698, %v3703
        %v3708 = vrsqrt.pop %v3629
        %v3709 = vmul.f32 %v3708, %v3629
        %v3710 = vmul.f32 %v3709, %v3708
        %v3711 = vmul.f32 0.5, %v3710
        %v3712 = vsub.f32 1.5, %v3711
        %v3713 = vmul.f32 %v3708, %v3712
        %vm3714 = vweird.f32 %v3629
        %vm3715 = vweird.f32 %v3708
        %vm3716 = vmor %vm3714, %vm3715
        %v3717 = vsel %vm3716, %v3708, %v3713
        %v3718 = vrsqrt.pop %v3630
        %v3719 = vmul.f32 %v3718, %v3630
        %v3720 = vmul.f32 %v3719, %v3718
        %v3721 = vmul.f32 0.5, %v3720
        %v3722 = vsub.f32 1.5, %v3721
        %v3723 = vmul.f32 %v3718, %v3722
        %vm3724 = vweird.f32 %v3630
        %vm3725 = vweird.f32 %v3718
        %vm3726 = vmor %vm3724, %vm3725
        %v3727 = vsel %vm3726, %v3718, %v3723
        %v3728 = vrsqrt.pop %v3631
        %v3729 = vmul.f32 %v3728, %v3631
        %v3730 = vmul.f32 %v3729, %v3728
        %v3731 = vmul.f32 0.5, %v3730
        %v3732 = vsub.f32 1.5, %v3731
        %v3733 = vmul.f32 %v3728, %v3732
        %vm3734 = vweird.f32 %v3631
        %vm3735 = vweird.f32 %v3728
        %vm3736 = vmor %vm3734, %vm3735
        %v3737 = vsel %vm3736, %v3728, %v3733
        %v3738 = vrsqrt.pop %v3632
        %v3739 = vmul.f32 %v3738, %v3632
        %v3740 = vmul.f32 %v3739, %v3738
        %v3741 = vmul.f32 0.5, %v3740
        %v3742 = vsub.f32 1.5, %v3741
        %v3743 = vmul.f32 %v3738, %v3742
        %vm3744 = vweird.f32 %v3632
        %vm3745 = vweird.f32 %v3738
        %vm3746 = vmor %vm3744, %vm3745
        %v3747 = vsel %vm3746, %v3738, %v3743
        %v3748 = vrsqrt.pop %v3633
        %v3749 = vmul.f32 %v3748, %v3633
        %v3750 = vmul.f32 %v3749, %v3748
        %v3751 = vmul.f32 0.5, %v3750
        %v3752 = vsub.f32 1.5, %v3751
        %v3753 = vmul.f32 %v3748, %v3752
        %vm3754 = vweird.f32 %v3633
        %vm3755 = vweird.f32 %v3748
        %vm3756 = vmor %vm3754, %vm3755
        %v3757 = vsel %vm3756, %v3748, %v3753
        %v3758 = vrsqrt.pop %v3634
        %v3759 = vmul.f32 %v3758, %v3634
        %v3760 = vmul.f32 %v3759, %v3758
        %v3761 = vmul.f32 0.5, %v3760
        %v3762 = vsub.f32 1.5, %v3761
        %v3763 = vmul.f32 %v3758, %v3762
        %vm3764 = vweird.f32 %v3634
        %vm3765 = vweird.f32 %v3758
        %vm3766 = vmor %vm3764, %vm3765
        %v3767 = vsel %vm3766, %v3758, %v3763
        %v3768 = vrsqrt.pop %v3635
        %v3769 = vmul.f32 %v3768, %v3635
        %v3770 = vmul.f32 %v3769, %v3768
        %v3771 = vmul.f32 0.5, %v3770
        %v3772 = vsub.f32 1.5, %v3771
        %v3773 = vmul.f32 %v3768, %v3772
        %vm3774 = vweird.f32 %v3635
        %vm3775 = vweird.f32 %v3768
        %vm3776 = vmor %vm3774, %vm3775
        %v3777 = vsel %vm3776, %v3768, %v3773
        %v3778 = vrsqrt.pop %v3636
        %v3779 = vmul.f32 %v3778, %v3636
        %v3780 = vmul.f32 %v3779, %v3778
        %v3781 = vmul.f32 0.5, %v3780
        %v3782 = vsub.f32 1.5, %v3781
        %v3783 = vmul.f32 %v3778, %v3782
        %vm3784 = vweird.f32 %v3636
        %vm3785 = vweird.f32 %v3778
        %vm3786 = vmor %vm3784, %vm3785
        %v3787 = vsel %vm3786, %v3778, %v3783
        %v3788 = vrsqrt.pop %v3637
        %v3789 = vmul.f32 %v3788, %v3637
        %v3790 = vmul.f32 %v3789, %v3788
        %v3791 = vmul.f32 0.5, %v3790
        %v3792 = vsub.f32 1.5, %v3791
        %v3793 = vmul.f32 %v3788, %v3792
        %vm3794 = vweird.f32 %v3637
        %vm3795 = vweird.f32 %v3788
        %vm3796 = vmor %vm3794, %vm3795
        %v3797 = vsel %vm3796, %v3788, %v3793
        %v3798 = vmul.f32 %v3462, %v3647
        %v3799 = vmul.f32 %v3463, %v3657
        %v3800 = vmul.f32 %v3464, %v3667
        %v3801 = vmul.f32 %v3465, %v3677
        %v3802 = vmul.f32 %v3466, %v3687
        %v3803 = vmul.f32 %v3467, %v3697
        %v3804 = vmul.f32 %v3468, %v3707
        %v3805 = vmul.f32 %v3469, %v3717
        %v3806 = vmul.f32 %v3470, %v3727
        %v3807 = vmul.f32 %v3471, %v3737
        %v3808 = vmul.f32 %v3472, %v3747
        %v3809 = vmul.f32 %v3473, %v3757
        %v3810 = vmul.f32 %v3474, %v3767
        %v3811 = vmul.f32 %v3475, %v3777
        %v3812 = vmul.f32 %v3476, %v3787
        %v3813 = vmul.f32 %v3477, %v3797
        %v3814 = vmul.f32 %v3798, %v2553
        %v3815 = vmul.f32 %v3799, %v2558
        %v3816 = vmul.f32 %v3800, %v2563
        %v3817 = vmul.f32 %v3801, %v2568
        %v3818 = vmul.f32 %v3802, %v2573
        %v3819 = vmul.f32 %v3803, %v2578
        %v3820 = vmul.f32 %v3804, %v2583
        %v3821 = vmul.f32 %v3805, %v2588
        %v3822 = vmul.f32 %v3806, %v2593
        %v3823 = vmul.f32 %v3807, %v2598
        %v3824 = vmul.f32 %v3808, %v2603
        %v3825 = vmul.f32 %v3809, %v2608
        %v3826 = vmul.f32 %v3810, %v2613
        %v3827 = vmul.f32 %v3811, %v2618
        %v3828 = vmul.f32 %v3812, %v2623
        %v3829 = vmul.f32 %v3813, %v2628
        %v3830 = vadd.f32 %v3814, %v2649
        %v3831 = vadd.f32 %v3815, %v2654
        %v3832 = vadd.f32 %v3816, %v2659
        %v3833 = vadd.f32 %v3817, %v2664
        %v3834 = vadd.f32 %v3818, %v2669
        %v3835 = vadd.f32 %v3819, %v2674
        %v3836 = vadd.f32 %v3820, %v2679
        %v3837 = vadd.f32 %v3821, %v2684
        %v3838 = vadd.f32 %v3822, %v2689
        %v3839 = vadd.f32 %v3823, %v2694
        %v3840 = vadd.f32 %v3824, %v2699
        %v3841 = vadd.f32 %v3825, %v2704
        %v3842 = vadd.f32 %v3826, %v2709
        %v3843 = vadd.f32 %v3827, %v2714
        %v3844 = vadd.f32 %v3828, %v2719
        %v3845 = vadd.f32 %v3829, %v2724
        %v3846 = vxor.u32 %v3830, 2147483648
        %v3847 = vxor.u32 %v3831, 2147483648
        %v3848 = vxor.u32 %v3832, 2147483648
        %v3849 = vxor.u32 %v3833, 2147483648
        %v3850 = vxor.u32 %v3834, 2147483648
        %v3851 = vxor.u32 %v3835, 2147483648
        %v3852 = vxor.u32 %v3836, 2147483648
        %v3853 = vxor.u32 %v3837, 2147483648
        %v3854 = vxor.u32 %v3838, 2147483648
        %v3855 = vxor.u32 %v3839, 2147483648
        %v3856 = vxor.u32 %v3840, 2147483648
        %v3857 = vxor.u32 %v3841, 2147483648
        %v3858 = vxor.u32 %v3842, 2147483648
        %v3859 = vxor.u32 %v3843, 2147483648
        %v3860 = vxor.u32 %v3844, 2147483648
        %v3861 = vxor.u32 %v3845, 2147483648
        %v3862 = vmul.f32 %v3846, 1.442695
        %v3863 = vpow.pop %v3862
        %v3864 = vmul.f32 %v3847, 1.442695
        %v3865 = vpow.pop %v3864
        %v3866 = vmul.f32 %v3848, 1.442695
        %v3867 = vpow.pop %v3866
        %v3868 = vmul.f32 %v3849, 1.442695
        %v3869 = vpow.pop %v3868
        %v3870 = vmul.f32 %v3850, 1.442695
        %v3871 = vpow.pop %v3870
        %v3872 = vmul.f32 %v3851, 1.442695
        %v3873 = vpow.pop %v3872
        %v3874 = vmul.f32 %v3852, 1.442695
        %v3875 = vpow.pop %v3874
        %v3876 = vmul.f32 %v3853, 1.442695
        %v3877 = vpow.pop %v3876
        %v3878 = vmul.f32 %v3854, 1.442695
        %v3879 = vpow.pop %v3878
        %v3880 = vmul.f32 %v3855, 1.442695
        %v3881 = vpow.pop %v3880
        %v3882 = vmul.f32 %v3856, 1.442695
        %v3883 = vpow.pop %v3882
        %v3884 = vmul.f32 %v3857, 1.442695
        %v3885 = vpow.pop %v3884
        %v3886 = vmul.f32 %v3858, 1.442695
        %v3887 = vpow.pop %v3886
        %v3888 = vmul.f32 %v3859, 1.442695
        %v3889 = vpow.pop %v3888
        %v3890 = vmul.f32 %v3860, 1.442695
        %v3891 = vpow.pop %v3890
        %v3892 = vmul.f32 %v3861, 1.442695
        %v3893 = vpow.pop %v3892
        %v3894 = vadd.f32 %v3863, 1.0
        %v3895 = vadd.f32 %v3865, 1.0
        %v3896 = vadd.f32 %v3867, 1.0
        %v3897 = vadd.f32 %v3869, 1.0
        %v3898 = vadd.f32 %v3871, 1.0
        %v3899 = vadd.f32 %v3873, 1.0
        %v3900 = vadd.f32 %v3875, 1.0
        %v3901 = vadd.f32 %v3877, 1.0
        %v3902 = vadd.f32 %v3879, 1.0
        %v3903 = vadd.f32 %v3881, 1.0
        %v3904 = vadd.f32 %v3883, 1.0
        %v3905 = vadd.f32 %v3885, 1.0
        %v3906 = vadd.f32 %v3887, 1.0
        %v3907 = vadd.f32 %v3889, 1.0
        %v3908 = vadd.f32 %v3891, 1.0
        %v3909 = vadd.f32 %v3893, 1.0
        %v3910 = vrcp.pop %v3894
        %v3911 = vmul.f32 %v3894, %v3910
        %v3912 = vsub.f32 1.0, %v3911
        %v3913 = vmul.f32 %v3910, %v3912
        %v3914 = vadd.f32 %v3910, %v3913
        %vm3915 = vweird.f32 %v3894
        %vm3916 = vweird.f32 %v3910
        %vm3917 = vmor %vm3915, %vm3916
        %v3918 = vsel %vm3917, %v3910, %v3914
        %v3919 = vand.u32 2147483647, %v3894
        %vm3920 = vcmp.eq.f32.partialorder %v3919, 8.507059e+37
        %v3921 = vand.u32 %v3894, 2147483648
        %v3922 = vor.u32 1.1754944e-38, %v3921
        %v3923 = vsel %vm3920, %v3922, %v3918
        %v3924 = vmul.f32 1.0, %v3923
        %v3925 = vrcp.pop %v3895
        %v3926 = vmul.f32 %v3895, %v3925
        %v3927 = vsub.f32 1.0, %v3926
        %v3928 = vmul.f32 %v3925, %v3927
        %v3929 = vadd.f32 %v3925, %v3928
        %vm3930 = vweird.f32 %v3895
        %vm3931 = vweird.f32 %v3925
        %vm3932 = vmor %vm3930, %vm3931
        %v3933 = vsel %vm3932, %v3925, %v3929
        %v3934 = vand.u32 2147483647, %v3895
        %vm3935 = vcmp.eq.f32.partialorder %v3934, 8.507059e+37
        %v3936 = vand.u32 %v3895, 2147483648
        %v3937 = vor.u32 1.1754944e-38, %v3936
        %v3938 = vsel %vm3935, %v3937, %v3933
        %v3939 = vmul.f32 1.0, %v3938
        %v3940 = vrcp.pop %v3896
        %v3941 = vmul.f32 %v3896, %v3940
        %v3942 = vsub.f32 1.0, %v3941
        %v3943 = vmul.f32 %v3940, %v3942
        %v3944 = vadd.f32 %v3940, %v3943
        %vm3945 = vweird.f32 %v3896
        %vm3946 = vweird.f32 %v3940
        %vm3947 = vmor %vm3945, %vm3946
        %v3948 = vsel %vm3947, %v3940, %v3944
        %v3949 = vand.u32 2147483647, %v3896
        %vm3950 = vcmp.eq.f32.partialorder %v3949, 8.507059e+37
        %v3951 = vand.u32 %v3896, 2147483648
        %v3952 = vor.u32 1.1754944e-38, %v3951
        %v3953 = vsel %vm3950, %v3952, %v3948
        %v3954 = vmul.f32 1.0, %v3953
        %v3955 = vrcp.pop %v3897
        %v3956 = vmul.f32 %v3897, %v3955
        %v3957 = vsub.f32 1.0, %v3956
        %v3958 = vmul.f32 %v3955, %v3957
        %v3959 = vadd.f32 %v3955, %v3958
        %vm3960 = vweird.f32 %v3897
        %vm3961 = vweird.f32 %v3955
        %vm3962 = vmor %vm3960, %vm3961
        %v3963 = vsel %vm3962, %v3955, %v3959
        %v3964 = vand.u32 2147483647, %v3897
        %vm3965 = vcmp.eq.f32.partialorder %v3964, 8.507059e+37
        %v3966 = vand.u32 %v3897, 2147483648
        %v3967 = vor.u32 1.1754944e-38, %v3966
        %v3968 = vsel %vm3965, %v3967, %v3963
        %v3969 = vmul.f32 1.0, %v3968
        %v3970 = vrcp.pop %v3898
        %v3971 = vmul.f32 %v3898, %v3970
        %v3972 = vsub.f32 1.0, %v3971
        %v3973 = vmul.f32 %v3970, %v3972
        %v3974 = vadd.f32 %v3970, %v3973
        %vm3975 = vweird.f32 %v3898
        %vm3976 = vweird.f32 %v3970
        %vm3977 = vmor %vm3975, %vm3976
        %v3978 = vsel %vm3977, %v3970, %v3974
        %v3979 = vand.u32 2147483647, %v3898
        %vm3980 = vcmp.eq.f32.partialorder %v3979, 8.507059e+37
        %v3981 = vand.u32 %v3898, 2147483648
        %v3982 = vor.u32 1.1754944e-38, %v3981
        %v3983 = vsel %vm3980, %v3982, %v3978
        %v3984 = vmul.f32 1.0, %v3983
        %v3985 = vrcp.pop %v3899
        %v3986 = vmul.f32 %v3899, %v3985
        %v3987 = vsub.f32 1.0, %v3986
        %v3988 = vmul.f32 %v3985, %v3987
        %v3989 = vadd.f32 %v3985, %v3988
        %vm3990 = vweird.f32 %v3899
        %vm3991 = vweird.f32 %v3985
        %vm3992 = vmor %vm3990, %vm3991
        %v3993 = vsel %vm3992, %v3985, %v3989
        %v3994 = vand.u32 2147483647, %v3899
        %vm3995 = vcmp.eq.f32.partialorder %v3994, 8.507059e+37
        %v3996 = vand.u32 %v3899, 2147483648
        %v3997 = vor.u32 1.1754944e-38, %v3996
        %v3998 = vsel %vm3995, %v3997, %v3993
        %v3999 = vmul.f32 1.0, %v3998
        %v4000 = vrcp.pop %v3900
        %v4001 = vmul.f32 %v3900, %v4000
        %v4002 = vsub.f32 1.0, %v4001
        %v4003 = vmul.f32 %v4000, %v4002
        %v4004 = vadd.f32 %v4000, %v4003
        %vm4005 = vweird.f32 %v3900
        %vm4006 = vweird.f32 %v4000
        %vm4007 = vmor %vm4005, %vm4006
        %v4008 = vsel %vm4007, %v4000, %v4004
        %v4009 = vand.u32 2147483647, %v3900
        %vm4010 = vcmp.eq.f32.partialorder %v4009, 8.507059e+37
        %v4011 = vand.u32 %v3900, 2147483648
        %v4012 = vor.u32 1.1754944e-38, %v4011
        %v4013 = vsel %vm4010, %v4012, %v4008
        %v4014 = vmul.f32 1.0, %v4013
        %v4015 = vrcp.pop %v3901
        %v4016 = vmul.f32 %v3901, %v4015
        %v4017 = vsub.f32 1.0, %v4016
        %v4018 = vmul.f32 %v4015, %v4017
        %v4019 = vadd.f32 %v4015, %v4018
        %vm4020 = vweird.f32 %v3901
        %vm4021 = vweird.f32 %v4015
        %vm4022 = vmor %vm4020, %vm4021
        %v4023 = vsel %vm4022, %v4015, %v4019
        %v4024 = vand.u32 2147483647, %v3901
        %vm4025 = vcmp.eq.f32.partialorder %v4024, 8.507059e+37
        %v4026 = vand.u32 %v3901, 2147483648
        %v4027 = vor.u32 1.1754944e-38, %v4026
        %v4028 = vsel %vm4025, %v4027, %v4023
        %v4029 = vmul.f32 1.0, %v4028
        %v4030 = vrcp.pop %v3902
        %v4031 = vmul.f32 %v3902, %v4030
        %v4032 = vsub.f32 1.0, %v4031
        %v4033 = vmul.f32 %v4030, %v4032
        %v4034 = vadd.f32 %v4030, %v4033
        %vm4035 = vweird.f32 %v3902
        %vm4036 = vweird.f32 %v4030
        %vm4037 = vmor %vm4035, %vm4036
        %v4038 = vsel %vm4037, %v4030, %v4034
        %v4039 = vand.u32 2147483647, %v3902
        %vm4040 = vcmp.eq.f32.partialorder %v4039, 8.507059e+37
        %v4041 = vand.u32 %v3902, 2147483648
        %v4042 = vor.u32 1.1754944e-38, %v4041
        %v4043 = vsel %vm4040, %v4042, %v4038
        %v4044 = vmul.f32 1.0, %v4043
        %v4045 = vrcp.pop %v3903
        %v4046 = vmul.f32 %v3903, %v4045
        %v4047 = vsub.f32 1.0, %v4046
        %v4048 = vmul.f32 %v4045, %v4047
        %v4049 = vadd.f32 %v4045, %v4048
        %vm4050 = vweird.f32 %v3903
        %vm4051 = vweird.f32 %v4045
        %vm4052 = vmor %vm4050, %vm4051
        %v4053 = vsel %vm4052, %v4045, %v4049
        %v4054 = vand.u32 2147483647, %v3903
        %vm4055 = vcmp.eq.f32.partialorder %v4054, 8.507059e+37
        %v4056 = vand.u32 %v3903, 2147483648
        %v4057 = vor.u32 1.1754944e-38, %v4056
        %v4058 = vsel %vm4055, %v4057, %v4053
        %v4059 = vmul.f32 1.0, %v4058
        %v4060 = vrcp.pop %v3904
        %v4061 = vmul.f32 %v3904, %v4060
        %v4062 = vsub.f32 1.0, %v4061
        %v4063 = vmul.f32 %v4060, %v4062
        %v4064 = vadd.f32 %v4060, %v4063
        %vm4065 = vweird.f32 %v3904
        %vm4066 = vweird.f32 %v4060
        %vm4067 = vmor %vm4065, %vm4066
        %v4068 = vsel %vm4067, %v4060, %v4064
        %v4069 = vand.u32 2147483647, %v3904
        %vm4070 = vcmp.eq.f32.partialorder %v4069, 8.507059e+37
        %v4071 = vand.u32 %v3904, 2147483648
        %v4072 = vor.u32 1.1754944e-38, %v4071
        %v4073 = vsel %vm4070, %v4072, %v4068
        %v4074 = vmul.f32 1.0, %v4073
        %v4075 = vrcp.pop %v3905
        %v4076 = vmul.f32 %v3905, %v4075
        %v4077 = vsub.f32 1.0, %v4076
        %v4078 = vmul.f32 %v4075, %v4077
        %v4079 = vadd.f32 %v4075, %v4078
        %vm4080 = vweird.f32 %v3905
        %vm4081 = vweird.f32 %v4075
        %vm4082 = vmor %vm4080, %vm4081
        %v4083 = vsel %vm4082, %v4075, %v4079
        %v4084 = vand.u32 2147483647, %v3905
        %vm4085 = vcmp.eq.f32.partialorder %v4084, 8.507059e+37
        %v4086 = vand.u32 %v3905, 2147483648
        %v4087 = vor.u32 1.1754944e-38, %v4086
        %v4088 = vsel %vm4085, %v4087, %v4083
        %v4089 = vmul.f32 1.0, %v4088
        %v4090 = vrcp.pop %v3906
        %v4091 = vmul.f32 %v3906, %v4090
        %v4092 = vsub.f32 1.0, %v4091
        %v4093 = vmul.f32 %v4090, %v4092
        %v4094 = vadd.f32 %v4090, %v4093
        %vm4095 = vweird.f32 %v3906
        %vm4096 = vweird.f32 %v4090
        %vm4097 = vmor %vm4095, %vm4096
        %v4098 = vsel %vm4097, %v4090, %v4094
        %v4099 = vand.u32 2147483647, %v3906
        %vm4100 = vcmp.eq.f32.partialorder %v4099, 8.507059e+37
        %v4101 = vand.u32 %v3906, 2147483648
        %v4102 = vor.u32 1.1754944e-38, %v4101
        %v4103 = vsel %vm4100, %v4102, %v4098
        %v4104 = vmul.f32 1.0, %v4103
        %v4105 = vrcp.pop %v3907
        %v4106 = vmul.f32 %v3907, %v4105
        %v4107 = vsub.f32 1.0, %v4106
        %v4108 = vmul.f32 %v4105, %v4107
        %v4109 = vadd.f32 %v4105, %v4108
        %vm4110 = vweird.f32 %v3907
        %vm4111 = vweird.f32 %v4105
        %vm4112 = vmor %vm4110, %vm4111
        %v4113 = vsel %vm4112, %v4105, %v4109
        %v4114 = vand.u32 2147483647, %v3907
        %vm4115 = vcmp.eq.f32.partialorder %v4114, 8.507059e+37
        %v4116 = vand.u32 %v3907, 2147483648
        %v4117 = vor.u32 1.1754944e-38, %v4116
        %v4118 = vsel %vm4115, %v4117, %v4113
        %v4119 = vmul.f32 1.0, %v4118
        %v4120 = vrcp.pop %v3908
        %v4121 = vmul.f32 %v3908, %v4120
        %v4122 = vsub.f32 1.0, %v4121
        %v4123 = vmul.f32 %v4120, %v4122
        %v4124 = vadd.f32 %v4120, %v4123
        %vm4125 = vweird.f32 %v3908
        %vm4126 = vweird.f32 %v4120
        %vm4127 = vmor %vm4125, %vm4126
        %v4128 = vsel %vm4127, %v4120, %v4124
        %v4129 = vand.u32 2147483647, %v3908
        %vm4130 = vcmp.eq.f32.partialorder %v4129, 8.507059e+37
        %v4131 = vand.u32 %v3908, 2147483648
        %v4132 = vor.u32 1.1754944e-38, %v4131
        %v4133 = vsel %vm4130, %v4132, %v4128
        %v4134 = vmul.f32 1.0, %v4133
        %v4135 = vrcp.pop %v3909
        %v4136 = vmul.f32 %v3909, %v4135
        %v4137 = vsub.f32 1.0, %v4136
        %v4138 = vmul.f32 %v4135, %v4137
        %v4139 = vadd.f32 %v4135, %v4138
        %vm4140 = vweird.f32 %v3909
        %vm4141 = vweird.f32 %v4135
        %vm4142 = vmor %vm4140, %vm4141
        %v4143 = vsel %vm4142, %v4135, %v4139
        %v4144 = vand.u32 2147483647, %v3909
        %vm4145 = vcmp.eq.f32.partialorder %v4144, 8.507059e+37
        %v4146 = vand.u32 %v3909, 2147483648
        %v4147 = vor.u32 1.1754944e-38, %v4146
        %v4148 = vsel %vm4145, %v4147, %v4143
        %v4149 = vmul.f32 1.0, %v4148
        %v4150 = vmul.f32 %v3049, %v3924
        %v4151 = vmul.f32 %v3054, %v3939
        %v4152 = vmul.f32 %v3059, %v3954
        %v4153 = vmul.f32 %v3064, %v3969
        %v4154 = vmul.f32 %v3069, %v3984
        %v4155 = vmul.f32 %v3074, %v3999
        %v4156 = vmul.f32 %v3079, %v4014
        %v4157 = vmul.f32 %v3084, %v4029
        %v4158 = vmul.f32 %v3089, %v4044
        %v4159 = vmul.f32 %v3094, %v4059
        %v4160 = vmul.f32 %v3099, %v4074
        %v4161 = vmul.f32 %v3104, %v4089
        %v4162 = vmul.f32 %v3109, %v4104
        %v4163 = vmul.f32 %v3114, %v4119
        %v4164 = vmul.f32 %v3119, %v4134
        %v4165 = vmul.f32 %v3124, %v4149
        %v4166 = vadd.f32 %v3145, %v4150
        %v4167 = vadd.f32 %v3150, %v4151
        %v4168 = vadd.f32 %v3155, %v4152
        %v4169 = vadd.f32 %v3160, %v4153
        %v4170 = vadd.f32 %v3165, %v4154
        %v4171 = vadd.f32 %v3170, %v4155
        %v4172 = vadd.f32 %v3175, %v4156
        %v4173 = vadd.f32 %v3180, %v4157
        %v4174 = vadd.f32 %v3185, %v4158
        %v4175 = vadd.f32 %v3190, %v4159
        %v4176 = vadd.f32 %v3195, %v4160
        %v4177 = vadd.f32 %v3200, %v4161
        %v4178 = vadd.f32 %v3205, %v4162
        %v4179 = vadd.f32 %v3210, %v4163
        %v4180 = vadd.f32 %v3215, %v4164
        %v4181 = vadd.f32 %v3220, %v4165
        %v4182 = vld [vmem:[%s2] sm:$0xff]
        %v4183 = vld [vmem:[%s2 + $0x8] sm:$0xff]
        %v4184 = vld [vmem:[%s2 + $0x10] sm:$0xff]
        %v4185 = vld [vmem:[%s2 + $0x18] sm:$0xff]
        %v4187 = vsel %vm2197, %v3318, 0
        %v4190 = vsel %vm2197, %v3319, 0
        %v4193 = vsel %vm2197, %v3320, 0
        %v4196 = vsel %vm2197, %v3321, 0
        %v4199 = vsel %vm2197, %v3322, 0
        %v4202 = vsel %vm2197, %v3323, 0
        %v4205 = vsel %vm2197, %v3324, 0
        %v4208 = vsel %vm2197, %v3325, 0
        %v4211 = vsel %vm2197, %v3326, 0
        %v4214 = vsel %vm2197, %v3327, 0
        %v4217 = vsel %vm2197, %v3328, 0
        %v4220 = vsel %vm2197, %v3329, 0
        %v4223 = vsel %vm2197, %v3330, 0
        %v4226 = vsel %vm2197, %v3331, 0
        %v4229 = vsel %vm2197, %v3332, 0
        %v4232 = vsel %vm2197, %v3333, 0
        %4234 = vmatpush.msra.mxu0 0.0
        %4235 = vmatpush.msra.mxu0 0.0
        %4236 = vmatpush.msra.mxu0 0.0
        %4237 = vmatpush.msra.mxu0 0.0
        %4238 = vmatpush.msra.mxu0 0.0
        %4239 = vmatpush.msra.mxu0 0.0
        %4240 = vmatpush.msra.mxu0 0.0
        %4241 = vmatpush.msra.mxu0 0.0
        %4242 = vmatpush.msra.mxu0 0.0
        %4243 = vmatpush.msra.mxu0 0.0
        %4244 = vmatpush.msra.mxu0 0.0
        %4245 = vmatpush.msra.mxu0 0.0
        %4246 = vmatpush.msra.mxu0 0.0
        %4247 = vmatpush.msra.mxu0 0.0
        %4248 = vmatpush.msra.mxu0 %v4184
        %4249 = vmatpush.msra.mxu0 %v4182
        %4250 = vmatmul.f32.gmra.mxu0 %v4187
        %v4251 = vpop.f32.mrf.mxu0
        %v4252 = vadd.f32 0.0, %v4251
        %4253 = vmatmul.f32.gmra.mxu0 %v4190
        %v4254 = vpop.f32.mrf.mxu0
        %v4255 = vadd.f32 0.0, %v4254
        %4256 = vmatmul.f32.gmra.mxu0 %v4193
        %v4257 = vpop.f32.mrf.mxu0
        %v4258 = vadd.f32 0.0, %v4257
        %4259 = vmatmul.f32.gmra.mxu0 %v4196
        %v4260 = vpop.f32.mrf.mxu0
        %v4261 = vadd.f32 0.0, %v4260
        %4262 = vmatmul.f32.gmra.mxu0 %v4199
        %v4263 = vpop.f32.mrf.mxu0
        %v4264 = vadd.f32 0.0, %v4263
        %4265 = vmatmul.f32.gmra.mxu0 %v4202
        %v4266 = vpop.f32.mrf.mxu0
        %v4267 = vadd.f32 0.0, %v4266
        %4268 = vmatmul.f32.gmra.mxu0 %v4205
        %v4269 = vpop.f32.mrf.mxu0
        %v4270 = vadd.f32 0.0, %v4269
        %4271 = vmatmul.f32.gmra.mxu0 %v4208
        %v4272 = vpop.f32.mrf.mxu0
        %v4273 = vadd.f32 0.0, %v4272
        %4274 = vmatmul.f32.gmra.mxu0 %v4211
        %v4275 = vpop.f32.mrf.mxu0
        %v4276 = vadd.f32 0.0, %v4275
        %4277 = vmatmul.f32.gmra.mxu0 %v4214
        %v4278 = vpop.f32.mrf.mxu0
        %v4279 = vadd.f32 0.0, %v4278
        %4280 = vmatmul.f32.gmra.mxu0 %v4217
        %v4281 = vpop.f32.mrf.mxu0
        %v4282 = vadd.f32 0.0, %v4281
        %4283 = vmatmul.f32.gmra.mxu0 %v4220
        %v4284 = vpop.f32.mrf.mxu0
        %v4285 = vadd.f32 0.0, %v4284
        %4286 = vmatmul.f32.gmra.mxu0 %v4223
        %v4287 = vpop.f32.mrf.mxu0
        %v4288 = vadd.f32 0.0, %v4287
        %4289 = vmatmul.f32.gmra.mxu0 %v4226
        %v4290 = vpop.f32.mrf.mxu0
        %v4291 = vadd.f32 0.0, %v4290
        %4292 = vmatmul.f32.gmra.mxu0 %v4229
        %v4293 = vpop.f32.mrf.mxu0
        %v4294 = vadd.f32 0.0, %v4293
        %4295 = vmatmul.f32.gmra.mxu0 %v4232
        %v4296 = vpop.f32.mrf.mxu0
        %v4297 = vadd.f32 0.0, %v4296
        %4298 = vdwg.mxu0
        %4299 = vmatpush.msra.mxu0 0.0
        %4300 = vmatpush.msra.mxu0 0.0
        %4301 = vmatpush.msra.mxu0 0.0
        %4302 = vmatpush.msra.mxu0 0.0
        %4303 = vmatpush.msra.mxu0 0.0
        %4304 = vmatpush.msra.mxu0 0.0
        %4305 = vmatpush.msra.mxu0 0.0
        %4306 = vmatpush.msra.mxu0 0.0
        %4307 = vmatpush.msra.mxu0 0.0
        %4308 = vmatpush.msra.mxu0 0.0
        %4309 = vmatpush.msra.mxu0 0.0
        %4310 = vmatpush.msra.mxu0 0.0
        %4311 = vmatpush.msra.mxu0 0.0
        %4312 = vmatpush.msra.mxu0 0.0
        %4313 = vmatpush.msra.mxu0 %v4185
        %4314 = vmatpush.msra.mxu0 %v4183
        %4315 = vmatmul.f32.gmra.mxu0 %v4187
        %v4316 = vpop.f32.mrf.mxu0
        %v4317 = vadd.f32 0.0, %v4316
        %4318 = vmatmul.f32.gmra.mxu0 %v4190
        %v4319 = vpop.f32.mrf.mxu0
        %v4320 = vadd.f32 0.0, %v4319
        %4321 = vmatmul.f32.gmra.mxu0 %v4193
        %v4322 = vpop.f32.mrf.mxu0
        %v4323 = vadd.f32 0.0, %v4322
        %4324 = vmatmul.f32.gmra.mxu0 %v4196
        %v4325 = vpop.f32.mrf.mxu0
        %v4326 = vadd.f32 0.0, %v4325
        %4327 = vmatmul.f32.gmra.mxu0 %v4199
        %v4328 = vpop.f32.mrf.mxu0
        %v4329 = vadd.f32 0.0, %v4328
        %4330 = vmatmul.f32.gmra.mxu0 %v4202
        %v4331 = vpop.f32.mrf.mxu0
        %v4332 = vadd.f32 0.0, %v4331
        %4333 = vmatmul.f32.gmra.mxu0 %v4205
        %v4334 = vpop.f32.mrf.mxu0
        %v4335 = vadd.f32 0.0, %v4334
        %4336 = vmatmul.f32.gmra.mxu0 %v4208
        %v4337 = vpop.f32.mrf.mxu0
        %v4338 = vadd.f32 0.0, %v4337
        %4339 = vmatmul.f32.gmra.mxu0 %v4211
        %v4340 = vpop.f32.mrf.mxu0
        %v4341 = vadd.f32 0.0, %v4340
        %4342 = vmatmul.f32.gmra.mxu0 %v4214
        %v4343 = vpop.f32.mrf.mxu0
        %v4344 = vadd.f32 0.0, %v4343
        %4345 = vmatmul.f32.gmra.mxu0 %v4217
        %v4346 = vpop.f32.mrf.mxu0
        %v4347 = vadd.f32 0.0, %v4346
        %4348 = vmatmul.f32.gmra.mxu0 %v4220
        %v4349 = vpop.f32.mrf.mxu0
        %v4350 = vadd.f32 0.0, %v4349
        %4351 = vmatmul.f32.gmra.mxu0 %v4223
        %v4352 = vpop.f32.mrf.mxu0
        %v4353 = vadd.f32 0.0, %v4352
        %4354 = vmatmul.f32.gmra.mxu0 %v4226
        %v4355 = vpop.f32.mrf.mxu0
        %v4356 = vadd.f32 0.0, %v4355
        %4357 = vmatmul.f32.gmra.mxu0 %v4229
        %v4358 = vpop.f32.mrf.mxu0
        %v4359 = vadd.f32 0.0, %v4358
        %4360 = vmatmul.f32.gmra.mxu0 %v4232
        %v4361 = vpop.f32.mrf.mxu0
        %v4362 = vadd.f32 0.0, %v4361
        %4363 = vdwg.mxu0
        %v4364 = vld [vmem:[%s3] sm:$0xff]
        %v4365 = vld [vmem:[%s3 + $0x8] sm:$0xff]
        %v4366 = vld [vmem:[%s3 + $0x10] sm:$0xff]
        %v4367 = vld [vmem:[%s3 + $0x18] sm:$0xff]
        %4384 = vrot.lane.b32.xlu0 %v4166, 106
        %v4385 = vpop.permute.xlu0 %4384
        %4386 = vrot.lane.b32.xlu0 %v4167, 106
        %v4387 = vpop.permute.xlu0 %4386
        %4388 = vrot.lane.b32.xlu0 %v4168, 106
        %v4389 = vpop.permute.xlu0 %4388
        %4390 = vrot.lane.b32.xlu0 %v4169, 106
        %v4391 = vpop.permute.xlu0 %4390
        %4392 = vrot.lane.b32.xlu0 %v4170, 106
        %v4393 = vpop.permute.xlu0 %4392
        %4394 = vrot.lane.b32.xlu0 %v4171, 106
        %v4395 = vpop.permute.xlu0 %4394
        %4396 = vrot.lane.b32.xlu0 %v4172, 106
        %v4397 = vpop.permute.xlu0 %4396
        %4398 = vrot.lane.b32.xlu0 %v4173, 106
        %v4399 = vpop.permute.xlu0 %4398
        %4400 = vrot.lane.b32.xlu0 %v4174, 106
        %v4401 = vpop.permute.xlu0 %4400
        %4402 = vrot.lane.b32.xlu0 %v4175, 106
        %v4403 = vpop.permute.xlu0 %4402
        %4404 = vrot.lane.b32.xlu0 %v4176, 106
        %v4405 = vpop.permute.xlu0 %4404
        %4406 = vrot.lane.b32.xlu0 %v4177, 106
        %v4407 = vpop.permute.xlu0 %4406
        %4408 = vrot.lane.b32.xlu0 %v4178, 106
        %v4409 = vpop.permute.xlu0 %4408
        %4410 = vrot.lane.b32.xlu0 %v4179, 106
        %v4411 = vpop.permute.xlu0 %4410
        %4412 = vrot.lane.b32.xlu0 %v4180, 106
        %v4413 = vpop.permute.xlu0 %4412
        %4414 = vrot.lane.b32.xlu0 %v4181, 106
        %v4415 = vpop.permute.xlu0 %4414
        %v4416 = vsel %vm2197, %v4385, 0
        %v4418 = vsel %vm2197, %v4387, 0
        %v4420 = vsel %vm2197, %v4389, 0
        %v4422 = vsel %vm2197, %v4391, 0
        %v4424 = vsel %vm2197, %v4393, 0
        %v4426 = vsel %vm2197, %v4395, 0
        %v4428 = vsel %vm2197, %v4397, 0
        %v4430 = vsel %vm2197, %v4399, 0
        %v4432 = vsel %vm2197, %v4401, 0
        %v4434 = vsel %vm2197, %v4403, 0
        %v4436 = vsel %vm2197, %v4405, 0
        %v4438 = vsel %vm2197, %v4407, 0
        %v4440 = vsel %vm2197, %v4409, 0
        %v4442 = vsel %vm2197, %v4411, 0
        %v4444 = vsel %vm2197, %v4413, 0
        %v4446 = vsel %vm2197, %v4415, 0
        %4448 = vmatpush.msra.mxu0 0.0
        %4449 = vmatpush.msra.mxu0 0.0
        %4450 = vmatpush.msra.mxu0 0.0
        %4451 = vmatpush.msra.mxu0 0.0
        %4452 = vmatpush.msra.mxu0 0.0
        %4453 = vmatpush.msra.mxu0 0.0
        %4454 = vmatpush.msra.mxu0 0.0
        %4455 = vmatpush.msra.mxu0 0.0
        %4456 = vmatpush.msra.mxu0 0.0
        %4457 = vmatpush.msra.mxu0 0.0
        %4458 = vmatpush.msra.mxu0 0.0
        %4459 = vmatpush.msra.mxu0 0.0
        %4460 = vmatpush.msra.mxu0 0.0
        %4461 = vmatpush.msra.mxu0 0.0
        %4462 = vmatpush.msra.mxu0 %v4366
        %4463 = vmatpush.msra.mxu0 %v4364
        %4464 = vmatmul.f32.gmra.mxu0 %v4416
        %v4465 = vpop.f32.mrf.mxu0
        %v4466 = vadd.f32 0.0, %v4465
        %4467 = vmatmul.f32.gmra.mxu0 %v4418
        %v4468 = vpop.f32.mrf.mxu0
        %v4469 = vadd.f32 0.0, %v4468
        %4470 = vmatmul.f32.gmra.mxu0 %v4420
        %v4471 = vpop.f32.mrf.mxu0
        %v4472 = vadd.f32 0.0, %v4471
        %4473 = vmatmul.f32.gmra.mxu0 %v4422
        %v4474 = vpop.f32.mrf.mxu0
        %v4475 = vadd.f32 0.0, %v4474
        %4476 = vmatmul.f32.gmra.mxu0 %v4424
        %v4477 = vpop.f32.mrf.mxu0
        %v4478 = vadd.f32 0.0, %v4477
        %4479 = vmatmul.f32.gmra.mxu0 %v4426
        %v4480 = vpop.f32.mrf.mxu0
        %v4481 = vadd.f32 0.0, %v4480
        %4482 = vmatmul.f32.gmra.mxu0 %v4428
        %v4483 = vpop.f32.mrf.mxu0
        %v4484 = vadd.f32 0.0, %v4483
        %4485 = vmatmul.f32.gmra.mxu0 %v4430
        %v4486 = vpop.f32.mrf.mxu0
        %v4487 = vadd.f32 0.0, %v4486
        %4488 = vmatmul.f32.gmra.mxu0 %v4432
        %v4489 = vpop.f32.mrf.mxu0
        %v4490 = vadd.f32 0.0, %v4489
        %4491 = vmatmul.f32.gmra.mxu0 %v4434
        %v4492 = vpop.f32.mrf.mxu0
        %v4493 = vadd.f32 0.0, %v4492
        %4494 = vmatmul.f32.gmra.mxu0 %v4436
        %v4495 = vpop.f32.mrf.mxu0
        %v4496 = vadd.f32 0.0, %v4495
        %4497 = vmatmul.f32.gmra.mxu0 %v4438
        %v4498 = vpop.f32.mrf.mxu0
        %v4499 = vadd.f32 0.0, %v4498
        %4500 = vmatmul.f32.gmra.mxu0 %v4440
        %v4501 = vpop.f32.mrf.mxu0
        %v4502 = vadd.f32 0.0, %v4501
        %4503 = vmatmul.f32.gmra.mxu0 %v4442
        %v4504 = vpop.f32.mrf.mxu0
        %v4505 = vadd.f32 0.0, %v4504
        %4506 = vmatmul.f32.gmra.mxu0 %v4444
        %v4507 = vpop.f32.mrf.mxu0
        %v4508 = vadd.f32 0.0, %v4507
        %4509 = vmatmul.f32.gmra.mxu0 %v4446
        %v4510 = vpop.f32.mrf.mxu0
        %v4511 = vadd.f32 0.0, %v4510
        %4512 = vdwg.mxu0
        %4513 = vmatpush.msra.mxu0 0.0
        %4514 = vmatpush.msra.mxu0 0.0
        %4515 = vmatpush.msra.mxu0 0.0
        %4516 = vmatpush.msra.mxu0 0.0
        %4517 = vmatpush.msra.mxu0 0.0
        %4518 = vmatpush.msra.mxu0 0.0
        %4519 = vmatpush.msra.mxu0 0.0
        %4520 = vmatpush.msra.mxu0 0.0
        %4521 = vmatpush.msra.mxu0 0.0
        %4522 = vmatpush.msra.mxu0 0.0
        %4523 = vmatpush.msra.mxu0 0.0
        %4524 = vmatpush.msra.mxu0 0.0
        %4525 = vmatpush.msra.mxu0 0.0
        %4526 = vmatpush.msra.mxu0 0.0
        %4527 = vmatpush.msra.mxu0 %v4367
        %4528 = vmatpush.msra.mxu0 %v4365
        %4529 = vmatmul.f32.gmra.mxu0 %v4416
        %v4530 = vpop.f32.mrf.mxu0
        %v4531 = vadd.f32 0.0, %v4530
        %4532 = vmatmul.f32.gmra.mxu0 %v4418
        %v4533 = vpop.f32.mrf.mxu0
        %v4534 = vadd.f32 0.0, %v4533
        %4535 = vmatmul.f32.gmra.mxu0 %v4420
        %v4536 = vpop.f32.mrf.mxu0
        %v4537 = vadd.f32 0.0, %v4536
        %4538 = vmatmul.f32.gmra.mxu0 %v4422
        %v4539 = vpop.f32.mrf.mxu0
        %v4540 = vadd.f32 0.0, %v4539
        %4541 = vmatmul.f32.gmra.mxu0 %v4424
        %v4542 = vpop.f32.mrf.mxu0
        %v4543 = vadd.f32 0.0, %v4542
        %4544 = vmatmul.f32.gmra.mxu0 %v4426
        %v4545 = vpop.f32.mrf.mxu0
        %v4546 = vadd.f32 0.0, %v4545
        %4547 = vmatmul.f32.gmra.mxu0 %v4428
        %v4548 = vpop.f32.mrf.mxu0
        %v4549 = vadd.f32 0.0, %v4548
        %4550 = vmatmul.f32.gmra.mxu0 %v4430
        %v4551 = vpop.f32.mrf.mxu0
        %v4552 = vadd.f32 0.0, %v4551
        %4553 = vmatmul.f32.gmra.mxu0 %v4432
        %v4554 = vpop.f32.mrf.mxu0
        %v4555 = vadd.f32 0.0, %v4554
        %4556 = vmatmul.f32.gmra.mxu0 %v4434
        %v4557 = vpop.f32.mrf.mxu0
        %v4558 = vadd.f32 0.0, %v4557
        %4559 = vmatmul.f32.gmra.mxu0 %v4436
        %v4560 = vpop.f32.mrf.mxu0
        %v4561 = vadd.f32 0.0, %v4560
        %4562 = vmatmul.f32.gmra.mxu0 %v4438
        %v4563 = vpop.f32.mrf.mxu0
        %v4564 = vadd.f32 0.0, %v4563
        %4565 = vmatmul.f32.gmra.mxu0 %v4440
        %v4566 = vpop.f32.mrf.mxu0
        %v4567 = vadd.f32 0.0, %v4566
        %4568 = vmatmul.f32.gmra.mxu0 %v4442
        %v4569 = vpop.f32.mrf.mxu0
        %v4570 = vadd.f32 0.0, %v4569
        %4571 = vmatmul.f32.gmra.mxu0 %v4444
        %v4572 = vpop.f32.mrf.mxu0
        %v4573 = vadd.f32 0.0, %v4572
        %4574 = vmatmul.f32.gmra.mxu0 %v4446
        %v4575 = vpop.f32.mrf.mxu0
        %v4576 = vadd.f32 0.0, %v4575
        %4577 = vdwg.mxu0
        %v4578 = vld [vmem:[%s330] sm:$0xff]
        %v4579 = vld [vmem:[%s330 + $0x8] sm:$0xff]
        %v4580 = vld [vmem:[%s330 + $0x10] sm:$0xff]
        %v4581 = vld [vmem:[%s330 + $0x18] sm:$0xff]
        %v4582 = vld [vmem:[%s330 + $0x20] sm:$0xff]
        %v4583 = vld [vmem:[%s330 + $0x28] sm:$0xff]
        %v4584 = vld [vmem:[%s330 + $0x30] sm:$0xff]
        %v4585 = vld [vmem:[%s330 + $0x38] sm:$0xff]
        %v4586 = vld [vmem:[%s330 + $0x40] sm:$0xff]
        %v4587 = vld [vmem:[%s330 + $0x48] sm:$0xff]
        %v4588 = vld [vmem:[%s330 + $0x50] sm:$0xff]
        %v4589 = vld [vmem:[%s330 + $0x58] sm:$0xff]
        %v4590 = vld [vmem:[%s330 + $0x60] sm:$0xff]
        %v4591 = vld [vmem:[%s330 + $0x68] sm:$0xff]
        %v4592 = vld [vmem:[%s330 + $0x70] sm:$0xff]
        %v4593 = vld [vmem:[%s330 + $0x78] sm:$0xff]
        %v4594 = vld [vmem:[%s330 + $0x80] sm:$0xff]
        %v4595 = vld [vmem:[%s330 + $0x88] sm:$0xff]
        %v4596 = vld [vmem:[%s330 + $0x90] sm:$0xff]
        %v4597 = vld [vmem:[%s330 + $0x98] sm:$0xff]
        %v4598 = vld [vmem:[%s330 + $0xa0] sm:$0xff]
        %v4599 = vld [vmem:[%s330 + $0xa8] sm:$0xff]
        %v4600 = vld [vmem:[%s330 + $0xb0] sm:$0xff]
        %v4601 = vld [vmem:[%s330 + $0xb8] sm:$0xff]
        %v4602 = vld [vmem:[%s330 + $0xc0] sm:$0xff]
        %v4603 = vld [vmem:[%s330 + $0xc8] sm:$0xff]
        %v4604 = vld [vmem:[%s330 + $0xd0] sm:$0xff]
        %v4605 = vld [vmem:[%s330 + $0xd8] sm:$0xff]
        %v4606 = vld [vmem:[%s330 + $0xe0] sm:$0xff]
        %v4607 = vld [vmem:[%s330 + $0xe8] sm:$0xff]
        %v4608 = vld [vmem:[%s330 + $0xf0] sm:$0xff]
        %v4609 = vld [vmem:[%s330 + $0xf8] sm:$0xff]
        %v4610 = vmul.f32 %v4578, %v4252
        %v4611 = vmul.f32 %v4579, %v4317
        %v4612 = vmul.f32 %v4580, %v4255
        %v4613 = vmul.f32 %v4581, %v4320
        %v4614 = vmul.f32 %v4582, %v4258
        %v4615 = vmul.f32 %v4583, %v4323
        %v4616 = vmul.f32 %v4584, %v4261
        %v4617 = vmul.f32 %v4585, %v4326
        %v4618 = vmul.f32 %v4586, %v4264
        %v4619 = vmul.f32 %v4587, %v4329
        %v4620 = vmul.f32 %v4588, %v4267
        %v4621 = vmul.f32 %v4589, %v4332
        %v4622 = vmul.f32 %v4590, %v4270
        %v4623 = vmul.f32 %v4591, %v4335
        %v4624 = vmul.f32 %v4592, %v4273
        %v4625 = vmul.f32 %v4593, %v4338
        %v4626 = vmul.f32 %v4594, %v4276
        %v4627 = vmul.f32 %v4595, %v4341
        %v4628 = vmul.f32 %v4596, %v4279
        %v4629 = vmul.f32 %v4597, %v4344
        %v4630 = vmul.f32 %v4598, %v4282
        %v4631 = vmul.f32 %v4599, %v4347
        %v4632 = vmul.f32 %v4600, %v4285
        %v4633 = vmul.f32 %v4601, %v4350
        %v4634 = vmul.f32 %v4602, %v4288
        %v4635 = vmul.f32 %v4603, %v4353
        %v4636 = vmul.f32 %v4604, %v4291
        %v4637 = vmul.f32 %v4605, %v4356
        %v4638 = vmul.f32 %v4606, %v4294
        %v4639 = vmul.f32 %v4607, %v4359
        %v4640 = vmul.f32 %v4608, %v4297
        %v4641 = vmul.f32 %v4609, %v4362
        %v4642 = vmul.f32 %v4610, %v4466
        %v4643 = vmul.f32 %v4611, %v4531
        %v4644 = vmul.f32 %v4612, %v4469
        %v4645 = vmul.f32 %v4613, %v4534
        %v4646 = vmul.f32 %v4614, %v4472
        %v4647 = vmul.f32 %v4615, %v4537
        %v4648 = vmul.f32 %v4616, %v4475
        %v4649 = vmul.f32 %v4617, %v4540
        %v4650 = vmul.f32 %v4618, %v4478
        %v4651 = vmul.f32 %v4619, %v4543
        %v4652 = vmul.f32 %v4620, %v4481
        %v4653 = vmul.f32 %v4621, %v4546
        %v4654 = vmul.f32 %v4622, %v4484
        %v4655 = vmul.f32 %v4623, %v4549
        %v4656 = vmul.f32 %v4624, %v4487
        %v4657 = vmul.f32 %v4625, %v4552
        %v4658 = vmul.f32 %v4626, %v4490
        %v4659 = vmul.f32 %v4627, %v4555
        %v4660 = vmul.f32 %v4628, %v4493
        %v4661 = vmul.f32 %v4629, %v4558
        %v4662 = vmul.f32 %v4630, %v4496
        %v4663 = vmul.f32 %v4631, %v4561
        %v4664 = vmul.f32 %v4632, %v4499
        %v4665 = vmul.f32 %v4633, %v4564
        %v4666 = vmul.f32 %v4634, %v4502
        %v4667 = vmul.f32 %v4635, %v4567
        %v4668 = vmul.f32 %v4636, %v4505
        %v4669 = vmul.f32 %v4637, %v4570
        %v4670 = vmul.f32 %v4638, %v4508
        %v4671 = vmul.f32 %v4639, %v4573
        %v4672 = vmul.f32 %v4640, %v4511
        %v4673 = vmul.f32 %v4641, %v4576
        %4674 = vst [vmem:[%s370] sm:$0xff] %v4642
        %4675 = vst [vmem:[%s370 + $0x8] sm:$0xff] %v4643
        %4676 = vst [vmem:[%s370 + $0x10] sm:$0xff] %v4644
        %4677 = vst [vmem:[%s370 + $0x18] sm:$0xff] %v4645
        %4678 = vst [vmem:[%s370 + $0x20] sm:$0xff] %v4646
        %4679 = vst [vmem:[%s370 + $0x28] sm:$0xff] %v4647
        %4680 = vst [vmem:[%s370 + $0x30] sm:$0xff] %v4648
        %4681 = vst [vmem:[%s370 + $0x38] sm:$0xff] %v4649
        %4682 = vst [vmem:[%s370 + $0x40] sm:$0xff] %v4650
        %4683 = vst [vmem:[%s370 + $0x48] sm:$0xff] %v4651
        %4684 = vst [vmem:[%s370 + $0x50] sm:$0xff] %v4652
        %4685 = vst [vmem:[%s370 + $0x58] sm:$0xff] %v4653
        %4686 = vst [vmem:[%s370 + $0x60] sm:$0xff] %v4654
        %4687 = vst [vmem:[%s370 + $0x68] sm:$0xff] %v4655
        %4688 = vst [vmem:[%s370 + $0x70] sm:$0xff] %v4656
        %4689 = vst [vmem:[%s370 + $0x78] sm:$0xff] %v4657
        %4690 = vst [vmem:[%s370 + $0x80] sm:$0xff] %v4658
        %4691 = vst [vmem:[%s370 + $0x88] sm:$0xff] %v4659
        %4692 = vst [vmem:[%s370 + $0x90] sm:$0xff] %v4660
        %4693 = vst [vmem:[%s370 + $0x98] sm:$0xff] %v4661
        %4694 = vst [vmem:[%s370 + $0xa0] sm:$0xff] %v4662
        %4695 = vst [vmem:[%s370 + $0xa8] sm:$0xff] %v4663
        %4696 = vst [vmem:[%s370 + $0xb0] sm:$0xff] %v4664
        %4697 = vst [vmem:[%s370 + $0xb8] sm:$0xff] %v4665
        %4698 = vst [vmem:[%s370 + $0xc0] sm:$0xff] %v4666
        %4699 = vst [vmem:[%s370 + $0xc8] sm:$0xff] %v4667
        %4700 = vst [vmem:[%s370 + $0xd0] sm:$0xff] %v4668
        %4701 = vst [vmem:[%s370 + $0xd8] sm:$0xff] %v4669
        %4702 = vst [vmem:[%s370 + $0xe0] sm:$0xff] %v4670
        %4703 = vst [vmem:[%s370 + $0xe8] sm:$0xff] %v4671
        %4704 = vst [vmem:[%s370 + $0xf0] sm:$0xff] %v4672
        %4705 = vst [vmem:[%s370 + $0xf8] sm:$0xff] %v4673
        %v4706 = vld [vmem:[%s4] sm:$0xff]
        %v4707 = vld [vmem:[%s4 + $0x8] sm:$0xff]
        %v4708 = vld [vmem:[%s4 + $0x10] sm:$0xff]
        %v4709 = vld [vmem:[%s4 + $0x18] sm:$0xff]
        %v4710 = vld [vmem:[%s4 + $0x20] sm:$0xff]
        %v4711 = vld [vmem:[%s4 + $0x28] sm:$0xff]
        %v4712 = vld [vmem:[%s4 + $0x30] sm:$0xff]
        %v4713 = vld [vmem:[%s4 + $0x38] sm:$0xff]
        %v4714 = vld [vmem:[%s4 + $0x40] sm:$0xff]
        %v4715 = vld [vmem:[%s4 + $0x48] sm:$0xff]
        %v4716 = vld [vmem:[%s4 + $0x50] sm:$0xff]
        %v4717 = vld [vmem:[%s4 + $0x58] sm:$0xff]
        %v4718 = vld [vmem:[%s4 + $0x60] sm:$0xff]
        %v4719 = vld [vmem:[%s4 + $0x68] sm:$0xff]
        %v4720 = vld [vmem:[%s4 + $0x70] sm:$0xff]
        %v4721 = vld [vmem:[%s4 + $0x78] sm:$0xff]
        %4722 = vmatpush.msra.mxu0 %v693
        %4723 = vmatpush.msra.mxu0 %v690
        %4724 = vmatpush.msra.mxu0 %v687
        %4725 = vmatpush.msra.mxu0 %v684
        %4726 = vmatpush.msra.mxu0 %v681
        %4727 = vmatpush.msra.mxu0 %v678
        %4728 = vmatpush.msra.mxu0 %v675
        %4729 = vmatpush.msra.mxu0 %v672
        %4730 = vmatpush.msra.mxu0 %v669
        %4731 = vmatpush.msra.mxu0 %v666
        %4732 = vmatpush.msra.mxu0 %v663
        %4733 = vmatpush.msra.mxu0 %v660
        %4734 = vmatpush.msra.mxu0 %v657
        %4735 = vmatpush.msra.mxu0 %v654
        %4736 = vmatpush.msra.mxu0 %v651
        %4737 = vmatpush.msra.mxu0 %v648
        %4738 = vmatmul.f32.gmra.mxu0 %v4706
        %v4739 = vpop.f32.mrf.mxu0
        %v4740 = vadd.f32 0.0, %v4739
        %4741 = vmatmul.f32.gmra.mxu0 %v4707
        %v4742 = vpop.f32.mrf.mxu0
        %v4743 = vadd.f32 0.0, %v4742
        %4744 = vmatmul.f32.gmra.mxu0 %v4708
        %v4745 = vpop.f32.mrf.mxu0
        %v4746 = vadd.f32 0.0, %v4745
        %4747 = vmatmul.f32.gmra.mxu0 %v4709
        %v4748 = vpop.f32.mrf.mxu0
        %v4749 = vadd.f32 0.0, %v4748
        %4750 = vmatmul.f32.gmra.mxu0 %v4710
        %v4751 = vpop.f32.mrf.mxu0
        %v4752 = vadd.f32 0.0, %v4751
        %4753 = vmatmul.f32.gmra.mxu0 %v4711
        %v4754 = vpop.f32.mrf.mxu0
        %v4755 = vadd.f32 0.0, %v4754
        %4756 = vmatmul.f32.gmra.mxu0 %v4712
        %v4757 = vpop.f32.mrf.mxu0
        %v4758 = vadd.f32 0.0, %v4757
        %4759 = vmatmul.f32.gmra.mxu0 %v4713
        %v4760 = vpop.f32.mrf.mxu0
        %v4761 = vadd.f32 0.0, %v4760
        %4762 = vmatmul.f32.gmra.mxu0 %v4714
        %v4763 = vpop.f32.mrf.mxu0
        %v4764 = vadd.f32 0.0, %v4763
        %4765 = vmatmul.f32.gmra.mxu0 %v4715
        %v4766 = vpop.f32.mrf.mxu0
        %v4767 = vadd.f32 0.0, %v4766
        %4768 = vmatmul.f32.gmra.mxu0 %v4716
        %v4769 = vpop.f32.mrf.mxu0
        %v4770 = vadd.f32 0.0, %v4769
        %4771 = vmatmul.f32.gmra.mxu0 %v4717
        %v4772 = vpop.f32.mrf.mxu0
        %v4773 = vadd.f32 0.0, %v4772
        %4774 = vmatmul.f32.gmra.mxu0 %v4718
        %v4775 = vpop.f32.mrf.mxu0
        %v4776 = vadd.f32 0.0, %v4775
        %4777 = vmatmul.f32.gmra.mxu0 %v4719
        %v4778 = vpop.f32.mrf.mxu0
        %v4779 = vadd.f32 0.0, %v4778
        %4780 = vmatmul.f32.gmra.mxu0 %v4720
        %v4781 = vpop.f32.mrf.mxu0
        %v4782 = vadd.f32 0.0, %v4781
        %4783 = vmatmul.f32.gmra.mxu0 %v4721
        %v4784 = vpop.f32.mrf.mxu0
        %v4785 = vadd.f32 0.0, %v4784
        %4786 = vdwg.mxu0
        %v4787 = vxor.u32 %v4740, 2147483648
        %v4788 = vxor.u32 %v4743, 2147483648
        %v4789 = vxor.u32 %v4746, 2147483648
        %v4790 = vxor.u32 %v4749, 2147483648
        %v4791 = vxor.u32 %v4752, 2147483648
        %v4792 = vxor.u32 %v4755, 2147483648
        %v4793 = vxor.u32 %v4758, 2147483648
        %v4794 = vxor.u32 %v4761, 2147483648
        %v4795 = vxor.u32 %v4764, 2147483648
        %v4796 = vxor.u32 %v4767, 2147483648
        %v4797 = vxor.u32 %v4770, 2147483648
        %v4798 = vxor.u32 %v4773, 2147483648
        %v4799 = vxor.u32 %v4776, 2147483648
        %v4800 = vxor.u32 %v4779, 2147483648
        %v4801 = vxor.u32 %v4782, 2147483648
        %v4802 = vxor.u32 %v4785, 2147483648
        %v4803 = vmul.f32 %v4787, 1.442695
        %v4804 = vpow.pop %v4803
        %v4805 = vmul.f32 %v4788, 1.442695
        %v4806 = vpow.pop %v4805
        %v4807 = vmul.f32 %v4789, 1.442695
        %v4808 = vpow.pop %v4807
        %v4809 = vmul.f32 %v4790, 1.442695
        %v4810 = vpow.pop %v4809
        %v4811 = vmul.f32 %v4791, 1.442695
        %v4812 = vpow.pop %v4811
        %v4813 = vmul.f32 %v4792, 1.442695
        %v4814 = vpow.pop %v4813
        %v4815 = vmul.f32 %v4793, 1.442695
        %v4816 = vpow.pop %v4815
        %v4817 = vmul.f32 %v4794, 1.442695
        %v4818 = vpow.pop %v4817
        %v4819 = vmul.f32 %v4795, 1.442695
        %v4820 = vpow.pop %v4819
        %v4821 = vmul.f32 %v4796, 1.442695
        %v4822 = vpow.pop %v4821
        %v4823 = vmul.f32 %v4797, 1.442695
        %v4824 = vpow.pop %v4823
        %v4825 = vmul.f32 %v4798, 1.442695
        %v4826 = vpow.pop %v4825
        %v4827 = vmul.f32 %v4799, 1.442695
        %v4828 = vpow.pop %v4827
        %v4829 = vmul.f32 %v4800, 1.442695
        %v4830 = vpow.pop %v4829
        %v4831 = vmul.f32 %v4801, 1.442695
        %v4832 = vpow.pop %v4831
        %v4833 = vmul.f32 %v4802, 1.442695
        %v4834 = vpow.pop %v4833
        %v4835 = vadd.f32 %v4804, 1.0
        %v4836 = vadd.f32 %v4806, 1.0
        %v4837 = vadd.f32 %v4808, 1.0
        %v4838 = vadd.f32 %v4810, 1.0
        %v4839 = vadd.f32 %v4812, 1.0
        %v4840 = vadd.f32 %v4814, 1.0
        %v4841 = vadd.f32 %v4816, 1.0
        %v4842 = vadd.f32 %v4818, 1.0
        %v4843 = vadd.f32 %v4820, 1.0
        %v4844 = vadd.f32 %v4822, 1.0
        %v4845 = vadd.f32 %v4824, 1.0
        %v4846 = vadd.f32 %v4826, 1.0
        %v4847 = vadd.f32 %v4828, 1.0
        %v4848 = vadd.f32 %v4830, 1.0
        %v4849 = vadd.f32 %v4832, 1.0
        %v4850 = vadd.f32 %v4834, 1.0
        %v4851 = vrcp.pop %v4835
        %v4852 = vmul.f32 %v4835, %v4851
        %v4853 = vsub.f32 1.0, %v4852
        %v4854 = vmul.f32 %v4851, %v4853
        %v4855 = vadd.f32 %v4851, %v4854
        %vm4856 = vweird.f32 %v4835
        %vm4857 = vweird.f32 %v4851
        %vm4858 = vmor %vm4856, %vm4857
        %v4859 = vsel %vm4858, %v4851, %v4855
        %v4860 = vand.u32 2147483647, %v4835
        %vm4861 = vcmp.eq.f32.partialorder %v4860, 8.507059e+37
        %v4862 = vand.u32 %v4835, 2147483648
        %v4863 = vor.u32 1.1754944e-38, %v4862
        %v4864 = vsel %vm4861, %v4863, %v4859
        %v4865 = vmul.f32 1.0, %v4864
        %v4866 = vrcp.pop %v4836
        %v4867 = vmul.f32 %v4836, %v4866
        %v4868 = vsub.f32 1.0, %v4867
        %v4869 = vmul.f32 %v4866, %v4868
        %v4870 = vadd.f32 %v4866, %v4869
        %vm4871 = vweird.f32 %v4836
        %vm4872 = vweird.f32 %v4866
        %vm4873 = vmor %vm4871, %vm4872
        %v4874 = vsel %vm4873, %v4866, %v4870
        %v4875 = vand.u32 2147483647, %v4836
        %vm4876 = vcmp.eq.f32.partialorder %v4875, 8.507059e+37
        %v4877 = vand.u32 %v4836, 2147483648
        %v4878 = vor.u32 1.1754944e-38, %v4877
        %v4879 = vsel %vm4876, %v4878, %v4874
        %v4880 = vmul.f32 1.0, %v4879
        %v4881 = vrcp.pop %v4837
        %v4882 = vmul.f32 %v4837, %v4881
        %v4883 = vsub.f32 1.0, %v4882
        %v4884 = vmul.f32 %v4881, %v4883
        %v4885 = vadd.f32 %v4881, %v4884
        %vm4886 = vweird.f32 %v4837
        %vm4887 = vweird.f32 %v4881
        %vm4888 = vmor %vm4886, %vm4887
        %v4889 = vsel %vm4888, %v4881, %v4885
        %v4890 = vand.u32 2147483647, %v4837
        %vm4891 = vcmp.eq.f32.partialorder %v4890, 8.507059e+37
        %v4892 = vand.u32 %v4837, 2147483648
        %v4893 = vor.u32 1.1754944e-38, %v4892
        %v4894 = vsel %vm4891, %v4893, %v4889
        %v4895 = vmul.f32 1.0, %v4894
        %v4896 = vrcp.pop %v4838
        %v4897 = vmul.f32 %v4838, %v4896
        %v4898 = vsub.f32 1.0, %v4897
        %v4899 = vmul.f32 %v4896, %v4898
        %v4900 = vadd.f32 %v4896, %v4899
        %vm4901 = vweird.f32 %v4838
        %vm4902 = vweird.f32 %v4896
        %vm4903 = vmor %vm4901, %vm4902
        %v4904 = vsel %vm4903, %v4896, %v4900
        %v4905 = vand.u32 2147483647, %v4838
        %vm4906 = vcmp.eq.f32.partialorder %v4905, 8.507059e+37
        %v4907 = vand.u32 %v4838, 2147483648
        %v4908 = vor.u32 1.1754944e-38, %v4907
        %v4909 = vsel %vm4906, %v4908, %v4904
        %v4910 = vmul.f32 1.0, %v4909
        %v4911 = vrcp.pop %v4839
        %v4912 = vmul.f32 %v4839, %v4911
        %v4913 = vsub.f32 1.0, %v4912
        %v4914 = vmul.f32 %v4911, %v4913
        %v4915 = vadd.f32 %v4911, %v4914
        %vm4916 = vweird.f32 %v4839
        %vm4917 = vweird.f32 %v4911
        %vm4918 = vmor %vm4916, %vm4917
        %v4919 = vsel %vm4918, %v4911, %v4915
        %v4920 = vand.u32 2147483647, %v4839
        %vm4921 = vcmp.eq.f32.partialorder %v4920, 8.507059e+37
        %v4922 = vand.u32 %v4839, 2147483648
        %v4923 = vor.u32 1.1754944e-38, %v4922
        %v4924 = vsel %vm4921, %v4923, %v4919
        %v4925 = vmul.f32 1.0, %v4924
        %v4926 = vrcp.pop %v4840
        %v4927 = vmul.f32 %v4840, %v4926
        %v4928 = vsub.f32 1.0, %v4927
        %v4929 = vmul.f32 %v4926, %v4928
        %v4930 = vadd.f32 %v4926, %v4929
        %vm4931 = vweird.f32 %v4840
        %vm4932 = vweird.f32 %v4926
        %vm4933 = vmor %vm4931, %vm4932
        %v4934 = vsel %vm4933, %v4926, %v4930
        %v4935 = vand.u32 2147483647, %v4840
        %vm4936 = vcmp.eq.f32.partialorder %v4935, 8.507059e+37
        %v4937 = vand.u32 %v4840, 2147483648
        %v4938 = vor.u32 1.1754944e-38, %v4937
        %v4939 = vsel %vm4936, %v4938, %v4934
        %v4940 = vmul.f32 1.0, %v4939
        %v4941 = vrcp.pop %v4841
        %v4942 = vmul.f32 %v4841, %v4941
        %v4943 = vsub.f32 1.0, %v4942
        %v4944 = vmul.f32 %v4941, %v4943
        %v4945 = vadd.f32 %v4941, %v4944
        %vm4946 = vweird.f32 %v4841
        %vm4947 = vweird.f32 %v4941
        %vm4948 = vmor %vm4946, %vm4947
        %v4949 = vsel %vm4948, %v4941, %v4945
        %v4950 = vand.u32 2147483647, %v4841
        %vm4951 = vcmp.eq.f32.partialorder %v4950, 8.507059e+37
        %v4952 = vand.u32 %v4841, 2147483648
        %v4953 = vor.u32 1.1754944e-38, %v4952
        %v4954 = vsel %vm4951, %v4953, %v4949
        %v4955 = vmul.f32 1.0, %v4954
        %v4956 = vrcp.pop %v4842
        %v4957 = vmul.f32 %v4842, %v4956
        %v4958 = vsub.f32 1.0, %v4957
        %v4959 = vmul.f32 %v4956, %v4958
        %v4960 = vadd.f32 %v4956, %v4959
        %vm4961 = vweird.f32 %v4842
        %vm4962 = vweird.f32 %v4956
        %vm4963 = vmor %vm4961, %vm4962
        %v4964 = vsel %vm4963, %v4956, %v4960
        %v4965 = vand.u32 2147483647, %v4842
        %vm4966 = vcmp.eq.f32.partialorder %v4965, 8.507059e+37
        %v4967 = vand.u32 %v4842, 2147483648
        %v4968 = vor.u32 1.1754944e-38, %v4967
        %v4969 = vsel %vm4966, %v4968, %v4964
        %v4970 = vmul.f32 1.0, %v4969
        %v4971 = vrcp.pop %v4843
        %v4972 = vmul.f32 %v4843, %v4971
        %v4973 = vsub.f32 1.0, %v4972
        %v4974 = vmul.f32 %v4971, %v4973
        %v4975 = vadd.f32 %v4971, %v4974
        %vm4976 = vweird.f32 %v4843
        %vm4977 = vweird.f32 %v4971
        %vm4978 = vmor %vm4976, %vm4977
        %v4979 = vsel %vm4978, %v4971, %v4975
        %v4980 = vand.u32 2147483647, %v4843
        %vm4981 = vcmp.eq.f32.partialorder %v4980, 8.507059e+37
        %v4982 = vand.u32 %v4843, 2147483648
        %v4983 = vor.u32 1.1754944e-38, %v4982
        %v4984 = vsel %vm4981, %v4983, %v4979
        %v4985 = vmul.f32 1.0, %v4984
        %v4986 = vrcp.pop %v4844
        %v4987 = vmul.f32 %v4844, %v4986
        %v4988 = vsub.f32 1.0, %v4987
        %v4989 = vmul.f32 %v4986, %v4988
        %v4990 = vadd.f32 %v4986, %v4989
        %vm4991 = vweird.f32 %v4844
        %vm4992 = vweird.f32 %v4986
        %vm4993 = vmor %vm4991, %vm4992
        %v4994 = vsel %vm4993, %v4986, %v4990
        %v4995 = vand.u32 2147483647, %v4844
        %vm4996 = vcmp.eq.f32.partialorder %v4995, 8.507059e+37
        %v4997 = vand.u32 %v4844, 2147483648
        %v4998 = vor.u32 1.1754944e-38, %v4997
        %v4999 = vsel %vm4996, %v4998, %v4994
        %v5000 = vmul.f32 1.0, %v4999
        %v5001 = vrcp.pop %v4845
        %v5002 = vmul.f32 %v4845, %v5001
        %v5003 = vsub.f32 1.0, %v5002
        %v5004 = vmul.f32 %v5001, %v5003
        %v5005 = vadd.f32 %v5001, %v5004
        %vm5006 = vweird.f32 %v4845
        %vm5007 = vweird.f32 %v5001
        %vm5008 = vmor %vm5006, %vm5007
        %v5009 = vsel %vm5008, %v5001, %v5005
        %v5010 = vand.u32 2147483647, %v4845
        %vm5011 = vcmp.eq.f32.partialorder %v5010, 8.507059e+37
        %v5012 = vand.u32 %v4845, 2147483648
        %v5013 = vor.u32 1.1754944e-38, %v5012
        %v5014 = vsel %vm5011, %v5013, %v5009
        %v5015 = vmul.f32 1.0, %v5014
        %v5016 = vrcp.pop %v4846
        %v5017 = vmul.f32 %v4846, %v5016
        %v5018 = vsub.f32 1.0, %v5017
        %v5019 = vmul.f32 %v5016, %v5018
        %v5020 = vadd.f32 %v5016, %v5019
        %vm5021 = vweird.f32 %v4846
        %vm5022 = vweird.f32 %v5016
        %vm5023 = vmor %vm5021, %vm5022
        %v5024 = vsel %vm5023, %v5016, %v5020
        %v5025 = vand.u32 2147483647, %v4846
        %vm5026 = vcmp.eq.f32.partialorder %v5025, 8.507059e+37
        %v5027 = vand.u32 %v4846, 2147483648
        %v5028 = vor.u32 1.1754944e-38, %v5027
        %v5029 = vsel %vm5026, %v5028, %v5024
        %v5030 = vmul.f32 1.0, %v5029
        %v5031 = vrcp.pop %v4847
        %v5032 = vmul.f32 %v4847, %v5031
        %v5033 = vsub.f32 1.0, %v5032
        %v5034 = vmul.f32 %v5031, %v5033
        %v5035 = vadd.f32 %v5031, %v5034
        %vm5036 = vweird.f32 %v4847
        %vm5037 = vweird.f32 %v5031
        %vm5038 = vmor %vm5036, %vm5037
        %v5039 = vsel %vm5038, %v5031, %v5035
        %v5040 = vand.u32 2147483647, %v4847
        %vm5041 = vcmp.eq.f32.partialorder %v5040, 8.507059e+37
        %v5042 = vand.u32 %v4847, 2147483648
        %v5043 = vor.u32 1.1754944e-38, %v5042
        %v5044 = vsel %vm5041, %v5043, %v5039
        %v5045 = vmul.f32 1.0, %v5044
        %v5046 = vrcp.pop %v4848
        %v5047 = vmul.f32 %v4848, %v5046
        %v5048 = vsub.f32 1.0, %v5047
        %v5049 = vmul.f32 %v5046, %v5048
        %v5050 = vadd.f32 %v5046, %v5049
        %vm5051 = vweird.f32 %v4848
        %vm5052 = vweird.f32 %v5046
        %vm5053 = vmor %vm5051, %vm5052
        %v5054 = vsel %vm5053, %v5046, %v5050
        %v5055 = vand.u32 2147483647, %v4848
        %vm5056 = vcmp.eq.f32.partialorder %v5055, 8.507059e+37
        %v5057 = vand.u32 %v4848, 2147483648
        %v5058 = vor.u32 1.1754944e-38, %v5057
        %v5059 = vsel %vm5056, %v5058, %v5054
        %v5060 = vmul.f32 1.0, %v5059
        %v5061 = vrcp.pop %v4849
        %v5062 = vmul.f32 %v4849, %v5061
        %v5063 = vsub.f32 1.0, %v5062
        %v5064 = vmul.f32 %v5061, %v5063
        %v5065 = vadd.f32 %v5061, %v5064
        %vm5066 = vweird.f32 %v4849
        %vm5067 = vweird.f32 %v5061
        %vm5068 = vmor %vm5066, %vm5067
        %v5069 = vsel %vm5068, %v5061, %v5065
        %v5070 = vand.u32 2147483647, %v4849
        %vm5071 = vcmp.eq.f32.partialorder %v5070, 8.507059e+37
        %v5072 = vand.u32 %v4849, 2147483648
        %v5073 = vor.u32 1.1754944e-38, %v5072
        %v5074 = vsel %vm5071, %v5073, %v5069
        %v5075 = vmul.f32 1.0, %v5074
        %v5076 = vrcp.pop %v4850
        %v5077 = vmul.f32 %v4850, %v5076
        %v5078 = vsub.f32 1.0, %v5077
        %v5079 = vmul.f32 %v5076, %v5078
        %v5080 = vadd.f32 %v5076, %v5079
        %vm5081 = vweird.f32 %v4850
        %vm5082 = vweird.f32 %v5076
        %vm5083 = vmor %vm5081, %vm5082
        %v5084 = vsel %vm5083, %v5076, %v5080
        %v5085 = vand.u32 2147483647, %v4850
        %vm5086 = vcmp.eq.f32.partialorder %v5085, 8.507059e+37
        %v5087 = vand.u32 %v4850, 2147483648
        %v5088 = vor.u32 1.1754944e-38, %v5087
        %v5089 = vsel %vm5086, %v5088, %v5084
        %v5090 = vmul.f32 1.0, %v5089
        %5107 = vrot.lane.b32.xlu0 %v4865, 84
        %v5108 = vpop.permute.xlu0 %5107
        %5109 = vrot.lane.b32.xlu0 %v4880, 84
        %v5110 = vpop.permute.xlu0 %5109
        %5111 = vrot.lane.b32.xlu0 %v4895, 84
        %v5112 = vpop.permute.xlu0 %5111
        %5113 = vrot.lane.b32.xlu0 %v4910, 84
        %v5114 = vpop.permute.xlu0 %5113
        %5115 = vrot.lane.b32.xlu0 %v4925, 84
        %v5116 = vpop.permute.xlu0 %5115
        %5117 = vrot.lane.b32.xlu0 %v4940, 84
        %v5118 = vpop.permute.xlu0 %5117
        %5119 = vrot.lane.b32.xlu0 %v4955, 84
        %v5120 = vpop.permute.xlu0 %5119
        %5121 = vrot.lane.b32.xlu0 %v4970, 84
        %v5122 = vpop.permute.xlu0 %5121
        %5123 = vrot.lane.b32.xlu0 %v4985, 84
        %v5124 = vpop.permute.xlu0 %5123
        %5125 = vrot.lane.b32.xlu0 %v5000, 84
        %v5126 = vpop.permute.xlu0 %5125
        %5127 = vrot.lane.b32.xlu0 %v5015, 84
        %v5128 = vpop.permute.xlu0 %5127
        %5129 = vrot.lane.b32.xlu0 %v5030, 84
        %v5130 = vpop.permute.xlu0 %5129
        %5131 = vrot.lane.b32.xlu0 %v5045, 84
        %v5132 = vpop.permute.xlu0 %5131
        %5133 = vrot.lane.b32.xlu0 %v5060, 84
        %v5134 = vpop.permute.xlu0 %5133
        %5135 = vrot.lane.b32.xlu0 %v5075, 84
        %v5136 = vpop.permute.xlu0 %5135
        %5137 = vrot.lane.b32.xlu0 %v5090, 84
        %v5138 = vpop.permute.xlu0 %5137
        %v5155 = vmul.f32 %v727, %v5108
        %v5156 = vmul.f32 %v728, %v5110
        %v5157 = vmul.f32 %v729, %v5112
        %v5158 = vmul.f32 %v730, %v5114
        %v5159 = vmul.f32 %v731, %v5116
        %v5160 = vmul.f32 %v732, %v5118
        %v5161 = vmul.f32 %v733, %v5120
        %v5162 = vmul.f32 %v734, %v5122
        %v5163 = vmul.f32 %v735, %v5124
        %v5164 = vmul.f32 %v736, %v5126
        %v5165 = vmul.f32 %v737, %v5128
        %v5166 = vmul.f32 %v738, %v5130
        %v5167 = vmul.f32 %v739, %v5132
        %v5168 = vmul.f32 %v740, %v5134
        %v5169 = vmul.f32 %v741, %v5136
        %v5170 = vmul.f32 %v742, %v5138
        %v5171 = vadd.f32 %v5155, %v743
        %v5172 = vadd.f32 %v5156, %v744
        %v5173 = vadd.f32 %v5157, %v745
        %v5174 = vadd.f32 %v5158, %v746
        %v5175 = vadd.f32 %v5159, %v747
        %v5176 = vadd.f32 %v5160, %v748
        %v5177 = vadd.f32 %v5161, %v749
        %v5178 = vadd.f32 %v5162, %v750
        %v5179 = vadd.f32 %v5163, %v751
        %v5180 = vadd.f32 %v5164, %v752
        %v5181 = vadd.f32 %v5165, %v753
        %v5182 = vadd.f32 %v5166, %v754
        %v5183 = vadd.f32 %v5167, %v755
        %v5184 = vadd.f32 %v5168, %v756
        %v5185 = vadd.f32 %v5169, %v757
        %v5186 = vadd.f32 %v5170, %v758
        %v5187 = vld [vmem:[#allocation5] sm:$0xff]
        %v5188 = vld [vmem:[#allocation5 + $0x8] sm:$0xff]
        %v5189 = vld [vmem:[#allocation5 + $0x10] sm:$0xff]
        %v5190 = vld [vmem:[#allocation5 + $0x18] sm:$0xff]
        %v5191 = vld [vmem:[#allocation5 + $0x20] sm:$0xff]
        %v5192 = vld [vmem:[#allocation5 + $0x28] sm:$0xff]
        %v5193 = vld [vmem:[#allocation5 + $0x30] sm:$0xff]
        %v5194 = vld [vmem:[#allocation5 + $0x38] sm:$0xff]
        %v5195 = vld [vmem:[#allocation5 + $0x40] sm:$0xff]
        %v5196 = vld [vmem:[#allocation5 + $0x48] sm:$0xff]
        %v5197 = vld [vmem:[#allocation5 + $0x50] sm:$0xff]
        %v5198 = vld [vmem:[#allocation5 + $0x58] sm:$0xff]
        %v5199 = vld [vmem:[#allocation5 + $0x60] sm:$0xff]
        %v5200 = vld [vmem:[#allocation5 + $0x68] sm:$0xff]
        %v5201 = vld [vmem:[#allocation5 + $0x70] sm:$0xff]
        %v5202 = vld [vmem:[#allocation5 + $0x78] sm:$0xff]
        %v5203 = vld [vmem:[%s1256] sm:$0xff]
        %v5204 = vld [vmem:[%s1256 + $0x8] sm:$0xff]
        %v5205 = vld [vmem:[%s1256 + $0x10] sm:$0xff]
        %v5206 = vld [vmem:[%s1256 + $0x18] sm:$0xff]
        %v5207 = vld [vmem:[%s1256 + $0x20] sm:$0xff]
        %v5208 = vld [vmem:[%s1256 + $0x28] sm:$0xff]
        %v5209 = vld [vmem:[%s1256 + $0x30] sm:$0xff]
        %v5210 = vld [vmem:[%s1256 + $0x38] sm:$0xff]
        %v5211 = vld [vmem:[%s1256 + $0x40] sm:$0xff]
        %v5212 = vld [vmem:[%s1256 + $0x48] sm:$0xff]
        %v5213 = vld [vmem:[%s1256 + $0x50] sm:$0xff]
        %v5214 = vld [vmem:[%s1256 + $0x58] sm:$0xff]
        %v5215 = vld [vmem:[%s1256 + $0x60] sm:$0xff]
        %v5216 = vld [vmem:[%s1256 + $0x68] sm:$0xff]
        %v5217 = vld [vmem:[%s1256 + $0x70] sm:$0xff]
        %v5218 = vld [vmem:[%s1256 + $0x78] sm:$0xff]
        %5235 = vrot.lane.b32.xlu0 %v648, 127
        %v5236 = vpop.permute.xlu0 %5235
        %5237 = vrot.lane.b32.xlu0 %v651, 127
        %v5238 = vpop.permute.xlu0 %5237
        %5239 = vrot.lane.b32.xlu0 %v654, 127
        %v5240 = vpop.permute.xlu0 %5239
        %5241 = vrot.lane.b32.xlu0 %v657, 127
        %v5242 = vpop.permute.xlu0 %5241
        %5243 = vrot.lane.b32.xlu0 %v660, 127
        %v5244 = vpop.permute.xlu0 %5243
        %5245 = vrot.lane.b32.xlu0 %v663, 127
        %v5246 = vpop.permute.xlu0 %5245
        %5247 = vrot.lane.b32.xlu0 %v666, 127
        %v5248 = vpop.permute.xlu0 %5247
        %5249 = vrot.lane.b32.xlu0 %v669, 127
        %v5250 = vpop.permute.xlu0 %5249
        %5251 = vrot.lane.b32.xlu0 %v672, 127
        %v5252 = vpop.permute.xlu0 %5251
        %5253 = vrot.lane.b32.xlu0 %v675, 127
        %v5254 = vpop.permute.xlu0 %5253
        %5255 = vrot.lane.b32.xlu0 %v678, 127
        %v5256 = vpop.permute.xlu0 %5255
        %5257 = vrot.lane.b32.xlu0 %v681, 127
        %v5258 = vpop.permute.xlu0 %5257
        %5259 = vrot.lane.b32.xlu0 %v684, 127
        %v5260 = vpop.permute.xlu0 %5259
        %5261 = vrot.lane.b32.xlu0 %v687, 127
        %v5262 = vpop.permute.xlu0 %5261
        %5263 = vrot.lane.b32.xlu0 %v690, 127
        %v5264 = vpop.permute.xlu0 %5263
        %5265 = vrot.lane.b32.xlu0 %v693, 127
        %v5266 = vpop.permute.xlu0 %5265
        %5283 = vmatpush.msra.mxu0 %v5266
        %5284 = vmatpush.msra.mxu0 %v5264
        %5285 = vmatpush.msra.mxu0 %v5262
        %5286 = vmatpush.msra.mxu0 %v5260
        %5287 = vmatpush.msra.mxu0 %v5258
        %5288 = vmatpush.msra.mxu0 %v5256
        %5289 = vmatpush.msra.mxu0 %v5254
        %5290 = vmatpush.msra.mxu0 %v5252
        %5291 = vmatpush.msra.mxu0 %v5250
        %5292 = vmatpush.msra.mxu0 %v5248
        %5293 = vmatpush.msra.mxu0 %v5246
        %5294 = vmatpush.msra.mxu0 %v5244
        %5295 = vmatpush.msra.mxu0 %v5242
        %5296 = vmatpush.msra.mxu0 %v5240
        %5297 = vmatpush.msra.mxu0 %v5238
        %5298 = vmatpush.msra.mxu0 %v5236
        %5299 = vmatmul.f32.gmra.mxu0 %v5203
        %v5300 = vpop.f32.mrf.mxu0
        %v5301 = vadd.f32 0.0, %v5300
        %5302 = vmatmul.f32.gmra.mxu0 %v5204
        %v5303 = vpop.f32.mrf.mxu0
        %v5304 = vadd.f32 0.0, %v5303
        %5305 = vmatmul.f32.gmra.mxu0 %v5205
        %v5306 = vpop.f32.mrf.mxu0
        %v5307 = vadd.f32 0.0, %v5306
        %5308 = vmatmul.f32.gmra.mxu0 %v5206
        %v5309 = vpop.f32.mrf.mxu0
        %v5310 = vadd.f32 0.0, %v5309
        %5311 = vmatmul.f32.gmra.mxu0 %v5207
        %v5312 = vpop.f32.mrf.mxu0
        %v5313 = vadd.f32 0.0, %v5312
        %5314 = vmatmul.f32.gmra.mxu0 %v5208
        %v5315 = vpop.f32.mrf.mxu0
        %v5316 = vadd.f32 0.0, %v5315
        %5317 = vmatmul.f32.gmra.mxu0 %v5209
        %v5318 = vpop.f32.mrf.mxu0
        %v5319 = vadd.f32 0.0, %v5318
        %5320 = vmatmul.f32.gmra.mxu0 %v5210
        %v5321 = vpop.f32.mrf.mxu0
        %v5322 = vadd.f32 0.0, %v5321
        %5323 = vmatmul.f32.gmra.mxu0 %v5211
        %v5324 = vpop.f32.mrf.mxu0
        %v5325 = vadd.f32 0.0, %v5324
        %5326 = vmatmul.f32.gmra.mxu0 %v5212
        %v5327 = vpop.f32.mrf.mxu0
        %v5328 = vadd.f32 0.0, %v5327
        %5329 = vmatmul.f32.gmra.mxu0 %v5213
        %v5330 = vpop.f32.mrf.mxu0
        %v5331 = vadd.f32 0.0, %v5330
        %5332 = vmatmul.f32.gmra.mxu0 %v5214
        %v5333 = vpop.f32.mrf.mxu0
        %v5334 = vadd.f32 0.0, %v5333
        %5335 = vmatmul.f32.gmra.mxu0 %v5215
        %v5336 = vpop.f32.mrf.mxu0
        %v5337 = vadd.f32 0.0, %v5336
        %5338 = vmatmul.f32.gmra.mxu0 %v5216
        %v5339 = vpop.f32.mrf.mxu0
        %v5340 = vadd.f32 0.0, %v5339
        %5341 = vmatmul.f32.gmra.mxu0 %v5217
        %v5342 = vpop.f32.mrf.mxu0
        %v5343 = vadd.f32 0.0, %v5342
        %5344 = vmatmul.f32.gmra.mxu0 %v5218
        %v5345 = vpop.f32.mrf.mxu0
        %v5346 = vadd.f32 0.0, %v5345
        %5347 = vdwg.mxu0
        %5348 = vmatpush.msra.mxu0 %v693
        %5349 = vmatpush.msra.mxu0 %v690
        %5350 = vmatpush.msra.mxu0 %v687
        %5351 = vmatpush.msra.mxu0 %v684
        %5352 = vmatpush.msra.mxu0 %v681
        %5353 = vmatpush.msra.mxu0 %v678
        %5354 = vmatpush.msra.mxu0 %v675
        %5355 = vmatpush.msra.mxu0 %v672
        %5356 = vmatpush.msra.mxu0 %v669
        %5357 = vmatpush.msra.mxu0 %v666
        %5358 = vmatpush.msra.mxu0 %v663
        %5359 = vmatpush.msra.mxu0 %v660
        %5360 = vmatpush.msra.mxu0 %v657
        %5361 = vmatpush.msra.mxu0 %v654
        %5362 = vmatpush.msra.mxu0 %v651
        %5363 = vmatpush.msra.mxu0 %v648
        %5364 = vmatmul.f32.gmra.mxu0 %v5187
        %v5365 = vpop.f32.mrf.mxu0
        %v5366 = vadd.f32 %v5301, %v5365
        %5367 = vmatmul.f32.gmra.mxu0 %v5188
        %v5368 = vpop.f32.mrf.mxu0
        %v5369 = vadd.f32 %v5304, %v5368
        %5370 = vmatmul.f32.gmra.mxu0 %v5189
        %v5371 = vpop.f32.mrf.mxu0
        %v5372 = vadd.f32 %v5307, %v5371
        %5373 = vmatmul.f32.gmra.mxu0 %v5190
        %v5374 = vpop.f32.mrf.mxu0
        %v5375 = vadd.f32 %v5310, %v5374
        %5376 = vmatmul.f32.gmra.mxu0 %v5191
        %v5377 = vpop.f32.mrf.mxu0
        %v5378 = vadd.f32 %v5313, %v5377
        %5379 = vmatmul.f32.gmra.mxu0 %v5192
        %v5380 = vpop.f32.mrf.mxu0
        %v5381 = vadd.f32 %v5316, %v5380
        %5382 = vmatmul.f32.gmra.mxu0 %v5193
        %v5383 = vpop.f32.mrf.mxu0
        %v5384 = vadd.f32 %v5319, %v5383
        %5385 = vmatmul.f32.gmra.mxu0 %v5194
        %v5386 = vpop.f32.mrf.mxu0
        %v5387 = vadd.f32 %v5322, %v5386
        %5388 = vmatmul.f32.gmra.mxu0 %v5195
        %v5389 = vpop.f32.mrf.mxu0
        %v5390 = vadd.f32 %v5325, %v5389
        %5391 = vmatmul.f32.gmra.mxu0 %v5196
        %v5392 = vpop.f32.mrf.mxu0
        %v5393 = vadd.f32 %v5328, %v5392
        %5394 = vmatmul.f32.gmra.mxu0 %v5197
        %v5395 = vpop.f32.mrf.mxu0
        %v5396 = vadd.f32 %v5331, %v5395
        %5397 = vmatmul.f32.gmra.mxu0 %v5198
        %v5398 = vpop.f32.mrf.mxu0
        %v5399 = vadd.f32 %v5334, %v5398
        %5400 = vmatmul.f32.gmra.mxu0 %v5199
        %v5401 = vpop.f32.mrf.mxu0
        %v5402 = vadd.f32 %v5337, %v5401
        %5403 = vmatmul.f32.gmra.mxu0 %v5200
        %v5404 = vpop.f32.mrf.mxu0
        %v5405 = vadd.f32 %v5340, %v5404
        %5406 = vmatmul.f32.gmra.mxu0 %v5201
        %v5407 = vpop.f32.mrf.mxu0
        %v5408 = vadd.f32 %v5343, %v5407
        %5409 = vmatmul.f32.gmra.mxu0 %v5202
        %v5410 = vpop.f32.mrf.mxu0
        %v5411 = vadd.f32 %v5346, %v5410
        %5412 = vdwg.mxu0
        %v5413 = vld [vmem:[%s1467] sm:$0xff]
        %v5414 = vld [vmem:[%s1467 + $0x8] sm:$0xff]
        %v5415 = vld [vmem:[%s1467 + $0x10] sm:$0xff]
        %v5416 = vld [vmem:[%s1467 + $0x18] sm:$0xff]
        %v5417 = vld [vmem:[%s1467 + $0x20] sm:$0xff]
        %v5418 = vld [vmem:[%s1467 + $0x28] sm:$0xff]
        %v5419 = vld [vmem:[%s1467 + $0x30] sm:$0xff]
        %v5420 = vld [vmem:[%s1467 + $0x38] sm:$0xff]
        %v5421 = vld [vmem:[%s1467 + $0x40] sm:$0xff]
        %v5422 = vld [vmem:[%s1467 + $0x48] sm:$0xff]
        %v5423 = vld [vmem:[%s1467 + $0x50] sm:$0xff]
        %v5424 = vld [vmem:[%s1467 + $0x58] sm:$0xff]
        %v5425 = vld [vmem:[%s1467 + $0x60] sm:$0xff]
        %v5426 = vld [vmem:[%s1467 + $0x68] sm:$0xff]
        %v5427 = vld [vmem:[%s1467 + $0x70] sm:$0xff]
        %v5428 = vld [vmem:[%s1467 + $0x78] sm:$0xff]
        %5429 = vrot.lane.b32.xlu0 %v648, 126
        %v5430 = vpop.permute.xlu0 %5429
        %5431 = vrot.lane.b32.xlu0 %v651, 126
        %v5432 = vpop.permute.xlu0 %5431
        %5433 = vrot.lane.b32.xlu0 %v654, 126
        %v5434 = vpop.permute.xlu0 %5433
        %5435 = vrot.lane.b32.xlu0 %v657, 126
        %v5436 = vpop.permute.xlu0 %5435
        %5437 = vrot.lane.b32.xlu0 %v660, 126
        %v5438 = vpop.permute.xlu0 %5437
        %5439 = vrot.lane.b32.xlu0 %v663, 126
        %v5440 = vpop.permute.xlu0 %5439
        %5441 = vrot.lane.b32.xlu0 %v666, 126
        %v5442 = vpop.permute.xlu0 %5441
        %5443 = vrot.lane.b32.xlu0 %v669, 126
        %v5444 = vpop.permute.xlu0 %5443
        %5445 = vrot.lane.b32.xlu0 %v672, 126
        %v5446 = vpop.permute.xlu0 %5445
        %5447 = vrot.lane.b32.xlu0 %v675, 126
        %v5448 = vpop.permute.xlu0 %5447
        %5449 = vrot.lane.b32.xlu0 %v678, 126
        %v5450 = vpop.permute.xlu0 %5449
        %5451 = vrot.lane.b32.xlu0 %v681, 126
        %v5452 = vpop.permute.xlu0 %5451
        %5453 = vrot.lane.b32.xlu0 %v684, 126
        %v5454 = vpop.permute.xlu0 %5453
        %5455 = vrot.lane.b32.xlu0 %v687, 126
        %v5456 = vpop.permute.xlu0 %5455
        %5457 = vrot.lane.b32.xlu0 %v690, 126
        %v5458 = vpop.permute.xlu0 %5457
        %5459 = vrot.lane.b32.xlu0 %v693, 126
        %v5460 = vpop.permute.xlu0 %5459
        %5477 = vmatpush.msra.mxu0 %v5460
        %5478 = vmatpush.msra.mxu0 %v5458
        %5479 = vmatpush.msra.mxu0 %v5456
        %5480 = vmatpush.msra.mxu0 %v5454
        %5481 = vmatpush.msra.mxu0 %v5452
        %5482 = vmatpush.msra.mxu0 %v5450
        %5483 = vmatpush.msra.mxu0 %v5448
        %5484 = vmatpush.msra.mxu0 %v5446
        %5485 = vmatpush.msra.mxu0 %v5444
        %5486 = vmatpush.msra.mxu0 %v5442
        %5487 = vmatpush.msra.mxu0 %v5440
        %5488 = vmatpush.msra.mxu0 %v5438
        %5489 = vmatpush.msra.mxu0 %v5436
        %5490 = vmatpush.msra.mxu0 %v5434
        %5491 = vmatpush.msra.mxu0 %v5432
        %5492 = vmatpush.msra.mxu0 %v5430
        %5493 = vmatmul.f32.gmra.mxu0 %v5413
        %v5494 = vpop.f32.mrf.mxu0
        %v5495 = vadd.f32 0.0, %v5494
        %5496 = vmatmul.f32.gmra.mxu0 %v5414
        %v5497 = vpop.f32.mrf.mxu0
        %v5498 = vadd.f32 0.0, %v5497
        %5499 = vmatmul.f32.gmra.mxu0 %v5415
        %v5500 = vpop.f32.mrf.mxu0
        %v5501 = vadd.f32 0.0, %v5500
        %5502 = vmatmul.f32.gmra.mxu0 %v5416
        %v5503 = vpop.f32.mrf.mxu0
        %v5504 = vadd.f32 0.0, %v5503
        %5505 = vmatmul.f32.gmra.mxu0 %v5417
        %v5506 = vpop.f32.mrf.mxu0
        %v5507 = vadd.f32 0.0, %v5506
        %5508 = vmatmul.f32.gmra.mxu0 %v5418
        %v5509 = vpop.f32.mrf.mxu0
        %v5510 = vadd.f32 0.0, %v5509
        %5511 = vmatmul.f32.gmra.mxu0 %v5419
        %v5512 = vpop.f32.mrf.mxu0
        %v5513 = vadd.f32 0.0, %v5512
        %5514 = vmatmul.f32.gmra.mxu0 %v5420
        %v5515 = vpop.f32.mrf.mxu0
        %v5516 = vadd.f32 0.0, %v5515
        %5517 = vmatmul.f32.gmra.mxu0 %v5421
        %v5518 = vpop.f32.mrf.mxu0
        %v5519 = vadd.f32 0.0, %v5518
        %5520 = vmatmul.f32.gmra.mxu0 %v5422
        %v5521 = vpop.f32.mrf.mxu0
        %v5522 = vadd.f32 0.0, %v5521
        %5523 = vmatmul.f32.gmra.mxu0 %v5423
        %v5524 = vpop.f32.mrf.mxu0
        %v5525 = vadd.f32 0.0, %v5524
        %5526 = vmatmul.f32.gmra.mxu0 %v5424
        %v5527 = vpop.f32.mrf.mxu0
        %v5528 = vadd.f32 0.0, %v5527
        %5529 = vmatmul.f32.gmra.mxu0 %v5425
        %v5530 = vpop.f32.mrf.mxu0
        %v5531 = vadd.f32 0.0, %v5530
        %5532 = vmatmul.f32.gmra.mxu0 %v5426
        %v5533 = vpop.f32.mrf.mxu0
        %v5534 = vadd.f32 0.0, %v5533
        %5535 = vmatmul.f32.gmra.mxu0 %v5427
        %v5536 = vpop.f32.mrf.mxu0
        %v5537 = vadd.f32 0.0, %v5536
        %5538 = vmatmul.f32.gmra.mxu0 %v5428
        %v5539 = vpop.f32.mrf.mxu0
        %v5540 = vadd.f32 0.0, %v5539
        %5541 = vdwg.mxu0
        %v5542 = vadd.f32 %v5366, %v5495
        %v5543 = vadd.f32 %v5369, %v5498
        %v5544 = vadd.f32 %v5372, %v5501
        %v5545 = vadd.f32 %v5375, %v5504
        %v5546 = vadd.f32 %v5378, %v5507
        %v5547 = vadd.f32 %v5381, %v5510
        %v5548 = vadd.f32 %v5384, %v5513
        %v5549 = vadd.f32 %v5387, %v5516
        %v5550 = vadd.f32 %v5390, %v5519
        %v5551 = vadd.f32 %v5393, %v5522
        %v5552 = vadd.f32 %v5396, %v5525
        %v5553 = vadd.f32 %v5399, %v5528
        %v5554 = vadd.f32 %v5402, %v5531
        %v5555 = vadd.f32 %v5405, %v5534
        %v5556 = vadd.f32 %v5408, %v5537
        %v5557 = vadd.f32 %v5411, %v5540
        %v5558 = vld [vmem:[%s1613] sm:$0xff]
        %v5559 = vld [vmem:[%s1613 + $0x8] sm:$0xff]
        %v5560 = vld [vmem:[%s1613 + $0x10] sm:$0xff]
        %v5561 = vld [vmem:[%s1613 + $0x18] sm:$0xff]
        %v5562 = vld [vmem:[%s1613 + $0x20] sm:$0xff]
        %v5563 = vld [vmem:[%s1613 + $0x28] sm:$0xff]
        %v5564 = vld [vmem:[%s1613 + $0x30] sm:$0xff]
        %v5565 = vld [vmem:[%s1613 + $0x38] sm:$0xff]
        %v5566 = vld [vmem:[%s1613 + $0x40] sm:$0xff]
        %v5567 = vld [vmem:[%s1613 + $0x48] sm:$0xff]
        %v5568 = vld [vmem:[%s1613 + $0x50] sm:$0xff]
        %v5569 = vld [vmem:[%s1613 + $0x58] sm:$0xff]
        %v5570 = vld [vmem:[%s1613 + $0x60] sm:$0xff]
        %v5571 = vld [vmem:[%s1613 + $0x68] sm:$0xff]
        %v5572 = vld [vmem:[%s1613 + $0x70] sm:$0xff]
        %v5573 = vld [vmem:[%s1613 + $0x78] sm:$0xff]
        %5574 = vrot.lane.b32.xlu0 %v648, 125
        %v5575 = vpop.permute.xlu0 %5574
        %5576 = vrot.lane.b32.xlu0 %v651, 125
        %v5577 = vpop.permute.xlu0 %5576
        %5578 = vrot.lane.b32.xlu0 %v654, 125
        %v5579 = vpop.permute.xlu0 %5578
        %5580 = vrot.lane.b32.xlu0 %v657, 125
        %v5581 = vpop.permute.xlu0 %5580
        %5582 = vrot.lane.b32.xlu0 %v660, 125
        %v5583 = vpop.permute.xlu0 %5582
        %5584 = vrot.lane.b32.xlu0 %v663, 125
        %v5585 = vpop.permute.xlu0 %5584
        %5586 = vrot.lane.b32.xlu0 %v666, 125
        %v5587 = vpop.permute.xlu0 %5586
        %5588 = vrot.lane.b32.xlu0 %v669, 125
        %v5589 = vpop.permute.xlu0 %5588
        %5590 = vrot.lane.b32.xlu0 %v672, 125
        %v5591 = vpop.permute.xlu0 %5590
        %5592 = vrot.lane.b32.xlu0 %v675, 125
        %v5593 = vpop.permute.xlu0 %5592
        %5594 = vrot.lane.b32.xlu0 %v678, 125
        %v5595 = vpop.permute.xlu0 %5594
        %5596 = vrot.lane.b32.xlu0 %v681, 125
        %v5597 = vpop.permute.xlu0 %5596
        %5598 = vrot.lane.b32.xlu0 %v684, 125
        %v5599 = vpop.permute.xlu0 %5598
        %5600 = vrot.lane.b32.xlu0 %v687, 125
        %v5601 = vpop.permute.xlu0 %5600
        %5602 = vrot.lane.b32.xlu0 %v690, 125
        %v5603 = vpop.permute.xlu0 %5602
        %5604 = vrot.lane.b32.xlu0 %v693, 125
        %v5605 = vpop.permute.xlu0 %5604
        %5622 = vmatpush.msra.mxu0 %v5605
        %5623 = vmatpush.msra.mxu0 %v5603
        %5624 = vmatpush.msra.mxu0 %v5601
        %5625 = vmatpush.msra.mxu0 %v5599
        %5626 = vmatpush.msra.mxu0 %v5597
        %5627 = vmatpush.msra.mxu0 %v5595
        %5628 = vmatpush.msra.mxu0 %v5593
        %5629 = vmatpush.msra.mxu0 %v5591
        %5630 = vmatpush.msra.mxu0 %v5589
        %5631 = vmatpush.msra.mxu0 %v5587
        %5632 = vmatpush.msra.mxu0 %v5585
        %5633 = vmatpush.msra.mxu0 %v5583
        %5634 = vmatpush.msra.mxu0 %v5581
        %5635 = vmatpush.msra.mxu0 %v5579
        %5636 = vmatpush.msra.mxu0 %v5577
        %5637 = vmatpush.msra.mxu0 %v5575
        %5638 = vmatmul.f32.gmra.mxu0 %v5558
        %v5639 = vpop.f32.mrf.mxu0
        %v5640 = vadd.f32 0.0, %v5639
        %5641 = vmatmul.f32.gmra.mxu0 %v5559
        %v5642 = vpop.f32.mrf.mxu0
        %v5643 = vadd.f32 0.0, %v5642
        %5644 = vmatmul.f32.gmra.mxu0 %v5560
        %v5645 = vpop.f32.mrf.mxu0
        %v5646 = vadd.f32 0.0, %v5645
        %5647 = vmatmul.f32.gmra.mxu0 %v5561
        %v5648 = vpop.f32.mrf.mxu0
        %v5649 = vadd.f32 0.0, %v5648
        %5650 = vmatmul.f32.gmra.mxu0 %v5562
        %v5651 = vpop.f32.mrf.mxu0
        %v5652 = vadd.f32 0.0, %v5651
        %5653 = vmatmul.f32.gmra.mxu0 %v5563
        %v5654 = vpop.f32.mrf.mxu0
        %v5655 = vadd.f32 0.0, %v5654
        %5656 = vmatmul.f32.gmra.mxu0 %v5564
        %v5657 = vpop.f32.mrf.mxu0
        %v5658 = vadd.f32 0.0, %v5657
        %5659 = vmatmul.f32.gmra.mxu0 %v5565
        %v5660 = vpop.f32.mrf.mxu0
        %v5661 = vadd.f32 0.0, %v5660
        %5662 = vmatmul.f32.gmra.mxu0 %v5566
        %v5663 = vpop.f32.mrf.mxu0
        %v5664 = vadd.f32 0.0, %v5663
        %5665 = vmatmul.f32.gmra.mxu0 %v5567
        %v5666 = vpop.f32.mrf.mxu0
        %v5667 = vadd.f32 0.0, %v5666
        %5668 = vmatmul.f32.gmra.mxu0 %v5568
        %v5669 = vpop.f32.mrf.mxu0
        %v5670 = vadd.f32 0.0, %v5669
        %5671 = vmatmul.f32.gmra.mxu0 %v5569
        %v5672 = vpop.f32.mrf.mxu0
        %v5673 = vadd.f32 0.0, %v5672
        %5674 = vmatmul.f32.gmra.mxu0 %v5570
        %v5675 = vpop.f32.mrf.mxu0
        %v5676 = vadd.f32 0.0, %v5675
        %5677 = vmatmul.f32.gmra.mxu0 %v5571
        %v5678 = vpop.f32.mrf.mxu0
        %v5679 = vadd.f32 0.0, %v5678
        %5680 = vmatmul.f32.gmra.mxu0 %v5572
        %v5681 = vpop.f32.mrf.mxu0
        %v5682 = vadd.f32 0.0, %v5681
        %5683 = vmatmul.f32.gmra.mxu0 %v5573
        %v5684 = vpop.f32.mrf.mxu0
        %v5685 = vadd.f32 0.0, %v5684
        %5686 = vdwg.mxu0
        %v5687 = vadd.f32 %v5542, %v5640
        %v5688 = vadd.f32 %v5543, %v5643
        %v5689 = vadd.f32 %v5544, %v5646
        %v5690 = vadd.f32 %v5545, %v5649
        %v5691 = vadd.f32 %v5546, %v5652
        %v5692 = vadd.f32 %v5547, %v5655
        %v5693 = vadd.f32 %v5548, %v5658
        %v5694 = vadd.f32 %v5549, %v5661
        %v5695 = vadd.f32 %v5550, %v5664
        %v5696 = vadd.f32 %v5551, %v5667
        %v5697 = vadd.f32 %v5552, %v5670
        %v5698 = vadd.f32 %v5553, %v5673
        %v5699 = vadd.f32 %v5554, %v5676
        %v5700 = vadd.f32 %v5555, %v5679
        %v5701 = vadd.f32 %v5556, %v5682
        %v5702 = vadd.f32 %v5557, %v5685
        %v5703 = vld [vmem:[%s1759] sm:$0xff]
        %v5704 = vld [vmem:[%s1759 + $0x8] sm:$0xff]
        %v5705 = vld [vmem:[%s1759 + $0x10] sm:$0xff]
        %v5706 = vld [vmem:[%s1759 + $0x18] sm:$0xff]
        %v5707 = vld [vmem:[%s1759 + $0x20] sm:$0xff]
        %v5708 = vld [vmem:[%s1759 + $0x28] sm:$0xff]
        %v5709 = vld [vmem:[%s1759 + $0x30] sm:$0xff]
        %v5710 = vld [vmem:[%s1759 + $0x38] sm:$0xff]
        %v5711 = vld [vmem:[%s1759 + $0x40] sm:$0xff]
        %v5712 = vld [vmem:[%s1759 + $0x48] sm:$0xff]
        %v5713 = vld [vmem:[%s1759 + $0x50] sm:$0xff]
        %v5714 = vld [vmem:[%s1759 + $0x58] sm:$0xff]
        %v5715 = vld [vmem:[%s1759 + $0x60] sm:$0xff]
        %v5716 = vld [vmem:[%s1759 + $0x68] sm:$0xff]
        %v5717 = vld [vmem:[%s1759 + $0x70] sm:$0xff]
        %v5718 = vld [vmem:[%s1759 + $0x78] sm:$0xff]
        %5719 = vrot.lane.b32.xlu0 %v648, 124
        %v5720 = vpop.permute.xlu0 %5719
        %5721 = vrot.lane.b32.xlu0 %v651, 124
        %v5722 = vpop.permute.xlu0 %5721
        %5723 = vrot.lane.b32.xlu0 %v654, 124
        %v5724 = vpop.permute.xlu0 %5723
        %5725 = vrot.lane.b32.xlu0 %v657, 124
        %v5726 = vpop.permute.xlu0 %5725
        %5727 = vrot.lane.b32.xlu0 %v660, 124
        %v5728 = vpop.permute.xlu0 %5727
        %5729 = vrot.lane.b32.xlu0 %v663, 124
        %v5730 = vpop.permute.xlu0 %5729
        %5731 = vrot.lane.b32.xlu0 %v666, 124
        %v5732 = vpop.permute.xlu0 %5731
        %5733 = vrot.lane.b32.xlu0 %v669, 124
        %v5734 = vpop.permute.xlu0 %5733
        %5735 = vrot.lane.b32.xlu0 %v672, 124
        %v5736 = vpop.permute.xlu0 %5735
        %5737 = vrot.lane.b32.xlu0 %v675, 124
        %v5738 = vpop.permute.xlu0 %5737
        %5739 = vrot.lane.b32.xlu0 %v678, 124
        %v5740 = vpop.permute.xlu0 %5739
        %5741 = vrot.lane.b32.xlu0 %v681, 124
        %v5742 = vpop.permute.xlu0 %5741
        %5743 = vrot.lane.b32.xlu0 %v684, 124
        %v5744 = vpop.permute.xlu0 %5743
        %5745 = vrot.lane.b32.xlu0 %v687, 124
        %v5746 = vpop.permute.xlu0 %5745
        %5747 = vrot.lane.b32.xlu0 %v690, 124
        %v5748 = vpop.permute.xlu0 %5747
        %5749 = vrot.lane.b32.xlu0 %v693, 124
        %v5750 = vpop.permute.xlu0 %5749
        %5767 = vmatpush.msra.mxu0 %v5750
        %5768 = vmatpush.msra.mxu0 %v5748
        %5769 = vmatpush.msra.mxu0 %v5746
        %5770 = vmatpush.msra.mxu0 %v5744
        %5771 = vmatpush.msra.mxu0 %v5742
        %5772 = vmatpush.msra.mxu0 %v5740
        %5773 = vmatpush.msra.mxu0 %v5738
        %5774 = vmatpush.msra.mxu0 %v5736
        %5775 = vmatpush.msra.mxu0 %v5734
        %5776 = vmatpush.msra.mxu0 %v5732
        %5777 = vmatpush.msra.mxu0 %v5730
        %5778 = vmatpush.msra.mxu0 %v5728
        %5779 = vmatpush.msra.mxu0 %v5726
        %5780 = vmatpush.msra.mxu0 %v5724
        %5781 = vmatpush.msra.mxu0 %v5722
        %5782 = vmatpush.msra.mxu0 %v5720
        %5783 = vmatmul.f32.gmra.mxu0 %v5703
        %v5784 = vpop.f32.mrf.mxu0
        %v5785 = vadd.f32 0.0, %v5784
        %5786 = vmatmul.f32.gmra.mxu0 %v5704
        %v5787 = vpop.f32.mrf.mxu0
        %v5788 = vadd.f32 0.0, %v5787
        %5789 = vmatmul.f32.gmra.mxu0 %v5705
        %v5790 = vpop.f32.mrf.mxu0
        %v5791 = vadd.f32 0.0, %v5790
        %5792 = vmatmul.f32.gmra.mxu0 %v5706
        %v5793 = vpop.f32.mrf.mxu0
        %v5794 = vadd.f32 0.0, %v5793
        %5795 = vmatmul.f32.gmra.mxu0 %v5707
        %v5796 = vpop.f32.mrf.mxu0
        %v5797 = vadd.f32 0.0, %v5796
        %5798 = vmatmul.f32.gmra.mxu0 %v5708
        %v5799 = vpop.f32.mrf.mxu0
        %v5800 = vadd.f32 0.0, %v5799
        %5801 = vmatmul.f32.gmra.mxu0 %v5709
        %v5802 = vpop.f32.mrf.mxu0
        %v5803 = vadd.f32 0.0, %v5802
        %5804 = vmatmul.f32.gmra.mxu0 %v5710
        %v5805 = vpop.f32.mrf.mxu0
        %v5806 = vadd.f32 0.0, %v5805
        %5807 = vmatmul.f32.gmra.mxu0 %v5711
        %v5808 = vpop.f32.mrf.mxu0
        %v5809 = vadd.f32 0.0, %v5808
        %5810 = vmatmul.f32.gmra.mxu0 %v5712
        %v5811 = vpop.f32.mrf.mxu0
        %v5812 = vadd.f32 0.0, %v5811
        %5813 = vmatmul.f32.gmra.mxu0 %v5713
        %v5814 = vpop.f32.mrf.mxu0
        %v5815 = vadd.f32 0.0, %v5814
        %5816 = vmatmul.f32.gmra.mxu0 %v5714
        %v5817 = vpop.f32.mrf.mxu0
        %v5818 = vadd.f32 0.0, %v5817
        %5819 = vmatmul.f32.gmra.mxu0 %v5715
        %v5820 = vpop.f32.mrf.mxu0
        %v5821 = vadd.f32 0.0, %v5820
        %5822 = vmatmul.f32.gmra.mxu0 %v5716
        %v5823 = vpop.f32.mrf.mxu0
        %v5824 = vadd.f32 0.0, %v5823
        %5825 = vmatmul.f32.gmra.mxu0 %v5717
        %v5826 = vpop.f32.mrf.mxu0
        %v5827 = vadd.f32 0.0, %v5826
        %5828 = vmatmul.f32.gmra.mxu0 %v5718
        %v5829 = vpop.f32.mrf.mxu0
        %v5830 = vadd.f32 0.0, %v5829
        %5831 = vdwg.mxu0
        %v5832 = vadd.f32 %v5687, %v5785
        %v5833 = vadd.f32 %v5688, %v5788
        %v5834 = vadd.f32 %v5689, %v5791
        %v5835 = vadd.f32 %v5690, %v5794
        %v5836 = vadd.f32 %v5691, %v5797
        %v5837 = vadd.f32 %v5692, %v5800
        %v5838 = vadd.f32 %v5693, %v5803
        %v5839 = vadd.f32 %v5694, %v5806
        %v5840 = vadd.f32 %v5695, %v5809
        %v5841 = vadd.f32 %v5696, %v5812
        %v5842 = vadd.f32 %v5697, %v5815
        %v5843 = vadd.f32 %v5698, %v5818
        %v5844 = vadd.f32 %v5699, %v5821
        %v5845 = vadd.f32 %v5700, %v5824
        %v5846 = vadd.f32 %v5701, %v5827
        %v5847 = vadd.f32 %v5702, %v5830
        %v5848 = vld [vmem:[%s1905] sm:$0xff]
        %v5849 = vld [vmem:[%s1905 + $0x8] sm:$0xff]
        %v5850 = vld [vmem:[%s1905 + $0x10] sm:$0xff]
        %v5851 = vld [vmem:[%s1905 + $0x18] sm:$0xff]
        %v5852 = vld [vmem:[%s1905 + $0x20] sm:$0xff]
        %v5853 = vld [vmem:[%s1905 + $0x28] sm:$0xff]
        %v5854 = vld [vmem:[%s1905 + $0x30] sm:$0xff]
        %v5855 = vld [vmem:[%s1905 + $0x38] sm:$0xff]
        %v5856 = vld [vmem:[%s1905 + $0x40] sm:$0xff]
        %v5857 = vld [vmem:[%s1905 + $0x48] sm:$0xff]
        %v5858 = vld [vmem:[%s1905 + $0x50] sm:$0xff]
        %v5859 = vld [vmem:[%s1905 + $0x58] sm:$0xff]
        %v5860 = vld [vmem:[%s1905 + $0x60] sm:$0xff]
        %v5861 = vld [vmem:[%s1905 + $0x68] sm:$0xff]
        %v5862 = vld [vmem:[%s1905 + $0x70] sm:$0xff]
        %v5863 = vld [vmem:[%s1905 + $0x78] sm:$0xff]
        %5864 = vrot.lane.b32.xlu0 %v648, 123
        %v5865 = vpop.permute.xlu0 %5864
        %5866 = vrot.lane.b32.xlu0 %v651, 123
        %v5867 = vpop.permute.xlu0 %5866
        %5868 = vrot.lane.b32.xlu0 %v654, 123
        %v5869 = vpop.permute.xlu0 %5868
        %5870 = vrot.lane.b32.xlu0 %v657, 123
        %v5871 = vpop.permute.xlu0 %5870
        %5872 = vrot.lane.b32.xlu0 %v660, 123
        %v5873 = vpop.permute.xlu0 %5872
        %5874 = vrot.lane.b32.xlu0 %v663, 123
        %v5875 = vpop.permute.xlu0 %5874
        %5876 = vrot.lane.b32.xlu0 %v666, 123
        %v5877 = vpop.permute.xlu0 %5876
        %5878 = vrot.lane.b32.xlu0 %v669, 123
        %v5879 = vpop.permute.xlu0 %5878
        %5880 = vrot.lane.b32.xlu0 %v672, 123
        %v5881 = vpop.permute.xlu0 %5880
        %5882 = vrot.lane.b32.xlu0 %v675, 123
        %v5883 = vpop.permute.xlu0 %5882
        %5884 = vrot.lane.b32.xlu0 %v678, 123
        %v5885 = vpop.permute.xlu0 %5884
        %5886 = vrot.lane.b32.xlu0 %v681, 123
        %v5887 = vpop.permute.xlu0 %5886
        %5888 = vrot.lane.b32.xlu0 %v684, 123
        %v5889 = vpop.permute.xlu0 %5888
        %5890 = vrot.lane.b32.xlu0 %v687, 123
        %v5891 = vpop.permute.xlu0 %5890
        %5892 = vrot.lane.b32.xlu0 %v690, 123
        %v5893 = vpop.permute.xlu0 %5892
        %5894 = vrot.lane.b32.xlu0 %v693, 123
        %v5895 = vpop.permute.xlu0 %5894
        %5912 = vmatpush.msra.mxu0 %v5895
        %5913 = vmatpush.msra.mxu0 %v5893
        %5914 = vmatpush.msra.mxu0 %v5891
        %5915 = vmatpush.msra.mxu0 %v5889
        %5916 = vmatpush.msra.mxu0 %v5887
        %5917 = vmatpush.msra.mxu0 %v5885
        %5918 = vmatpush.msra.mxu0 %v5883
        %5919 = vmatpush.msra.mxu0 %v5881
        %5920 = vmatpush.msra.mxu0 %v5879
        %5921 = vmatpush.msra.mxu0 %v5877
        %5922 = vmatpush.msra.mxu0 %v5875
        %5923 = vmatpush.msra.mxu0 %v5873
        %5924 = vmatpush.msra.mxu0 %v5871
        %5925 = vmatpush.msra.mxu0 %v5869
        %5926 = vmatpush.msra.mxu0 %v5867
        %5927 = vmatpush.msra.mxu0 %v5865
        %5928 = vmatmul.f32.gmra.mxu0 %v5848
        %v5929 = vpop.f32.mrf.mxu0
        %v5930 = vadd.f32 0.0, %v5929
        %5931 = vmatmul.f32.gmra.mxu0 %v5849
        %v5932 = vpop.f32.mrf.mxu0
        %v5933 = vadd.f32 0.0, %v5932
        %5934 = vmatmul.f32.gmra.mxu0 %v5850
        %v5935 = vpop.f32.mrf.mxu0
        %v5936 = vadd.f32 0.0, %v5935
        %5937 = vmatmul.f32.gmra.mxu0 %v5851
        %v5938 = vpop.f32.mrf.mxu0
        %v5939 = vadd.f32 0.0, %v5938
        %5940 = vmatmul.f32.gmra.mxu0 %v5852
        %v5941 = vpop.f32.mrf.mxu0
        %v5942 = vadd.f32 0.0, %v5941
        %5943 = vmatmul.f32.gmra.mxu0 %v5853
        %v5944 = vpop.f32.mrf.mxu0
        %v5945 = vadd.f32 0.0, %v5944
        %5946 = vmatmul.f32.gmra.mxu0 %v5854
        %v5947 = vpop.f32.mrf.mxu0
        %v5948 = vadd.f32 0.0, %v5947
        %5949 = vmatmul.f32.gmra.mxu0 %v5855
        %v5950 = vpop.f32.mrf.mxu0
        %v5951 = vadd.f32 0.0, %v5950
        %5952 = vmatmul.f32.gmra.mxu0 %v5856
        %v5953 = vpop.f32.mrf.mxu0
        %v5954 = vadd.f32 0.0, %v5953
        %5955 = vmatmul.f32.gmra.mxu0 %v5857
        %v5956 = vpop.f32.mrf.mxu0
        %v5957 = vadd.f32 0.0, %v5956
        %5958 = vmatmul.f32.gmra.mxu0 %v5858
        %v5959 = vpop.f32.mrf.mxu0
        %v5960 = vadd.f32 0.0, %v5959
        %5961 = vmatmul.f32.gmra.mxu0 %v5859
        %v5962 = vpop.f32.mrf.mxu0
        %v5963 = vadd.f32 0.0, %v5962
        %5964 = vmatmul.f32.gmra.mxu0 %v5860
        %v5965 = vpop.f32.mrf.mxu0
        %v5966 = vadd.f32 0.0, %v5965
        %5967 = vmatmul.f32.gmra.mxu0 %v5861
        %v5968 = vpop.f32.mrf.mxu0
        %v5969 = vadd.f32 0.0, %v5968
        %5970 = vmatmul.f32.gmra.mxu0 %v5862
        %v5971 = vpop.f32.mrf.mxu0
        %v5972 = vadd.f32 0.0, %v5971
        %5973 = vmatmul.f32.gmra.mxu0 %v5863
        %v5974 = vpop.f32.mrf.mxu0
        %v5975 = vadd.f32 0.0, %v5974
        %5976 = vdwg.mxu0
        %v5977 = vadd.f32 %v5832, %v5930
        %v5978 = vadd.f32 %v5833, %v5933
        %v5979 = vadd.f32 %v5834, %v5936
        %v5980 = vadd.f32 %v5835, %v5939
        %v5981 = vadd.f32 %v5836, %v5942
        %v5982 = vadd.f32 %v5837, %v5945
        %v5983 = vadd.f32 %v5838, %v5948
        %v5984 = vadd.f32 %v5839, %v5951
        %v5985 = vadd.f32 %v5840, %v5954
        %v5986 = vadd.f32 %v5841, %v5957
        %v5987 = vadd.f32 %v5842, %v5960
        %v5988 = vadd.f32 %v5843, %v5963
        %v5989 = vadd.f32 %v5844, %v5966
        %v5990 = vadd.f32 %v5845, %v5969
        %v5991 = vadd.f32 %v5846, %v5972
        %v5992 = vadd.f32 %v5847, %v5975
        %v5993 = vld [vmem:[%s2051] sm:$0xff]
        %v5994 = vld [vmem:[%s2051 + $0x8] sm:$0xff]
        %v5995 = vld [vmem:[%s2051 + $0x10] sm:$0xff]
        %v5996 = vld [vmem:[%s2051 + $0x18] sm:$0xff]
        %v5997 = vld [vmem:[%s2051 + $0x20] sm:$0xff]
        %v5998 = vld [vmem:[%s2051 + $0x28] sm:$0xff]
        %v5999 = vld [vmem:[%s2051 + $0x30] sm:$0xff]
        %v6000 = vld [vmem:[%s2051 + $0x38] sm:$0xff]
        %v6001 = vld [vmem:[%s2051 + $0x40] sm:$0xff]
        %v6002 = vld [vmem:[%s2051 + $0x48] sm:$0xff]
        %v6003 = vld [vmem:[%s2051 + $0x50] sm:$0xff]
        %v6004 = vld [vmem:[%s2051 + $0x58] sm:$0xff]
        %v6005 = vld [vmem:[%s2051 + $0x60] sm:$0xff]
        %v6006 = vld [vmem:[%s2051 + $0x68] sm:$0xff]
        %v6007 = vld [vmem:[%s2051 + $0x70] sm:$0xff]
        %v6008 = vld [vmem:[%s2051 + $0x78] sm:$0xff]
        %6009 = vrot.lane.b32.xlu0 %v648, 122
        %v6010 = vpop.permute.xlu0 %6009
        %6011 = vrot.lane.b32.xlu0 %v651, 122
        %v6012 = vpop.permute.xlu0 %6011
        %6013 = vrot.lane.b32.xlu0 %v654, 122
        %v6014 = vpop.permute.xlu0 %6013
        %6015 = vrot.lane.b32.xlu0 %v657, 122
        %v6016 = vpop.permute.xlu0 %6015
        %6017 = vrot.lane.b32.xlu0 %v660, 122
        %v6018 = vpop.permute.xlu0 %6017
        %6019 = vrot.lane.b32.xlu0 %v663, 122
        %v6020 = vpop.permute.xlu0 %6019
        %6021 = vrot.lane.b32.xlu0 %v666, 122
        %v6022 = vpop.permute.xlu0 %6021
        %6023 = vrot.lane.b32.xlu0 %v669, 122
        %v6024 = vpop.permute.xlu0 %6023
        %6025 = vrot.lane.b32.xlu0 %v672, 122
        %v6026 = vpop.permute.xlu0 %6025
        %6027 = vrot.lane.b32.xlu0 %v675, 122
        %v6028 = vpop.permute.xlu0 %6027
        %6029 = vrot.lane.b32.xlu0 %v678, 122
        %v6030 = vpop.permute.xlu0 %6029
        %6031 = vrot.lane.b32.xlu0 %v681, 122
        %v6032 = vpop.permute.xlu0 %6031
        %6033 = vrot.lane.b32.xlu0 %v684, 122
        %v6034 = vpop.permute.xlu0 %6033
        %6035 = vrot.lane.b32.xlu0 %v687, 122
        %v6036 = vpop.permute.xlu0 %6035
        %6037 = vrot.lane.b32.xlu0 %v690, 122
        %v6038 = vpop.permute.xlu0 %6037
        %6039 = vrot.lane.b32.xlu0 %v693, 122
        %v6040 = vpop.permute.xlu0 %6039
        %6057 = vmatpush.msra.mxu0 %v6040
        %6058 = vmatpush.msra.mxu0 %v6038
        %6059 = vmatpush.msra.mxu0 %v6036
        %6060 = vmatpush.msra.mxu0 %v6034
        %6061 = vmatpush.msra.mxu0 %v6032
        %6062 = vmatpush.msra.mxu0 %v6030
        %6063 = vmatpush.msra.mxu0 %v6028
        %6064 = vmatpush.msra.mxu0 %v6026
        %6065 = vmatpush.msra.mxu0 %v6024
        %6066 = vmatpush.msra.mxu0 %v6022
        %6067 = vmatpush.msra.mxu0 %v6020
        %6068 = vmatpush.msra.mxu0 %v6018
        %6069 = vmatpush.msra.mxu0 %v6016
        %6070 = vmatpush.msra.mxu0 %v6014
        %6071 = vmatpush.msra.mxu0 %v6012
        %6072 = vmatpush.msra.mxu0 %v6010
        %6073 = vmatmul.f32.gmra.mxu0 %v5993
        %v6074 = vpop.f32.mrf.mxu0
        %v6075 = vadd.f32 0.0, %v6074
        %6076 = vmatmul.f32.gmra.mxu0 %v5994
        %v6077 = vpop.f32.mrf.mxu0
        %v6078 = vadd.f32 0.0, %v6077
        %6079 = vmatmul.f32.gmra.mxu0 %v5995
        %v6080 = vpop.f32.mrf.mxu0
        %v6081 = vadd.f32 0.0, %v6080
        %6082 = vmatmul.f32.gmra.mxu0 %v5996
        %v6083 = vpop.f32.mrf.mxu0
        %v6084 = vadd.f32 0.0, %v6083
        %6085 = vmatmul.f32.gmra.mxu0 %v5997
        %v6086 = vpop.f32.mrf.mxu0
        %v6087 = vadd.f32 0.0, %v6086
        %6088 = vmatmul.f32.gmra.mxu0 %v5998
        %v6089 = vpop.f32.mrf.mxu0
        %v6090 = vadd.f32 0.0, %v6089
        %6091 = vmatmul.f32.gmra.mxu0 %v5999
        %v6092 = vpop.f32.mrf.mxu0
        %v6093 = vadd.f32 0.0, %v6092
        %6094 = vmatmul.f32.gmra.mxu0 %v6000
        %v6095 = vpop.f32.mrf.mxu0
        %v6096 = vadd.f32 0.0, %v6095
        %6097 = vmatmul.f32.gmra.mxu0 %v6001
        %v6098 = vpop.f32.mrf.mxu0
        %v6099 = vadd.f32 0.0, %v6098
        %6100 = vmatmul.f32.gmra.mxu0 %v6002
        %v6101 = vpop.f32.mrf.mxu0
        %v6102 = vadd.f32 0.0, %v6101
        %6103 = vmatmul.f32.gmra.mxu0 %v6003
        %v6104 = vpop.f32.mrf.mxu0
        %v6105 = vadd.f32 0.0, %v6104
        %6106 = vmatmul.f32.gmra.mxu0 %v6004
        %v6107 = vpop.f32.mrf.mxu0
        %v6108 = vadd.f32 0.0, %v6107
        %6109 = vmatmul.f32.gmra.mxu0 %v6005
        %v6110 = vpop.f32.mrf.mxu0
        %v6111 = vadd.f32 0.0, %v6110
        %6112 = vmatmul.f32.gmra.mxu0 %v6006
        %v6113 = vpop.f32.mrf.mxu0
        %v6114 = vadd.f32 0.0, %v6113
        %6115 = vmatmul.f32.gmra.mxu0 %v6007
        %v6116 = vpop.f32.mrf.mxu0
        %v6117 = vadd.f32 0.0, %v6116
        %6118 = vmatmul.f32.gmra.mxu0 %v6008
        %v6119 = vpop.f32.mrf.mxu0
        %v6120 = vadd.f32 0.0, %v6119
        %6121 = vdwg.mxu0
        %v6122 = vadd.f32 %v5977, %v6075
        %v6123 = vadd.f32 %v5978, %v6078
        %v6124 = vadd.f32 %v5979, %v6081
        %v6125 = vadd.f32 %v5980, %v6084
        %v6126 = vadd.f32 %v5981, %v6087
        %v6127 = vadd.f32 %v5982, %v6090
        %v6128 = vadd.f32 %v5983, %v6093
        %v6129 = vadd.f32 %v5984, %v6096
        %v6130 = vadd.f32 %v5985, %v6099
        %v6131 = vadd.f32 %v5986, %v6102
        %v6132 = vadd.f32 %v5987, %v6105
        %v6133 = vadd.f32 %v5988, %v6108
        %v6134 = vadd.f32 %v5989, %v6111
        %v6135 = vadd.f32 %v5990, %v6114
        %v6136 = vadd.f32 %v5991, %v6117
        %v6137 = vadd.f32 %v5992, %v6120
        %v6138 = vsel %vm2197, %v6122, 0.0
        %6139 = vadd.xlane.f32.xlu0 %v6138
        %v6140 = vpop.xlane.xlu0 %6139
        %v6141 = vsel %vm2197, %v6123, 0.0
        %6142 = vadd.xlane.f32.xlu0 %v6141
        %v6143 = vpop.xlane.xlu0 %6142
        %v6144 = vsel %vm2197, %v6124, 0.0
        %6145 = vadd.xlane.f32.xlu0 %v6144
        %v6146 = vpop.xlane.xlu0 %6145
        %v6147 = vsel %vm2197, %v6125, 0.0
        %6148 = vadd.xlane.f32.xlu0 %v6147
        %v6149 = vpop.xlane.xlu0 %6148
        %v6150 = vsel %vm2197, %v6126, 0.0
        %6151 = vadd.xlane.f32.xlu0 %v6150
        %v6152 = vpop.xlane.xlu0 %6151
        %v6153 = vsel %vm2197, %v6127, 0.0
        %6154 = vadd.xlane.f32.xlu0 %v6153
        %v6155 = vpop.xlane.xlu0 %6154
        %v6156 = vsel %vm2197, %v6128, 0.0
        %6157 = vadd.xlane.f32.xlu0 %v6156
        %v6158 = vpop.xlane.xlu0 %6157
        %v6159 = vsel %vm2197, %v6129, 0.0
        %6160 = vadd.xlane.f32.xlu0 %v6159
        %v6161 = vpop.xlane.xlu0 %6160
        %v6162 = vsel %vm2197, %v6130, 0.0
        %6163 = vadd.xlane.f32.xlu0 %v6162
        %v6164 = vpop.xlane.xlu0 %6163
        %v6165 = vsel %vm2197, %v6131, 0.0
        %6166 = vadd.xlane.f32.xlu0 %v6165
        %v6167 = vpop.xlane.xlu0 %6166
        %v6168 = vsel %vm2197, %v6132, 0.0
        %6169 = vadd.xlane.f32.xlu0 %v6168
        %v6170 = vpop.xlane.xlu0 %6169
        %v6171 = vsel %vm2197, %v6133, 0.0
        %6172 = vadd.xlane.f32.xlu0 %v6171
        %v6173 = vpop.xlane.xlu0 %6172
        %v6174 = vsel %vm2197, %v6134, 0.0
        %6175 = vadd.xlane.f32.xlu0 %v6174
        %v6176 = vpop.xlane.xlu0 %6175
        %v6177 = vsel %vm2197, %v6135, 0.0
        %6178 = vadd.xlane.f32.xlu0 %v6177
        %v6179 = vpop.xlane.xlu0 %6178
        %v6180 = vsel %vm2197, %v6136, 0.0
        %6181 = vadd.xlane.f32.xlu0 %v6180
        %v6182 = vpop.xlane.xlu0 %6181
        %v6183 = vsel %vm2197, %v6137, 0.0
        %6184 = vadd.xlane.f32.xlu0 %v6183
        %v6185 = vpop.xlane.xlu0 %6184
        %v6186 = vmul.f32 %v6140, 0.0625
        %v6187 = vmul.f32 %v6143, 0.0625
        %v6188 = vmul.f32 %v6146, 0.0625
        %v6189 = vmul.f32 %v6149, 0.0625
        %v6190 = vmul.f32 %v6152, 0.0625
        %v6191 = vmul.f32 %v6155, 0.0625
        %v6192 = vmul.f32 %v6158, 0.0625
        %v6193 = vmul.f32 %v6161, 0.0625
        %v6194 = vmul.f32 %v6164, 0.0625
        %v6195 = vmul.f32 %v6167, 0.0625
        %v6196 = vmul.f32 %v6170, 0.0625
        %v6197 = vmul.f32 %v6173, 0.0625
        %v6198 = vmul.f32 %v6176, 0.0625
        %v6199 = vmul.f32 %v6179, 0.0625
        %v6200 = vmul.f32 %v6182, 0.0625
        %v6201 = vmul.f32 %v6185, 0.0625
        %v6202 = vsub.f32 %v6122, %v6186
        %v6203 = vsub.f32 %v6123, %v6187
        %v6204 = vsub.f32 %v6124, %v6188
        %v6205 = vsub.f32 %v6125, %v6189
        %v6206 = vsub.f32 %v6126, %v6190
        %v6207 = vsub.f32 %v6127, %v6191
        %v6208 = vsub.f32 %v6128, %v6192
        %v6209 = vsub.f32 %v6129, %v6193
        %v6210 = vsub.f32 %v6130, %v6194
        %v6211 = vsub.f32 %v6131, %v6195
        %v6212 = vsub.f32 %v6132, %v6196
        %v6213 = vsub.f32 %v6133, %v6197
        %v6214 = vsub.f32 %v6134, %v6198
        %v6215 = vsub.f32 %v6135, %v6199
        %v6216 = vsub.f32 %v6136, %v6200
        %v6217 = vsub.f32 %v6137, %v6201
        %v6218 = vmul.f32 %v6202, %v6202
        %v6219 = vmul.f32 %v6203, %v6203
        %v6220 = vmul.f32 %v6204, %v6204
        %v6221 = vmul.f32 %v6205, %v6205
        %v6222 = vmul.f32 %v6206, %v6206
        %v6223 = vmul.f32 %v6207, %v6207
        %v6224 = vmul.f32 %v6208, %v6208
        %v6225 = vmul.f32 %v6209, %v6209
        %v6226 = vmul.f32 %v6210, %v6210
        %v6227 = vmul.f32 %v6211, %v6211
        %v6228 = vmul.f32 %v6212, %v6212
        %v6229 = vmul.f32 %v6213, %v6213
        %v6230 = vmul.f32 %v6214, %v6214
        %v6231 = vmul.f32 %v6215, %v6215
        %v6232 = vmul.f32 %v6216, %v6216
        %v6233 = vmul.f32 %v6217, %v6217
        %v6234 = vsel %vm2197, %v6218, 0.0
        %6235 = vadd.xlane.f32.xlu0 %v6234
        %v6236 = vpop.xlane.xlu0 %6235
        %v6237 = vsel %vm2197, %v6219, 0.0
        %6238 = vadd.xlane.f32.xlu0 %v6237
        %v6239 = vpop.xlane.xlu0 %6238
        %v6240 = vsel %vm2197, %v6220, 0.0
        %6241 = vadd.xlane.f32.xlu0 %v6240
        %v6242 = vpop.xlane.xlu0 %6241
        %v6243 = vsel %vm2197, %v6221, 0.0
        %6244 = vadd.xlane.f32.xlu0 %v6243
        %v6245 = vpop.xlane.xlu0 %6244
        %v6246 = vsel %vm2197, %v6222, 0.0
        %6247 = vadd.xlane.f32.xlu0 %v6246
        %v6248 = vpop.xlane.xlu0 %6247
        %v6249 = vsel %vm2197, %v6223, 0.0
        %6250 = vadd.xlane.f32.xlu0 %v6249
        %v6251 = vpop.xlane.xlu0 %6250
        %v6252 = vsel %vm2197, %v6224, 0.0
        %6253 = vadd.xlane.f32.xlu0 %v6252
        %v6254 = vpop.xlane.xlu0 %6253
        %v6255 = vsel %vm2197, %v6225, 0.0
        %6256 = vadd.xlane.f32.xlu0 %v6255
        %v6257 = vpop.xlane.xlu0 %6256
        %v6258 = vsel %vm2197, %v6226, 0.0
        %6259 = vadd.xlane.f32.xlu0 %v6258
        %v6260 = vpop.xlane.xlu0 %6259
        %v6261 = vsel %vm2197, %v6227, 0.0
        %6262 = vadd.xlane.f32.xlu0 %v6261
        %v6263 = vpop.xlane.xlu0 %6262
        %v6264 = vsel %vm2197, %v6228, 0.0
        %6265 = vadd.xlane.f32.xlu0 %v6264
        %v6266 = vpop.xlane.xlu0 %6265
        %v6267 = vsel %vm2197, %v6229, 0.0
        %6268 = vadd.xlane.f32.xlu0 %v6267
        %v6269 = vpop.xlane.xlu0 %6268
        %v6270 = vsel %vm2197, %v6230, 0.0
        %6271 = vadd.xlane.f32.xlu0 %v6270
        %v6272 = vpop.xlane.xlu0 %6271
        %v6273 = vsel %vm2197, %v6231, 0.0
        %6274 = vadd.xlane.f32.xlu0 %v6273
        %v6275 = vpop.xlane.xlu0 %6274
        %v6276 = vsel %vm2197, %v6232, 0.0
        %6277 = vadd.xlane.f32.xlu0 %v6276
        %v6278 = vpop.xlane.xlu0 %6277
        %v6279 = vsel %vm2197, %v6233, 0.0
        %6280 = vadd.xlane.f32.xlu0 %v6279
        %v6281 = vpop.xlane.xlu0 %6280
        %v6282 = vmul.f32 %v6236, 0.0625
        %v6283 = vmul.f32 %v6239, 0.0625
        %v6284 = vmul.f32 %v6242, 0.0625
        %v6285 = vmul.f32 %v6245, 0.0625
        %v6286 = vmul.f32 %v6248, 0.0625
        %v6287 = vmul.f32 %v6251, 0.0625
        %v6288 = vmul.f32 %v6254, 0.0625
        %v6289 = vmul.f32 %v6257, 0.0625
        %v6290 = vmul.f32 %v6260, 0.0625
        %v6291 = vmul.f32 %v6263, 0.0625
        %v6292 = vmul.f32 %v6266, 0.0625
        %v6293 = vmul.f32 %v6269, 0.0625
        %v6294 = vmul.f32 %v6272, 0.0625
        %v6295 = vmul.f32 %v6275, 0.0625
        %v6296 = vmul.f32 %v6278, 0.0625
        %v6297 = vmul.f32 %v6281, 0.0625
        %v6298 = vadd.f32 %v6282, 1e-05
        %v6299 = vadd.f32 %v6283, 1e-05
        %v6300 = vadd.f32 %v6284, 1e-05
        %v6301 = vadd.f32 %v6285, 1e-05
        %v6302 = vadd.f32 %v6286, 1e-05
        %v6303 = vadd.f32 %v6287, 1e-05
        %v6304 = vadd.f32 %v6288, 1e-05
        %v6305 = vadd.f32 %v6289, 1e-05
        %v6306 = vadd.f32 %v6290, 1e-05
        %v6307 = vadd.f32 %v6291, 1e-05
        %v6308 = vadd.f32 %v6292, 1e-05
        %v6309 = vadd.f32 %v6293, 1e-05
        %v6310 = vadd.f32 %v6294, 1e-05
        %v6311 = vadd.f32 %v6295, 1e-05
        %v6312 = vadd.f32 %v6296, 1e-05
        %v6313 = vadd.f32 %v6297, 1e-05
        %v6314 = vrsqrt.pop %v6298
        %v6315 = vmul.f32 %v6314, %v6298
        %v6316 = vmul.f32 %v6315, %v6314
        %v6317 = vmul.f32 0.5, %v6316
        %v6318 = vsub.f32 1.5, %v6317
        %v6319 = vmul.f32 %v6314, %v6318
        %vm6320 = vweird.f32 %v6298
        %vm6321 = vweird.f32 %v6314
        %vm6322 = vmor %vm6320, %vm6321
        %v6323 = vsel %vm6322, %v6314, %v6319
        %v6324 = vrsqrt.pop %v6299
        %v6325 = vmul.f32 %v6324, %v6299
        %v6326 = vmul.f32 %v6325, %v6324
        %v6327 = vmul.f32 0.5, %v6326
        %v6328 = vsub.f32 1.5, %v6327
        %v6329 = vmul.f32 %v6324, %v6328
        %vm6330 = vweird.f32 %v6299
        %vm6331 = vweird.f32 %v6324
        %vm6332 = vmor %vm6330, %vm6331
        %v6333 = vsel %vm6332, %v6324, %v6329
        %v6334 = vrsqrt.pop %v6300
        %v6335 = vmul.f32 %v6334, %v6300
        %v6336 = vmul.f32 %v6335, %v6334
        %v6337 = vmul.f32 0.5, %v6336
        %v6338 = vsub.f32 1.5, %v6337
        %v6339 = vmul.f32 %v6334, %v6338
        %vm6340 = vweird.f32 %v6300
        %vm6341 = vweird.f32 %v6334
        %vm6342 = vmor %vm6340, %vm6341
        %v6343 = vsel %vm6342, %v6334, %v6339
        %v6344 = vrsqrt.pop %v6301
        %v6345 = vmul.f32 %v6344, %v6301
        %v6346 = vmul.f32 %v6345, %v6344
        %v6347 = vmul.f32 0.5, %v6346
        %v6348 = vsub.f32 1.5, %v6347
        %v6349 = vmul.f32 %v6344, %v6348
        %vm6350 = vweird.f32 %v6301
        %vm6351 = vweird.f32 %v6344
        %vm6352 = vmor %vm6350, %vm6351
        %v6353 = vsel %vm6352, %v6344, %v6349
        %v6354 = vrsqrt.pop %v6302
        %v6355 = vmul.f32 %v6354, %v6302
        %v6356 = vmul.f32 %v6355, %v6354
        %v6357 = vmul.f32 0.5, %v6356
        %v6358 = vsub.f32 1.5, %v6357
        %v6359 = vmul.f32 %v6354, %v6358
        %vm6360 = vweird.f32 %v6302
        %vm6361 = vweird.f32 %v6354
        %vm6362 = vmor %vm6360, %vm6361
        %v6363 = vsel %vm6362, %v6354, %v6359
        %v6364 = vrsqrt.pop %v6303
        %v6365 = vmul.f32 %v6364, %v6303
        %v6366 = vmul.f32 %v6365, %v6364
        %v6367 = vmul.f32 0.5, %v6366
        %v6368 = vsub.f32 1.5, %v6367
        %v6369 = vmul.f32 %v6364, %v6368
        %vm6370 = vweird.f32 %v6303
        %vm6371 = vweird.f32 %v6364
        %vm6372 = vmor %vm6370, %vm6371
        %v6373 = vsel %vm6372, %v6364, %v6369
        %v6374 = vrsqrt.pop %v6304
        %v6375 = vmul.f32 %v6374, %v6304
        %v6376 = vmul.f32 %v6375, %v6374
        %v6377 = vmul.f32 0.5, %v6376
        %v6378 = vsub.f32 1.5, %v6377
        %v6379 = vmul.f32 %v6374, %v6378
        %vm6380 = vweird.f32 %v6304
        %vm6381 = vweird.f32 %v6374
        %vm6382 = vmor %vm6380, %vm6381
        %v6383 = vsel %vm6382, %v6374, %v6379
        %v6384 = vrsqrt.pop %v6305
        %v6385 = vmul.f32 %v6384, %v6305
        %v6386 = vmul.f32 %v6385, %v6384
        %v6387 = vmul.f32 0.5, %v6386
        %v6388 = vsub.f32 1.5, %v6387
        %v6389 = vmul.f32 %v6384, %v6388
        %vm6390 = vweird.f32 %v6305
        %vm6391 = vweird.f32 %v6384
        %vm6392 = vmor %vm6390, %vm6391
        %v6393 = vsel %vm6392, %v6384, %v6389
        %v6394 = vrsqrt.pop %v6306
        %v6395 = vmul.f32 %v6394, %v6306
        %v6396 = vmul.f32 %v6395, %v6394
        %v6397 = vmul.f32 0.5, %v6396
        %v6398 = vsub.f32 1.5, %v6397
        %v6399 = vmul.f32 %v6394, %v6398
        %vm6400 = vweird.f32 %v6306
        %vm6401 = vweird.f32 %v6394
        %vm6402 = vmor %vm6400, %vm6401
        %v6403 = vsel %vm6402, %v6394, %v6399
        %v6404 = vrsqrt.pop %v6307
        %v6405 = vmul.f32 %v6404, %v6307
        %v6406 = vmul.f32 %v6405, %v6404
        %v6407 = vmul.f32 0.5, %v6406
        %v6408 = vsub.f32 1.5, %v6407
        %v6409 = vmul.f32 %v6404, %v6408
        %vm6410 = vweird.f32 %v6307
        %vm6411 = vweird.f32 %v6404
        %vm6412 = vmor %vm6410, %vm6411
        %v6413 = vsel %vm6412, %v6404, %v6409
        %v6414 = vrsqrt.pop %v6308
        %v6415 = vmul.f32 %v6414, %v6308
        %v6416 = vmul.f32 %v6415, %v6414
        %v6417 = vmul.f32 0.5, %v6416
        %v6418 = vsub.f32 1.5, %v6417
        %v6419 = vmul.f32 %v6414, %v6418
        %vm6420 = vweird.f32 %v6308
        %vm6421 = vweird.f32 %v6414
        %vm6422 = vmor %vm6420, %vm6421
        %v6423 = vsel %vm6422, %v6414, %v6419
        %v6424 = vrsqrt.pop %v6309
        %v6425 = vmul.f32 %v6424, %v6309
        %v6426 = vmul.f32 %v6425, %v6424
        %v6427 = vmul.f32 0.5, %v6426
        %v6428 = vsub.f32 1.5, %v6427
        %v6429 = vmul.f32 %v6424, %v6428
        %vm6430 = vweird.f32 %v6309
        %vm6431 = vweird.f32 %v6424
        %vm6432 = vmor %vm6430, %vm6431
        %v6433 = vsel %vm6432, %v6424, %v6429
        %v6434 = vrsqrt.pop %v6310
        %v6435 = vmul.f32 %v6434, %v6310
        %v6436 = vmul.f32 %v6435, %v6434
        %v6437 = vmul.f32 0.5, %v6436
        %v6438 = vsub.f32 1.5, %v6437
        %v6439 = vmul.f32 %v6434, %v6438
        %vm6440 = vweird.f32 %v6310
        %vm6441 = vweird.f32 %v6434
        %vm6442 = vmor %vm6440, %vm6441
        %v6443 = vsel %vm6442, %v6434, %v6439
        %v6444 = vrsqrt.pop %v6311
        %v6445 = vmul.f32 %v6444, %v6311
        %v6446 = vmul.f32 %v6445, %v6444
        %v6447 = vmul.f32 0.5, %v6446
        %v6448 = vsub.f32 1.5, %v6447
        %v6449 = vmul.f32 %v6444, %v6448
        %vm6450 = vweird.f32 %v6311
        %vm6451 = vweird.f32 %v6444
        %vm6452 = vmor %vm6450, %vm6451
        %v6453 = vsel %vm6452, %v6444, %v6449
        %v6454 = vrsqrt.pop %v6312
        %v6455 = vmul.f32 %v6454, %v6312
        %v6456 = vmul.f32 %v6455, %v6454
        %v6457 = vmul.f32 0.5, %v6456
        %v6458 = vsub.f32 1.5, %v6457
        %v6459 = vmul.f32 %v6454, %v6458
        %vm6460 = vweird.f32 %v6312
        %vm6461 = vweird.f32 %v6454
        %vm6462 = vmor %vm6460, %vm6461
        %v6463 = vsel %vm6462, %v6454, %v6459
        %v6464 = vrsqrt.pop %v6313
        %v6465 = vmul.f32 %v6464, %v6313
        %v6466 = vmul.f32 %v6465, %v6464
        %v6467 = vmul.f32 0.5, %v6466
        %v6468 = vsub.f32 1.5, %v6467
        %v6469 = vmul.f32 %v6464, %v6468
        %vm6470 = vweird.f32 %v6313
        %vm6471 = vweird.f32 %v6464
        %vm6472 = vmor %vm6470, %vm6471
        %v6473 = vsel %vm6472, %v6464, %v6469
        %v6474 = vmul.f32 %v6202, %v6323
        %v6475 = vmul.f32 %v6203, %v6333
        %v6476 = vmul.f32 %v6204, %v6343
        %v6477 = vmul.f32 %v6205, %v6353
        %v6478 = vmul.f32 %v6206, %v6363
        %v6479 = vmul.f32 %v6207, %v6373
        %v6480 = vmul.f32 %v6208, %v6383
        %v6481 = vmul.f32 %v6209, %v6393
        %v6482 = vmul.f32 %v6210, %v6403
        %v6483 = vmul.f32 %v6211, %v6413
        %v6484 = vmul.f32 %v6212, %v6423
        %v6485 = vmul.f32 %v6213, %v6433
        %v6486 = vmul.f32 %v6214, %v6443
        %v6487 = vmul.f32 %v6215, %v6453
        %v6488 = vmul.f32 %v6216, %v6463
        %v6489 = vmul.f32 %v6217, %v6473
        %v6490 = vmul.f32 %v6474, %v2553
        %v6491 = vmul.f32 %v6475, %v2558
        %v6492 = vmul.f32 %v6476, %v2563
        %v6493 = vmul.f32 %v6477, %v2568
        %v6494 = vmul.f32 %v6478, %v2573
        %v6495 = vmul.f32 %v6479, %v2578
        %v6496 = vmul.f32 %v6480, %v2583
        %v6497 = vmul.f32 %v6481, %v2588
        %v6498 = vmul.f32 %v6482, %v2593
        %v6499 = vmul.f32 %v6483, %v2598
        %v6500 = vmul.f32 %v6484, %v2603
        %v6501 = vmul.f32 %v6485, %v2608
        %v6502 = vmul.f32 %v6486, %v2613
        %v6503 = vmul.f32 %v6487, %v2618
        %v6504 = vmul.f32 %v6488, %v2623
        %v6505 = vmul.f32 %v6489, %v2628
        %v6506 = vadd.f32 %v6490, %v2649
        %v6507 = vadd.f32 %v6491, %v2654
        %v6508 = vadd.f32 %v6492, %v2659
        %v6509 = vadd.f32 %v6493, %v2664
        %v6510 = vadd.f32 %v6494, %v2669
        %v6511 = vadd.f32 %v6495, %v2674
        %v6512 = vadd.f32 %v6496, %v2679
        %v6513 = vadd.f32 %v6497, %v2684
        %v6514 = vadd.f32 %v6498, %v2689
        %v6515 = vadd.f32 %v6499, %v2694
        %v6516 = vadd.f32 %v6500, %v2699
        %v6517 = vadd.f32 %v6501, %v2704
        %v6518 = vadd.f32 %v6502, %v2709
        %v6519 = vadd.f32 %v6503, %v2714
        %v6520 = vadd.f32 %v6504, %v2719
        %v6521 = vadd.f32 %v6505, %v2724
        %v6522 = vxor.u32 %v6506, 2147483648
        %v6523 = vxor.u32 %v6507, 2147483648
        %v6524 = vxor.u32 %v6508, 2147483648
        %v6525 = vxor.u32 %v6509, 2147483648
        %v6526 = vxor.u32 %v6510, 2147483648
        %v6527 = vxor.u32 %v6511, 2147483648
        %v6528 = vxor.u32 %v6512, 2147483648
        %v6529 = vxor.u32 %v6513, 2147483648
        %v6530 = vxor.u32 %v6514, 2147483648
        %v6531 = vxor.u32 %v6515, 2147483648
        %v6532 = vxor.u32 %v6516, 2147483648
        %v6533 = vxor.u32 %v6517, 2147483648
        %v6534 = vxor.u32 %v6518, 2147483648
        %v6535 = vxor.u32 %v6519, 2147483648
        %v6536 = vxor.u32 %v6520, 2147483648
        %v6537 = vxor.u32 %v6521, 2147483648
        %v6538 = vmul.f32 %v6522, 1.442695
        %v6539 = vpow.pop %v6538
        %v6540 = vmul.f32 %v6523, 1.442695
        %v6541 = vpow.pop %v6540
        %v6542 = vmul.f32 %v6524, 1.442695
        %v6543 = vpow.pop %v6542
        %v6544 = vmul.f32 %v6525, 1.442695
        %v6545 = vpow.pop %v6544
        %v6546 = vmul.f32 %v6526, 1.442695
        %v6547 = vpow.pop %v6546
        %v6548 = vmul.f32 %v6527, 1.442695
        %v6549 = vpow.pop %v6548
        %v6550 = vmul.f32 %v6528, 1.442695
        %v6551 = vpow.pop %v6550
        %v6552 = vmul.f32 %v6529, 1.442695
        %v6553 = vpow.pop %v6552
        %v6554 = vmul.f32 %v6530, 1.442695
        %v6555 = vpow.pop %v6554
        %v6556 = vmul.f32 %v6531, 1.442695
        %v6557 = vpow.pop %v6556
        %v6558 = vmul.f32 %v6532, 1.442695
        %v6559 = vpow.pop %v6558
        %v6560 = vmul.f32 %v6533, 1.442695
        %v6561 = vpow.pop %v6560
        %v6562 = vmul.f32 %v6534, 1.442695
        %v6563 = vpow.pop %v6562
        %v6564 = vmul.f32 %v6535, 1.442695
        %v6565 = vpow.pop %v6564
        %v6566 = vmul.f32 %v6536, 1.442695
        %v6567 = vpow.pop %v6566
        %v6568 = vmul.f32 %v6537, 1.442695
        %v6569 = vpow.pop %v6568
        %v6570 = vadd.f32 %v6539, 1.0
        %v6571 = vadd.f32 %v6541, 1.0
        %v6572 = vadd.f32 %v6543, 1.0
        %v6573 = vadd.f32 %v6545, 1.0
        %v6574 = vadd.f32 %v6547, 1.0
        %v6575 = vadd.f32 %v6549, 1.0
        %v6576 = vadd.f32 %v6551, 1.0
        %v6577 = vadd.f32 %v6553, 1.0
        %v6578 = vadd.f32 %v6555, 1.0
        %v6579 = vadd.f32 %v6557, 1.0
        %v6580 = vadd.f32 %v6559, 1.0
        %v6581 = vadd.f32 %v6561, 1.0
        %v6582 = vadd.f32 %v6563, 1.0
        %v6583 = vadd.f32 %v6565, 1.0
        %v6584 = vadd.f32 %v6567, 1.0
        %v6585 = vadd.f32 %v6569, 1.0
        %v6586 = vrcp.pop %v6570
        %v6587 = vmul.f32 %v6570, %v6586
        %v6588 = vsub.f32 1.0, %v6587
        %v6589 = vmul.f32 %v6586, %v6588
        %v6590 = vadd.f32 %v6586, %v6589
        %vm6591 = vweird.f32 %v6570
        %vm6592 = vweird.f32 %v6586
        %vm6593 = vmor %vm6591, %vm6592
        %v6594 = vsel %vm6593, %v6586, %v6590
        %v6595 = vand.u32 2147483647, %v6570
        %vm6596 = vcmp.eq.f32.partialorder %v6595, 8.507059e+37
        %v6597 = vand.u32 %v6570, 2147483648
        %v6598 = vor.u32 1.1754944e-38, %v6597
        %v6599 = vsel %vm6596, %v6598, %v6594
        %v6600 = vmul.f32 1.0, %v6599
        %v6601 = vrcp.pop %v6571
        %v6602 = vmul.f32 %v6571, %v6601
        %v6603 = vsub.f32 1.0, %v6602
        %v6604 = vmul.f32 %v6601, %v6603
        %v6605 = vadd.f32 %v6601, %v6604
        %vm6606 = vweird.f32 %v6571
        %vm6607 = vweird.f32 %v6601
        %vm6608 = vmor %vm6606, %vm6607
        %v6609 = vsel %vm6608, %v6601, %v6605
        %v6610 = vand.u32 2147483647, %v6571
        %vm6611 = vcmp.eq.f32.partialorder %v6610, 8.507059e+37
        %v6612 = vand.u32 %v6571, 2147483648
        %v6613 = vor.u32 1.1754944e-38, %v6612
        %v6614 = vsel %vm6611, %v6613, %v6609
        %v6615 = vmul.f32 1.0, %v6614
        %v6616 = vrcp.pop %v6572
        %v6617 = vmul.f32 %v6572, %v6616
        %v6618 = vsub.f32 1.0, %v6617
        %v6619 = vmul.f32 %v6616, %v6618
        %v6620 = vadd.f32 %v6616, %v6619
        %vm6621 = vweird.f32 %v6572
        %vm6622 = vweird.f32 %v6616
        %vm6623 = vmor %vm6621, %vm6622
        %v6624 = vsel %vm6623, %v6616, %v6620
        %v6625 = vand.u32 2147483647, %v6572
        %vm6626 = vcmp.eq.f32.partialorder %v6625, 8.507059e+37
        %v6627 = vand.u32 %v6572, 2147483648
        %v6628 = vor.u32 1.1754944e-38, %v6627
        %v6629 = vsel %vm6626, %v6628, %v6624
        %v6630 = vmul.f32 1.0, %v6629
        %v6631 = vrcp.pop %v6573
        %v6632 = vmul.f32 %v6573, %v6631
        %v6633 = vsub.f32 1.0, %v6632
        %v6634 = vmul.f32 %v6631, %v6633
        %v6635 = vadd.f32 %v6631, %v6634
        %vm6636 = vweird.f32 %v6573
        %vm6637 = vweird.f32 %v6631
        %vm6638 = vmor %vm6636, %vm6637
        %v6639 = vsel %vm6638, %v6631, %v6635
        %v6640 = vand.u32 2147483647, %v6573
        %vm6641 = vcmp.eq.f32.partialorder %v6640, 8.507059e+37
        %v6642 = vand.u32 %v6573, 2147483648
        %v6643 = vor.u32 1.1754944e-38, %v6642
        %v6644 = vsel %vm6641, %v6643, %v6639
        %v6645 = vmul.f32 1.0, %v6644
        %v6646 = vrcp.pop %v6574
        %v6647 = vmul.f32 %v6574, %v6646
        %v6648 = vsub.f32 1.0, %v6647
        %v6649 = vmul.f32 %v6646, %v6648
        %v6650 = vadd.f32 %v6646, %v6649
        %vm6651 = vweird.f32 %v6574
        %vm6652 = vweird.f32 %v6646
        %vm6653 = vmor %vm6651, %vm6652
        %v6654 = vsel %vm6653, %v6646, %v6650
        %v6655 = vand.u32 2147483647, %v6574
        %vm6656 = vcmp.eq.f32.partialorder %v6655, 8.507059e+37
        %v6657 = vand.u32 %v6574, 2147483648
        %v6658 = vor.u32 1.1754944e-38, %v6657
        %v6659 = vsel %vm6656, %v6658, %v6654
        %v6660 = vmul.f32 1.0, %v6659
        %v6661 = vrcp.pop %v6575
        %v6662 = vmul.f32 %v6575, %v6661
        %v6663 = vsub.f32 1.0, %v6662
        %v6664 = vmul.f32 %v6661, %v6663
        %v6665 = vadd.f32 %v6661, %v6664
        %vm6666 = vweird.f32 %v6575
        %vm6667 = vweird.f32 %v6661
        %vm6668 = vmor %vm6666, %vm6667
        %v6669 = vsel %vm6668, %v6661, %v6665
        %v6670 = vand.u32 2147483647, %v6575
        %vm6671 = vcmp.eq.f32.partialorder %v6670, 8.507059e+37
        %v6672 = vand.u32 %v6575, 2147483648
        %v6673 = vor.u32 1.1754944e-38, %v6672
        %v6674 = vsel %vm6671, %v6673, %v6669
        %v6675 = vmul.f32 1.0, %v6674
        %v6676 = vrcp.pop %v6576
        %v6677 = vmul.f32 %v6576, %v6676
        %v6678 = vsub.f32 1.0, %v6677
        %v6679 = vmul.f32 %v6676, %v6678
        %v6680 = vadd.f32 %v6676, %v6679
        %vm6681 = vweird.f32 %v6576
        %vm6682 = vweird.f32 %v6676
        %vm6683 = vmor %vm6681, %vm6682
        %v6684 = vsel %vm6683, %v6676, %v6680
        %v6685 = vand.u32 2147483647, %v6576
        %vm6686 = vcmp.eq.f32.partialorder %v6685, 8.507059e+37
        %v6687 = vand.u32 %v6576, 2147483648
        %v6688 = vor.u32 1.1754944e-38, %v6687
        %v6689 = vsel %vm6686, %v6688, %v6684
        %v6690 = vmul.f32 1.0, %v6689
        %v6691 = vrcp.pop %v6577
        %v6692 = vmul.f32 %v6577, %v6691
        %v6693 = vsub.f32 1.0, %v6692
        %v6694 = vmul.f32 %v6691, %v6693
        %v6695 = vadd.f32 %v6691, %v6694
        %vm6696 = vweird.f32 %v6577
        %vm6697 = vweird.f32 %v6691
        %vm6698 = vmor %vm6696, %vm6697
        %v6699 = vsel %vm6698, %v6691, %v6695
        %v6700 = vand.u32 2147483647, %v6577
        %vm6701 = vcmp.eq.f32.partialorder %v6700, 8.507059e+37
        %v6702 = vand.u32 %v6577, 2147483648
        %v6703 = vor.u32 1.1754944e-38, %v6702
        %v6704 = vsel %vm6701, %v6703, %v6699
        %v6705 = vmul.f32 1.0, %v6704
        %v6706 = vrcp.pop %v6578
        %v6707 = vmul.f32 %v6578, %v6706
        %v6708 = vsub.f32 1.0, %v6707
        %v6709 = vmul.f32 %v6706, %v6708
        %v6710 = vadd.f32 %v6706, %v6709
        %vm6711 = vweird.f32 %v6578
        %vm6712 = vweird.f32 %v6706
        %vm6713 = vmor %vm6711, %vm6712
        %v6714 = vsel %vm6713, %v6706, %v6710
        %v6715 = vand.u32 2147483647, %v6578
        %vm6716 = vcmp.eq.f32.partialorder %v6715, 8.507059e+37
        %v6717 = vand.u32 %v6578, 2147483648
        %v6718 = vor.u32 1.1754944e-38, %v6717
        %v6719 = vsel %vm6716, %v6718, %v6714
        %v6720 = vmul.f32 1.0, %v6719
        %v6721 = vrcp.pop %v6579
        %v6722 = vmul.f32 %v6579, %v6721
        %v6723 = vsub.f32 1.0, %v6722
        %v6724 = vmul.f32 %v6721, %v6723
        %v6725 = vadd.f32 %v6721, %v6724
        %vm6726 = vweird.f32 %v6579
        %vm6727 = vweird.f32 %v6721
        %vm6728 = vmor %vm6726, %vm6727
        %v6729 = vsel %vm6728, %v6721, %v6725
        %v6730 = vand.u32 2147483647, %v6579
        %vm6731 = vcmp.eq.f32.partialorder %v6730, 8.507059e+37
        %v6732 = vand.u32 %v6579, 2147483648
        %v6733 = vor.u32 1.1754944e-38, %v6732
        %v6734 = vsel %vm6731, %v6733, %v6729
        %v6735 = vmul.f32 1.0, %v6734
        %v6736 = vrcp.pop %v6580
        %v6737 = vmul.f32 %v6580, %v6736
        %v6738 = vsub.f32 1.0, %v6737
        %v6739 = vmul.f32 %v6736, %v6738
        %v6740 = vadd.f32 %v6736, %v6739
        %vm6741 = vweird.f32 %v6580
        %vm6742 = vweird.f32 %v6736
        %vm6743 = vmor %vm6741, %vm6742
        %v6744 = vsel %vm6743, %v6736, %v6740
        %v6745 = vand.u32 2147483647, %v6580
        %vm6746 = vcmp.eq.f32.partialorder %v6745, 8.507059e+37
        %v6747 = vand.u32 %v6580, 2147483648
        %v6748 = vor.u32 1.1754944e-38, %v6747
        %v6749 = vsel %vm6746, %v6748, %v6744
        %v6750 = vmul.f32 1.0, %v6749
        %v6751 = vrcp.pop %v6581
        %v6752 = vmul.f32 %v6581, %v6751
        %v6753 = vsub.f32 1.0, %v6752
        %v6754 = vmul.f32 %v6751, %v6753
        %v6755 = vadd.f32 %v6751, %v6754
        %vm6756 = vweird.f32 %v6581
        %vm6757 = vweird.f32 %v6751
        %vm6758 = vmor %vm6756, %vm6757
        %v6759 = vsel %vm6758, %v6751, %v6755
        %v6760 = vand.u32 2147483647, %v6581
        %vm6761 = vcmp.eq.f32.partialorder %v6760, 8.507059e+37
        %v6762 = vand.u32 %v6581, 2147483648
        %v6763 = vor.u32 1.1754944e-38, %v6762
        %v6764 = vsel %vm6761, %v6763, %v6759
        %v6765 = vmul.f32 1.0, %v6764
        %v6766 = vrcp.pop %v6582
        %v6767 = vmul.f32 %v6582, %v6766
        %v6768 = vsub.f32 1.0, %v6767
        %v6769 = vmul.f32 %v6766, %v6768
        %v6770 = vadd.f32 %v6766, %v6769
        %vm6771 = vweird.f32 %v6582
        %vm6772 = vweird.f32 %v6766
        %vm6773 = vmor %vm6771, %vm6772
        %v6774 = vsel %vm6773, %v6766, %v6770
        %v6775 = vand.u32 2147483647, %v6582
        %vm6776 = vcmp.eq.f32.partialorder %v6775, 8.507059e+37
        %v6777 = vand.u32 %v6582, 2147483648
        %v6778 = vor.u32 1.1754944e-38, %v6777
        %v6779 = vsel %vm6776, %v6778, %v6774
        %v6780 = vmul.f32 1.0, %v6779
        %v6781 = vrcp.pop %v6583
        %v6782 = vmul.f32 %v6583, %v6781
        %v6783 = vsub.f32 1.0, %v6782
        %v6784 = vmul.f32 %v6781, %v6783
        %v6785 = vadd.f32 %v6781, %v6784
        %vm6786 = vweird.f32 %v6583
        %vm6787 = vweird.f32 %v6781
        %vm6788 = vmor %vm6786, %vm6787
        %v6789 = vsel %vm6788, %v6781, %v6785
        %v6790 = vand.u32 2147483647, %v6583
        %vm6791 = vcmp.eq.f32.partialorder %v6790, 8.507059e+37
        %v6792 = vand.u32 %v6583, 2147483648
        %v6793 = vor.u32 1.1754944e-38, %v6792
        %v6794 = vsel %vm6791, %v6793, %v6789
        %v6795 = vmul.f32 1.0, %v6794
        %v6796 = vrcp.pop %v6584
        %v6797 = vmul.f32 %v6584, %v6796
        %v6798 = vsub.f32 1.0, %v6797
        %v6799 = vmul.f32 %v6796, %v6798
        %v6800 = vadd.f32 %v6796, %v6799
        %vm6801 = vweird.f32 %v6584
        %vm6802 = vweird.f32 %v6796
        %vm6803 = vmor %vm6801, %vm6802
        %v6804 = vsel %vm6803, %v6796, %v6800
        %v6805 = vand.u32 2147483647, %v6584
        %vm6806 = vcmp.eq.f32.partialorder %v6805, 8.507059e+37
        %v6807 = vand.u32 %v6584, 2147483648
        %v6808 = vor.u32 1.1754944e-38, %v6807
        %v6809 = vsel %vm6806, %v6808, %v6804
        %v6810 = vmul.f32 1.0, %v6809
        %v6811 = vrcp.pop %v6585
        %v6812 = vmul.f32 %v6585, %v6811
        %v6813 = vsub.f32 1.0, %v6812
        %v6814 = vmul.f32 %v6811, %v6813
        %v6815 = vadd.f32 %v6811, %v6814
        %vm6816 = vweird.f32 %v6585
        %vm6817 = vweird.f32 %v6811
        %vm6818 = vmor %vm6816, %vm6817
        %v6819 = vsel %vm6818, %v6811, %v6815
        %v6820 = vand.u32 2147483647, %v6585
        %vm6821 = vcmp.eq.f32.partialorder %v6820, 8.507059e+37
        %v6822 = vand.u32 %v6585, 2147483648
        %v6823 = vor.u32 1.1754944e-38, %v6822
        %v6824 = vsel %vm6821, %v6823, %v6819
        %v6825 = vmul.f32 1.0, %v6824
        %v6826 = vmul.f32 %v3049, %v6600
        %v6827 = vmul.f32 %v3054, %v6615
        %v6828 = vmul.f32 %v3059, %v6630
        %v6829 = vmul.f32 %v3064, %v6645
        %v6830 = vmul.f32 %v3069, %v6660
        %v6831 = vmul.f32 %v3074, %v6675
        %v6832 = vmul.f32 %v3079, %v6690
        %v6833 = vmul.f32 %v3084, %v6705
        %v6834 = vmul.f32 %v3089, %v6720
        %v6835 = vmul.f32 %v3094, %v6735
        %v6836 = vmul.f32 %v3099, %v6750
        %v6837 = vmul.f32 %v3104, %v6765
        %v6838 = vmul.f32 %v3109, %v6780
        %v6839 = vmul.f32 %v3114, %v6795
        %v6840 = vmul.f32 %v3119, %v6810
        %v6841 = vmul.f32 %v3124, %v6825
        %v6842 = vadd.f32 %v3145, %v6826
        %v6843 = vadd.f32 %v3150, %v6827
        %v6844 = vadd.f32 %v3155, %v6828
        %v6845 = vadd.f32 %v3160, %v6829
        %v6846 = vadd.f32 %v3165, %v6830
        %v6847 = vadd.f32 %v3170, %v6831
        %v6848 = vadd.f32 %v3175, %v6832
        %v6849 = vadd.f32 %v3180, %v6833
        %v6850 = vadd.f32 %v3185, %v6834
        %v6851 = vadd.f32 %v3190, %v6835
        %v6852 = vadd.f32 %v3195, %v6836
        %v6853 = vadd.f32 %v3200, %v6837
        %v6854 = vadd.f32 %v3205, %v6838
        %v6855 = vadd.f32 %v3210, %v6839
        %v6856 = vadd.f32 %v3215, %v6840
        %v6857 = vadd.f32 %v3220, %v6841
        %6859 = vset.pattern.permute.xlu0 0
        %6860 = vperm.xlu0 %6859, %v5171
        %v6861 = vpop.permute.xlu0 %6860
        %6864 = vset.pattern.permute.xlu0 0
        %6865 = vperm.xlu0 %6864, %v5172
        %v6866 = vpop.permute.xlu0 %6865
        %6869 = vset.pattern.permute.xlu0 0
        %6870 = vperm.xlu0 %6869, %v5173
        %v6871 = vpop.permute.xlu0 %6870
        %6874 = vset.pattern.permute.xlu0 0
        %6875 = vperm.xlu0 %6874, %v5174
        %v6876 = vpop.permute.xlu0 %6875
        %6879 = vset.pattern.permute.xlu0 0
        %6880 = vperm.xlu0 %6879, %v5175
        %v6881 = vpop.permute.xlu0 %6880
        %6884 = vset.pattern.permute.xlu0 0
        %6885 = vperm.xlu0 %6884, %v5176
        %v6886 = vpop.permute.xlu0 %6885
        %6889 = vset.pattern.permute.xlu0 0
        %6890 = vperm.xlu0 %6889, %v5177
        %v6891 = vpop.permute.xlu0 %6890
        %6894 = vset.pattern.permute.xlu0 0
        %6895 = vperm.xlu0 %6894, %v5178
        %v6896 = vpop.permute.xlu0 %6895
        %6899 = vset.pattern.permute.xlu0 0
        %6900 = vperm.xlu0 %6899, %v5179
        %v6901 = vpop.permute.xlu0 %6900
        %6904 = vset.pattern.permute.xlu0 0
        %6905 = vperm.xlu0 %6904, %v5180
        %v6906 = vpop.permute.xlu0 %6905
        %6909 = vset.pattern.permute.xlu0 0
        %6910 = vperm.xlu0 %6909, %v5181
        %v6911 = vpop.permute.xlu0 %6910
        %6914 = vset.pattern.permute.xlu0 0
        %6915 = vperm.xlu0 %6914, %v5182
        %v6916 = vpop.permute.xlu0 %6915
        %6919 = vset.pattern.permute.xlu0 0
        %6920 = vperm.xlu0 %6919, %v5183
        %v6921 = vpop.permute.xlu0 %6920
        %6924 = vset.pattern.permute.xlu0 0
        %6925 = vperm.xlu0 %6924, %v5184
        %v6926 = vpop.permute.xlu0 %6925
        %6929 = vset.pattern.permute.xlu0 0
        %6930 = vperm.xlu0 %6929, %v5185
        %v6931 = vpop.permute.xlu0 %6930
        %6934 = vset.pattern.permute.xlu0 0
        %6935 = vperm.xlu0 %6934, %v5186
        %v6936 = vpop.permute.xlu0 %6935
        %v6938 = vmul.f32 %v6842, %v6861
        %v6939 = vmul.f32 %v6843, %v6866
        %v6940 = vmul.f32 %v6844, %v6871
        %v6941 = vmul.f32 %v6845, %v6876
        %v6942 = vmul.f32 %v6846, %v6881
        %v6943 = vmul.f32 %v6847, %v6886
        %v6944 = vmul.f32 %v6848, %v6891
        %v6945 = vmul.f32 %v6849, %v6896
        %v6946 = vmul.f32 %v6850, %v6901
        %v6947 = vmul.f32 %v6851, %v6906
        %v6948 = vmul.f32 %v6852, %v6911
        %v6949 = vmul.f32 %v6853, %v6916
        %v6950 = vmul.f32 %v6854, %v6921
        %v6951 = vmul.f32 %v6855, %v6926
        %v6952 = vmul.f32 %v6856, %v6931
        %v6953 = vmul.f32 %v6857, %v6936
        %6970 = vrot.lane.b32.xlu0 %v6122, 106
        %v6971 = vpop.permute.xlu0 %6970
        %6972 = vrot.lane.b32.xlu0 %v6123, 106
        %v6973 = vpop.permute.xlu0 %6972
        %6974 = vrot.lane.b32.xlu0 %v6124, 106
        %v6975 = vpop.permute.xlu0 %6974
        %6976 = vrot.lane.b32.xlu0 %v6125, 106
        %v6977 = vpop.permute.xlu0 %6976
        %6978 = vrot.lane.b32.xlu0 %v6126, 106
        %v6979 = vpop.permute.xlu0 %6978
        %6980 = vrot.lane.b32.xlu0 %v6127, 106
        %v6981 = vpop.permute.xlu0 %6980
        %6982 = vrot.lane.b32.xlu0 %v6128, 106
        %v6983 = vpop.permute.xlu0 %6982
        %6984 = vrot.lane.b32.xlu0 %v6129, 106
        %v6985 = vpop.permute.xlu0 %6984
        %6986 = vrot.lane.b32.xlu0 %v6130, 106
        %v6987 = vpop.permute.xlu0 %6986
        %6988 = vrot.lane.b32.xlu0 %v6131, 106
        %v6989 = vpop.permute.xlu0 %6988
        %6990 = vrot.lane.b32.xlu0 %v6132, 106
        %v6991 = vpop.permute.xlu0 %6990
        %6992 = vrot.lane.b32.xlu0 %v6133, 106
        %v6993 = vpop.permute.xlu0 %6992
        %6994 = vrot.lane.b32.xlu0 %v6134, 106
        %v6995 = vpop.permute.xlu0 %6994
        %6996 = vrot.lane.b32.xlu0 %v6135, 106
        %v6997 = vpop.permute.xlu0 %6996
        %6998 = vrot.lane.b32.xlu0 %v6136, 106
        %v6999 = vpop.permute.xlu0 %6998
        %7000 = vrot.lane.b32.xlu0 %v6137, 106
        %v7001 = vpop.permute.xlu0 %7000
        %v7018 = vsel %vm2197, %v6971, 0.0
        %7019 = vadd.xlane.f32.xlu0 %v7018
        %v7020 = vpop.xlane.xlu0 %7019
        %v7021 = vsel %vm2197, %v6973, 0.0
        %7022 = vadd.xlane.f32.xlu0 %v7021
        %v7023 = vpop.xlane.xlu0 %7022
        %v7024 = vsel %vm2197, %v6975, 0.0
        %7025 = vadd.xlane.f32.xlu0 %v7024
        %v7026 = vpop.xlane.xlu0 %7025
        %v7027 = vsel %vm2197, %v6977, 0.0
        %7028 = vadd.xlane.f32.xlu0 %v7027
        %v7029 = vpop.xlane.xlu0 %7028
        %v7030 = vsel %vm2197, %v6979, 0.0
        %7031 = vadd.xlane.f32.xlu0 %v7030
        %v7032 = vpop.xlane.xlu0 %7031
        %v7033 = vsel %vm2197, %v6981, 0.0
        %7034 = vadd.xlane.f32.xlu0 %v7033
        %v7035 = vpop.xlane.xlu0 %7034
        %v7036 = vsel %vm2197, %v6983, 0.0
        %7037 = vadd.xlane.f32.xlu0 %v7036
        %v7038 = vpop.xlane.xlu0 %7037
        %v7039 = vsel %vm2197, %v6985, 0.0
        %7040 = vadd.xlane.f32.xlu0 %v7039
        %v7041 = vpop.xlane.xlu0 %7040
        %v7042 = vsel %vm2197, %v6987, 0.0
        %7043 = vadd.xlane.f32.xlu0 %v7042
        %v7044 = vpop.xlane.xlu0 %7043
        %v7045 = vsel %vm2197, %v6989, 0.0
        %7046 = vadd.xlane.f32.xlu0 %v7045
        %v7047 = vpop.xlane.xlu0 %7046
        %v7048 = vsel %vm2197, %v6991, 0.0
        %7049 = vadd.xlane.f32.xlu0 %v7048
        %v7050 = vpop.xlane.xlu0 %7049
        %v7051 = vsel %vm2197, %v6993, 0.0
        %7052 = vadd.xlane.f32.xlu0 %v7051
        %v7053 = vpop.xlane.xlu0 %7052
        %v7054 = vsel %vm2197, %v6995, 0.0
        %7055 = vadd.xlane.f32.xlu0 %v7054
        %v7056 = vpop.xlane.xlu0 %7055
        %v7057 = vsel %vm2197, %v6997, 0.0
        %7058 = vadd.xlane.f32.xlu0 %v7057
        %v7059 = vpop.xlane.xlu0 %7058
        %v7060 = vsel %vm2197, %v6999, 0.0
        %7061 = vadd.xlane.f32.xlu0 %v7060
        %v7062 = vpop.xlane.xlu0 %7061
        %v7063 = vsel %vm2197, %v7001, 0.0
        %7064 = vadd.xlane.f32.xlu0 %v7063
        %v7065 = vpop.xlane.xlu0 %7064
        %v7066 = vmul.f32 %v7020, 0.0625
        %v7067 = vmul.f32 %v7023, 0.0625
        %v7068 = vmul.f32 %v7026, 0.0625
        %v7069 = vmul.f32 %v7029, 0.0625
        %v7070 = vmul.f32 %v7032, 0.0625
        %v7071 = vmul.f32 %v7035, 0.0625
        %v7072 = vmul.f32 %v7038, 0.0625
        %v7073 = vmul.f32 %v7041, 0.0625
        %v7074 = vmul.f32 %v7044, 0.0625
        %v7075 = vmul.f32 %v7047, 0.0625
        %v7076 = vmul.f32 %v7050, 0.0625
        %v7077 = vmul.f32 %v7053, 0.0625
        %v7078 = vmul.f32 %v7056, 0.0625
        %v7079 = vmul.f32 %v7059, 0.0625
        %v7080 = vmul.f32 %v7062, 0.0625
        %v7081 = vmul.f32 %v7065, 0.0625
        %v7082 = vsub.f32 %v6122, %v7066
        %v7083 = vsub.f32 %v6123, %v7067
        %v7084 = vsub.f32 %v6124, %v7068
        %v7085 = vsub.f32 %v6125, %v7069
        %v7086 = vsub.f32 %v6126, %v7070
        %v7087 = vsub.f32 %v6127, %v7071
        %v7088 = vsub.f32 %v6128, %v7072
        %v7089 = vsub.f32 %v6129, %v7073
        %v7090 = vsub.f32 %v6130, %v7074
        %v7091 = vsub.f32 %v6131, %v7075
        %v7092 = vsub.f32 %v6132, %v7076
        %v7093 = vsub.f32 %v6133, %v7077
        %v7094 = vsub.f32 %v6134, %v7078
        %v7095 = vsub.f32 %v6135, %v7079
        %v7096 = vsub.f32 %v6136, %v7080
        %v7097 = vsub.f32 %v6137, %v7081
        %v7098 = vmul.f32 %v7082, %v7082
        %v7099 = vmul.f32 %v7083, %v7083
        %v7100 = vmul.f32 %v7084, %v7084
        %v7101 = vmul.f32 %v7085, %v7085
        %v7102 = vmul.f32 %v7086, %v7086
        %v7103 = vmul.f32 %v7087, %v7087
        %v7104 = vmul.f32 %v7088, %v7088
        %v7105 = vmul.f32 %v7089, %v7089
        %v7106 = vmul.f32 %v7090, %v7090
        %v7107 = vmul.f32 %v7091, %v7091
        %v7108 = vmul.f32 %v7092, %v7092
        %v7109 = vmul.f32 %v7093, %v7093
        %v7110 = vmul.f32 %v7094, %v7094
        %v7111 = vmul.f32 %v7095, %v7095
        %v7112 = vmul.f32 %v7096, %v7096
        %v7113 = vmul.f32 %v7097, %v7097
        %7130 = vrot.lane.b32.xlu0 %v7098, 106
        %v7131 = vpop.permute.xlu0 %7130
        %7132 = vrot.lane.b32.xlu0 %v7099, 106
        %v7133 = vpop.permute.xlu0 %7132
        %7134 = vrot.lane.b32.xlu0 %v7100, 106
        %v7135 = vpop.permute.xlu0 %7134
        %7136 = vrot.lane.b32.xlu0 %v7101, 106
        %v7137 = vpop.permute.xlu0 %7136
        %7138 = vrot.lane.b32.xlu0 %v7102, 106
        %v7139 = vpop.permute.xlu0 %7138
        %7140 = vrot.lane.b32.xlu0 %v7103, 106
        %v7141 = vpop.permute.xlu0 %7140
        %7142 = vrot.lane.b32.xlu0 %v7104, 106
        %v7143 = vpop.permute.xlu0 %7142
        %7144 = vrot.lane.b32.xlu0 %v7105, 106
        %v7145 = vpop.permute.xlu0 %7144
        %7146 = vrot.lane.b32.xlu0 %v7106, 106
        %v7147 = vpop.permute.xlu0 %7146
        %7148 = vrot.lane.b32.xlu0 %v7107, 106
        %v7149 = vpop.permute.xlu0 %7148
        %7150 = vrot.lane.b32.xlu0 %v7108, 106
        %v7151 = vpop.permute.xlu0 %7150
        %7152 = vrot.lane.b32.xlu0 %v7109, 106
        %v7153 = vpop.permute.xlu0 %7152
        %7154 = vrot.lane.b32.xlu0 %v7110, 106
        %v7155 = vpop.permute.xlu0 %7154
        %7156 = vrot.lane.b32.xlu0 %v7111, 106
        %v7157 = vpop.permute.xlu0 %7156
        %7158 = vrot.lane.b32.xlu0 %v7112, 106
        %v7159 = vpop.permute.xlu0 %7158
        %7160 = vrot.lane.b32.xlu0 %v7113, 106
        %v7161 = vpop.permute.xlu0 %7160
        %v7178 = vsel %vm2197, %v7131, 0.0
        %7179 = vadd.xlane.f32.xlu0 %v7178
        %v7180 = vpop.xlane.xlu0 %7179
        %v7181 = vsel %vm2197, %v7133, 0.0
        %7182 = vadd.xlane.f32.xlu0 %v7181
        %v7183 = vpop.xlane.xlu0 %7182
        %v7184 = vsel %vm2197, %v7135, 0.0
        %7185 = vadd.xlane.f32.xlu0 %v7184
        %v7186 = vpop.xlane.xlu0 %7185
        %v7187 = vsel %vm2197, %v7137, 0.0
        %7188 = vadd.xlane.f32.xlu0 %v7187
        %v7189 = vpop.xlane.xlu0 %7188
        %v7190 = vsel %vm2197, %v7139, 0.0
        %7191 = vadd.xlane.f32.xlu0 %v7190
        %v7192 = vpop.xlane.xlu0 %7191
        %v7193 = vsel %vm2197, %v7141, 0.0
        %7194 = vadd.xlane.f32.xlu0 %v7193
        %v7195 = vpop.xlane.xlu0 %7194
        %v7196 = vsel %vm2197, %v7143, 0.0
        %7197 = vadd.xlane.f32.xlu0 %v7196
        %v7198 = vpop.xlane.xlu0 %7197
        %v7199 = vsel %vm2197, %v7145, 0.0
        %7200 = vadd.xlane.f32.xlu0 %v7199
        %v7201 = vpop.xlane.xlu0 %7200
        %v7202 = vsel %vm2197, %v7147, 0.0
        %7203 = vadd.xlane.f32.xlu0 %v7202
        %v7204 = vpop.xlane.xlu0 %7203
        %v7205 = vsel %vm2197, %v7149, 0.0
        %7206 = vadd.xlane.f32.xlu0 %v7205
        %v7207 = vpop.xlane.xlu0 %7206
        %v7208 = vsel %vm2197, %v7151, 0.0
        %7209 = vadd.xlane.f32.xlu0 %v7208
        %v7210 = vpop.xlane.xlu0 %7209
        %v7211 = vsel %vm2197, %v7153, 0.0
        %7212 = vadd.xlane.f32.xlu0 %v7211
        %v7213 = vpop.xlane.xlu0 %7212
        %v7214 = vsel %vm2197, %v7155, 0.0
        %7215 = vadd.xlane.f32.xlu0 %v7214
        %v7216 = vpop.xlane.xlu0 %7215
        %v7217 = vsel %vm2197, %v7157, 0.0
        %7218 = vadd.xlane.f32.xlu0 %v7217
        %v7219 = vpop.xlane.xlu0 %7218
        %v7220 = vsel %vm2197, %v7159, 0.0
        %7221 = vadd.xlane.f32.xlu0 %v7220
        %v7222 = vpop.xlane.xlu0 %7221
        %v7223 = vsel %vm2197, %v7161, 0.0
        %7224 = vadd.xlane.f32.xlu0 %v7223
        %v7225 = vpop.xlane.xlu0 %7224
        %v7226 = vmul.f32 %v7180, 0.0625
        %v7227 = vmul.f32 %v7183, 0.0625
        %v7228 = vmul.f32 %v7186, 0.0625
        %v7229 = vmul.f32 %v7189, 0.0625
        %v7230 = vmul.f32 %v7192, 0.0625
        %v7231 = vmul.f32 %v7195, 0.0625
        %v7232 = vmul.f32 %v7198, 0.0625
        %v7233 = vmul.f32 %v7201, 0.0625
        %v7234 = vmul.f32 %v7204, 0.0625
        %v7235 = vmul.f32 %v7207, 0.0625
        %v7236 = vmul.f32 %v7210, 0.0625
        %v7237 = vmul.f32 %v7213, 0.0625
        %v7238 = vmul.f32 %v7216, 0.0625
        %v7239 = vmul.f32 %v7219, 0.0625
        %v7240 = vmul.f32 %v7222, 0.0625
        %v7241 = vmul.f32 %v7225, 0.0625
        %v7242 = vadd.f32 %v7226, 1e-05
        %v7243 = vadd.f32 %v7227, 1e-05
        %v7244 = vadd.f32 %v7228, 1e-05
        %v7245 = vadd.f32 %v7229, 1e-05
        %v7246 = vadd.f32 %v7230, 1e-05
        %v7247 = vadd.f32 %v7231, 1e-05
        %v7248 = vadd.f32 %v7232, 1e-05
        %v7249 = vadd.f32 %v7233, 1e-05
        %v7250 = vadd.f32 %v7234, 1e-05
        %v7251 = vadd.f32 %v7235, 1e-05
        %v7252 = vadd.f32 %v7236, 1e-05
        %v7253 = vadd.f32 %v7237, 1e-05
        %v7254 = vadd.f32 %v7238, 1e-05
        %v7255 = vadd.f32 %v7239, 1e-05
        %v7256 = vadd.f32 %v7240, 1e-05
        %v7257 = vadd.f32 %v7241, 1e-05
        %v7258 = vrsqrt.pop %v7242
        %v7259 = vmul.f32 %v7258, %v7242
        %v7260 = vmul.f32 %v7259, %v7258
        %v7261 = vmul.f32 0.5, %v7260
        %v7262 = vsub.f32 1.5, %v7261
        %v7263 = vmul.f32 %v7258, %v7262
        %vm7264 = vweird.f32 %v7242
        %vm7265 = vweird.f32 %v7258
        %vm7266 = vmor %vm7264, %vm7265
        %v7267 = vsel %vm7266, %v7258, %v7263
        %v7268 = vrsqrt.pop %v7243
        %v7269 = vmul.f32 %v7268, %v7243
        %v7270 = vmul.f32 %v7269, %v7268
        %v7271 = vmul.f32 0.5, %v7270
        %v7272 = vsub.f32 1.5, %v7271
        %v7273 = vmul.f32 %v7268, %v7272
        %vm7274 = vweird.f32 %v7243
        %vm7275 = vweird.f32 %v7268
        %vm7276 = vmor %vm7274, %vm7275
        %v7277 = vsel %vm7276, %v7268, %v7273
        %v7278 = vrsqrt.pop %v7244
        %v7279 = vmul.f32 %v7278, %v7244
        %v7280 = vmul.f32 %v7279, %v7278
        %v7281 = vmul.f32 0.5, %v7280
        %v7282 = vsub.f32 1.5, %v7281
        %v7283 = vmul.f32 %v7278, %v7282
        %vm7284 = vweird.f32 %v7244
        %vm7285 = vweird.f32 %v7278
        %vm7286 = vmor %vm7284, %vm7285
        %v7287 = vsel %vm7286, %v7278, %v7283
        %v7288 = vrsqrt.pop %v7245
        %v7289 = vmul.f32 %v7288, %v7245
        %v7290 = vmul.f32 %v7289, %v7288
        %v7291 = vmul.f32 0.5, %v7290
        %v7292 = vsub.f32 1.5, %v7291
        %v7293 = vmul.f32 %v7288, %v7292
        %vm7294 = vweird.f32 %v7245
        %vm7295 = vweird.f32 %v7288
        %vm7296 = vmor %vm7294, %vm7295
        %v7297 = vsel %vm7296, %v7288, %v7293
        %v7298 = vrsqrt.pop %v7246
        %v7299 = vmul.f32 %v7298, %v7246
        %v7300 = vmul.f32 %v7299, %v7298
        %v7301 = vmul.f32 0.5, %v7300
        %v7302 = vsub.f32 1.5, %v7301
        %v7303 = vmul.f32 %v7298, %v7302
        %vm7304 = vweird.f32 %v7246
        %vm7305 = vweird.f32 %v7298
        %vm7306 = vmor %vm7304, %vm7305
        %v7307 = vsel %vm7306, %v7298, %v7303
        %v7308 = vrsqrt.pop %v7247
        %v7309 = vmul.f32 %v7308, %v7247
        %v7310 = vmul.f32 %v7309, %v7308
        %v7311 = vmul.f32 0.5, %v7310
        %v7312 = vsub.f32 1.5, %v7311
        %v7313 = vmul.f32 %v7308, %v7312
        %vm7314 = vweird.f32 %v7247
        %vm7315 = vweird.f32 %v7308
        %vm7316 = vmor %vm7314, %vm7315
        %v7317 = vsel %vm7316, %v7308, %v7313
        %v7318 = vrsqrt.pop %v7248
        %v7319 = vmul.f32 %v7318, %v7248
        %v7320 = vmul.f32 %v7319, %v7318
        %v7321 = vmul.f32 0.5, %v7320
        %v7322 = vsub.f32 1.5, %v7321
        %v7323 = vmul.f32 %v7318, %v7322
        %vm7324 = vweird.f32 %v7248
        %vm7325 = vweird.f32 %v7318
        %vm7326 = vmor %vm7324, %vm7325
        %v7327 = vsel %vm7326, %v7318, %v7323
        %v7328 = vrsqrt.pop %v7249
        %v7329 = vmul.f32 %v7328, %v7249
        %v7330 = vmul.f32 %v7329, %v7328
        %v7331 = vmul.f32 0.5, %v7330
        %v7332 = vsub.f32 1.5, %v7331
        %v7333 = vmul.f32 %v7328, %v7332
        %vm7334 = vweird.f32 %v7249
        %vm7335 = vweird.f32 %v7328
        %vm7336 = vmor %vm7334, %vm7335
        %v7337 = vsel %vm7336, %v7328, %v7333
        %v7338 = vrsqrt.pop %v7250
        %v7339 = vmul.f32 %v7338, %v7250
        %v7340 = vmul.f32 %v7339, %v7338
        %v7341 = vmul.f32 0.5, %v7340
        %v7342 = vsub.f32 1.5, %v7341
        %v7343 = vmul.f32 %v7338, %v7342
        %vm7344 = vweird.f32 %v7250
        %vm7345 = vweird.f32 %v7338
        %vm7346 = vmor %vm7344, %vm7345
        %v7347 = vsel %vm7346, %v7338, %v7343
        %v7348 = vrsqrt.pop %v7251
        %v7349 = vmul.f32 %v7348, %v7251
        %v7350 = vmul.f32 %v7349, %v7348
        %v7351 = vmul.f32 0.5, %v7350
        %v7352 = vsub.f32 1.5, %v7351
        %v7353 = vmul.f32 %v7348, %v7352
        %vm7354 = vweird.f32 %v7251
        %vm7355 = vweird.f32 %v7348
        %vm7356 = vmor %vm7354, %vm7355
        %v7357 = vsel %vm7356, %v7348, %v7353
        %v7358 = vrsqrt.pop %v7252
        %v7359 = vmul.f32 %v7358, %v7252
        %v7360 = vmul.f32 %v7359, %v7358
        %v7361 = vmul.f32 0.5, %v7360
        %v7362 = vsub.f32 1.5, %v7361
        %v7363 = vmul.f32 %v7358, %v7362
        %vm7364 = vweird.f32 %v7252
        %vm7365 = vweird.f32 %v7358
        %vm7366 = vmor %vm7364, %vm7365
        %v7367 = vsel %vm7366, %v7358, %v7363
        %v7368 = vrsqrt.pop %v7253
        %v7369 = vmul.f32 %v7368, %v7253
        %v7370 = vmul.f32 %v7369, %v7368
        %v7371 = vmul.f32 0.5, %v7370
        %v7372 = vsub.f32 1.5, %v7371
        %v7373 = vmul.f32 %v7368, %v7372
        %vm7374 = vweird.f32 %v7253
        %vm7375 = vweird.f32 %v7368
        %vm7376 = vmor %vm7374, %vm7375
        %v7377 = vsel %vm7376, %v7368, %v7373
        %v7378 = vrsqrt.pop %v7254
        %v7379 = vmul.f32 %v7378, %v7254
        %v7380 = vmul.f32 %v7379, %v7378
        %v7381 = vmul.f32 0.5, %v7380
        %v7382 = vsub.f32 1.5, %v7381
        %v7383 = vmul.f32 %v7378, %v7382
        %vm7384 = vweird.f32 %v7254
        %vm7385 = vweird.f32 %v7378
        %vm7386 = vmor %vm7384, %vm7385
        %v7387 = vsel %vm7386, %v7378, %v7383
        %v7388 = vrsqrt.pop %v7255
        %v7389 = vmul.f32 %v7388, %v7255
        %v7390 = vmul.f32 %v7389, %v7388
        %v7391 = vmul.f32 0.5, %v7390
        %v7392 = vsub.f32 1.5, %v7391
        %v7393 = vmul.f32 %v7388, %v7392
        %vm7394 = vweird.f32 %v7255
        %vm7395 = vweird.f32 %v7388
        %vm7396 = vmor %vm7394, %vm7395
        %v7397 = vsel %vm7396, %v7388, %v7393
        %v7398 = vrsqrt.pop %v7256
        %v7399 = vmul.f32 %v7398, %v7256
        %v7400 = vmul.f32 %v7399, %v7398
        %v7401 = vmul.f32 0.5, %v7400
        %v7402 = vsub.f32 1.5, %v7401
        %v7403 = vmul.f32 %v7398, %v7402
        %vm7404 = vweird.f32 %v7256
        %vm7405 = vweird.f32 %v7398
        %vm7406 = vmor %vm7404, %vm7405
        %v7407 = vsel %vm7406, %v7398, %v7403
        %v7408 = vrsqrt.pop %v7257
        %v7409 = vmul.f32 %v7408, %v7257
        %v7410 = vmul.f32 %v7409, %v7408
        %v7411 = vmul.f32 0.5, %v7410
        %v7412 = vsub.f32 1.5, %v7411
        %v7413 = vmul.f32 %v7408, %v7412
        %vm7414 = vweird.f32 %v7257
        %vm7415 = vweird.f32 %v7408
        %vm7416 = vmor %vm7414, %vm7415
        %v7417 = vsel %vm7416, %v7408, %v7413
        %v7418 = vmul.f32 %v7082, %v7267
        %v7419 = vmul.f32 %v7083, %v7277
        %v7420 = vmul.f32 %v7084, %v7287
        %v7421 = vmul.f32 %v7085, %v7297
        %v7422 = vmul.f32 %v7086, %v7307
        %v7423 = vmul.f32 %v7087, %v7317
        %v7424 = vmul.f32 %v7088, %v7327
        %v7425 = vmul.f32 %v7089, %v7337
        %v7426 = vmul.f32 %v7090, %v7347
        %v7427 = vmul.f32 %v7091, %v7357
        %v7428 = vmul.f32 %v7092, %v7367
        %v7429 = vmul.f32 %v7093, %v7377
        %v7430 = vmul.f32 %v7094, %v7387
        %v7431 = vmul.f32 %v7095, %v7397
        %v7432 = vmul.f32 %v7096, %v7407
        %v7433 = vmul.f32 %v7097, %v7417
        %v7434 = vmul.f32 %v7418, %v2553
        %v7435 = vmul.f32 %v7419, %v2558
        %v7436 = vmul.f32 %v7420, %v2563
        %v7437 = vmul.f32 %v7421, %v2568
        %v7438 = vmul.f32 %v7422, %v2573
        %v7439 = vmul.f32 %v7423, %v2578
        %v7440 = vmul.f32 %v7424, %v2583
        %v7441 = vmul.f32 %v7425, %v2588
        %v7442 = vmul.f32 %v7426, %v2593
        %v7443 = vmul.f32 %v7427, %v2598
        %v7444 = vmul.f32 %v7428, %v2603
        %v7445 = vmul.f32 %v7429, %v2608
        %v7446 = vmul.f32 %v7430, %v2613
        %v7447 = vmul.f32 %v7431, %v2618
        %v7448 = vmul.f32 %v7432, %v2623
        %v7449 = vmul.f32 %v7433, %v2628
        %v7450 = vadd.f32 %v7434, %v2649
        %v7451 = vadd.f32 %v7435, %v2654
        %v7452 = vadd.f32 %v7436, %v2659
        %v7453 = vadd.f32 %v7437, %v2664
        %v7454 = vadd.f32 %v7438, %v2669
        %v7455 = vadd.f32 %v7439, %v2674
        %v7456 = vadd.f32 %v7440, %v2679
        %v7457 = vadd.f32 %v7441, %v2684
        %v7458 = vadd.f32 %v7442, %v2689
        %v7459 = vadd.f32 %v7443, %v2694
        %v7460 = vadd.f32 %v7444, %v2699
        %v7461 = vadd.f32 %v7445, %v2704
        %v7462 = vadd.f32 %v7446, %v2709
        %v7463 = vadd.f32 %v7447, %v2714
        %v7464 = vadd.f32 %v7448, %v2719
        %v7465 = vadd.f32 %v7449, %v2724
        %v7466 = vxor.u32 %v7450, 2147483648
        %v7467 = vxor.u32 %v7451, 2147483648
        %v7468 = vxor.u32 %v7452, 2147483648
        %v7469 = vxor.u32 %v7453, 2147483648
        %v7470 = vxor.u32 %v7454, 2147483648
        %v7471 = vxor.u32 %v7455, 2147483648
        %v7472 = vxor.u32 %v7456, 2147483648
        %v7473 = vxor.u32 %v7457, 2147483648
        %v7474 = vxor.u32 %v7458, 2147483648
        %v7475 = vxor.u32 %v7459, 2147483648
        %v7476 = vxor.u32 %v7460, 2147483648
        %v7477 = vxor.u32 %v7461, 2147483648
        %v7478 = vxor.u32 %v7462, 2147483648
        %v7479 = vxor.u32 %v7463, 2147483648
        %v7480 = vxor.u32 %v7464, 2147483648
        %v7481 = vxor.u32 %v7465, 2147483648
        %v7482 = vmul.f32 %v7466, 1.442695
        %v7483 = vpow.pop %v7482
        %v7484 = vmul.f32 %v7467, 1.442695
        %v7485 = vpow.pop %v7484
        %v7486 = vmul.f32 %v7468, 1.442695
        %v7487 = vpow.pop %v7486
        %v7488 = vmul.f32 %v7469, 1.442695
        %v7489 = vpow.pop %v7488
        %v7490 = vmul.f32 %v7470, 1.442695
        %v7491 = vpow.pop %v7490
        %v7492 = vmul.f32 %v7471, 1.442695
        %v7493 = vpow.pop %v7492
        %v7494 = vmul.f32 %v7472, 1.442695
        %v7495 = vpow.pop %v7494
        %v7496 = vmul.f32 %v7473, 1.442695
        %v7497 = vpow.pop %v7496
        %v7498 = vmul.f32 %v7474, 1.442695
        %v7499 = vpow.pop %v7498
        %v7500 = vmul.f32 %v7475, 1.442695
        %v7501 = vpow.pop %v7500
        %v7502 = vmul.f32 %v7476, 1.442695
        %v7503 = vpow.pop %v7502
        %v7504 = vmul.f32 %v7477, 1.442695
        %v7505 = vpow.pop %v7504
        %v7506 = vmul.f32 %v7478, 1.442695
        %v7507 = vpow.pop %v7506
        %v7508 = vmul.f32 %v7479, 1.442695
        %v7509 = vpow.pop %v7508
        %v7510 = vmul.f32 %v7480, 1.442695
        %v7511 = vpow.pop %v7510
        %v7512 = vmul.f32 %v7481, 1.442695
        %v7513 = vpow.pop %v7512
        %v7514 = vadd.f32 %v7483, 1.0
        %v7515 = vadd.f32 %v7485, 1.0
        %v7516 = vadd.f32 %v7487, 1.0
        %v7517 = vadd.f32 %v7489, 1.0
        %v7518 = vadd.f32 %v7491, 1.0
        %v7519 = vadd.f32 %v7493, 1.0
        %v7520 = vadd.f32 %v7495, 1.0
        %v7521 = vadd.f32 %v7497, 1.0
        %v7522 = vadd.f32 %v7499, 1.0
        %v7523 = vadd.f32 %v7501, 1.0
        %v7524 = vadd.f32 %v7503, 1.0
        %v7525 = vadd.f32 %v7505, 1.0
        %v7526 = vadd.f32 %v7507, 1.0
        %v7527 = vadd.f32 %v7509, 1.0
        %v7528 = vadd.f32 %v7511, 1.0
        %v7529 = vadd.f32 %v7513, 1.0
        %v7530 = vrcp.pop %v7514
        %v7531 = vmul.f32 %v7514, %v7530
        %v7532 = vsub.f32 1.0, %v7531
        %v7533 = vmul.f32 %v7530, %v7532
        %v7534 = vadd.f32 %v7530, %v7533
        %vm7535 = vweird.f32 %v7514
        %vm7536 = vweird.f32 %v7530
        %vm7537 = vmor %vm7535, %vm7536
        %v7538 = vsel %vm7537, %v7530, %v7534
        %v7539 = vand.u32 2147483647, %v7514
        %vm7540 = vcmp.eq.f32.partialorder %v7539, 8.507059e+37
        %v7541 = vand.u32 %v7514, 2147483648
        %v7542 = vor.u32 1.1754944e-38, %v7541
        %v7543 = vsel %vm7540, %v7542, %v7538
        %v7544 = vmul.f32 1.0, %v7543
        %v7545 = vrcp.pop %v7515
        %v7546 = vmul.f32 %v7515, %v7545
        %v7547 = vsub.f32 1.0, %v7546
        %v7548 = vmul.f32 %v7545, %v7547
        %v7549 = vadd.f32 %v7545, %v7548
        %vm7550 = vweird.f32 %v7515
        %vm7551 = vweird.f32 %v7545
        %vm7552 = vmor %vm7550, %vm7551
        %v7553 = vsel %vm7552, %v7545, %v7549
        %v7554 = vand.u32 2147483647, %v7515
        %vm7555 = vcmp.eq.f32.partialorder %v7554, 8.507059e+37
        %v7556 = vand.u32 %v7515, 2147483648
        %v7557 = vor.u32 1.1754944e-38, %v7556
        %v7558 = vsel %vm7555, %v7557, %v7553
        %v7559 = vmul.f32 1.0, %v7558
        %v7560 = vrcp.pop %v7516
        %v7561 = vmul.f32 %v7516, %v7560
        %v7562 = vsub.f32 1.0, %v7561
        %v7563 = vmul.f32 %v7560, %v7562
        %v7564 = vadd.f32 %v7560, %v7563
        %vm7565 = vweird.f32 %v7516
        %vm7566 = vweird.f32 %v7560
        %vm7567 = vmor %vm7565, %vm7566
        %v7568 = vsel %vm7567, %v7560, %v7564
        %v7569 = vand.u32 2147483647, %v7516
        %vm7570 = vcmp.eq.f32.partialorder %v7569, 8.507059e+37
        %v7571 = vand.u32 %v7516, 2147483648
        %v7572 = vor.u32 1.1754944e-38, %v7571
        %v7573 = vsel %vm7570, %v7572, %v7568
        %v7574 = vmul.f32 1.0, %v7573
        %v7575 = vrcp.pop %v7517
        %v7576 = vmul.f32 %v7517, %v7575
        %v7577 = vsub.f32 1.0, %v7576
        %v7578 = vmul.f32 %v7575, %v7577
        %v7579 = vadd.f32 %v7575, %v7578
        %vm7580 = vweird.f32 %v7517
        %vm7581 = vweird.f32 %v7575
        %vm7582 = vmor %vm7580, %vm7581
        %v7583 = vsel %vm7582, %v7575, %v7579
        %v7584 = vand.u32 2147483647, %v7517
        %vm7585 = vcmp.eq.f32.partialorder %v7584, 8.507059e+37
        %v7586 = vand.u32 %v7517, 2147483648
        %v7587 = vor.u32 1.1754944e-38, %v7586
        %v7588 = vsel %vm7585, %v7587, %v7583
        %v7589 = vmul.f32 1.0, %v7588
        %v7590 = vrcp.pop %v7518
        %v7591 = vmul.f32 %v7518, %v7590
        %v7592 = vsub.f32 1.0, %v7591
        %v7593 = vmul.f32 %v7590, %v7592
        %v7594 = vadd.f32 %v7590, %v7593
        %vm7595 = vweird.f32 %v7518
        %vm7596 = vweird.f32 %v7590
        %vm7597 = vmor %vm7595, %vm7596
        %v7598 = vsel %vm7597, %v7590, %v7594
        %v7599 = vand.u32 2147483647, %v7518
        %vm7600 = vcmp.eq.f32.partialorder %v7599, 8.507059e+37
        %v7601 = vand.u32 %v7518, 2147483648
        %v7602 = vor.u32 1.1754944e-38, %v7601
        %v7603 = vsel %vm7600, %v7602, %v7598
        %v7604 = vmul.f32 1.0, %v7603
        %v7605 = vrcp.pop %v7519
        %v7606 = vmul.f32 %v7519, %v7605
        %v7607 = vsub.f32 1.0, %v7606
        %v7608 = vmul.f32 %v7605, %v7607
        %v7609 = vadd.f32 %v7605, %v7608
        %vm7610 = vweird.f32 %v7519
        %vm7611 = vweird.f32 %v7605
        %vm7612 = vmor %vm7610, %vm7611
        %v7613 = vsel %vm7612, %v7605, %v7609
        %v7614 = vand.u32 2147483647, %v7519
        %vm7615 = vcmp.eq.f32.partialorder %v7614, 8.507059e+37
        %v7616 = vand.u32 %v7519, 2147483648
        %v7617 = vor.u32 1.1754944e-38, %v7616
        %v7618 = vsel %vm7615, %v7617, %v7613
        %v7619 = vmul.f32 1.0, %v7618
        %v7620 = vrcp.pop %v7520
        %v7621 = vmul.f32 %v7520, %v7620
        %v7622 = vsub.f32 1.0, %v7621
        %v7623 = vmul.f32 %v7620, %v7622
        %v7624 = vadd.f32 %v7620, %v7623
        %vm7625 = vweird.f32 %v7520
        %vm7626 = vweird.f32 %v7620
        %vm7627 = vmor %vm7625, %vm7626
        %v7628 = vsel %vm7627, %v7620, %v7624
        %v7629 = vand.u32 2147483647, %v7520
        %vm7630 = vcmp.eq.f32.partialorder %v7629, 8.507059e+37
        %v7631 = vand.u32 %v7520, 2147483648
        %v7632 = vor.u32 1.1754944e-38, %v7631
        %v7633 = vsel %vm7630, %v7632, %v7628
        %v7634 = vmul.f32 1.0, %v7633
        %v7635 = vrcp.pop %v7521
        %v7636 = vmul.f32 %v7521, %v7635
        %v7637 = vsub.f32 1.0, %v7636
        %v7638 = vmul.f32 %v7635, %v7637
        %v7639 = vadd.f32 %v7635, %v7638
        %vm7640 = vweird.f32 %v7521
        %vm7641 = vweird.f32 %v7635
        %vm7642 = vmor %vm7640, %vm7641
        %v7643 = vsel %vm7642, %v7635, %v7639
        %v7644 = vand.u32 2147483647, %v7521
        %vm7645 = vcmp.eq.f32.partialorder %v7644, 8.507059e+37
        %v7646 = vand.u32 %v7521, 2147483648
        %v7647 = vor.u32 1.1754944e-38, %v7646
        %v7648 = vsel %vm7645, %v7647, %v7643
        %v7649 = vmul.f32 1.0, %v7648
        %v7650 = vrcp.pop %v7522
        %v7651 = vmul.f32 %v7522, %v7650
        %v7652 = vsub.f32 1.0, %v7651
        %v7653 = vmul.f32 %v7650, %v7652
        %v7654 = vadd.f32 %v7650, %v7653
        %vm7655 = vweird.f32 %v7522
        %vm7656 = vweird.f32 %v7650
        %vm7657 = vmor %vm7655, %vm7656
        %v7658 = vsel %vm7657, %v7650, %v7654
        %v7659 = vand.u32 2147483647, %v7522
        %vm7660 = vcmp.eq.f32.partialorder %v7659, 8.507059e+37
        %v7661 = vand.u32 %v7522, 2147483648
        %v7662 = vor.u32 1.1754944e-38, %v7661
        %v7663 = vsel %vm7660, %v7662, %v7658
        %v7664 = vmul.f32 1.0, %v7663
        %v7665 = vrcp.pop %v7523
        %v7666 = vmul.f32 %v7523, %v7665
        %v7667 = vsub.f32 1.0, %v7666
        %v7668 = vmul.f32 %v7665, %v7667
        %v7669 = vadd.f32 %v7665, %v7668
        %vm7670 = vweird.f32 %v7523
        %vm7671 = vweird.f32 %v7665
        %vm7672 = vmor %vm7670, %vm7671
        %v7673 = vsel %vm7672, %v7665, %v7669
        %v7674 = vand.u32 2147483647, %v7523
        %vm7675 = vcmp.eq.f32.partialorder %v7674, 8.507059e+37
        %v7676 = vand.u32 %v7523, 2147483648
        %v7677 = vor.u32 1.1754944e-38, %v7676
        %v7678 = vsel %vm7675, %v7677, %v7673
        %v7679 = vmul.f32 1.0, %v7678
        %v7680 = vrcp.pop %v7524
        %v7681 = vmul.f32 %v7524, %v7680
        %v7682 = vsub.f32 1.0, %v7681
        %v7683 = vmul.f32 %v7680, %v7682
        %v7684 = vadd.f32 %v7680, %v7683
        %vm7685 = vweird.f32 %v7524
        %vm7686 = vweird.f32 %v7680
        %vm7687 = vmor %vm7685, %vm7686
        %v7688 = vsel %vm7687, %v7680, %v7684
        %v7689 = vand.u32 2147483647, %v7524
        %vm7690 = vcmp.eq.f32.partialorder %v7689, 8.507059e+37
        %v7691 = vand.u32 %v7524, 2147483648
        %v7692 = vor.u32 1.1754944e-38, %v7691
        %v7693 = vsel %vm7690, %v7692, %v7688
        %v7694 = vmul.f32 1.0, %v7693
        %v7695 = vrcp.pop %v7525
        %v7696 = vmul.f32 %v7525, %v7695
        %v7697 = vsub.f32 1.0, %v7696
        %v7698 = vmul.f32 %v7695, %v7697
        %v7699 = vadd.f32 %v7695, %v7698
        %vm7700 = vweird.f32 %v7525
        %vm7701 = vweird.f32 %v7695
        %vm7702 = vmor %vm7700, %vm7701
        %v7703 = vsel %vm7702, %v7695, %v7699
        %v7704 = vand.u32 2147483647, %v7525
        %vm7705 = vcmp.eq.f32.partialorder %v7704, 8.507059e+37
        %v7706 = vand.u32 %v7525, 2147483648
        %v7707 = vor.u32 1.1754944e-38, %v7706
        %v7708 = vsel %vm7705, %v7707, %v7703
        %v7709 = vmul.f32 1.0, %v7708
        %v7710 = vrcp.pop %v7526
        %v7711 = vmul.f32 %v7526, %v7710
        %v7712 = vsub.f32 1.0, %v7711
        %v7713 = vmul.f32 %v7710, %v7712
        %v7714 = vadd.f32 %v7710, %v7713
        %vm7715 = vweird.f32 %v7526
        %vm7716 = vweird.f32 %v7710
        %vm7717 = vmor %vm7715, %vm7716
        %v7718 = vsel %vm7717, %v7710, %v7714
        %v7719 = vand.u32 2147483647, %v7526
        %vm7720 = vcmp.eq.f32.partialorder %v7719, 8.507059e+37
        %v7721 = vand.u32 %v7526, 2147483648
        %v7722 = vor.u32 1.1754944e-38, %v7721
        %v7723 = vsel %vm7720, %v7722, %v7718
        %v7724 = vmul.f32 1.0, %v7723
        %v7725 = vrcp.pop %v7527
        %v7726 = vmul.f32 %v7527, %v7725
        %v7727 = vsub.f32 1.0, %v7726
        %v7728 = vmul.f32 %v7725, %v7727
        %v7729 = vadd.f32 %v7725, %v7728
        %vm7730 = vweird.f32 %v7527
        %vm7731 = vweird.f32 %v7725
        %vm7732 = vmor %vm7730, %vm7731
        %v7733 = vsel %vm7732, %v7725, %v7729
        %v7734 = vand.u32 2147483647, %v7527
        %vm7735 = vcmp.eq.f32.partialorder %v7734, 8.507059e+37
        %v7736 = vand.u32 %v7527, 2147483648
        %v7737 = vor.u32 1.1754944e-38, %v7736
        %v7738 = vsel %vm7735, %v7737, %v7733
        %v7739 = vmul.f32 1.0, %v7738
        %v7740 = vrcp.pop %v7528
        %v7741 = vmul.f32 %v7528, %v7740
        %v7742 = vsub.f32 1.0, %v7741
        %v7743 = vmul.f32 %v7740, %v7742
        %v7744 = vadd.f32 %v7740, %v7743
        %vm7745 = vweird.f32 %v7528
        %vm7746 = vweird.f32 %v7740
        %vm7747 = vmor %vm7745, %vm7746
        %v7748 = vsel %vm7747, %v7740, %v7744
        %v7749 = vand.u32 2147483647, %v7528
        %vm7750 = vcmp.eq.f32.partialorder %v7749, 8.507059e+37
        %v7751 = vand.u32 %v7528, 2147483648
        %v7752 = vor.u32 1.1754944e-38, %v7751
        %v7753 = vsel %vm7750, %v7752, %v7748
        %v7754 = vmul.f32 1.0, %v7753
        %v7755 = vrcp.pop %v7529
        %v7756 = vmul.f32 %v7529, %v7755
        %v7757 = vsub.f32 1.0, %v7756
        %v7758 = vmul.f32 %v7755, %v7757
        %v7759 = vadd.f32 %v7755, %v7758
        %vm7760 = vweird.f32 %v7529
        %vm7761 = vweird.f32 %v7755
        %vm7762 = vmor %vm7760, %vm7761
        %v7763 = vsel %vm7762, %v7755, %v7759
        %v7764 = vand.u32 2147483647, %v7529
        %vm7765 = vcmp.eq.f32.partialorder %v7764, 8.507059e+37
        %v7766 = vand.u32 %v7529, 2147483648
        %v7767 = vor.u32 1.1754944e-38, %v7766
        %v7768 = vsel %vm7765, %v7767, %v7763
        %v7769 = vmul.f32 1.0, %v7768
        %v7770 = vmul.f32 %v3049, %v7544
        %v7771 = vmul.f32 %v3054, %v7559
        %v7772 = vmul.f32 %v3059, %v7574
        %v7773 = vmul.f32 %v3064, %v7589
        %v7774 = vmul.f32 %v3069, %v7604
        %v7775 = vmul.f32 %v3074, %v7619
        %v7776 = vmul.f32 %v3079, %v7634
        %v7777 = vmul.f32 %v3084, %v7649
        %v7778 = vmul.f32 %v3089, %v7664
        %v7779 = vmul.f32 %v3094, %v7679
        %v7780 = vmul.f32 %v3099, %v7694
        %v7781 = vmul.f32 %v3104, %v7709
        %v7782 = vmul.f32 %v3109, %v7724
        %v7783 = vmul.f32 %v3114, %v7739
        %v7784 = vmul.f32 %v3119, %v7754
        %v7785 = vmul.f32 %v3124, %v7769
        %v7786 = vadd.f32 %v3145, %v7770
        %v7787 = vadd.f32 %v3150, %v7771
        %v7788 = vadd.f32 %v3155, %v7772
        %v7789 = vadd.f32 %v3160, %v7773
        %v7790 = vadd.f32 %v3165, %v7774
        %v7791 = vadd.f32 %v3170, %v7775
        %v7792 = vadd.f32 %v3175, %v7776
        %v7793 = vadd.f32 %v3180, %v7777
        %v7794 = vadd.f32 %v3185, %v7778
        %v7795 = vadd.f32 %v3190, %v7779
        %v7796 = vadd.f32 %v3195, %v7780
        %v7797 = vadd.f32 %v3200, %v7781
        %v7798 = vadd.f32 %v3205, %v7782
        %v7799 = vadd.f32 %v3210, %v7783
        %v7800 = vadd.f32 %v3215, %v7784
        %v7801 = vadd.f32 %v3220, %v7785
        %v7802 = vld [vmem:[%s2] sm:$0xff]
        %v7803 = vld [vmem:[%s2 + $0x8] sm:$0xff]
        %v7804 = vld [vmem:[%s2 + $0x10] sm:$0xff]
        %v7805 = vld [vmem:[%s2 + $0x18] sm:$0xff]
        %v7807 = vsel %vm2197, %v6938, 0
        %v7810 = vsel %vm2197, %v6939, 0
        %v7813 = vsel %vm2197, %v6940, 0
        %v7816 = vsel %vm2197, %v6941, 0
        %v7819 = vsel %vm2197, %v6942, 0
        %v7822 = vsel %vm2197, %v6943, 0
        %v7825 = vsel %vm2197, %v6944, 0
        %v7828 = vsel %vm2197, %v6945, 0
        %v7831 = vsel %vm2197, %v6946, 0
        %v7834 = vsel %vm2197, %v6947, 0
        %v7837 = vsel %vm2197, %v6948, 0
        %v7840 = vsel %vm2197, %v6949, 0
        %v7843 = vsel %vm2197, %v6950, 0
        %v7846 = vsel %vm2197, %v6951, 0
        %v7849 = vsel %vm2197, %v6952, 0
        %v7852 = vsel %vm2197, %v6953, 0
        %7854 = vmatpush.msra.mxu0 0.0
        %7855 = vmatpush.msra.mxu0 0.0
        %7856 = vmatpush.msra.mxu0 0.0
        %7857 = vmatpush.msra.mxu0 0.0
        %7858 = vmatpush.msra.mxu0 0.0
        %7859 = vmatpush.msra.mxu0 0.0
        %7860 = vmatpush.msra.mxu0 0.0
        %7861 = vmatpush.msra.mxu0 0.0
        %7862 = vmatpush.msra.mxu0 0.0
        %7863 = vmatpush.msra.mxu0 0.0
        %7864 = vmatpush.msra.mxu0 0.0
        %7865 = vmatpush.msra.mxu0 0.0
        %7866 = vmatpush.msra.mxu0 0.0
        %7867 = vmatpush.msra.mxu0 0.0
        %7868 = vmatpush.msra.mxu0 %v7804
        %7869 = vmatpush.msra.mxu0 %v7802
        %7870 = vmatmul.f32.gmra.mxu0 %v7807
        %v7871 = vpop.f32.mrf.mxu0
        %v7872 = vadd.f32 0.0, %v7871
        %7873 = vmatmul.f32.gmra.mxu0 %v7810
        %v7874 = vpop.f32.mrf.mxu0
        %v7875 = vadd.f32 0.0, %v7874
        %7876 = vmatmul.f32.gmra.mxu0 %v7813
        %v7877 = vpop.f32.mrf.mxu0
        %v7878 = vadd.f32 0.0, %v7877
        %7879 = vmatmul.f32.gmra.mxu0 %v7816
        %v7880 = vpop.f32.mrf.mxu0
        %v7881 = vadd.f32 0.0, %v7880
        %7882 = vmatmul.f32.gmra.mxu0 %v7819
        %v7883 = vpop.f32.mrf.mxu0
        %v7884 = vadd.f32 0.0, %v7883
        %7885 = vmatmul.f32.gmra.mxu0 %v7822
        %v7886 = vpop.f32.mrf.mxu0
        %v7887 = vadd.f32 0.0, %v7886
        %7888 = vmatmul.f32.gmra.mxu0 %v7825
        %v7889 = vpop.f32.mrf.mxu0
        %v7890 = vadd.f32 0.0, %v7889
        %7891 = vmatmul.f32.gmra.mxu0 %v7828
        %v7892 = vpop.f32.mrf.mxu0
        %v7893 = vadd.f32 0.0, %v7892
        %7894 = vmatmul.f32.gmra.mxu0 %v7831
        %v7895 = vpop.f32.mrf.mxu0
        %v7896 = vadd.f32 0.0, %v7895
        %7897 = vmatmul.f32.gmra.mxu0 %v7834
        %v7898 = vpop.f32.mrf.mxu0
        %v7899 = vadd.f32 0.0, %v7898
        %7900 = vmatmul.f32.gmra.mxu0 %v7837
        %v7901 = vpop.f32.mrf.mxu0
        %v7902 = vadd.f32 0.0, %v7901
        %7903 = vmatmul.f32.gmra.mxu0 %v7840
        %v7904 = vpop.f32.mrf.mxu0
        %v7905 = vadd.f32 0.0, %v7904
        %7906 = vmatmul.f32.gmra.mxu0 %v7843
        %v7907 = vpop.f32.mrf.mxu0
        %v7908 = vadd.f32 0.0, %v7907
        %7909 = vmatmul.f32.gmra.mxu0 %v7846
        %v7910 = vpop.f32.mrf.mxu0
        %v7911 = vadd.f32 0.0, %v7910
        %7912 = vmatmul.f32.gmra.mxu0 %v7849
        %v7913 = vpop.f32.mrf.mxu0
        %v7914 = vadd.f32 0.0, %v7913
        %7915 = vmatmul.f32.gmra.mxu0 %v7852
        %v7916 = vpop.f32.mrf.mxu0
        %v7917 = vadd.f32 0.0, %v7916
        %7918 = vdwg.mxu0
        %7919 = vmatpush.msra.mxu0 0.0
        %7920 = vmatpush.msra.mxu0 0.0
        %7921 = vmatpush.msra.mxu0 0.0
        %7922 = vmatpush.msra.mxu0 0.0
        %7923 = vmatpush.msra.mxu0 0.0
        %7924 = vmatpush.msra.mxu0 0.0
        %7925 = vmatpush.msra.mxu0 0.0
        %7926 = vmatpush.msra.mxu0 0.0
        %7927 = vmatpush.msra.mxu0 0.0
        %7928 = vmatpush.msra.mxu0 0.0
        %7929 = vmatpush.msra.mxu0 0.0
        %7930 = vmatpush.msra.mxu0 0.0
        %7931 = vmatpush.msra.mxu0 0.0
        %7932 = vmatpush.msra.mxu0 0.0
        %7933 = vmatpush.msra.mxu0 %v7805
        %7934 = vmatpush.msra.mxu0 %v7803
        %7935 = vmatmul.f32.gmra.mxu0 %v7807
        %v7936 = vpop.f32.mrf.mxu0
        %v7937 = vadd.f32 0.0, %v7936
        %7938 = vmatmul.f32.gmra.mxu0 %v7810
        %v7939 = vpop.f32.mrf.mxu0
        %v7940 = vadd.f32 0.0, %v7939
        %7941 = vmatmul.f32.gmra.mxu0 %v7813
        %v7942 = vpop.f32.mrf.mxu0
        %v7943 = vadd.f32 0.0, %v7942
        %7944 = vmatmul.f32.gmra.mxu0 %v7816
        %v7945 = vpop.f32.mrf.mxu0
        %v7946 = vadd.f32 0.0, %v7945
        %7947 = vmatmul.f32.gmra.mxu0 %v7819
        %v7948 = vpop.f32.mrf.mxu0
        %v7949 = vadd.f32 0.0, %v7948
        %7950 = vmatmul.f32.gmra.mxu0 %v7822
        %v7951 = vpop.f32.mrf.mxu0
        %v7952 = vadd.f32 0.0, %v7951
        %7953 = vmatmul.f32.gmra.mxu0 %v7825
        %v7954 = vpop.f32.mrf.mxu0
        %v7955 = vadd.f32 0.0, %v7954
        %7956 = vmatmul.f32.gmra.mxu0 %v7828
        %v7957 = vpop.f32.mrf.mxu0
        %v7958 = vadd.f32 0.0, %v7957
        %7959 = vmatmul.f32.gmra.mxu0 %v7831
        %v7960 = vpop.f32.mrf.mxu0
        %v7961 = vadd.f32 0.0, %v7960
        %7962 = vmatmul.f32.gmra.mxu0 %v7834
        %v7963 = vpop.f32.mrf.mxu0
        %v7964 = vadd.f32 0.0, %v7963
        %7965 = vmatmul.f32.gmra.mxu0 %v7837
        %v7966 = vpop.f32.mrf.mxu0
        %v7967 = vadd.f32 0.0, %v7966
        %7968 = vmatmul.f32.gmra.mxu0 %v7840
        %v7969 = vpop.f32.mrf.mxu0
        %v7970 = vadd.f32 0.0, %v7969
        %7971 = vmatmul.f32.gmra.mxu0 %v7843
        %v7972 = vpop.f32.mrf.mxu0
        %v7973 = vadd.f32 0.0, %v7972
        %7974 = vmatmul.f32.gmra.mxu0 %v7846
        %v7975 = vpop.f32.mrf.mxu0
        %v7976 = vadd.f32 0.0, %v7975
        %7977 = vmatmul.f32.gmra.mxu0 %v7849
        %v7978 = vpop.f32.mrf.mxu0
        %v7979 = vadd.f32 0.0, %v7978
        %7980 = vmatmul.f32.gmra.mxu0 %v7852
        %v7981 = vpop.f32.mrf.mxu0
        %v7982 = vadd.f32 0.0, %v7981
        %7983 = vdwg.mxu0
        %v7984 = vld [vmem:[%s3] sm:$0xff]
        %v7985 = vld [vmem:[%s3 + $0x8] sm:$0xff]
        %v7986 = vld [vmem:[%s3 + $0x10] sm:$0xff]
        %v7987 = vld [vmem:[%s3 + $0x18] sm:$0xff]
        %8004 = vrot.lane.b32.xlu0 %v7786, 106
        %v8005 = vpop.permute.xlu0 %8004
        %8006 = vrot.lane.b32.xlu0 %v7787, 106
        %v8007 = vpop.permute.xlu0 %8006
        %8008 = vrot.lane.b32.xlu0 %v7788, 106
        %v8009 = vpop.permute.xlu0 %8008
        %8010 = vrot.lane.b32.xlu0 %v7789, 106
        %v8011 = vpop.permute.xlu0 %8010
        %8012 = vrot.lane.b32.xlu0 %v7790, 106
        %v8013 = vpop.permute.xlu0 %8012
        %8014 = vrot.lane.b32.xlu0 %v7791, 106
        %v8015 = vpop.permute.xlu0 %8014
        %8016 = vrot.lane.b32.xlu0 %v7792, 106
        %v8017 = vpop.permute.xlu0 %8016
        %8018 = vrot.lane.b32.xlu0 %v7793, 106
        %v8019 = vpop.permute.xlu0 %8018
        %8020 = vrot.lane.b32.xlu0 %v7794, 106
        %v8021 = vpop.permute.xlu0 %8020
        %8022 = vrot.lane.b32.xlu0 %v7795, 106
        %v8023 = vpop.permute.xlu0 %8022
        %8024 = vrot.lane.b32.xlu0 %v7796, 106
        %v8025 = vpop.permute.xlu0 %8024
        %8026 = vrot.lane.b32.xlu0 %v7797, 106
        %v8027 = vpop.permute.xlu0 %8026
        %8028 = vrot.lane.b32.xlu0 %v7798, 106
        %v8029 = vpop.permute.xlu0 %8028
        %8030 = vrot.lane.b32.xlu0 %v7799, 106
        %v8031 = vpop.permute.xlu0 %8030
        %8032 = vrot.lane.b32.xlu0 %v7800, 106
        %v8033 = vpop.permute.xlu0 %8032
        %8034 = vrot.lane.b32.xlu0 %v7801, 106
        %v8035 = vpop.permute.xlu0 %8034
        %v8036 = vsel %vm2197, %v8005, 0
        %v8038 = vsel %vm2197, %v8007, 0
        %v8040 = vsel %vm2197, %v8009, 0
        %v8042 = vsel %vm2197, %v8011, 0
        %v8044 = vsel %vm2197, %v8013, 0
        %v8046 = vsel %vm2197, %v8015, 0
        %v8048 = vsel %vm2197, %v8017, 0
        %v8050 = vsel %vm2197, %v8019, 0
        %v8052 = vsel %vm2197, %v8021, 0
        %v8054 = vsel %vm2197, %v8023, 0
        %v8056 = vsel %vm2197, %v8025, 0
        %v8058 = vsel %vm2197, %v8027, 0
        %v8060 = vsel %vm2197, %v8029, 0
        %v8062 = vsel %vm2197, %v8031, 0
        %v8064 = vsel %vm2197, %v8033, 0
        %v8066 = vsel %vm2197, %v8035, 0
        %8068 = vmatpush.msra.mxu0 0.0
        %8069 = vmatpush.msra.mxu0 0.0
        %8070 = vmatpush.msra.mxu0 0.0
        %8071 = vmatpush.msra.mxu0 0.0
        %8072 = vmatpush.msra.mxu0 0.0
        %8073 = vmatpush.msra.mxu0 0.0
        %8074 = vmatpush.msra.mxu0 0.0
        %8075 = vmatpush.msra.mxu0 0.0
        %8076 = vmatpush.msra.mxu0 0.0
        %8077 = vmatpush.msra.mxu0 0.0
        %8078 = vmatpush.msra.mxu0 0.0
        %8079 = vmatpush.msra.mxu0 0.0
        %8080 = vmatpush.msra.mxu0 0.0
        %8081 = vmatpush.msra.mxu0 0.0
        %8082 = vmatpush.msra.mxu0 %v7986
        %8083 = vmatpush.msra.mxu0 %v7984
        %8084 = vmatmul.f32.gmra.mxu0 %v8036
        %v8085 = vpop.f32.mrf.mxu0
        %v8086 = vadd.f32 0.0, %v8085
        %8087 = vmatmul.f32.gmra.mxu0 %v8038
        %v8088 = vpop.f32.mrf.mxu0
        %v8089 = vadd.f32 0.0, %v8088
        %8090 = vmatmul.f32.gmra.mxu0 %v8040
        %v8091 = vpop.f32.mrf.mxu0
        %v8092 = vadd.f32 0.0, %v8091
        %8093 = vmatmul.f32.gmra.mxu0 %v8042
        %v8094 = vpop.f32.mrf.mxu0
        %v8095 = vadd.f32 0.0, %v8094
        %8096 = vmatmul.f32.gmra.mxu0 %v8044
        %v8097 = vpop.f32.mrf.mxu0
        %v8098 = vadd.f32 0.0, %v8097
        %8099 = vmatmul.f32.gmra.mxu0 %v8046
        %v8100 = vpop.f32.mrf.mxu0
        %v8101 = vadd.f32 0.0, %v8100
        %8102 = vmatmul.f32.gmra.mxu0 %v8048
        %v8103 = vpop.f32.mrf.mxu0
        %v8104 = vadd.f32 0.0, %v8103
        %8105 = vmatmul.f32.gmra.mxu0 %v8050
        %v8106 = vpop.f32.mrf.mxu0
        %v8107 = vadd.f32 0.0, %v8106
        %8108 = vmatmul.f32.gmra.mxu0 %v8052
        %v8109 = vpop.f32.mrf.mxu0
        %v8110 = vadd.f32 0.0, %v8109
        %8111 = vmatmul.f32.gmra.mxu0 %v8054
        %v8112 = vpop.f32.mrf.mxu0
        %v8113 = vadd.f32 0.0, %v8112
        %8114 = vmatmul.f32.gmra.mxu0 %v8056
        %v8115 = vpop.f32.mrf.mxu0
        %v8116 = vadd.f32 0.0, %v8115
        %8117 = vmatmul.f32.gmra.mxu0 %v8058
        %v8118 = vpop.f32.mrf.mxu0
        %v8119 = vadd.f32 0.0, %v8118
        %8120 = vmatmul.f32.gmra.mxu0 %v8060
        %v8121 = vpop.f32.mrf.mxu0
        %v8122 = vadd.f32 0.0, %v8121
        %8123 = vmatmul.f32.gmra.mxu0 %v8062
        %v8124 = vpop.f32.mrf.mxu0
        %v8125 = vadd.f32 0.0, %v8124
        %8126 = vmatmul.f32.gmra.mxu0 %v8064
        %v8127 = vpop.f32.mrf.mxu0
        %v8128 = vadd.f32 0.0, %v8127
        %8129 = vmatmul.f32.gmra.mxu0 %v8066
        %v8130 = vpop.f32.mrf.mxu0
        %v8131 = vadd.f32 0.0, %v8130
        %8132 = vdwg.mxu0
        %8133 = vmatpush.msra.mxu0 0.0
        %8134 = vmatpush.msra.mxu0 0.0
        %8135 = vmatpush.msra.mxu0 0.0
        %8136 = vmatpush.msra.mxu0 0.0
        %8137 = vmatpush.msra.mxu0 0.0
        %8138 = vmatpush.msra.mxu0 0.0
        %8139 = vmatpush.msra.mxu0 0.0
        %8140 = vmatpush.msra.mxu0 0.0
        %8141 = vmatpush.msra.mxu0 0.0
        %8142 = vmatpush.msra.mxu0 0.0
        %8143 = vmatpush.msra.mxu0 0.0
        %8144 = vmatpush.msra.mxu0 0.0
        %8145 = vmatpush.msra.mxu0 0.0
        %8146 = vmatpush.msra.mxu0 0.0
        %8147 = vmatpush.msra.mxu0 %v7987
        %8148 = vmatpush.msra.mxu0 %v7985
        %8149 = vmatmul.f32.gmra.mxu0 %v8036
        %v8150 = vpop.f32.mrf.mxu0
        %v8151 = vadd.f32 0.0, %v8150
        %8152 = vmatmul.f32.gmra.mxu0 %v8038
        %v8153 = vpop.f32.mrf.mxu0
        %v8154 = vadd.f32 0.0, %v8153
        %8155 = vmatmul.f32.gmra.mxu0 %v8040
        %v8156 = vpop.f32.mrf.mxu0
        %v8157 = vadd.f32 0.0, %v8156
        %8158 = vmatmul.f32.gmra.mxu0 %v8042
        %v8159 = vpop.f32.mrf.mxu0
        %v8160 = vadd.f32 0.0, %v8159
        %8161 = vmatmul.f32.gmra.mxu0 %v8044
        %v8162 = vpop.f32.mrf.mxu0
        %v8163 = vadd.f32 0.0, %v8162
        %8164 = vmatmul.f32.gmra.mxu0 %v8046
        %v8165 = vpop.f32.mrf.mxu0
        %v8166 = vadd.f32 0.0, %v8165
        %8167 = vmatmul.f32.gmra.mxu0 %v8048
        %v8168 = vpop.f32.mrf.mxu0
        %v8169 = vadd.f32 0.0, %v8168
        %8170 = vmatmul.f32.gmra.mxu0 %v8050
        %v8171 = vpop.f32.mrf.mxu0
        %v8172 = vadd.f32 0.0, %v8171
        %8173 = vmatmul.f32.gmra.mxu0 %v8052
        %v8174 = vpop.f32.mrf.mxu0
        %v8175 = vadd.f32 0.0, %v8174
        %8176 = vmatmul.f32.gmra.mxu0 %v8054
        %v8177 = vpop.f32.mrf.mxu0
        %v8178 = vadd.f32 0.0, %v8177
        %8179 = vmatmul.f32.gmra.mxu0 %v8056
        %v8180 = vpop.f32.mrf.mxu0
        %v8181 = vadd.f32 0.0, %v8180
        %8182 = vmatmul.f32.gmra.mxu0 %v8058
        %v8183 = vpop.f32.mrf.mxu0
        %v8184 = vadd.f32 0.0, %v8183
        %8185 = vmatmul.f32.gmra.mxu0 %v8060
        %v8186 = vpop.f32.mrf.mxu0
        %v8187 = vadd.f32 0.0, %v8186
        %8188 = vmatmul.f32.gmra.mxu0 %v8062
        %v8189 = vpop.f32.mrf.mxu0
        %v8190 = vadd.f32 0.0, %v8189
        %8191 = vmatmul.f32.gmra.mxu0 %v8064
        %v8192 = vpop.f32.mrf.mxu0
        %v8193 = vadd.f32 0.0, %v8192
        %8194 = vmatmul.f32.gmra.mxu0 %v8066
        %v8195 = vpop.f32.mrf.mxu0
        %v8196 = vadd.f32 0.0, %v8195
        %8197 = vdwg.mxu0
        %v8198 = vld [vmem:[%s330 + $0x100] sm:$0xff]
        %v8199 = vld [vmem:[%s330 + $0x108] sm:$0xff]
        %v8200 = vld [vmem:[%s330 + $0x110] sm:$0xff]
        %v8201 = vld [vmem:[%s330 + $0x118] sm:$0xff]
        %v8202 = vld [vmem:[%s330 + $0x120] sm:$0xff]
        %v8203 = vld [vmem:[%s330 + $0x128] sm:$0xff]
        %v8204 = vld [vmem:[%s330 + $0x130] sm:$0xff]
        %v8205 = vld [vmem:[%s330 + $0x138] sm:$0xff]
        %v8206 = vld [vmem:[%s330 + $0x140] sm:$0xff]
        %v8207 = vld [vmem:[%s330 + $0x148] sm:$0xff]
        %v8208 = vld [vmem:[%s330 + $0x150] sm:$0xff]
        %v8209 = vld [vmem:[%s330 + $0x158] sm:$0xff]
        %v8210 = vld [vmem:[%s330 + $0x160] sm:$0xff]
        %v8211 = vld [vmem:[%s330 + $0x168] sm:$0xff]
        %v8212 = vld [vmem:[%s330 + $0x170] sm:$0xff]
        %v8213 = vld [vmem:[%s330 + $0x178] sm:$0xff]
        %v8214 = vld [vmem:[%s330 + $0x180] sm:$0xff]
        %v8215 = vld [vmem:[%s330 + $0x188] sm:$0xff]
        %v8216 = vld [vmem:[%s330 + $0x190] sm:$0xff]
        %v8217 = vld [vmem:[%s330 + $0x198] sm:$0xff]
        %v8218 = vld [vmem:[%s330 + $0x1a0] sm:$0xff]
        %v8219 = vld [vmem:[%s330 + $0x1a8] sm:$0xff]
        %v8220 = vld [vmem:[%s330 + $0x1b0] sm:$0xff]
        %v8221 = vld [vmem:[%s330 + $0x1b8] sm:$0xff]
        %v8222 = vld [vmem:[%s330 + $0x1c0] sm:$0xff]
        %v8223 = vld [vmem:[%s330 + $0x1c8] sm:$0xff]
        %v8224 = vld [vmem:[%s330 + $0x1d0] sm:$0xff]
        %v8225 = vld [vmem:[%s330 + $0x1d8] sm:$0xff]
        %v8226 = vld [vmem:[%s330 + $0x1e0] sm:$0xff]
        %v8227 = vld [vmem:[%s330 + $0x1e8] sm:$0xff]
        %v8228 = vld [vmem:[%s330 + $0x1f0] sm:$0xff]
        %v8229 = vld [vmem:[%s330 + $0x1f8] sm:$0xff]
        %v8230 = vmul.f32 %v8198, %v7872
        %v8231 = vmul.f32 %v8199, %v7937
        %v8232 = vmul.f32 %v8200, %v7875
        %v8233 = vmul.f32 %v8201, %v7940
        %v8234 = vmul.f32 %v8202, %v7878
        %v8235 = vmul.f32 %v8203, %v7943
        %v8236 = vmul.f32 %v8204, %v7881
        %v8237 = vmul.f32 %v8205, %v7946
        %v8238 = vmul.f32 %v8206, %v7884
        %v8239 = vmul.f32 %v8207, %v7949
        %v8240 = vmul.f32 %v8208, %v7887
        %v8241 = vmul.f32 %v8209, %v7952
        %v8242 = vmul.f32 %v8210, %v7890
        %v8243 = vmul.f32 %v8211, %v7955
        %v8244 = vmul.f32 %v8212, %v7893
        %v8245 = vmul.f32 %v8213, %v7958
        %v8246 = vmul.f32 %v8214, %v7896
        %v8247 = vmul.f32 %v8215, %v7961
        %v8248 = vmul.f32 %v8216, %v7899
        %v8249 = vmul.f32 %v8217, %v7964
        %v8250 = vmul.f32 %v8218, %v7902
        %v8251 = vmul.f32 %v8219, %v7967
        %v8252 = vmul.f32 %v8220, %v7905
        %v8253 = vmul.f32 %v8221, %v7970
        %v8254 = vmul.f32 %v8222, %v7908
        %v8255 = vmul.f32 %v8223, %v7973
        %v8256 = vmul.f32 %v8224, %v7911
        %v8257 = vmul.f32 %v8225, %v7976
        %v8258 = vmul.f32 %v8226, %v7914
        %v8259 = vmul.f32 %v8227, %v7979
        %v8260 = vmul.f32 %v8228, %v7917
        %v8261 = vmul.f32 %v8229, %v7982
        %v8262 = vmul.f32 %v8230, %v8086
        %v8263 = vmul.f32 %v8231, %v8151
        %v8264 = vmul.f32 %v8232, %v8089
        %v8265 = vmul.f32 %v8233, %v8154
        %v8266 = vmul.f32 %v8234, %v8092
        %v8267 = vmul.f32 %v8235, %v8157
        %v8268 = vmul.f32 %v8236, %v8095
        %v8269 = vmul.f32 %v8237, %v8160
        %v8270 = vmul.f32 %v8238, %v8098
        %v8271 = vmul.f32 %v8239, %v8163
        %v8272 = vmul.f32 %v8240, %v8101
        %v8273 = vmul.f32 %v8241, %v8166
        %v8274 = vmul.f32 %v8242, %v8104
        %v8275 = vmul.f32 %v8243, %v8169
        %v8276 = vmul.f32 %v8244, %v8107
        %v8277 = vmul.f32 %v8245, %v8172
        %v8278 = vmul.f32 %v8246, %v8110
        %v8279 = vmul.f32 %v8247, %v8175
        %v8280 = vmul.f32 %v8248, %v8113
        %v8281 = vmul.f32 %v8249, %v8178
        %v8282 = vmul.f32 %v8250, %v8116
        %v8283 = vmul.f32 %v8251, %v8181
        %v8284 = vmul.f32 %v8252, %v8119
        %v8285 = vmul.f32 %v8253, %v8184
        %v8286 = vmul.f32 %v8254, %v8122
        %v8287 = vmul.f32 %v8255, %v8187
        %v8288 = vmul.f32 %v8256, %v8125
        %v8289 = vmul.f32 %v8257, %v8190
        %v8290 = vmul.f32 %v8258, %v8128
        %v8291 = vmul.f32 %v8259, %v8193
        %v8292 = vmul.f32 %v8260, %v8131
        %v8293 = vmul.f32 %v8261, %v8196
        %8294 = vst [vmem:[%s370 + $0x100] sm:$0xff] %v8262
        %8295 = vst [vmem:[%s370 + $0x108] sm:$0xff] %v8263
        %8296 = vst [vmem:[%s370 + $0x110] sm:$0xff] %v8264
        %8297 = vst [vmem:[%s370 + $0x118] sm:$0xff] %v8265
        %8298 = vst [vmem:[%s370 + $0x120] sm:$0xff] %v8266
        %8299 = vst [vmem:[%s370 + $0x128] sm:$0xff] %v8267
        %8300 = vst [vmem:[%s370 + $0x130] sm:$0xff] %v8268
        %8301 = vst [vmem:[%s370 + $0x138] sm:$0xff] %v8269
        %8302 = vst [vmem:[%s370 + $0x140] sm:$0xff] %v8270
        %8303 = vst [vmem:[%s370 + $0x148] sm:$0xff] %v8271
        %8304 = vst [vmem:[%s370 + $0x150] sm:$0xff] %v8272
        %8305 = vst [vmem:[%s370 + $0x158] sm:$0xff] %v8273
        %8306 = vst [vmem:[%s370 + $0x160] sm:$0xff] %v8274
        %8307 = vst [vmem:[%s370 + $0x168] sm:$0xff] %v8275
        %8308 = vst [vmem:[%s370 + $0x170] sm:$0xff] %v8276
        %8309 = vst [vmem:[%s370 + $0x178] sm:$0xff] %v8277
        %8310 = vst [vmem:[%s370 + $0x180] sm:$0xff] %v8278
        %8311 = vst [vmem:[%s370 + $0x188] sm:$0xff] %v8279
        %8312 = vst [vmem:[%s370 + $0x190] sm:$0xff] %v8280
        %8313 = vst [vmem:[%s370 + $0x198] sm:$0xff] %v8281
        %8314 = vst [vmem:[%s370 + $0x1a0] sm:$0xff] %v8282
        %8315 = vst [vmem:[%s370 + $0x1a8] sm:$0xff] %v8283
        %8316 = vst [vmem:[%s370 + $0x1b0] sm:$0xff] %v8284
        %8317 = vst [vmem:[%s370 + $0x1b8] sm:$0xff] %v8285
        %8318 = vst [vmem:[%s370 + $0x1c0] sm:$0xff] %v8286
        %8319 = vst [vmem:[%s370 + $0x1c8] sm:$0xff] %v8287
        %8320 = vst [vmem:[%s370 + $0x1d0] sm:$0xff] %v8288
        %8321 = vst [vmem:[%s370 + $0x1d8] sm:$0xff] %v8289
        %8322 = vst [vmem:[%s370 + $0x1e0] sm:$0xff] %v8290
        %8323 = vst [vmem:[%s370 + $0x1e8] sm:$0xff] %v8291
        %8324 = vst [vmem:[%s370 + $0x1f0] sm:$0xff] %v8292
        %8325 = vst [vmem:[%s370 + $0x1f8] sm:$0xff] %v8293
        %s8326 = sand.u32 %s229, 1
        %s8327 = scalar_lea.sflag [#allocation4], %s8326
        %s8328 = sand.u32 %s229, 1
        %s8329 = smul.addr %s8328, 512
        %s8330 = scalar_lea.vmem [#allocation7], %s8329
        // Predicated region
        $region65: #{tpu_custom_call.1} parent=55 // pred_check
          %p8331 = pneg %p239
        $region66: #{tpu_custom_call.1} parent=55 // pred_check_branch
          %8333 = sbr.rel (%p8331) target = $region68
        $region67: #{tpu_custom_call.1} parent=55 // pred_region
          %s8334 = smul.u32 32, %s27
          %8336 = vsyncadd %s8327, 0
          %s8337 = smul.addr %s8334, 2
          %s8338 = smul.addr %s8337, 8
          %s8339 = scalar_lea.hbm %s9, %s8338
          %s8340 = sshll.u32 %s8330, 4
          %s8341 = int_to_ptr.vmem [resolvable:$true] %s8340
          %s8342 = sshll.u32 %s8339, 4
          %s8343 = int_to_ptr.hbm [resolvable:$true] %s8342
          %8348 = dma.vmem_to_hbm [thread:$0]  %s8341, 8192, %s8343, %s8327, 256, 256, 16
        $region68: #{tpu_custom_call.1} parent=55 // pred_fallthru
          _
      $region56: #{tpu_custom_call.1} parent=5 // pred_fallthru
        _
      %p8349 = scmp.le.s32.totalorder 2, %s22
      // Predicated region
      $region69: #{tpu_custom_call.1} parent=5 // pred_check
        %p8350 = pneg %p8349
      $region70: #{tpu_custom_call.1} parent=5 // pred_check_branch
        %8352 = sbr.rel (%p8350) target = $region72
      $region71: #{tpu_custom_call.1} parent=5 // pred_region
        %s8353 = ssub.s32 %s22, 2
        // Predicated region
        $region73: #{tpu_custom_call.1} parent=71 // pred_check
          %p8354 = pneg %p245
        $region74: #{tpu_custom_call.1} parent=71 // pred_check_branch
          %8356 = sbr.rel (%p8354) target = $region76
        $region75: #{tpu_custom_call.1} parent=71 // pred_region
          %s8357 = sand.u32 %s230, 1
          %s8358 = scalar_lea.sflag [#allocation4], %s8357
          %s8359 = sand.u32 %s230, 1
          %s8360 = smul.addr %s8359, 512
          %s8361 = scalar_lea.vmem [#allocation7], %s8360
          %8363 = dma.done %s8358, 8192
        $region76: #{tpu_custom_call.1} parent=71 // pred_fallthru
          _
      $region72: #{tpu_custom_call.1} parent=5 // pred_fallthru
        _
    $region6: #{tpu_custom_call.1} parent=1 // loop_footer
      %s26 = sadd.s32 1, %s22
    $region7: #{tpu_custom_call.1} parent=1 // loop_footer_branch
      %21 = sbr.rel target = $region3
    $region8: #{tpu_custom_call.1} parent=1 // loop_exit
      _
    %8364 = vsyncpa [#allocation3], 1
    %s8365 = scalar_lea.sflag [#allocation3], 1
    %8366 = vsyncpa %s8365, 1
    %8367 = vsyncpa [#allocation6], 1
    %8368 = vsyncpa [#allocation4], 1
    %s8369 = scalar_lea.sflag [#allocation4], 1
    %8370 = vsyncpa %s8369, 1

</llo_original>
